<compile_context>
chip_gen: v7x
topology: tpu7x:2x2x1
jax: 0.10.0
libtpu: 0.0.40
codegen_flags: <defaults>
</compile_context>

<pallas_src>
import functools

import jax
import jax.numpy as jnp
import numpy as np
from jax.experimental import pallas as pl
from jax.experimental.pallas import tpu as pltpu


def conv_bn_relu_pool_kernel(p_ref, w_ref, b_ref, o_ref, *, B, Hp, Wp):
    """3x3 conv (im2col matmul) + folded BN/bias + ReLU + fused 2x2 maxpool.

    p_ref: (B*H*W, F)      im2col patches, natural (b, h, w) row order, f32
    w_ref: (F, Cout)       conv weight with BN scale folded into its columns
    b_ref: (1, Cout)       folded bias: conv_b * bn_scale + bn_shift
    o_ref: (B*Hp*Wp, Cout) pooled output, rows ordered (b, hp, wp)
    """
    half = B * 2 * Hp * Wp                       # = B*H*Wp rows per w-parity
    w = w_ref[...]

    # ---- pool over w, fused into the matmul: even-/odd-w patch rows are read
    # with stride-2 ref loads; bias + ReLU applied after the max (monotonic).
    y_even = jnp.dot(p_ref[pl.ds(0, half, stride=2), :], w,
                     preferred_element_type=jnp.float32)
    y_odd = jnp.dot(p_ref[pl.ds(1, half, stride=2), :], w,
                    preferred_element_type=jnp.float32)
    yw = jnp.maximum(jnp.maximum(y_even, y_odd) + b_ref[...], 0.0)  # (B*H*Wp, C)

    # ---- pool over h: rows h=2hp and h=2hp+1 are Wp rows apart; static
    # contiguous Wp-row chunk pairs, max stored straight to the output.
    # TODO(synk): output last dim is Cout=32 (<128 lanes) -> masked stores;
    # not worth a relayout at ~50 KB / B=2.
    for i in range(B * Hp):                      # 28 static chunks at B=2
        a = 2 * i * Wp
        o_ref[i * Wp:(i + 1) * Wp, :] = jnp.maximum(yw[a:a + Wp, :],
                                                    yw[a + Wp:a + 2 * Wp, :])


def mlp_kernel(x_ref, w1_ref, b1_ref, w2_ref, b2_ref, o_ref):
    """fc1 (+ReLU) + fc2.

    x_ref: (B, 6272) f32, w1_ref: (6272, 128) bf16, w2_ref: (128, ncls) f32.
    The small activation tile is cast to w1's dtype in-kernel so the MXU runs
    its native bf16 x bf16 -> f32-accumulate path (no f32 upcast of w1).
    """
    x = x_ref[...].astype(w1_ref.dtype)
    h = jnp.dot(x, w1_ref[...], preferred_element_type=jnp.float32)
    h = jnp.maximum(h + b1_ref[...], 0.0)
    o_ref[...] = jnp.dot(h, w2_ref[...],
                         preferred_element_type=jnp.float32) + b2_ref[...]


def _full_spec(shape):
    return pl.BlockSpec(shape, lambda i: (0,) * len(shape))


def prepare_params(params, eps=1e-5, fc1_dtype=jnp.bfloat16):
    """One-time parameter folding / reordering (outside the jitted forward).

    fc1_dtype=jnp.bfloat16 halves the dominant HBM read (validated at the
    1e-2 test tolerance); pass jnp.float32 to disable the quantization.
    """
    Cout, Cin, KH, KW = params["conv_w"].shape
    F = KH * KW * Cin
    scale = params["bn_gamma"] / jnp.sqrt(params["bn_var"] + eps)
    shift = params["bn_beta"] - params["bn_mean"] * scale
    # (kh, kw, cin) x cout matrix; BN scale folded into the output columns.
    wmat = jnp.transpose(params["conv_w"], (2, 3, 1, 0)).reshape(F, Cout)
    wmat = wmat * scale[None, :]
    bias = (params["conv_b"] * scale + shift).reshape(1, Cout)

    # fc1 weight reordered so that pooled.reshape(B, 196*Cout) -- spatial-major
    # / channel-minor -- multiplies it directly: torch flatten index c*196 + s
    # becomes weight row s*Cout + c.
    nh, nin = params["fc1_w"].shape                    # (128, Cout*196)
    S = nin // Cout                                    # 196 spatial positions
    w1r = params["fc1_w"].reshape(nh, Cout, S).transpose(2, 1, 0).reshape(nin, nh)
    w1r = w1r.astype(fc1_dtype)
    return {
        "wmat": wmat,
        "bias": bias,
        "w1r": w1r,
        "b1": params["fc1_b"].reshape(1, nh),
        "w2t": params["fc2_w"].T,
        "b2": params["fc2_b"].reshape(1, -1),
    }


def combined_model_forward(x, prepped):
    B, Cin, H, W = x.shape
    F, Cout = prepped["wmat"].shape
    Hp, Wp = H // 2, W // 2
    N = B * Hp * Wp

    # ---- glue: NCHW -> NHWC, zero-pad, im2col in NATURAL (b, h, w) row order
    # (single gather-style XLA fusion; no pooling-phase transpose).
    xp = jnp.pad(jnp.transpose(x, (0, 2, 3, 1)), ((0, 0), (1, 1), (1, 1), (0, 0)))
    cols = [xp[:, kh:kh + H, kw:kw + W, :] for kh in range(3) for kw in range(3)]
    patches = jnp.stack(cols, axis=3).reshape(B * H * W, F)

    pooled = pl.pallas_call(
        functools.partial(conv_bn_relu_pool_kernel, B=B, Hp=Hp, Wp=Wp),
        out_shape=jax.ShapeDtypeStruct((N, Cout), jnp.float32),
        grid=(1,),
        in_specs=[_full_spec((B * H * W, F)), _full_spec((F, Cout)),
                  _full_spec((1, Cout))],
        out_specs=_full_spec((N, Cout)),
        compiler_params=pltpu.CompilerParams(dimension_semantics=("arbitrary",)),
    )(patches, prepped["wmat"], prepped["bias"])

    # Zero-copy reshape: rows are (b, s), cols are c, contiguous -> (B, S*Cout).
    # The torch flatten permutation is already folded into prepped["w1r"].
    flat = pooled.reshape(B, Hp * Wp * Cout)

    D, Hd = prepped["w1r"].shape
    ncls = prepped["w2t"].shape[1]
    logits = pl.pallas_call(
        mlp_kernel,
        out_shape=jax.ShapeDtypeStruct((B, ncls), jnp.float32),
        grid=(1,),
        in_specs=[_full_spec((B, D)), _full_spec((D, Hd)), _full_spec((1, Hd)),
                  _full_spec((Hd, ncls)), _full_spec((1, ncls))],
        out_specs=_full_spec((B, ncls)),
        compiler_params=pltpu.CompilerParams(dimension_semantics=("arbitrary",)),
    )(flat, prepped["w1r"], prepped["b1"], prepped["w2t"], prepped["b2"])
    return logits


def reference_forward(x, params):
    # Pure-JAX reference with PyTorch (NCHW) semantics.
    y = jax.lax.conv_general_dilated(
        x, params["conv_w"], (1, 1), ((1, 1), (1, 1)),
        dimension_numbers=("NCHW", "OIHW", "NCHW"),
        precision=jax.lax.Precision.HIGHEST)
    y = y + params["conv_b"][None, :, None, None]
    scale = params["bn_gamma"] / jnp.sqrt(params["bn_var"] + 1e-5)
    shift = params["bn_beta"] - params["bn_mean"] * scale
    y = y * scale[None, :, None, None] + shift[None, :, None, None]
    y = jnp.maximum(y, 0.0)
    B, C, H, W = y.shape
    y = y.reshape(B, C, H // 2, 2, W // 2, 2).max(axis=(3, 5))
    f = y.reshape(B, -1)
    h = jnp.maximum(
        jnp.matmul(f, params["fc1_w"].T, precision=jax.lax.Precision.HIGHEST)
        + params["fc1_b"], 0.0)
    return (jnp.matmul(h, params["fc2_w"].T, precision=jax.lax.Precision.HIGHEST)
            + params["fc2_b"])


if __name__ == "__main__":
    B, Cin, Cout, ncls = 2, 4, 32, 10
    H = W = 28  # conv(3x3, pad=1) keeps 28x28; maxpool(2) -> 14x14 -> 32*14*14 = 6272
    key = jax.random.PRNGKey(0)
    ks = jax.random.split(key, 12)
    params = {
        "conv_w": 0.1 * jax.random.normal(ks[0], (Cout, Cin, 3, 3), jnp.float32),
        "conv_b": 0.1 * jax.random.normal(ks[1], (Cout,), jnp.float32),
        "bn_gamma": 1.0 + 0.1 * jax.random.normal(ks[2], (Cout,), jnp.float32),
        "bn_beta": 0.1 * jax.random.normal(ks[3], (Cout,), jnp.float32),
        "bn_mean": 0.1 * jax.random.normal(ks[4], (Cout,), jnp.float32),
        "bn_var": 0.5 + jax.random.uniform(ks[5], (Cout,), jnp.float32),
        "fc1_w": 0.05 * jax.random.normal(ks[6], (128, Cout * 14 * 14), jnp.float32),
        "fc1_b": 0.05 * jax.random.normal(ks[7], (128,), jnp.float32),
        "fc2_w": 0.05 * jax.random.normal(ks[8], (ncls, 128), jnp.float32),
        "fc2_b": 0.05 * jax.random.normal(ks[9], (ncls,), jnp.float32),
    }
    x = jax.random.normal(ks[10], (B, Cin, H, W), jnp.float32)

    prepped = prepare_params(params)          # one-time parameter folding
    logits = jax.jit(combined_model_forward)(x, prepped)
    logits = jax.block_until_ready(logits)

    ref = reference_forward(x, params)
    # bf16 streaming of fc1 (weight + activation) is a deliberate perf choice;
    # validated at this tolerance (set fc1_dtype=jnp.float32 to tighten).
    np.testing.assert_allclose(np.asarray(logits), np.asarray(ref), rtol=1e-2, atol=1e-2)
    print("KERNEL_OK")
</pallas_src>

<mosaic_0001>
module attributes {stable_mosaic.version = 11 : i64} {
  func.func @conv_bn_relu_pool_kernel(%arg0: i32, %arg1: memref<1568x36xf32, #tpu.memory_space<vmem>>, %arg2: memref<36x32xf32, #tpu.memory_space<vmem>>, %arg3: memref<1x32xf32, #tpu.memory_space<vmem>>, %arg4: memref<392x32xf32, #tpu.memory_space<vmem>>) attributes {dimension_semantics = [#tpu.dimension_semantics<arbitrary>], iteration_bounds = array<i64: 1>, scalar_prefetch = 0 : i64, scratch_operands = 0 : i64, tpu.core_type = #tpu.core_type<tc>, window_params = [{pipeline_mode = #tpu.pipeline_mode<synchronous>, transform_indices = @transform_0, window_bounds = array<i64: 1568, 36>}, {pipeline_mode = #tpu.pipeline_mode<synchronous>, transform_indices = @transform_1, window_bounds = array<i64: 36, 32>}, {pipeline_mode = #tpu.pipeline_mode<synchronous>, transform_indices = @transform_2, window_bounds = array<i64: 1, 32>}, {pipeline_mode = #tpu.pipeline_mode<synchronous>, transform_indices = @transform_3, window_bounds = array<i64: 392, 32>}]} {
    %c0 = arith.constant 0 : index
    %c0_0 = arith.constant 0 : index
    %0 = vector.load %arg2[%c0, %c0_0] : memref<36x32xf32, #tpu.memory_space<vmem>>, vector<36x32xf32>
    %c0_1 = arith.constant 0 : index
    %c0_2 = arith.constant 0 : index
    %1 = tpu.strided_load %arg1[%c0_1, %c0_2] {strides = array<i32: 2, 1>} : memref<1568x36xf32, #tpu.memory_space<vmem>>, vector<784x36xf32>
    %cst = arith.constant dense<0.000000e+00> : vector<784x32xf32>
    %2 = tpu.matmul %1, %0, %cst {dimension_numbers = #tpu.dot_dimension_numbers<[1], [0], [0], [1], [0, 0, 1, 1], [], []>} : vector<784x36xf32>, vector<36x32xf32>, vector<784x32xf32> -> vector<784x32xf32>
    %c1 = arith.constant 1 : index
    %c0_3 = arith.constant 0 : index
    %3 = tpu.strided_load %arg1[%c1, %c0_3] {strides = array<i32: 2, 1>} : memref<1568x36xf32, #tpu.memory_space<vmem>>, vector<784x36xf32>
    %cst_4 = arith.constant dense<0.000000e+00> : vector<784x32xf32>
    %4 = tpu.matmul %3, %0, %cst_4 {dimension_numbers = #tpu.dot_dimension_numbers<[1], [0], [0], [1], [0, 0, 1, 1], [], []>} : vector<784x36xf32>, vector<36x32xf32>, vector<784x32xf32> -> vector<784x32xf32>
    %5 = arith.maximumf %2, %4 : vector<784x32xf32>
    %c0_5 = arith.constant 0 : index
    %c0_6 = arith.constant 0 : index
    %6 = vector.load %arg3[%c0_5, %c0_6] : memref<1x32xf32, #tpu.memory_space<vmem>>, vector<1x32xf32>
    %7 = vector.broadcast %6 : vector<1x32xf32> to vector<784x32xf32>
    %8 = arith.addf %5, %7 : vector<784x32xf32>
    %cst_7 = arith.constant 0.000000e+00 : f32
    %9 = vector.broadcast %cst_7 : f32 to vector<784x32xf32>
    %10 = arith.maximumf %8, %9 : vector<784x32xf32>
    %11 = vector.extract_strided_slice %10 {offsets = [0, 0], sizes = [14, 32], strides = [1, 1]} : vector<784x32xf32> to vector<14x32xf32>
    %12 = vector.extract_strided_slice %10 {offsets = [14, 0], sizes = [14, 32], strides = [1, 1]} : vector<784x32xf32> to vector<14x32xf32>
    %13 = arith.maximumf %11, %12 : vector<14x32xf32>
    %c0_8 = arith.constant 0 : index
    %c0_9 = arith.constant 0 : index
    %14 = vector.load %arg4[%c0_8, %c0_9] : memref<392x32xf32, #tpu.memory_space<vmem>>, vector<14x32xf32>
    tpu.vector_store %arg4[%c0_8, %c0_9], %13 {strides = array<i32>} : memref<392x32xf32, #tpu.memory_space<vmem>>, vector<14x32xf32>,
    %15 = vector.extract_strided_slice %10 {offsets = [28, 0], sizes = [14, 32], strides = [1, 1]} : vector<784x32xf32> to vector<14x32xf32>
    %16 = vector.extract_strided_slice %10 {offsets = [42, 0], sizes = [14, 32], strides = [1, 1]} : vector<784x32xf32> to vector<14x32xf32>
    %17 = arith.maximumf %15, %16 : vector<14x32xf32>
    %c14 = arith.constant 14 : index
    %c0_10 = arith.constant 0 : index
    %18 = vector.load %arg4[%c14, %c0_10] : memref<392x32xf32, #tpu.memory_space<vmem>>, vector<14x32xf32>
    tpu.vector_store %arg4[%c14, %c0_10], %17 {strides = array<i32>} : memref<392x32xf32, #tpu.memory_space<vmem>>, vector<14x32xf32>,
    %19 = vector.extract_strided_slice %10 {offsets = [56, 0], sizes = [14, 32], strides = [1, 1]} : vector<784x32xf32> to vector<14x32xf32>
    %20 = vector.extract_strided_slice %10 {offsets = [70, 0], sizes = [14, 32], strides = [1, 1]} : vector<784x32xf32> to vector<14x32xf32>
    %21 = arith.maximumf %19, %20 : vector<14x32xf32>
    %c28 = arith.constant 28 : index
    %c0_11 = arith.constant 0 : index
    %22 = vector.load %arg4[%c28, %c0_11] : memref<392x32xf32, #tpu.memory_space<vmem>>, vector<14x32xf32>
    tpu.vector_store %arg4[%c28, %c0_11], %21 {strides = array<i32>} : memref<392x32xf32, #tpu.memory_space<vmem>>, vector<14x32xf32>,
    %23 = vector.extract_strided_slice %10 {offsets = [84, 0], sizes = [14, 32], strides = [1, 1]} : vector<784x32xf32> to vector<14x32xf32>
    %24 = vector.extract_strided_slice %10 {offsets = [98, 0], sizes = [14, 32], strides = [1, 1]} : vector<784x32xf32> to vector<14x32xf32>
    %25 = arith.maximumf %23, %24 : vector<14x32xf32>
    %c42 = arith.constant 42 : index
    %c0_12 = arith.constant 0 : index
    %26 = vector.load %arg4[%c42, %c0_12] : memref<392x32xf32, #tpu.memory_space<vmem>>, vector<14x32xf32>
    tpu.vector_store %arg4[%c42, %c0_12], %25 {strides = array<i32>} : memref<392x32xf32, #tpu.memory_space<vmem>>, vector<14x32xf32>,
    %27 = vector.extract_strided_slice %10 {offsets = [112, 0], sizes = [14, 32], strides = [1, 1]} : vector<784x32xf32> to vector<14x32xf32>
    %28 = vector.extract_strided_slice %10 {offsets = [126, 0], sizes = [14, 32], strides = [1, 1]} : vector<784x32xf32> to vector<14x32xf32>
    %29 = arith.maximumf %27, %28 : vector<14x32xf32>
    %c56 = arith.constant 56 : index
    %c0_13 = arith.constant 0 : index
    %30 = vector.load %arg4[%c56, %c0_13] : memref<392x32xf32, #tpu.memory_space<vmem>>, vector<14x32xf32>
    tpu.vector_store %arg4[%c56, %c0_13], %29 {strides = array<i32>} : memref<392x32xf32, #tpu.memory_space<vmem>>, vector<14x32xf32>,
    %31 = vector.extract_strided_slice %10 {offsets = [140, 0], sizes = [14, 32], strides = [1, 1]} : vector<784x32xf32> to vector<14x32xf32>
    %32 = vector.extract_strided_slice %10 {offsets = [154, 0], sizes = [14, 32], strides = [1, 1]} : vector<784x32xf32> to vector<14x32xf32>
    %33 = arith.maximumf %31, %32 : vector<14x32xf32>
    %c70 = arith.constant 70 : index
    %c0_14 = arith.constant 0 : index
    %34 = vector.load %arg4[%c70, %c0_14] : memref<392x32xf32, #tpu.memory_space<vmem>>, vector<14x32xf32>
    tpu.vector_store %arg4[%c70, %c0_14], %33 {strides = array<i32>} : memref<392x32xf32, #tpu.memory_space<vmem>>, vector<14x32xf32>,
    %35 = vector.extract_strided_slice %10 {offsets = [168, 0], sizes = [14, 32], strides = [1, 1]} : vector<784x32xf32> to vector<14x32xf32>
    %36 = vector.extract_strided_slice %10 {offsets = [182, 0], sizes = [14, 32], strides = [1, 1]} : vector<784x32xf32> to vector<14x32xf32>
    %37 = arith.maximumf %35, %36 : vector<14x32xf32>
    %c84 = arith.constant 84 : index
    %c0_15 = arith.constant 0 : index
    %38 = vector.load %arg4[%c84, %c0_15] : memref<392x32xf32, #tpu.memory_space<vmem>>, vector<14x32xf32>
    tpu.vector_store %arg4[%c84, %c0_15], %37 {strides = array<i32>} : memref<392x32xf32, #tpu.memory_space<vmem>>, vector<14x32xf32>,
    %39 = vector.extract_strided_slice %10 {offsets = [196, 0], sizes = [14, 32], strides = [1, 1]} : vector<784x32xf32> to vector<14x32xf32>
    %40 = vector.extract_strided_slice %10 {offsets = [210, 0], sizes = [14, 32], strides = [1, 1]} : vector<784x32xf32> to vector<14x32xf32>
    %41 = arith.maximumf %39, %40 : vector<14x32xf32>
    %c98 = arith.constant 98 : index
    %c0_16 = arith.constant 0 : index
    %42 = vector.load %arg4[%c98, %c0_16] : memref<392x32xf32, #tpu.memory_space<vmem>>, vector<14x32xf32>
    tpu.vector_store %arg4[%c98, %c0_16], %41 {strides = array<i32>} : memref<392x32xf32, #tpu.memory_space<vmem>>, vector<14x32xf32>,
    %43 = vector.extract_strided_slice %10 {offsets = [224, 0], sizes = [14, 32], strides = [1, 1]} : vector<784x32xf32> to vector<14x32xf32>
    %44 = vector.extract_strided_slice %10 {offsets = [238, 0], sizes = [14, 32], strides = [1, 1]} : vector<784x32xf32> to vector<14x32xf32>
    %45 = arith.maximumf %43, %44 : vector<14x32xf32>
    %c112 = arith.constant 112 : index
    %c0_17 = arith.constant 0 : index
    %46 = vector.load %arg4[%c112, %c0_17] : memref<392x32xf32, #tpu.memory_space<vmem>>, vector<14x32xf32>
    tpu.vector_store %arg4[%c112, %c0_17], %45 {strides = array<i32>} : memref<392x32xf32, #tpu.memory_space<vmem>>, vector<14x32xf32>,
    %47 = vector.extract_strided_slice %10 {offsets = [252, 0], sizes = [14, 32], strides = [1, 1]} : vector<784x32xf32> to vector<14x32xf32>
    %48 = vector.extract_strided_slice %10 {offsets = [266, 0], sizes = [14, 32], strides = [1, 1]} : vector<784x32xf32> to vector<14x32xf32>
    %49 = arith.maximumf %47, %48 : vector<14x32xf32>
    %c126 = arith.constant 126 : index
    %c0_18 = arith.constant 0 : index
    %50 = vector.load %arg4[%c126, %c0_18] : memref<392x32xf32, #tpu.memory_space<vmem>>, vector<14x32xf32>
    tpu.vector_store %arg4[%c126, %c0_18], %49 {strides = array<i32>} : memref<392x32xf32, #tpu.memory_space<vmem>>, vector<14x32xf32>,
    %51 = vector.extract_strided_slice %10 {offsets = [280, 0], sizes = [14, 32], strides = [1, 1]} : vector<784x32xf32> to vector<14x32xf32>
    %52 = vector.extract_strided_slice %10 {offsets = [294, 0], sizes = [14, 32], strides = [1, 1]} : vector<784x32xf32> to vector<14x32xf32>
    %53 = arith.maximumf %51, %52 : vector<14x32xf32>
    %c140 = arith.constant 140 : index
    %c0_19 = arith.constant 0 : index
    %54 = vector.load %arg4[%c140, %c0_19] : memref<392x32xf32, #tpu.memory_space<vmem>>, vector<14x32xf32>
    tpu.vector_store %arg4[%c140, %c0_19], %53 {strides = array<i32>} : memref<392x32xf32, #tpu.memory_space<vmem>>, vector<14x32xf32>,
    %55 = vector.extract_strided_slice %10 {offsets = [308, 0], sizes = [14, 32], strides = [1, 1]} : vector<784x32xf32> to vector<14x32xf32>
    %56 = vector.extract_strided_slice %10 {offsets = [322, 0], sizes = [14, 32], strides = [1, 1]} : vector<784x32xf32> to vector<14x32xf32>
    %57 = arith.maximumf %55, %56 : vector<14x32xf32>
    %c154 = arith.constant 154 : index
    %c0_20 = arith.constant 0 : index
    %58 = vector.load %arg4[%c154, %c0_20] : memref<392x32xf32, #tpu.memory_space<vmem>>, vector<14x32xf32>
    tpu.vector_store %arg4[%c154, %c0_20], %57 {strides = array<i32>} : memref<392x32xf32, #tpu.memory_space<vmem>>, vector<14x32xf32>,
    %59 = vector.extract_strided_slice %10 {offsets = [336, 0], sizes = [14, 32], strides = [1, 1]} : vector<784x32xf32> to vector<14x32xf32>
    %60 = vector.extract_strided_slice %10 {offsets = [350, 0], sizes = [14, 32], strides = [1, 1]} : vector<784x32xf32> to vector<14x32xf32>
    %61 = arith.maximumf %59, %60 : vector<14x32xf32>
    %c168 = arith.constant 168 : index
    %c0_21 = arith.constant 0 : index
    %62 = vector.load %arg4[%c168, %c0_21] : memref<392x32xf32, #tpu.memory_space<vmem>>, vector<14x32xf32>
    tpu.vector_store %arg4[%c168, %c0_21], %61 {strides = array<i32>} : memref<392x32xf32, #tpu.memory_space<vmem>>, vector<14x32xf32>,
    %63 = vector.extract_strided_slice %10 {offsets = [364, 0], sizes = [14, 32], strides = [1, 1]} : vector<784x32xf32> to vector<14x32xf32>
    %64 = vector.extract_strided_slice %10 {offsets = [378, 0], sizes = [14, 32], strides = [1, 1]} : vector<784x32xf32> to vector<14x32xf32>
    %65 = arith.maximumf %63, %64 : vector<14x32xf32>
    %c182 = arith.constant 182 : index
    %c0_22 = arith.constant 0 : index
    %66 = vector.load %arg4[%c182, %c0_22] : memref<392x32xf32, #tpu.memory_space<vmem>>, vector<14x32xf32>
    tpu.vector_store %arg4[%c182, %c0_22], %65 {strides = array<i32>} : memref<392x32xf32, #tpu.memory_space<vmem>>, vector<14x32xf32>,
    %67 = vector.extract_strided_slice %10 {offsets = [392, 0], sizes = [14, 32], strides = [1, 1]} : vector<784x32xf32> to vector<14x32xf32>
    %68 = vector.extract_strided_slice %10 {offsets = [406, 0], sizes = [14, 32], strides = [1, 1]} : vector<784x32xf32> to vector<14x32xf32>
    %69 = arith.maximumf %67, %68 : vector<14x32xf32>
    %c196 = arith.constant 196 : index
    %c0_23 = arith.constant 0 : index
    %70 = vector.load %arg4[%c196, %c0_23] : memref<392x32xf32, #tpu.memory_space<vmem>>, vector<14x32xf32>
    tpu.vector_store %arg4[%c196, %c0_23], %69 {strides = array<i32>} : memref<392x32xf32, #tpu.memory_space<vmem>>, vector<14x32xf32>,
    %71 = vector.extract_strided_slice %10 {offsets = [420, 0], sizes = [14, 32], strides = [1, 1]} : vector<784x32xf32> to vector<14x32xf32>
    %72 = vector.extract_strided_slice %10 {offsets = [434, 0], sizes = [14, 32], strides = [1, 1]} : vector<784x32xf32> to vector<14x32xf32>
    %73 = arith.maximumf %71, %72 : vector<14x32xf32>
    %c210 = arith.constant 210 : index
    %c0_24 = arith.constant 0 : index
    %74 = vector.load %arg4[%c210, %c0_24] : memref<392x32xf32, #tpu.memory_space<vmem>>, vector<14x32xf32>
    tpu.vector_store %arg4[%c210, %c0_24], %73 {strides = array<i32>} : memref<392x32xf32, #tpu.memory_space<vmem>>, vector<14x32xf32>,
    %75 = vector.extract_strided_slice %10 {offsets = [448, 0], sizes = [14, 32], strides = [1, 1]} : vector<784x32xf32> to vector<14x32xf32>
    %76 = vector.extract_strided_slice %10 {offsets = [462, 0], sizes = [14, 32], strides = [1, 1]} : vector<784x32xf32> to vector<14x32xf32>
    %77 = arith.maximumf %75, %76 : vector<14x32xf32>
    %c224 = arith.constant 224 : index
    %c0_25 = arith.constant 0 : index
    %78 = vector.load %arg4[%c224, %c0_25] : memref<392x32xf32, #tpu.memory_space<vmem>>, vector<14x32xf32>
    tpu.vector_store %arg4[%c224, %c0_25], %77 {strides = array<i32>} : memref<392x32xf32, #tpu.memory_space<vmem>>, vector<14x32xf32>,
    %79 = vector.extract_strided_slice %10 {offsets = [476, 0], sizes = [14, 32], strides = [1, 1]} : vector<784x32xf32> to vector<14x32xf32>
    %80 = vector.extract_strided_slice %10 {offsets = [490, 0], sizes = [14, 32], strides = [1, 1]} : vector<784x32xf32> to vector<14x32xf32>
    %81 = arith.maximumf %79, %80 : vector<14x32xf32>
    %c238 = arith.constant 238 : index
    %c0_26 = arith.constant 0 : index
    %82 = vector.load %arg4[%c238, %c0_26] : memref<392x32xf32, #tpu.memory_space<vmem>>, vector<14x32xf32>
    tpu.vector_store %arg4[%c238, %c0_26], %81 {strides = array<i32>} : memref<392x32xf32, #tpu.memory_space<vmem>>, vector<14x32xf32>,
    %83 = vector.extract_strided_slice %10 {offsets = [504, 0], sizes = [14, 32], strides = [1, 1]} : vector<784x32xf32> to vector<14x32xf32>
    %84 = vector.extract_strided_slice %10 {offsets = [518, 0], sizes = [14, 32], strides = [1, 1]} : vector<784x32xf32> to vector<14x32xf32>
    %85 = arith.maximumf %83, %84 : vector<14x32xf32>
    %c252 = arith.constant 252 : index
    %c0_27 = arith.constant 0 : index
    %86 = vector.load %arg4[%c252, %c0_27] : memref<392x32xf32, #tpu.memory_space<vmem>>, vector<14x32xf32>
    tpu.vector_store %arg4[%c252, %c0_27], %85 {strides = array<i32>} : memref<392x32xf32, #tpu.memory_space<vmem>>, vector<14x32xf32>,
    %87 = vector.extract_strided_slice %10 {offsets = [532, 0], sizes = [14, 32], strides = [1, 1]} : vector<784x32xf32> to vector<14x32xf32>
    %88 = vector.extract_strided_slice %10 {offsets = [546, 0], sizes = [14, 32], strides = [1, 1]} : vector<784x32xf32> to vector<14x32xf32>
    %89 = arith.maximumf %87, %88 : vector<14x32xf32>
    %c266 = arith.constant 266 : index
    %c0_28 = arith.constant 0 : index
    %90 = vector.load %arg4[%c266, %c0_28] : memref<392x32xf32, #tpu.memory_space<vmem>>, vector<14x32xf32>
    tpu.vector_store %arg4[%c266, %c0_28], %89 {strides = array<i32>} : memref<392x32xf32, #tpu.memory_space<vmem>>, vector<14x32xf32>,
    %91 = vector.extract_strided_slice %10 {offsets = [560, 0], sizes = [14, 32], strides = [1, 1]} : vector<784x32xf32> to vector<14x32xf32>
    %92 = vector.extract_strided_slice %10 {offsets = [574, 0], sizes = [14, 32], strides = [1, 1]} : vector<784x32xf32> to vector<14x32xf32>
    %93 = arith.maximumf %91, %92 : vector<14x32xf32>
    %c280 = arith.constant 280 : index
    %c0_29 = arith.constant 0 : index
    %94 = vector.load %arg4[%c280, %c0_29] : memref<392x32xf32, #tpu.memory_space<vmem>>, vector<14x32xf32>
    tpu.vector_store %arg4[%c280, %c0_29], %93 {strides = array<i32>} : memref<392x32xf32, #tpu.memory_space<vmem>>, vector<14x32xf32>,
    %95 = vector.extract_strided_slice %10 {offsets = [588, 0], sizes = [14, 32], strides = [1, 1]} : vector<784x32xf32> to vector<14x32xf32>
    %96 = vector.extract_strided_slice %10 {offsets = [602, 0], sizes = [14, 32], strides = [1, 1]} : vector<784x32xf32> to vector<14x32xf32>
    %97 = arith.maximumf %95, %96 : vector<14x32xf32>
    %c294 = arith.constant 294 : index
    %c0_30 = arith.constant 0 : index
    %98 = vector.load %arg4[%c294, %c0_30] : memref<392x32xf32, #tpu.memory_space<vmem>>, vector<14x32xf32>
    tpu.vector_store %arg4[%c294, %c0_30], %97 {strides = array<i32>} : memref<392x32xf32, #tpu.memory_space<vmem>>, vector<14x32xf32>,
    %99 = vector.extract_strided_slice %10 {offsets = [616, 0], sizes = [14, 32], strides = [1, 1]} : vector<784x32xf32> to vector<14x32xf32>
    %100 = vector.extract_strided_slice %10 {offsets = [630, 0], sizes = [14, 32], strides = [1, 1]} : vector<784x32xf32> to vector<14x32xf32>
    %101 = arith.maximumf %99, %100 : vector<14x32xf32>
    %c308 = arith.constant 308 : index
    %c0_31 = arith.constant 0 : index
    %102 = vector.load %arg4[%c308, %c0_31] : memref<392x32xf32, #tpu.memory_space<vmem>>, vector<14x32xf32>
    tpu.vector_store %arg4[%c308, %c0_31], %101 {strides = array<i32>} : memref<392x32xf32, #tpu.memory_space<vmem>>, vector<14x32xf32>,
    %103 = vector.extract_strided_slice %10 {offsets = [644, 0], sizes = [14, 32], strides = [1, 1]} : vector<784x32xf32> to vector<14x32xf32>
    %104 = vector.extract_strided_slice %10 {offsets = [658, 0], sizes = [14, 32], strides = [1, 1]} : vector<784x32xf32> to vector<14x32xf32>
    %105 = arith.maximumf %103, %104 : vector<14x32xf32>
    %c322 = arith.constant 322 : index
    %c0_32 = arith.constant 0 : index
    %106 = vector.load %arg4[%c322, %c0_32] : memref<392x32xf32, #tpu.memory_space<vmem>>, vector<14x32xf32>
    tpu.vector_store %arg4[%c322, %c0_32], %105 {strides = array<i32>} : memref<392x32xf32, #tpu.memory_space<vmem>>, vector<14x32xf32>,
    %107 = vector.extract_strided_slice %10 {offsets = [672, 0], sizes = [14, 32], strides = [1, 1]} : vector<784x32xf32> to vector<14x32xf32>
    %108 = vector.extract_strided_slice %10 {offsets = [686, 0], sizes = [14, 32], strides = [1, 1]} : vector<784x32xf32> to vector<14x32xf32>
    %109 = arith.maximumf %107, %108 : vector<14x32xf32>
    %c336 = arith.constant 336 : index
    %c0_33 = arith.constant 0 : index
    %110 = vector.load %arg4[%c336, %c0_33] : memref<392x32xf32, #tpu.memory_space<vmem>>, vector<14x32xf32>
    tpu.vector_store %arg4[%c336, %c0_33], %109 {strides = array<i32>} : memref<392x32xf32, #tpu.memory_space<vmem>>, vector<14x32xf32>,
    %111 = vector.extract_strided_slice %10 {offsets = [700, 0], sizes = [14, 32], strides = [1, 1]} : vector<784x32xf32> to vector<14x32xf32>
    %112 = vector.extract_strided_slice %10 {offsets = [714, 0], sizes = [14, 32], strides = [1, 1]} : vector<784x32xf32> to vector<14x32xf32>
    %113 = arith.maximumf %111, %112 : vector<14x32xf32>
    %c350 = arith.constant 350 : index
    %c0_34 = arith.constant 0 : index
    %114 = vector.load %arg4[%c350, %c0_34] : memref<392x32xf32, #tpu.memory_space<vmem>>, vector<14x32xf32>
    tpu.vector_store %arg4[%c350, %c0_34], %113 {strides = array<i32>} : memref<392x32xf32, #tpu.memory_space<vmem>>, vector<14x32xf32>,
    %115 = vector.extract_strided_slice %10 {offsets = [728, 0], sizes = [14, 32], strides = [1, 1]} : vector<784x32xf32> to vector<14x32xf32>
    %116 = vector.extract_strided_slice %10 {offsets = [742, 0], sizes = [14, 32], strides = [1, 1]} : vector<784x32xf32> to vector<14x32xf32>
    %117 = arith.maximumf %115, %116 : vector<14x32xf32>
    %c364 = arith.constant 364 : index
    %c0_35 = arith.constant 0 : index
    %118 = vector.load %arg4[%c364, %c0_35] : memref<392x32xf32, #tpu.memory_space<vmem>>, vector<14x32xf32>
    tpu.vector_store %arg4[%c364, %c0_35], %117 {strides = array<i32>} : memref<392x32xf32, #tpu.memory_space<vmem>>, vector<14x32xf32>,
    %119 = vector.extract_strided_slice %10 {offsets = [756, 0], sizes = [14, 32], strides = [1, 1]} : vector<784x32xf32> to vector<14x32xf32>
    %120 = vector.extract_strided_slice %10 {offsets = [770, 0], sizes = [14, 32], strides = [1, 1]} : vector<784x32xf32> to vector<14x32xf32>
    %121 = arith.maximumf %119, %120 : vector<14x32xf32>
    %c378 = arith.constant 378 : index
    %c0_36 = arith.constant 0 : index
    %122 = vector.load %arg4[%c378, %c0_36] : memref<392x32xf32, #tpu.memory_space<vmem>>, vector<14x32xf32>
    tpu.vector_store %arg4[%c378, %c0_36], %121 {strides = array<i32>} : memref<392x32xf32, #tpu.memory_space<vmem>>, vector<14x32xf32>,
    return
  }
  func.func @transform_0(%arg0: i32) -> (i32, i32) {
    %c0_i32 = arith.constant 0 : i32
    %c0_i32_0 = arith.constant 0 : i32
    %c0_i32_1 = arith.constant 0 : i32
    return %c0_i32, %c0_i32_0 : i32, i32
  }
  func.func @transform_1(%arg0: i32) -> (i32, i32) {
    %c0_i32 = arith.constant 0 : i32
    %c0_i32_0 = arith.constant 0 : i32
    %c0_i32_1 = arith.constant 0 : i32
    return %c0_i32, %c0_i32_0 : i32, i32
  }
  func.func @transform_2(%arg0: i32) -> (i32, i32) {
    %c0_i32 = arith.constant 0 : i32
    %c0_i32_0 = arith.constant 0 : i32
    %c0_i32_1 = arith.constant 0 : i32
    return %c0_i32, %c0_i32_0 : i32, i32
  }
  func.func @transform_3(%arg0: i32) -> (i32, i32) {
    %c0_i32 = arith.constant 0 : i32
    %c0_i32_0 = arith.constant 0 : i32
    %c0_i32_1 = arith.constant 0 : i32
    return %c0_i32, %c0_i32_0 : i32, i32
  }
}

module attributes {stable_mosaic.version = 11 : i64} {
  func.func @mlp_kernel(%arg0: i32, %arg1: memref<2x6272xf32, #tpu.memory_space<vmem>>, %arg2: memref<6272x128xbf16, #tpu.memory_space<vmem>>, %arg3: memref<1x128xf32, #tpu.memory_space<vmem>>, %arg4: memref<128x10xf32, #tpu.memory_space<vmem>>, %arg5: memref<1x10xf32, #tpu.memory_space<vmem>>, %arg6: memref<2x10xf32, #tpu.memory_space<vmem>>) attributes {dimension_semantics = [#tpu.dimension_semantics<arbitrary>], iteration_bounds = array<i64: 1>, scalar_prefetch = 0 : i64, scratch_operands = 0 : i64, tpu.core_type = #tpu.core_type<tc>, window_params = [{pipeline_mode = #tpu.pipeline_mode<synchronous>, transform_indices = @transform_0, window_bounds = array<i64: 2, 6272>}, {pipeline_mode = #tpu.pipeline_mode<synchronous>, transform_indices = @transform_1, window_bounds = array<i64: 6272, 128>}, {pipeline_mode = #tpu.pipeline_mode<synchronous>, transform_indices = @transform_2, window_bounds = array<i64: 1, 128>}, {pipeline_mode = #tpu.pipeline_mode<synchronous>, transform_indices = @transform_3, window_bounds = array<i64: 128, 10>}, {pipeline_mode = #tpu.pipeline_mode<synchronous>, transform_indices = @transform_4, window_bounds = array<i64: 1, 10>}, {pipeline_mode = #tpu.pipeline_mode<synchronous>, transform_indices = @transform_5, window_bounds = array<i64: 2, 10>}]} {
    %c0 = arith.constant 0 : index
    %c0_0 = arith.constant 0 : index
    %0 = vector.load %arg1[%c0, %c0_0] : memref<2x6272xf32, #tpu.memory_space<vmem>>, vector<2x6272xf32>
    %1 = arith.truncf %0 : vector<2x6272xf32> to vector<2x6272xbf16>
    %c0_1 = arith.constant 0 : index
    %c0_2 = arith.constant 0 : index
    %2 = vector.load %arg2[%c0_1, %c0_2] : memref<6272x128xbf16, #tpu.memory_space<vmem>>, vector<6272x128xbf16>
    %cst = arith.constant dense<0.000000e+00> : vector<2x128xf32>
    %3 = tpu.matmul %1, %2, %cst {dimension_numbers = #tpu.dot_dimension_numbers<[1], [0], [0], [1], [0, 0, 1, 1], [], []>} : vector<2x6272xbf16>, vector<6272x128xbf16>, vector<2x128xf32> -> vector<2x128xf32>
    %c0_3 = arith.constant 0 : index
    %c0_4 = arith.constant 0 : index
    %4 = vector.load %arg3[%c0_3, %c0_4] : memref<1x128xf32, #tpu.memory_space<vmem>>, vector<1x128xf32>
    %5 = vector.broadcast %4 : vector<1x128xf32> to vector<2x128xf32>
    %6 = arith.addf %3, %5 : vector<2x128xf32>
    %cst_5 = arith.constant 0.000000e+00 : f32
    %7 = vector.broadcast %cst_5 : f32 to vector<2x128xf32>
    %8 = arith.maximumf %6, %7 : vector<2x128xf32>
    %c0_6 = arith.constant 0 : index
    %c0_7 = arith.constant 0 : index
    %9 = vector.load %arg4[%c0_6, %c0_7] : memref<128x10xf32, #tpu.memory_space<vmem>>, vector<128x10xf32>
    %cst_8 = arith.constant dense<0.000000e+00> : vector<2x10xf32>
    %10 = tpu.matmul %8, %9, %cst_8 {dimension_numbers = #tpu.dot_dimension_numbers<[1], [0], [0], [1], [0, 0, 1, 1], [], []>} : vector<2x128xf32>, vector<128x10xf32>, vector<2x10xf32> -> vector<2x10xf32>
    %c0_9 = arith.constant 0 : index
    %c0_10 = arith.constant 0 : index
    %11 = vector.load %arg5[%c0_9, %c0_10] : memref<1x10xf32, #tpu.memory_space<vmem>>, vector<1x10xf32>
    %12 = vector.broadcast %11 : vector<1x10xf32> to vector<2x10xf32>
    %13 = arith.addf %10, %12 : vector<2x10xf32>
    %c0_11 = arith.constant 0 : index
    %c0_12 = arith.constant 0 : index
    %14 = vector.load %arg6[%c0_11, %c0_12] : memref<2x10xf32, #tpu.memory_space<vmem>>, vector<2x10xf32>
    tpu.vector_store %arg6[%c0_11, %c0_12], %13 {strides = array<i32>} : memref<2x10xf32, #tpu.memory_space<vmem>>, vector<2x10xf32>,
    return
  }
  func.func @transform_0(%arg0: i32) -> (i32, i32) {
    %c0_i32 = arith.constant 0 : i32
    %c0_i32_0 = arith.constant 0 : i32
    %c0_i32_1 = arith.constant 0 : i32
    return %c0_i32, %c0_i32_0 : i32, i32
  }
  func.func @transform_1(%arg0: i32) -> (i32, i32) {
    %c0_i32 = arith.constant 0 : i32
    %c0_i32_0 = arith.constant 0 : i32
    %c0_i32_1 = arith.constant 0 : i32
    return %c0_i32, %c0_i32_0 : i32, i32
  }
  func.func @transform_2(%arg0: i32) -> (i32, i32) {
    %c0_i32 = arith.constant 0 : i32
    %c0_i32_0 = arith.constant 0 : i32
    %c0_i32_1 = arith.constant 0 : i32
    return %c0_i32, %c0_i32_0 : i32, i32
  }
  func.func @transform_3(%arg0: i32) -> (i32, i32) {
    %c0_i32 = arith.constant 0 : i32
    %c0_i32_0 = arith.constant 0 : i32
    %c0_i32_1 = arith.constant 0 : i32
    return %c0_i32, %c0_i32_0 : i32, i32
  }
  func.func @transform_4(%arg0: i32) -> (i32, i32) {
    %c0_i32 = arith.constant 0 : i32
    %c0_i32_0 = arith.constant 0 : i32
    %c0_i32_1 = arith.constant 0 : i32
    return %c0_i32, %c0_i32_0 : i32, i32
  }
  func.func @transform_5(%arg0: i32) -> (i32, i32) {
    %c0_i32 = arith.constant 0 : i32
    %c0_i32_0 = arith.constant 0 : i32
    %c0_i32_1 = arith.constant 0 : i32
    return %c0_i32, %c0_i32_0 : i32, i32
  }
}

</mosaic_0001>

<llo_original>
// kernel: combined_model_forward.2
$region0: #{combined_model_forward.2}
  #allocation0 [shape = 'u32[]', space=smem, size = 0x4, offset = 0x4, fixed_abs, tag = 'smem constant byte address 0x4 - core index']
  #allocation1 [shape = 'u32[144,128]{1,0:T(1,128)}', space=vmem, size = 0x12000, scoped, tag = 'internal scratch']
  %s0 = inlined_call_operand.vmem [shape: f32[1568,36], index: 0, kind: input, shape index: {}]
  %s1 = inlined_call_operand.vmem [shape: f32[36,32], index: 1, kind: input, shape index: {}]
  %s2 = inlined_call_operand.vmem [shape: f32[1,32], index: 2, kind: input, shape index: {}]
  %s3 = inlined_call_operand.vmem [shape: f32[392,32], index: 3, kind: output, shape index: {}]
  %s4 = sld [smem:[#allocation0]]
  $region22: #{combined_model_forward.2} parent=0
    _
  %s6 = ssub.s32 1, %s4
  %s7 = scalar_select 0, %s6, %s4
  // Predicated region
  $region2: #{combined_model_forward.2} parent=0 // pred_check
    _
  $region3: #{combined_model_forward.2} parent=0 // pred_check_branch
    %9 = sbr.rel (0) target = $region5
  $region4: #{combined_model_forward.2} parent=0 // pred_region
    _
  $region5: #{combined_model_forward.2} parent=0 // pred_fallthru
    _
  // Predicated region
  $region6: #{combined_model_forward.2} parent=0 // pred_check
    _
  $region7: #{combined_model_forward.2} parent=0 // pred_check_branch
    %11 = sbr.rel (0) target = $region9
  $region8: #{combined_model_forward.2} parent=0 // pred_region
    _
  $region9: #{combined_model_forward.2} parent=0 // pred_fallthru
    _
  // Predicated region
  $region10: #{combined_model_forward.2} parent=0 // pred_check
    _
  $region11: #{combined_model_forward.2} parent=0 // pred_check_branch
    %13 = sbr.rel (0) target = $region13
  $region12: #{combined_model_forward.2} parent=0 // pred_region
    _
  $region13: #{combined_model_forward.2} parent=0 // pred_fallthru
    _
  %v14 = vld [vmem:[%s1] sm:$0xff]
  %v15 = vld [vmem:[%s1 + $0x8] sm:$0xff]
  %v16 = vld [vmem:[%s1 + $0x10] sm:$0xff]
  %v17 = vld [vmem:[%s1 + $0x18] sm:$0xff]
  %v18 = vld [vmem:[%s1 + $0x20] sm:$0xf]
  %v19 = vld [vmem:[%s0] ss:$2 sm:$0xff]
  %s20 = scalar_lea.vmem %s0, 16
  %v21 = vld [vmem:[%s20] ss:$2 sm:$0xff]
  %s22 = scalar_lea.vmem %s0, 32
  %v23 = vld [vmem:[%s22] ss:$2 sm:$0xff]
  %s24 = scalar_lea.vmem %s0, 48
  %v25 = vld [vmem:[%s24] ss:$2 sm:$0xff]
  %s26 = scalar_lea.vmem %s0, 64
  %v27 = vld [vmem:[%s26] ss:$2 sm:$0xff]
  %s28 = scalar_lea.vmem %s0, 80
  %v29 = vld [vmem:[%s28] ss:$2 sm:$0xff]
  %s30 = scalar_lea.vmem %s0, 96
  %v31 = vld [vmem:[%s30] ss:$2 sm:$0xff]
  %s32 = scalar_lea.vmem %s0, 112
  %v33 = vld [vmem:[%s32] ss:$2 sm:$0xff]
  %s34 = scalar_lea.vmem %s0, 128
  %v35 = vld [vmem:[%s34] ss:$2 sm:$0xff]
  %s36 = scalar_lea.vmem %s0, 144
  %v37 = vld [vmem:[%s36] ss:$2 sm:$0xff]
  %s38 = scalar_lea.vmem %s0, 160
  %v39 = vld [vmem:[%s38] ss:$2 sm:$0xff]
  %s40 = scalar_lea.vmem %s0, 176
  %v41 = vld [vmem:[%s40] ss:$2 sm:$0xff]
  %s42 = scalar_lea.vmem %s0, 192
  %v43 = vld [vmem:[%s42] ss:$2 sm:$0xff]
  %s44 = scalar_lea.vmem %s0, 208
  %v45 = vld [vmem:[%s44] ss:$2 sm:$0xff]
  %s46 = scalar_lea.vmem %s0, 224
  %v47 = vld [vmem:[%s46] ss:$2 sm:$0xff]
  %s48 = scalar_lea.vmem %s0, 240
  %v49 = vld [vmem:[%s48] ss:$2 sm:$0xff]
  %s50 = scalar_lea.vmem %s0, 256
  %v51 = vld [vmem:[%s50] ss:$2 sm:$0xff]
  %s52 = scalar_lea.vmem %s0, 272
  %v53 = vld [vmem:[%s52] ss:$2 sm:$0xff]
  %s54 = scalar_lea.vmem %s0, 288
  %v55 = vld [vmem:[%s54] ss:$2 sm:$0xff]
  %s56 = scalar_lea.vmem %s0, 304
  %v57 = vld [vmem:[%s56] ss:$2 sm:$0xff]
  %s58 = scalar_lea.vmem %s0, 320
  %v59 = vld [vmem:[%s58] ss:$2 sm:$0xff]
  %s60 = scalar_lea.vmem %s0, 336
  %v61 = vld [vmem:[%s60] ss:$2 sm:$0xff]
  %s62 = scalar_lea.vmem %s0, 352
  %v63 = vld [vmem:[%s62] ss:$2 sm:$0xff]
  %s64 = scalar_lea.vmem %s0, 368
  %v65 = vld [vmem:[%s64] ss:$2 sm:$0xff]
  %s66 = scalar_lea.vmem %s0, 384
  %v67 = vld [vmem:[%s66] ss:$2 sm:$0xff]
  %s68 = scalar_lea.vmem %s0, 400
  %v69 = vld [vmem:[%s68] ss:$2 sm:$0xff]
  %s70 = scalar_lea.vmem %s0, 416
  %v71 = vld [vmem:[%s70] ss:$2 sm:$0xff]
  %s72 = scalar_lea.vmem %s0, 432
  %v73 = vld [vmem:[%s72] ss:$2 sm:$0xff]
  %s74 = scalar_lea.vmem %s0, 448
  %v75 = vld [vmem:[%s74] ss:$2 sm:$0xff]
  %s76 = scalar_lea.vmem %s0, 464
  %v77 = vld [vmem:[%s76] ss:$2 sm:$0xff]
  %s78 = scalar_lea.vmem %s0, 480
  %v79 = vld [vmem:[%s78] ss:$2 sm:$0xff]
  %s80 = scalar_lea.vmem %s0, 496
  %v81 = vld [vmem:[%s80] ss:$2 sm:$0xff]
  %s82 = scalar_lea.vmem %s0, 512
  %v83 = vld [vmem:[%s82] ss:$2 sm:$0xff]
  %s84 = scalar_lea.vmem %s0, 528
  %v85 = vld [vmem:[%s84] ss:$2 sm:$0xff]
  %s86 = scalar_lea.vmem %s0, 544
  %v87 = vld [vmem:[%s86] ss:$2 sm:$0xff]
  %s88 = scalar_lea.vmem %s0, 560
  %v89 = vld [vmem:[%s88] ss:$2 sm:$0xff]
  %s90 = scalar_lea.vmem %s0, 576
  %v91 = vld [vmem:[%s90] ss:$2 sm:$0xff]
  %s92 = scalar_lea.vmem %s0, 592
  %v93 = vld [vmem:[%s92] ss:$2 sm:$0xff]
  %s94 = scalar_lea.vmem %s0, 608
  %v95 = vld [vmem:[%s94] ss:$2 sm:$0xff]
  %s96 = scalar_lea.vmem %s0, 624
  %v97 = vld [vmem:[%s96] ss:$2 sm:$0xff]
  %s98 = scalar_lea.vmem %s0, 640
  %v99 = vld [vmem:[%s98] ss:$2 sm:$0xff]
  %s100 = scalar_lea.vmem %s0, 656
  %v101 = vld [vmem:[%s100] ss:$2 sm:$0xff]
  %s102 = scalar_lea.vmem %s0, 672
  %v103 = vld [vmem:[%s102] ss:$2 sm:$0xff]
  %s104 = scalar_lea.vmem %s0, 688
  %v105 = vld [vmem:[%s104] ss:$2 sm:$0xff]
  %s106 = scalar_lea.vmem %s0, 704
  %v107 = vld [vmem:[%s106] ss:$2 sm:$0xff]
  %s108 = scalar_lea.vmem %s0, 720
  %v109 = vld [vmem:[%s108] ss:$2 sm:$0xff]
  %s110 = scalar_lea.vmem %s0, 736
  %v111 = vld [vmem:[%s110] ss:$2 sm:$0xff]
  %s112 = scalar_lea.vmem %s0, 752
  %v113 = vld [vmem:[%s112] ss:$2 sm:$0xff]
  %s114 = scalar_lea.vmem %s0, 768
  %v115 = vld [vmem:[%s114] ss:$2 sm:$0xff]
  %s116 = scalar_lea.vmem %s0, 784
  %v117 = vld [vmem:[%s116] ss:$2 sm:$0xff]
  %s118 = scalar_lea.vmem %s0, 800
  %v119 = vld [vmem:[%s118] ss:$2 sm:$0xff]
  %s120 = scalar_lea.vmem %s0, 816
  %v121 = vld [vmem:[%s120] ss:$2 sm:$0xff]
  %s122 = scalar_lea.vmem %s0, 832
  %v123 = vld [vmem:[%s122] ss:$2 sm:$0xff]
  %s124 = scalar_lea.vmem %s0, 848
  %v125 = vld [vmem:[%s124] ss:$2 sm:$0xff]
  %s126 = scalar_lea.vmem %s0, 864
  %v127 = vld [vmem:[%s126] ss:$2 sm:$0xff]
  %s128 = scalar_lea.vmem %s0, 880
  %v129 = vld [vmem:[%s128] ss:$2 sm:$0xff]
  %s130 = scalar_lea.vmem %s0, 896
  %v131 = vld [vmem:[%s130] ss:$2 sm:$0xff]
  %s132 = scalar_lea.vmem %s0, 912
  %v133 = vld [vmem:[%s132] ss:$2 sm:$0xff]
  %s134 = scalar_lea.vmem %s0, 928
  %v135 = vld [vmem:[%s134] ss:$2 sm:$0xff]
  %s136 = scalar_lea.vmem %s0, 944
  %v137 = vld [vmem:[%s136] ss:$2 sm:$0xff]
  %s138 = scalar_lea.vmem %s0, 960
  %v139 = vld [vmem:[%s138] ss:$2 sm:$0xff]
  %s140 = scalar_lea.vmem %s0, 976
  %v141 = vld [vmem:[%s140] ss:$2 sm:$0xff]
  %s142 = scalar_lea.vmem %s0, 992
  %v143 = vld [vmem:[%s142] ss:$2 sm:$0xff]
  %s144 = scalar_lea.vmem %s0, 1008
  %v145 = vld [vmem:[%s144] ss:$2 sm:$0xff]
  %s146 = scalar_lea.vmem %s0, 1024
  %v147 = vld [vmem:[%s146] ss:$2 sm:$0xff]
  %s148 = scalar_lea.vmem %s0, 1040
  %v149 = vld [vmem:[%s148] ss:$2 sm:$0xff]
  %s150 = scalar_lea.vmem %s0, 1056
  %v151 = vld [vmem:[%s150] ss:$2 sm:$0xff]
  %s152 = scalar_lea.vmem %s0, 1072
  %v153 = vld [vmem:[%s152] ss:$2 sm:$0xff]
  %s154 = scalar_lea.vmem %s0, 1088
  %v155 = vld [vmem:[%s154] ss:$2 sm:$0xff]
  %s156 = scalar_lea.vmem %s0, 1104
  %v157 = vld [vmem:[%s156] ss:$2 sm:$0xff]
  %s158 = scalar_lea.vmem %s0, 1120
  %v159 = vld [vmem:[%s158] ss:$2 sm:$0xff]
  %s160 = scalar_lea.vmem %s0, 1136
  %v161 = vld [vmem:[%s160] ss:$2 sm:$0xff]
  %s162 = scalar_lea.vmem %s0, 1152
  %v163 = vld [vmem:[%s162] ss:$2 sm:$0xff]
  %s164 = scalar_lea.vmem %s0, 1168
  %v165 = vld [vmem:[%s164] ss:$2 sm:$0xff]
  %s166 = scalar_lea.vmem %s0, 1184
  %v167 = vld [vmem:[%s166] ss:$2 sm:$0xff]
  %s168 = scalar_lea.vmem %s0, 1200
  %v169 = vld [vmem:[%s168] ss:$2 sm:$0xff]
  %s170 = scalar_lea.vmem %s0, 1216
  %v171 = vld [vmem:[%s170] ss:$2 sm:$0xff]
  %s172 = scalar_lea.vmem %s0, 1232
  %v173 = vld [vmem:[%s172] ss:$2 sm:$0xff]
  %s174 = scalar_lea.vmem %s0, 1248
  %v175 = vld [vmem:[%s174] ss:$2 sm:$0xff]
  %s176 = scalar_lea.vmem %s0, 1264
  %v177 = vld [vmem:[%s176] ss:$2 sm:$0xff]
  %s178 = scalar_lea.vmem %s0, 1280
  %v179 = vld [vmem:[%s178] ss:$2 sm:$0xff]
  %s180 = scalar_lea.vmem %s0, 1296
  %v181 = vld [vmem:[%s180] ss:$2 sm:$0xff]
  %s182 = scalar_lea.vmem %s0, 1312
  %v183 = vld [vmem:[%s182] ss:$2 sm:$0xff]
  %s184 = scalar_lea.vmem %s0, 1328
  %v185 = vld [vmem:[%s184] ss:$2 sm:$0xff]
  %s186 = scalar_lea.vmem %s0, 1344
  %v187 = vld [vmem:[%s186] ss:$2 sm:$0xff]
  %s188 = scalar_lea.vmem %s0, 1360
  %v189 = vld [vmem:[%s188] ss:$2 sm:$0xff]
  %s190 = scalar_lea.vmem %s0, 1376
  %v191 = vld [vmem:[%s190] ss:$2 sm:$0xff]
  %s192 = scalar_lea.vmem %s0, 1392
  %v193 = vld [vmem:[%s192] ss:$2 sm:$0xff]
  %s194 = scalar_lea.vmem %s0, 1408
  %v195 = vld [vmem:[%s194] ss:$2 sm:$0xff]
  %s196 = scalar_lea.vmem %s0, 1424
  %v197 = vld [vmem:[%s196] ss:$2 sm:$0xff]
  %s198 = scalar_lea.vmem %s0, 1440
  %v199 = vld [vmem:[%s198] ss:$2 sm:$0xff]
  %s200 = scalar_lea.vmem %s0, 1456
  %v201 = vld [vmem:[%s200] ss:$2 sm:$0xff]
  %s202 = scalar_lea.vmem %s0, 1472
  %v203 = vld [vmem:[%s202] ss:$2 sm:$0xff]
  %s204 = scalar_lea.vmem %s0, 1488
  %v205 = vld [vmem:[%s204] ss:$2 sm:$0xff]
  %s206 = scalar_lea.vmem %s0, 1504
  %v207 = vld [vmem:[%s206] ss:$2 sm:$0xff]
  %s208 = scalar_lea.vmem %s0, 1520
  %v209 = vld [vmem:[%s208] ss:$2 sm:$0xff]
  %s210 = scalar_lea.vmem %s0, 1536
  %v211 = vld [vmem:[%s210] ss:$2 sm:$0xff]
  %s212 = scalar_lea.vmem %s0, 1552
  %v213 = vld [vmem:[%s212] ss:$2 sm:$0xff]
  %vm214 = vcmask 293888
  %v216 = vsel %vm214, %v19, 0
  %v219 = vsel %vm214, %v21, 0
  %v222 = vsel %vm214, %v23, 0
  %v225 = vsel %vm214, %v25, 0
  %v228 = vsel %vm214, %v27, 0
  %v231 = vsel %vm214, %v29, 0
  %v234 = vsel %vm214, %v31, 0
  %v237 = vsel %vm214, %v33, 0
  %v240 = vsel %vm214, %v35, 0
  %v243 = vsel %vm214, %v37, 0
  %v246 = vsel %vm214, %v39, 0
  %v249 = vsel %vm214, %v41, 0
  %v252 = vsel %vm214, %v43, 0
  %v255 = vsel %vm214, %v45, 0
  %v258 = vsel %vm214, %v47, 0
  %v261 = vsel %vm214, %v49, 0
  %v264 = vsel %vm214, %v51, 0
  %v267 = vsel %vm214, %v53, 0
  %v270 = vsel %vm214, %v55, 0
  %v273 = vsel %vm214, %v57, 0
  %v276 = vsel %vm214, %v59, 0
  %v279 = vsel %vm214, %v61, 0
  %v282 = vsel %vm214, %v63, 0
  %v285 = vsel %vm214, %v65, 0
  %v288 = vsel %vm214, %v67, 0
  %v291 = vsel %vm214, %v69, 0
  %v294 = vsel %vm214, %v71, 0
  %v297 = vsel %vm214, %v73, 0
  %v300 = vsel %vm214, %v75, 0
  %v303 = vsel %vm214, %v77, 0
  %v306 = vsel %vm214, %v79, 0
  %v309 = vsel %vm214, %v81, 0
  %v312 = vsel %vm214, %v83, 0
  %v315 = vsel %vm214, %v85, 0
  %v318 = vsel %vm214, %v87, 0
  %v321 = vsel %vm214, %v89, 0
  %v324 = vsel %vm214, %v91, 0
  %v327 = vsel %vm214, %v93, 0
  %v330 = vsel %vm214, %v95, 0
  %v333 = vsel %vm214, %v97, 0
  %v336 = vsel %vm214, %v99, 0
  %v339 = vsel %vm214, %v101, 0
  %v342 = vsel %vm214, %v103, 0
  %v345 = vsel %vm214, %v105, 0
  %v348 = vsel %vm214, %v107, 0
  %v351 = vsel %vm214, %v109, 0
  %v354 = vsel %vm214, %v111, 0
  %v357 = vsel %vm214, %v113, 0
  %v360 = vsel %vm214, %v115, 0
  %v363 = vsel %vm214, %v117, 0
  %v366 = vsel %vm214, %v119, 0
  %v369 = vsel %vm214, %v121, 0
  %v372 = vsel %vm214, %v123, 0
  %v375 = vsel %vm214, %v125, 0
  %v378 = vsel %vm214, %v127, 0
  %v381 = vsel %vm214, %v129, 0
  %v384 = vsel %vm214, %v131, 0
  %v387 = vsel %vm214, %v133, 0
  %v390 = vsel %vm214, %v135, 0
  %v393 = vsel %vm214, %v137, 0
  %v396 = vsel %vm214, %v139, 0
  %v399 = vsel %vm214, %v141, 0
  %v402 = vsel %vm214, %v143, 0
  %v405 = vsel %vm214, %v145, 0
  %v408 = vsel %vm214, %v147, 0
  %v411 = vsel %vm214, %v149, 0
  %v414 = vsel %vm214, %v151, 0
  %v417 = vsel %vm214, %v153, 0
  %v420 = vsel %vm214, %v155, 0
  %v423 = vsel %vm214, %v157, 0
  %v426 = vsel %vm214, %v159, 0
  %v429 = vsel %vm214, %v161, 0
  %v432 = vsel %vm214, %v163, 0
  %v435 = vsel %vm214, %v165, 0
  %v438 = vsel %vm214, %v167, 0
  %v441 = vsel %vm214, %v169, 0
  %v444 = vsel %vm214, %v171, 0
  %v447 = vsel %vm214, %v173, 0
  %v450 = vsel %vm214, %v175, 0
  %v453 = vsel %vm214, %v177, 0
  %v456 = vsel %vm214, %v179, 0
  %v459 = vsel %vm214, %v181, 0
  %v462 = vsel %vm214, %v183, 0
  %v465 = vsel %vm214, %v185, 0
  %v468 = vsel %vm214, %v187, 0
  %v471 = vsel %vm214, %v189, 0
  %v474 = vsel %vm214, %v191, 0
  %v477 = vsel %vm214, %v193, 0
  %v480 = vsel %vm214, %v195, 0
  %v483 = vsel %vm214, %v197, 0
  %v486 = vsel %vm214, %v199, 0
  %v489 = vsel %vm214, %v201, 0
  %v492 = vsel %vm214, %v203, 0
  %v495 = vsel %vm214, %v205, 0
  %v498 = vsel %vm214, %v207, 0
  %v501 = vsel %vm214, %v209, 0
  %v504 = vsel %vm214, %v211, 0
  %v507 = vsel %vm214, %v213, 0
  %vm509 = vcmask 1043456
  %v511 = vsel %vm509, %v18, 0
  %513 = vmatprep.subr.mxu0 0.0
  %514 = vmatpush1.msra.mxu0 %v14
  %515 = vmatprep.subr.mxu0 0.0
  %516 = vmatpush1.msra.mxu0 %v15
  %517 = vmatprep.subr.mxu0 0.0
  %518 = vmatpush1.msra.mxu0 %v16
  %519 = vmatprep.subr.mxu0 0.0
  %520 = vmatpush1.msra.mxu0 %v17
  %521 = vmatprep.subr.mxu0 0.0
  %522 = vmatpush1.msra.mxu0 %v511
  %523 = vmatprep.subr.mxu0 0.0
  %524 = vmatpush1.msra.mxu0 0.0
  %525 = vmatprep.subr.mxu0 0.0
  %526 = vmatpush1.msra.mxu0 0.0
  %527 = vmatprep.subr.mxu0 0.0
  %528 = vmatpush1.msra.mxu0 0.0
  %529 = vmatprep.subr.mxu0 0.0
  %530 = vmatpush1.msra.mxu0 0.0
  %531 = vmatprep.subr.mxu0 0.0
  %532 = vmatpush1.msra.mxu0 0.0
  %533 = vmatprep.subr.mxu0 0.0
  %534 = vmatpush1.msra.mxu0 0.0
  %535 = vmatprep.subr.mxu0 0.0
  %536 = vmatpush1.msra.mxu0 0.0
  %537 = vmatprep.subr.mxu0 0.0
  %538 = vmatpush1.msra.mxu0 0.0
  %539 = vmatprep.subr.mxu0 0.0
  %540 = vmatpush1.msra.mxu0 0.0
  %541 = vmatprep.subr.mxu0 0.0
  %542 = vmatpush1.msra.mxu0 0.0
  %543 = vmatprep.subr.mxu0 0.0
  %544 = vmatpush1.msra.mxu0 0.0
  %545 = vmatprep.subr.mxu0 0.0
  %546 = vmatpush1.msra.mxu0 0.0
  %547 = vmatprep.subr.mxu0 0.0
  %548 = vmatpush1.msra.mxu0 0.0
  %549 = vmatprep.subr.mxu0 0.0
  %550 = vmatpush1.msra.mxu0 0.0
  %551 = vmatprep.subr.mxu0 0.0
  %552 = vmatpush1.msra.mxu0 0.0
  %553 = vmatprep.subr.mxu0 0.0
  %554 = vmatpush1.msra.mxu0 0.0
  %555 = vmatprep.subr.mxu0 0.0
  %556 = vmatpush1.msra.mxu0 0.0
  %557 = vmatprep.subr.mxu0 0.0
  %558 = vmatpush1.msra.mxu0 0.0
  %559 = vmatprep.subr.mxu0 0.0
  %560 = vmatpush1.msra.mxu0 0.0
  %561 = vmatprep.subr.mxu0 0.0
  %562 = vmatpush1.msra.mxu0 0.0
  %563 = vmatprep.subr.mxu0 0.0
  %564 = vmatpush1.msra.mxu0 0.0
  %565 = vmatprep.subr.mxu0 0.0
  %566 = vmatpush1.msra.mxu0 0.0
  %567 = vmatprep.subr.mxu0 0.0
  %568 = vmatpush1.msra.mxu0 0.0
  %569 = vmatprep.subr.mxu0 0.0
  %570 = vmatpush1.msra.mxu0 0.0
  %571 = vmatprep.subr.mxu0 0.0
  %572 = vmatpush1.msra.mxu0 0.0
  %573 = vmatprep.subr.mxu0 0.0
  %574 = vmatpush1.msra.mxu0 0.0
  %575 = vmatprep.subr.mxu0 0.0
  %576 = vmatpush1.msra.mxu0 0.0
  %577 = vmatprep.mubr.f32.mxu0 0.0
  %578 = vmatmul.mubr.f32.gmra.mrb[0].mxu0 %v216
  %v579 = vpop.f32.mrb[0].mxu0
  %v580 = vadd.f32 0.0, %v579
  %v581 = vpop.f32.mrb[0].mxu0
  %582 = vmatprep.mubr.f32.mxu0 0.0
  %583 = vmatmul.mubr.f32.gmra.mrb[0].mxu0 %v219
  %v584 = vpop.f32.mrb[0].mxu0
  %v585 = vadd.f32 0.0, %v584
  %v586 = vpop.f32.mrb[0].mxu0
  %587 = vmatprep.mubr.f32.mxu0 0.0
  %588 = vmatmul.mubr.f32.gmra.mrb[0].mxu0 %v222
  %v589 = vpop.f32.mrb[0].mxu0
  %v590 = vadd.f32 0.0, %v589
  %v591 = vpop.f32.mrb[0].mxu0
  %592 = vmatprep.mubr.f32.mxu0 0.0
  %593 = vmatmul.mubr.f32.gmra.mrb[0].mxu0 %v225
  %v594 = vpop.f32.mrb[0].mxu0
  %v595 = vadd.f32 0.0, %v594
  %v596 = vpop.f32.mrb[0].mxu0
  %597 = vmatprep.mubr.f32.mxu0 0.0
  %598 = vmatmul.mubr.f32.gmra.mrb[0].mxu0 %v228
  %v599 = vpop.f32.mrb[0].mxu0
  %v600 = vadd.f32 0.0, %v599
  %v601 = vpop.f32.mrb[0].mxu0
  %602 = vmatprep.mubr.f32.mxu0 0.0
  %603 = vmatmul.mubr.f32.gmra.mrb[0].mxu0 %v231
  %v604 = vpop.f32.mrb[0].mxu0
  %v605 = vadd.f32 0.0, %v604
  %v606 = vpop.f32.mrb[0].mxu0
  %607 = vmatprep.mubr.f32.mxu0 0.0
  %608 = vmatmul.mubr.f32.gmra.mrb[0].mxu0 %v234
  %v609 = vpop.f32.mrb[0].mxu0
  %v610 = vadd.f32 0.0, %v609
  %v611 = vpop.f32.mrb[0].mxu0
  %612 = vmatprep.mubr.f32.mxu0 0.0
  %613 = vmatmul.mubr.f32.gmra.mrb[0].mxu0 %v237
  %v614 = vpop.f32.mrb[0].mxu0
  %v615 = vadd.f32 0.0, %v614
  %v616 = vpop.f32.mrb[0].mxu0
  %617 = vmatprep.mubr.f32.mxu0 0.0
  %618 = vmatmul.mubr.f32.gmra.mrb[0].mxu0 %v240
  %v619 = vpop.f32.mrb[0].mxu0
  %v620 = vadd.f32 0.0, %v619
  %v621 = vpop.f32.mrb[0].mxu0
  %622 = vmatprep.mubr.f32.mxu0 0.0
  %623 = vmatmul.mubr.f32.gmra.mrb[0].mxu0 %v243
  %v624 = vpop.f32.mrb[0].mxu0
  %v625 = vadd.f32 0.0, %v624
  %v626 = vpop.f32.mrb[0].mxu0
  %627 = vmatprep.mubr.f32.mxu0 0.0
  %628 = vmatmul.mubr.f32.gmra.mrb[0].mxu0 %v246
  %v629 = vpop.f32.mrb[0].mxu0
  %v630 = vadd.f32 0.0, %v629
  %v631 = vpop.f32.mrb[0].mxu0
  %632 = vmatprep.mubr.f32.mxu0 0.0
  %633 = vmatmul.mubr.f32.gmra.mrb[0].mxu0 %v249
  %v634 = vpop.f32.mrb[0].mxu0
  %v635 = vadd.f32 0.0, %v634
  %v636 = vpop.f32.mrb[0].mxu0
  %637 = vmatprep.mubr.f32.mxu0 0.0
  %638 = vmatmul.mubr.f32.gmra.mrb[0].mxu0 %v252
  %v639 = vpop.f32.mrb[0].mxu0
  %v640 = vadd.f32 0.0, %v639
  %v641 = vpop.f32.mrb[0].mxu0
  %642 = vmatprep.mubr.f32.mxu0 0.0
  %643 = vmatmul.mubr.f32.gmra.mrb[0].mxu0 %v255
  %v644 = vpop.f32.mrb[0].mxu0
  %v645 = vadd.f32 0.0, %v644
  %v646 = vpop.f32.mrb[0].mxu0
  %647 = vmatprep.mubr.f32.mxu0 0.0
  %648 = vmatmul.mubr.f32.gmra.mrb[0].mxu0 %v258
  %v649 = vpop.f32.mrb[0].mxu0
  %v650 = vadd.f32 0.0, %v649
  %v651 = vpop.f32.mrb[0].mxu0
  %652 = vmatprep.mubr.f32.mxu0 0.0
  %653 = vmatmul.mubr.f32.gmra.mrb[0].mxu0 %v261
  %v654 = vpop.f32.mrb[0].mxu0
  %v655 = vadd.f32 0.0, %v654
  %v656 = vpop.f32.mrb[0].mxu0
  %657 = vmatprep.mubr.f32.mxu0 0.0
  %658 = vmatmul.mubr.f32.gmra.mrb[0].mxu0 %v264
  %v659 = vpop.f32.mrb[0].mxu0
  %v660 = vadd.f32 0.0, %v659
  %v661 = vpop.f32.mrb[0].mxu0
  %662 = vmatprep.mubr.f32.mxu0 0.0
  %663 = vmatmul.mubr.f32.gmra.mrb[0].mxu0 %v267
  %v664 = vpop.f32.mrb[0].mxu0
  %v665 = vadd.f32 0.0, %v664
  %v666 = vpop.f32.mrb[0].mxu0
  %667 = vmatprep.mubr.f32.mxu0 0.0
  %668 = vmatmul.mubr.f32.gmra.mrb[0].mxu0 %v270
  %v669 = vpop.f32.mrb[0].mxu0
  %v670 = vadd.f32 0.0, %v669
  %v671 = vpop.f32.mrb[0].mxu0
  %672 = vmatprep.mubr.f32.mxu0 0.0
  %673 = vmatmul.mubr.f32.gmra.mrb[0].mxu0 %v273
  %v674 = vpop.f32.mrb[0].mxu0
  %v675 = vadd.f32 0.0, %v674
  %v676 = vpop.f32.mrb[0].mxu0
  %677 = vmatprep.mubr.f32.mxu0 0.0
  %678 = vmatmul.mubr.f32.gmra.mrb[0].mxu0 %v276
  %v679 = vpop.f32.mrb[0].mxu0
  %v680 = vadd.f32 0.0, %v679
  %v681 = vpop.f32.mrb[0].mxu0
  %682 = vmatprep.mubr.f32.mxu0 0.0
  %683 = vmatmul.mubr.f32.gmra.mrb[0].mxu0 %v279
  %v684 = vpop.f32.mrb[0].mxu0
  %v685 = vadd.f32 0.0, %v684
  %v686 = vpop.f32.mrb[0].mxu0
  %687 = vmatprep.mubr.f32.mxu0 0.0
  %688 = vmatmul.mubr.f32.gmra.mrb[0].mxu0 %v282
  %v689 = vpop.f32.mrb[0].mxu0
  %v690 = vadd.f32 0.0, %v689
  %v691 = vpop.f32.mrb[0].mxu0
  %692 = vmatprep.mubr.f32.mxu0 0.0
  %693 = vmatmul.mubr.f32.gmra.mrb[0].mxu0 %v285
  %v694 = vpop.f32.mrb[0].mxu0
  %v695 = vadd.f32 0.0, %v694
  %v696 = vpop.f32.mrb[0].mxu0
  %697 = vmatprep.mubr.f32.mxu0 0.0
  %698 = vmatmul.mubr.f32.gmra.mrb[0].mxu0 %v288
  %v699 = vpop.f32.mrb[0].mxu0
  %v700 = vadd.f32 0.0, %v699
  %v701 = vpop.f32.mrb[0].mxu0
  %702 = vmatprep.mubr.f32.mxu0 0.0
  %703 = vmatmul.mubr.f32.gmra.mrb[0].mxu0 %v291
  %v704 = vpop.f32.mrb[0].mxu0
  %v705 = vadd.f32 0.0, %v704
  %v706 = vpop.f32.mrb[0].mxu0
  %707 = vmatprep.mubr.f32.mxu0 0.0
  %708 = vmatmul.mubr.f32.gmra.mrb[0].mxu0 %v294
  %v709 = vpop.f32.mrb[0].mxu0
  %v710 = vadd.f32 0.0, %v709
  %v711 = vpop.f32.mrb[0].mxu0
  %712 = vmatprep.mubr.f32.mxu0 0.0
  %713 = vmatmul.mubr.f32.gmra.mrb[0].mxu0 %v297
  %v714 = vpop.f32.mrb[0].mxu0
  %v715 = vadd.f32 0.0, %v714
  %v716 = vpop.f32.mrb[0].mxu0
  %717 = vmatprep.mubr.f32.mxu0 0.0
  %718 = vmatmul.mubr.f32.gmra.mrb[0].mxu0 %v300
  %v719 = vpop.f32.mrb[0].mxu0
  %v720 = vadd.f32 0.0, %v719
  %v721 = vpop.f32.mrb[0].mxu0
  %722 = vmatprep.mubr.f32.mxu0 0.0
  %723 = vmatmul.mubr.f32.gmra.mrb[0].mxu0 %v303
  %v724 = vpop.f32.mrb[0].mxu0
  %v725 = vadd.f32 0.0, %v724
  %v726 = vpop.f32.mrb[0].mxu0
  %727 = vmatprep.mubr.f32.mxu0 0.0
  %728 = vmatmul.mubr.f32.gmra.mrb[0].mxu0 %v306
  %v729 = vpop.f32.mrb[0].mxu0
  %v730 = vadd.f32 0.0, %v729
  %v731 = vpop.f32.mrb[0].mxu0
  %732 = vmatprep.mubr.f32.mxu0 0.0
  %733 = vmatmul.mubr.f32.gmra.mrb[0].mxu0 %v309
  %v734 = vpop.f32.mrb[0].mxu0
  %v735 = vadd.f32 0.0, %v734
  %v736 = vpop.f32.mrb[0].mxu0
  %737 = vmatprep.mubr.f32.mxu0 0.0
  %738 = vmatmul.mubr.f32.gmra.mrb[0].mxu0 %v312
  %v739 = vpop.f32.mrb[0].mxu0
  %v740 = vadd.f32 0.0, %v739
  %v741 = vpop.f32.mrb[0].mxu0
  %742 = vmatprep.mubr.f32.mxu0 0.0
  %743 = vmatmul.mubr.f32.gmra.mrb[0].mxu0 %v315
  %v744 = vpop.f32.mrb[0].mxu0
  %v745 = vadd.f32 0.0, %v744
  %v746 = vpop.f32.mrb[0].mxu0
  %747 = vmatprep.mubr.f32.mxu0 0.0
  %748 = vmatmul.mubr.f32.gmra.mrb[0].mxu0 %v318
  %v749 = vpop.f32.mrb[0].mxu0
  %v750 = vadd.f32 0.0, %v749
  %v751 = vpop.f32.mrb[0].mxu0
  %752 = vmatprep.mubr.f32.mxu0 0.0
  %753 = vmatmul.mubr.f32.gmra.mrb[0].mxu0 %v321
  %v754 = vpop.f32.mrb[0].mxu0
  %v755 = vadd.f32 0.0, %v754
  %v756 = vpop.f32.mrb[0].mxu0
  %757 = vmatprep.mubr.f32.mxu0 0.0
  %758 = vmatmul.mubr.f32.gmra.mrb[0].mxu0 %v324
  %v759 = vpop.f32.mrb[0].mxu0
  %v760 = vadd.f32 0.0, %v759
  %v761 = vpop.f32.mrb[0].mxu0
  %762 = vmatprep.mubr.f32.mxu0 0.0
  %763 = vmatmul.mubr.f32.gmra.mrb[0].mxu0 %v327
  %v764 = vpop.f32.mrb[0].mxu0
  %v765 = vadd.f32 0.0, %v764
  %v766 = vpop.f32.mrb[0].mxu0
  %767 = vmatprep.mubr.f32.mxu0 0.0
  %768 = vmatmul.mubr.f32.gmra.mrb[0].mxu0 %v330
  %v769 = vpop.f32.mrb[0].mxu0
  %v770 = vadd.f32 0.0, %v769
  %v771 = vpop.f32.mrb[0].mxu0
  %772 = vmatprep.mubr.f32.mxu0 0.0
  %773 = vmatmul.mubr.f32.gmra.mrb[0].mxu0 %v333
  %v774 = vpop.f32.mrb[0].mxu0
  %v775 = vadd.f32 0.0, %v774
  %v776 = vpop.f32.mrb[0].mxu0
  %777 = vmatprep.mubr.f32.mxu0 0.0
  %778 = vmatmul.mubr.f32.gmra.mrb[0].mxu0 %v336
  %v779 = vpop.f32.mrb[0].mxu0
  %v780 = vadd.f32 0.0, %v779
  %v781 = vpop.f32.mrb[0].mxu0
  %782 = vmatprep.mubr.f32.mxu0 0.0
  %783 = vmatmul.mubr.f32.gmra.mrb[0].mxu0 %v339
  %v784 = vpop.f32.mrb[0].mxu0
  %v785 = vadd.f32 0.0, %v784
  %v786 = vpop.f32.mrb[0].mxu0
  %787 = vmatprep.mubr.f32.mxu0 0.0
  %788 = vmatmul.mubr.f32.gmra.mrb[0].mxu0 %v342
  %v789 = vpop.f32.mrb[0].mxu0
  %v790 = vadd.f32 0.0, %v789
  %v791 = vpop.f32.mrb[0].mxu0
  %792 = vmatprep.mubr.f32.mxu0 0.0
  %793 = vmatmul.mubr.f32.gmra.mrb[0].mxu0 %v345
  %v794 = vpop.f32.mrb[0].mxu0
  %v795 = vadd.f32 0.0, %v794
  %v796 = vpop.f32.mrb[0].mxu0
  %797 = vmatprep.mubr.f32.mxu0 0.0
  %798 = vmatmul.mubr.f32.gmra.mrb[0].mxu0 %v348
  %v799 = vpop.f32.mrb[0].mxu0
  %v800 = vadd.f32 0.0, %v799
  %v801 = vpop.f32.mrb[0].mxu0
  %802 = vmatprep.mubr.f32.mxu0 0.0
  %803 = vmatmul.mubr.f32.gmra.mrb[0].mxu0 %v351
  %v804 = vpop.f32.mrb[0].mxu0
  %v805 = vadd.f32 0.0, %v804
  %v806 = vpop.f32.mrb[0].mxu0
  %807 = vmatprep.mubr.f32.mxu0 0.0
  %808 = vmatmul.mubr.f32.gmra.mrb[0].mxu0 %v354
  %v809 = vpop.f32.mrb[0].mxu0
  %v810 = vadd.f32 0.0, %v809
  %v811 = vpop.f32.mrb[0].mxu0
  %812 = vmatprep.mubr.f32.mxu0 0.0
  %813 = vmatmul.mubr.f32.gmra.mrb[0].mxu0 %v357
  %v814 = vpop.f32.mrb[0].mxu0
  %v815 = vadd.f32 0.0, %v814
  %v816 = vpop.f32.mrb[0].mxu0
  %817 = vmatprep.mubr.f32.mxu0 0.0
  %818 = vmatmul.mubr.f32.gmra.mrb[0].mxu0 %v360
  %v819 = vpop.f32.mrb[0].mxu0
  %v820 = vadd.f32 0.0, %v819
  %v821 = vpop.f32.mrb[0].mxu0
  %822 = vmatprep.mubr.f32.mxu0 0.0
  %823 = vmatmul.mubr.f32.gmra.mrb[0].mxu0 %v363
  %v824 = vpop.f32.mrb[0].mxu0
  %v825 = vadd.f32 0.0, %v824
  %v826 = vpop.f32.mrb[0].mxu0
  %827 = vmatprep.mubr.f32.mxu0 0.0
  %828 = vmatmul.mubr.f32.gmra.mrb[0].mxu0 %v366
  %v829 = vpop.f32.mrb[0].mxu0
  %v830 = vadd.f32 0.0, %v829
  %v831 = vpop.f32.mrb[0].mxu0
  %832 = vmatprep.mubr.f32.mxu0 0.0
  %833 = vmatmul.mubr.f32.gmra.mrb[0].mxu0 %v369
  %v834 = vpop.f32.mrb[0].mxu0
  %v835 = vadd.f32 0.0, %v834
  %v836 = vpop.f32.mrb[0].mxu0
  %837 = vmatprep.mubr.f32.mxu0 0.0
  %838 = vmatmul.mubr.f32.gmra.mrb[0].mxu0 %v372
  %v839 = vpop.f32.mrb[0].mxu0
  %v840 = vadd.f32 0.0, %v839
  %v841 = vpop.f32.mrb[0].mxu0
  %842 = vmatprep.mubr.f32.mxu0 0.0
  %843 = vmatmul.mubr.f32.gmra.mrb[0].mxu0 %v375
  %v844 = vpop.f32.mrb[0].mxu0
  %v845 = vadd.f32 0.0, %v844
  %v846 = vpop.f32.mrb[0].mxu0
  %847 = vmatprep.mubr.f32.mxu0 0.0
  %848 = vmatmul.mubr.f32.gmra.mrb[0].mxu0 %v378
  %v849 = vpop.f32.mrb[0].mxu0
  %v850 = vadd.f32 0.0, %v849
  %v851 = vpop.f32.mrb[0].mxu0
  %852 = vmatprep.mubr.f32.mxu0 0.0
  %853 = vmatmul.mubr.f32.gmra.mrb[0].mxu0 %v381
  %v854 = vpop.f32.mrb[0].mxu0
  %v855 = vadd.f32 0.0, %v854
  %v856 = vpop.f32.mrb[0].mxu0
  %857 = vmatprep.mubr.f32.mxu0 0.0
  %858 = vmatmul.mubr.f32.gmra.mrb[0].mxu0 %v384
  %v859 = vpop.f32.mrb[0].mxu0
  %v860 = vadd.f32 0.0, %v859
  %v861 = vpop.f32.mrb[0].mxu0
  %862 = vmatprep.mubr.f32.mxu0 0.0
  %863 = vmatmul.mubr.f32.gmra.mrb[0].mxu0 %v387
  %v864 = vpop.f32.mrb[0].mxu0
  %v865 = vadd.f32 0.0, %v864
  %v866 = vpop.f32.mrb[0].mxu0
  %867 = vmatprep.mubr.f32.mxu0 0.0
  %868 = vmatmul.mubr.f32.gmra.mrb[0].mxu0 %v390
  %v869 = vpop.f32.mrb[0].mxu0
  %v870 = vadd.f32 0.0, %v869
  %v871 = vpop.f32.mrb[0].mxu0
  %872 = vmatprep.mubr.f32.mxu0 0.0
  %873 = vmatmul.mubr.f32.gmra.mrb[0].mxu0 %v393
  %v874 = vpop.f32.mrb[0].mxu0
  %v875 = vadd.f32 0.0, %v874
  %v876 = vpop.f32.mrb[0].mxu0
  %877 = vmatprep.mubr.f32.mxu0 0.0
  %878 = vmatmul.mubr.f32.gmra.mrb[0].mxu0 %v396
  %v879 = vpop.f32.mrb[0].mxu0
  %v880 = vadd.f32 0.0, %v879
  %v881 = vpop.f32.mrb[0].mxu0
  %882 = vmatprep.mubr.f32.mxu0 0.0
  %883 = vmatmul.mubr.f32.gmra.mrb[0].mxu0 %v399
  %v884 = vpop.f32.mrb[0].mxu0
  %v885 = vadd.f32 0.0, %v884
  %v886 = vpop.f32.mrb[0].mxu0
  %887 = vmatprep.mubr.f32.mxu0 0.0
  %888 = vmatmul.mubr.f32.gmra.mrb[0].mxu0 %v402
  %v889 = vpop.f32.mrb[0].mxu0
  %v890 = vadd.f32 0.0, %v889
  %v891 = vpop.f32.mrb[0].mxu0
  %892 = vmatprep.mubr.f32.mxu0 0.0
  %893 = vmatmul.mubr.f32.gmra.mrb[0].mxu0 %v405
  %v894 = vpop.f32.mrb[0].mxu0
  %v895 = vadd.f32 0.0, %v894
  %v896 = vpop.f32.mrb[0].mxu0
  %897 = vmatprep.mubr.f32.mxu0 0.0
  %898 = vmatmul.mubr.f32.gmra.mrb[0].mxu0 %v408
  %v899 = vpop.f32.mrb[0].mxu0
  %v900 = vadd.f32 0.0, %v899
  %v901 = vpop.f32.mrb[0].mxu0
  %902 = vmatprep.mubr.f32.mxu0 0.0
  %903 = vmatmul.mubr.f32.gmra.mrb[0].mxu0 %v411
  %v904 = vpop.f32.mrb[0].mxu0
  %v905 = vadd.f32 0.0, %v904
  %v906 = vpop.f32.mrb[0].mxu0
  %907 = vmatprep.mubr.f32.mxu0 0.0
  %908 = vmatmul.mubr.f32.gmra.mrb[0].mxu0 %v414
  %v909 = vpop.f32.mrb[0].mxu0
  %v910 = vadd.f32 0.0, %v909
  %v911 = vpop.f32.mrb[0].mxu0
  %912 = vmatprep.mubr.f32.mxu0 0.0
  %913 = vmatmul.mubr.f32.gmra.mrb[0].mxu0 %v417
  %v914 = vpop.f32.mrb[0].mxu0
  %v915 = vadd.f32 0.0, %v914
  %v916 = vpop.f32.mrb[0].mxu0
  %917 = vmatprep.mubr.f32.mxu0 0.0
  %918 = vmatmul.mubr.f32.gmra.mrb[0].mxu0 %v420
  %v919 = vpop.f32.mrb[0].mxu0
  %v920 = vadd.f32 0.0, %v919
  %v921 = vpop.f32.mrb[0].mxu0
  %922 = vmatprep.mubr.f32.mxu0 0.0
  %923 = vmatmul.mubr.f32.gmra.mrb[0].mxu0 %v423
  %v924 = vpop.f32.mrb[0].mxu0
  %v925 = vadd.f32 0.0, %v924
  %v926 = vpop.f32.mrb[0].mxu0
  %927 = vmatprep.mubr.f32.mxu0 0.0
  %928 = vmatmul.mubr.f32.gmra.mrb[0].mxu0 %v426
  %v929 = vpop.f32.mrb[0].mxu0
  %v930 = vadd.f32 0.0, %v929
  %v931 = vpop.f32.mrb[0].mxu0
  %932 = vmatprep.mubr.f32.mxu0 0.0
  %933 = vmatmul.mubr.f32.gmra.mrb[0].mxu0 %v429
  %v934 = vpop.f32.mrb[0].mxu0
  %v935 = vadd.f32 0.0, %v934
  %v936 = vpop.f32.mrb[0].mxu0
  %937 = vmatprep.mubr.f32.mxu0 0.0
  %938 = vmatmul.mubr.f32.gmra.mrb[0].mxu0 %v432
  %v939 = vpop.f32.mrb[0].mxu0
  %v940 = vadd.f32 0.0, %v939
  %v941 = vpop.f32.mrb[0].mxu0
  %942 = vmatprep.mubr.f32.mxu0 0.0
  %943 = vmatmul.mubr.f32.gmra.mrb[0].mxu0 %v435
  %v944 = vpop.f32.mrb[0].mxu0
  %v945 = vadd.f32 0.0, %v944
  %v946 = vpop.f32.mrb[0].mxu0
  %947 = vmatprep.mubr.f32.mxu0 0.0
  %948 = vmatmul.mubr.f32.gmra.mrb[0].mxu0 %v438
  %v949 = vpop.f32.mrb[0].mxu0
  %v950 = vadd.f32 0.0, %v949
  %v951 = vpop.f32.mrb[0].mxu0
  %952 = vmatprep.mubr.f32.mxu0 0.0
  %953 = vmatmul.mubr.f32.gmra.mrb[0].mxu0 %v441
  %v954 = vpop.f32.mrb[0].mxu0
  %v955 = vadd.f32 0.0, %v954
  %v956 = vpop.f32.mrb[0].mxu0
  %957 = vmatprep.mubr.f32.mxu0 0.0
  %958 = vmatmul.mubr.f32.gmra.mrb[0].mxu0 %v444
  %v959 = vpop.f32.mrb[0].mxu0
  %v960 = vadd.f32 0.0, %v959
  %v961 = vpop.f32.mrb[0].mxu0
  %962 = vmatprep.mubr.f32.mxu0 0.0
  %963 = vmatmul.mubr.f32.gmra.mrb[0].mxu0 %v447
  %v964 = vpop.f32.mrb[0].mxu0
  %v965 = vadd.f32 0.0, %v964
  %v966 = vpop.f32.mrb[0].mxu0
  %967 = vmatprep.mubr.f32.mxu0 0.0
  %968 = vmatmul.mubr.f32.gmra.mrb[0].mxu0 %v450
  %v969 = vpop.f32.mrb[0].mxu0
  %v970 = vadd.f32 0.0, %v969
  %v971 = vpop.f32.mrb[0].mxu0
  %972 = vmatprep.mubr.f32.mxu0 0.0
  %973 = vmatmul.mubr.f32.gmra.mrb[0].mxu0 %v453
  %v974 = vpop.f32.mrb[0].mxu0
  %v975 = vadd.f32 0.0, %v974
  %v976 = vpop.f32.mrb[0].mxu0
  %977 = vmatprep.mubr.f32.mxu0 0.0
  %978 = vmatmul.mubr.f32.gmra.mrb[0].mxu0 %v456
  %v979 = vpop.f32.mrb[0].mxu0
  %v980 = vadd.f32 0.0, %v979
  %v981 = vpop.f32.mrb[0].mxu0
  %982 = vmatprep.mubr.f32.mxu0 0.0
  %983 = vmatmul.mubr.f32.gmra.mrb[0].mxu0 %v459
  %v984 = vpop.f32.mrb[0].mxu0
  %v985 = vadd.f32 0.0, %v984
  %v986 = vpop.f32.mrb[0].mxu0
  %987 = vmatprep.mubr.f32.mxu0 0.0
  %988 = vmatmul.mubr.f32.gmra.mrb[0].mxu0 %v462
  %v989 = vpop.f32.mrb[0].mxu0
  %v990 = vadd.f32 0.0, %v989
  %v991 = vpop.f32.mrb[0].mxu0
  %992 = vmatprep.mubr.f32.mxu0 0.0
  %993 = vmatmul.mubr.f32.gmra.mrb[0].mxu0 %v465
  %v994 = vpop.f32.mrb[0].mxu0
  %v995 = vadd.f32 0.0, %v994
  %v996 = vpop.f32.mrb[0].mxu0
  %997 = vmatprep.mubr.f32.mxu0 0.0
  %998 = vmatmul.mubr.f32.gmra.mrb[0].mxu0 %v468
  %v999 = vpop.f32.mrb[0].mxu0
  %v1000 = vadd.f32 0.0, %v999
  %v1001 = vpop.f32.mrb[0].mxu0
  %1002 = vmatprep.mubr.f32.mxu0 0.0
  %1003 = vmatmul.mubr.f32.gmra.mrb[0].mxu0 %v471
  %v1004 = vpop.f32.mrb[0].mxu0
  %v1005 = vadd.f32 0.0, %v1004
  %v1006 = vpop.f32.mrb[0].mxu0
  %1007 = vmatprep.mubr.f32.mxu0 0.0
  %1008 = vmatmul.mubr.f32.gmra.mrb[0].mxu0 %v474
  %v1009 = vpop.f32.mrb[0].mxu0
  %v1010 = vadd.f32 0.0, %v1009
  %v1011 = vpop.f32.mrb[0].mxu0
  %1012 = vmatprep.mubr.f32.mxu0 0.0
  %1013 = vmatmul.mubr.f32.gmra.mrb[0].mxu0 %v477
  %v1014 = vpop.f32.mrb[0].mxu0
  %v1015 = vadd.f32 0.0, %v1014
  %v1016 = vpop.f32.mrb[0].mxu0
  %1017 = vmatprep.mubr.f32.mxu0 0.0
  %1018 = vmatmul.mubr.f32.gmra.mrb[0].mxu0 %v480
  %v1019 = vpop.f32.mrb[0].mxu0
  %v1020 = vadd.f32 0.0, %v1019
  %v1021 = vpop.f32.mrb[0].mxu0
  %1022 = vmatprep.mubr.f32.mxu0 0.0
  %1023 = vmatmul.mubr.f32.gmra.mrb[0].mxu0 %v483
  %v1024 = vpop.f32.mrb[0].mxu0
  %v1025 = vadd.f32 0.0, %v1024
  %v1026 = vpop.f32.mrb[0].mxu0
  %1027 = vmatprep.mubr.f32.mxu0 0.0
  %1028 = vmatmul.mubr.f32.gmra.mrb[0].mxu0 %v486
  %v1029 = vpop.f32.mrb[0].mxu0
  %v1030 = vadd.f32 0.0, %v1029
  %v1031 = vpop.f32.mrb[0].mxu0
  %1032 = vmatprep.mubr.f32.mxu0 0.0
  %1033 = vmatmul.mubr.f32.gmra.mrb[0].mxu0 %v489
  %v1034 = vpop.f32.mrb[0].mxu0
  %v1035 = vadd.f32 0.0, %v1034
  %v1036 = vpop.f32.mrb[0].mxu0
  %1037 = vmatprep.mubr.f32.mxu0 0.0
  %1038 = vmatmul.mubr.f32.gmra.mrb[0].mxu0 %v492
  %v1039 = vpop.f32.mrb[0].mxu0
  %v1040 = vadd.f32 0.0, %v1039
  %v1041 = vpop.f32.mrb[0].mxu0
  %1042 = vmatprep.mubr.f32.mxu0 0.0
  %1043 = vmatmul.mubr.f32.gmra.mrb[0].mxu0 %v495
  %v1044 = vpop.f32.mrb[0].mxu0
  %v1045 = vadd.f32 0.0, %v1044
  %v1046 = vpop.f32.mrb[0].mxu0
  %1047 = vmatprep.mubr.f32.mxu0 0.0
  %1048 = vmatmul.mubr.f32.gmra.mrb[0].mxu0 %v498
  %v1049 = vpop.f32.mrb[0].mxu0
  %v1050 = vadd.f32 0.0, %v1049
  %v1051 = vpop.f32.mrb[0].mxu0
  %1052 = vmatprep.mubr.f32.mxu0 0.0
  %1053 = vmatmul.mubr.f32.gmra.mrb[0].mxu0 %v501
  %v1054 = vpop.f32.mrb[0].mxu0
  %v1055 = vadd.f32 0.0, %v1054
  %v1056 = vpop.f32.mrb[0].mxu0
  %1057 = vmatprep.mubr.f32.mxu0 0.0
  %1058 = vmatmul.mubr.f32.gmra.mrb[0].mxu0 %v504
  %v1059 = vpop.f32.mrb[0].mxu0
  %v1060 = vadd.f32 0.0, %v1059
  %v1061 = vpop.f32.mrb[0].mxu0
  %1062 = vmatprep.mubr.f32.mxu0 0.0
  %1063 = vmatmul.mubr.f32.gmra.mrb[0].mxu0 %v507
  %v1064 = vpop.f32.mrb[0].mxu0
  %v1065 = vadd.f32 0.0, %v1064
  %v1066 = vpop.f32.mrb[0].mxu0
  %1067 = vdwg.mxu0
  %s1068 = scalar_lea.vmem %s0, 1
  %v1069 = vld [vmem:[%s1068] ss:$2 sm:$0xff]
  %s1070 = scalar_lea.vmem %s0, 17
  %v1071 = vld [vmem:[%s1070] ss:$2 sm:$0xff]
  %s1072 = scalar_lea.vmem %s0, 33
  %v1073 = vld [vmem:[%s1072] ss:$2 sm:$0xff]
  %s1074 = scalar_lea.vmem %s0, 49
  %v1075 = vld [vmem:[%s1074] ss:$2 sm:$0xff]
  %s1076 = scalar_lea.vmem %s0, 65
  %v1077 = vld [vmem:[%s1076] ss:$2 sm:$0xff]
  %s1078 = scalar_lea.vmem %s0, 81
  %v1079 = vld [vmem:[%s1078] ss:$2 sm:$0xff]
  %s1080 = scalar_lea.vmem %s0, 97
  %v1081 = vld [vmem:[%s1080] ss:$2 sm:$0xff]
  %s1082 = scalar_lea.vmem %s0, 113
  %v1083 = vld [vmem:[%s1082] ss:$2 sm:$0xff]
  %s1084 = scalar_lea.vmem %s0, 129
  %v1085 = vld [vmem:[%s1084] ss:$2 sm:$0xff]
  %s1086 = scalar_lea.vmem %s0, 145
  %v1087 = vld [vmem:[%s1086] ss:$2 sm:$0xff]
  %s1088 = scalar_lea.vmem %s0, 161
  %v1089 = vld [vmem:[%s1088] ss:$2 sm:$0xff]
  %s1090 = scalar_lea.vmem %s0, 177
  %v1091 = vld [vmem:[%s1090] ss:$2 sm:$0xff]
  %s1092 = scalar_lea.vmem %s0, 193
  %v1093 = vld [vmem:[%s1092] ss:$2 sm:$0xff]
  %s1094 = scalar_lea.vmem %s0, 209
  %v1095 = vld [vmem:[%s1094] ss:$2 sm:$0xff]
  %s1096 = scalar_lea.vmem %s0, 225
  %v1097 = vld [vmem:[%s1096] ss:$2 sm:$0xff]
  %s1098 = scalar_lea.vmem %s0, 241
  %v1099 = vld [vmem:[%s1098] ss:$2 sm:$0xff]
  %s1100 = scalar_lea.vmem %s0, 257
  %v1101 = vld [vmem:[%s1100] ss:$2 sm:$0xff]
  %s1102 = scalar_lea.vmem %s0, 273
  %v1103 = vld [vmem:[%s1102] ss:$2 sm:$0xff]
  %s1104 = scalar_lea.vmem %s0, 289
  %v1105 = vld [vmem:[%s1104] ss:$2 sm:$0xff]
  %s1106 = scalar_lea.vmem %s0, 305
  %v1107 = vld [vmem:[%s1106] ss:$2 sm:$0xff]
  %s1108 = scalar_lea.vmem %s0, 321
  %v1109 = vld [vmem:[%s1108] ss:$2 sm:$0xff]
  %s1110 = scalar_lea.vmem %s0, 337
  %v1111 = vld [vmem:[%s1110] ss:$2 sm:$0xff]
  %s1112 = scalar_lea.vmem %s0, 353
  %v1113 = vld [vmem:[%s1112] ss:$2 sm:$0xff]
  %s1114 = scalar_lea.vmem %s0, 369
  %v1115 = vld [vmem:[%s1114] ss:$2 sm:$0xff]
  %s1116 = scalar_lea.vmem %s0, 385
  %v1117 = vld [vmem:[%s1116] ss:$2 sm:$0xff]
  %s1118 = scalar_lea.vmem %s0, 401
  %v1119 = vld [vmem:[%s1118] ss:$2 sm:$0xff]
  %s1120 = scalar_lea.vmem %s0, 417
  %v1121 = vld [vmem:[%s1120] ss:$2 sm:$0xff]
  %s1122 = scalar_lea.vmem %s0, 433
  %v1123 = vld [vmem:[%s1122] ss:$2 sm:$0xff]
  %s1124 = scalar_lea.vmem %s0, 449
  %v1125 = vld [vmem:[%s1124] ss:$2 sm:$0xff]
  %s1126 = scalar_lea.vmem %s0, 465
  %v1127 = vld [vmem:[%s1126] ss:$2 sm:$0xff]
  %s1128 = scalar_lea.vmem %s0, 481
  %v1129 = vld [vmem:[%s1128] ss:$2 sm:$0xff]
  %s1130 = scalar_lea.vmem %s0, 497
  %v1131 = vld [vmem:[%s1130] ss:$2 sm:$0xff]
  %s1132 = scalar_lea.vmem %s0, 513
  %v1133 = vld [vmem:[%s1132] ss:$2 sm:$0xff]
  %s1134 = scalar_lea.vmem %s0, 529
  %v1135 = vld [vmem:[%s1134] ss:$2 sm:$0xff]
  %s1136 = scalar_lea.vmem %s0, 545
  %v1137 = vld [vmem:[%s1136] ss:$2 sm:$0xff]
  %s1138 = scalar_lea.vmem %s0, 561
  %v1139 = vld [vmem:[%s1138] ss:$2 sm:$0xff]
  %s1140 = scalar_lea.vmem %s0, 577
  %v1141 = vld [vmem:[%s1140] ss:$2 sm:$0xff]
  %s1142 = scalar_lea.vmem %s0, 593
  %v1143 = vld [vmem:[%s1142] ss:$2 sm:$0xff]
  %s1144 = scalar_lea.vmem %s0, 609
  %v1145 = vld [vmem:[%s1144] ss:$2 sm:$0xff]
  %s1146 = scalar_lea.vmem %s0, 625
  %v1147 = vld [vmem:[%s1146] ss:$2 sm:$0xff]
  %s1148 = scalar_lea.vmem %s0, 641
  %v1149 = vld [vmem:[%s1148] ss:$2 sm:$0xff]
  %s1150 = scalar_lea.vmem %s0, 657
  %v1151 = vld [vmem:[%s1150] ss:$2 sm:$0xff]
  %s1152 = scalar_lea.vmem %s0, 673
  %v1153 = vld [vmem:[%s1152] ss:$2 sm:$0xff]
  %s1154 = scalar_lea.vmem %s0, 689
  %v1155 = vld [vmem:[%s1154] ss:$2 sm:$0xff]
  %s1156 = scalar_lea.vmem %s0, 705
  %v1157 = vld [vmem:[%s1156] ss:$2 sm:$0xff]
  %s1158 = scalar_lea.vmem %s0, 721
  %v1159 = vld [vmem:[%s1158] ss:$2 sm:$0xff]
  %s1160 = scalar_lea.vmem %s0, 737
  %v1161 = vld [vmem:[%s1160] ss:$2 sm:$0xff]
  %s1162 = scalar_lea.vmem %s0, 753
  %v1163 = vld [vmem:[%s1162] ss:$2 sm:$0xff]
  %s1164 = scalar_lea.vmem %s0, 769
  %v1165 = vld [vmem:[%s1164] ss:$2 sm:$0xff]
  %s1166 = scalar_lea.vmem %s0, 785
  %v1167 = vld [vmem:[%s1166] ss:$2 sm:$0xff]
  %s1168 = scalar_lea.vmem %s0, 801
  %v1169 = vld [vmem:[%s1168] ss:$2 sm:$0xff]
  %s1170 = scalar_lea.vmem %s0, 817
  %v1171 = vld [vmem:[%s1170] ss:$2 sm:$0xff]
  %s1172 = scalar_lea.vmem %s0, 833
  %v1173 = vld [vmem:[%s1172] ss:$2 sm:$0xff]
  %s1174 = scalar_lea.vmem %s0, 849
  %v1175 = vld [vmem:[%s1174] ss:$2 sm:$0xff]
  %s1176 = scalar_lea.vmem %s0, 865
  %v1177 = vld [vmem:[%s1176] ss:$2 sm:$0xff]
  %s1178 = scalar_lea.vmem %s0, 881
  %v1179 = vld [vmem:[%s1178] ss:$2 sm:$0xff]
  %s1180 = scalar_lea.vmem %s0, 897
  %v1181 = vld [vmem:[%s1180] ss:$2 sm:$0xff]
  %s1182 = scalar_lea.vmem %s0, 913
  %v1183 = vld [vmem:[%s1182] ss:$2 sm:$0xff]
  %s1184 = scalar_lea.vmem %s0, 929
  %v1185 = vld [vmem:[%s1184] ss:$2 sm:$0xff]
  %s1186 = scalar_lea.vmem %s0, 945
  %v1187 = vld [vmem:[%s1186] ss:$2 sm:$0xff]
  %s1188 = scalar_lea.vmem %s0, 961
  %v1189 = vld [vmem:[%s1188] ss:$2 sm:$0xff]
  %s1190 = scalar_lea.vmem %s0, 977
  %v1191 = vld [vmem:[%s1190] ss:$2 sm:$0xff]
  %s1192 = scalar_lea.vmem %s0, 993
  %v1193 = vld [vmem:[%s1192] ss:$2 sm:$0xff]
  %s1194 = scalar_lea.vmem %s0, 1009
  %v1195 = vld [vmem:[%s1194] ss:$2 sm:$0xff]
  %s1196 = scalar_lea.vmem %s0, 1025
  %v1197 = vld [vmem:[%s1196] ss:$2 sm:$0xff]
  %s1198 = scalar_lea.vmem %s0, 1041
  %v1199 = vld [vmem:[%s1198] ss:$2 sm:$0xff]
  %s1200 = scalar_lea.vmem %s0, 1057
  %v1201 = vld [vmem:[%s1200] ss:$2 sm:$0xff]
  %s1202 = scalar_lea.vmem %s0, 1073
  %v1203 = vld [vmem:[%s1202] ss:$2 sm:$0xff]
  %s1204 = scalar_lea.vmem %s0, 1089
  %v1205 = vld [vmem:[%s1204] ss:$2 sm:$0xff]
  %s1206 = scalar_lea.vmem %s0, 1105
  %v1207 = vld [vmem:[%s1206] ss:$2 sm:$0xff]
  %s1208 = scalar_lea.vmem %s0, 1121
  %v1209 = vld [vmem:[%s1208] ss:$2 sm:$0xff]
  %s1210 = scalar_lea.vmem %s0, 1137
  %v1211 = vld [vmem:[%s1210] ss:$2 sm:$0xff]
  %s1212 = scalar_lea.vmem %s0, 1153
  %v1213 = vld [vmem:[%s1212] ss:$2 sm:$0xff]
  %s1214 = scalar_lea.vmem %s0, 1169
  %v1215 = vld [vmem:[%s1214] ss:$2 sm:$0xff]
  %s1216 = scalar_lea.vmem %s0, 1185
  %v1217 = vld [vmem:[%s1216] ss:$2 sm:$0xff]
  %s1218 = scalar_lea.vmem %s0, 1201
  %v1219 = vld [vmem:[%s1218] ss:$2 sm:$0xff]
  %s1220 = scalar_lea.vmem %s0, 1217
  %v1221 = vld [vmem:[%s1220] ss:$2 sm:$0xff]
  %s1222 = scalar_lea.vmem %s0, 1233
  %v1223 = vld [vmem:[%s1222] ss:$2 sm:$0xff]
  %s1224 = scalar_lea.vmem %s0, 1249
  %v1225 = vld [vmem:[%s1224] ss:$2 sm:$0xff]
  %s1226 = scalar_lea.vmem %s0, 1265
  %v1227 = vld [vmem:[%s1226] ss:$2 sm:$0xff]
  %s1228 = scalar_lea.vmem %s0, 1281
  %v1229 = vld [vmem:[%s1228] ss:$2 sm:$0xff]
  %s1230 = scalar_lea.vmem %s0, 1297
  %v1231 = vld [vmem:[%s1230] ss:$2 sm:$0xff]
  %s1232 = scalar_lea.vmem %s0, 1313
  %v1233 = vld [vmem:[%s1232] ss:$2 sm:$0xff]
  %s1234 = scalar_lea.vmem %s0, 1329
  %v1235 = vld [vmem:[%s1234] ss:$2 sm:$0xff]
  %s1236 = scalar_lea.vmem %s0, 1345
  %v1237 = vld [vmem:[%s1236] ss:$2 sm:$0xff]
  %s1238 = scalar_lea.vmem %s0, 1361
  %v1239 = vld [vmem:[%s1238] ss:$2 sm:$0xff]
  %s1240 = scalar_lea.vmem %s0, 1377
  %v1241 = vld [vmem:[%s1240] ss:$2 sm:$0xff]
  %s1242 = scalar_lea.vmem %s0, 1393
  %v1243 = vld [vmem:[%s1242] ss:$2 sm:$0xff]
  %s1244 = scalar_lea.vmem %s0, 1409
  %v1245 = vld [vmem:[%s1244] ss:$2 sm:$0xff]
  %s1246 = scalar_lea.vmem %s0, 1425
  %v1247 = vld [vmem:[%s1246] ss:$2 sm:$0xff]
  %s1248 = scalar_lea.vmem %s0, 1441
  %v1249 = vld [vmem:[%s1248] ss:$2 sm:$0xff]
  %s1250 = scalar_lea.vmem %s0, 1457
  %v1251 = vld [vmem:[%s1250] ss:$2 sm:$0xff]
  %s1252 = scalar_lea.vmem %s0, 1473
  %v1253 = vld [vmem:[%s1252] ss:$2 sm:$0xff]
  %s1254 = scalar_lea.vmem %s0, 1489
  %v1255 = vld [vmem:[%s1254] ss:$2 sm:$0xff]
  %s1256 = scalar_lea.vmem %s0, 1505
  %v1257 = vld [vmem:[%s1256] ss:$2 sm:$0xff]
  %s1258 = scalar_lea.vmem %s0, 1521
  %v1259 = vld [vmem:[%s1258] ss:$2 sm:$0xff]
  %s1260 = scalar_lea.vmem %s0, 1537
  %v1261 = vld [vmem:[%s1260] ss:$2 sm:$0xff]
  %s1262 = scalar_lea.vmem %s0, 1553
  %v1263 = vld [vmem:[%s1262] ss:$2 sm:$0xff]
  %v1265 = vsel %vm214, %v1069, 0
  %v1268 = vsel %vm214, %v1071, 0
  %v1271 = vsel %vm214, %v1073, 0
  %v1274 = vsel %vm214, %v1075, 0
  %v1277 = vsel %vm214, %v1077, 0
  %v1280 = vsel %vm214, %v1079, 0
  %v1283 = vsel %vm214, %v1081, 0
  %v1286 = vsel %vm214, %v1083, 0
  %v1289 = vsel %vm214, %v1085, 0
  %v1292 = vsel %vm214, %v1087, 0
  %v1295 = vsel %vm214, %v1089, 0
  %v1298 = vsel %vm214, %v1091, 0
  %v1301 = vsel %vm214, %v1093, 0
  %v1304 = vsel %vm214, %v1095, 0
  %v1307 = vsel %vm214, %v1097, 0
  %v1310 = vsel %vm214, %v1099, 0
  %v1313 = vsel %vm214, %v1101, 0
  %v1316 = vsel %vm214, %v1103, 0
  %v1319 = vsel %vm214, %v1105, 0
  %v1322 = vsel %vm214, %v1107, 0
  %v1325 = vsel %vm214, %v1109, 0
  %v1328 = vsel %vm214, %v1111, 0
  %v1331 = vsel %vm214, %v1113, 0
  %v1334 = vsel %vm214, %v1115, 0
  %v1337 = vsel %vm214, %v1117, 0
  %v1340 = vsel %vm214, %v1119, 0
  %v1343 = vsel %vm214, %v1121, 0
  %v1346 = vsel %vm214, %v1123, 0
  %v1349 = vsel %vm214, %v1125, 0
  %v1352 = vsel %vm214, %v1127, 0
  %v1355 = vsel %vm214, %v1129, 0
  %v1358 = vsel %vm214, %v1131, 0
  %v1361 = vsel %vm214, %v1133, 0
  %v1364 = vsel %vm214, %v1135, 0
  %v1367 = vsel %vm214, %v1137, 0
  %v1370 = vsel %vm214, %v1139, 0
  %v1373 = vsel %vm214, %v1141, 0
  %v1376 = vsel %vm214, %v1143, 0
  %v1379 = vsel %vm214, %v1145, 0
  %v1382 = vsel %vm214, %v1147, 0
  %v1385 = vsel %vm214, %v1149, 0
  %v1388 = vsel %vm214, %v1151, 0
  %v1391 = vsel %vm214, %v1153, 0
  %v1394 = vsel %vm214, %v1155, 0
  %v1397 = vsel %vm214, %v1157, 0
  %v1400 = vsel %vm214, %v1159, 0
  %v1403 = vsel %vm214, %v1161, 0
  %v1406 = vsel %vm214, %v1163, 0
  %v1409 = vsel %vm214, %v1165, 0
  %v1412 = vsel %vm214, %v1167, 0
  %v1415 = vsel %vm214, %v1169, 0
  %v1418 = vsel %vm214, %v1171, 0
  %v1421 = vsel %vm214, %v1173, 0
  %v1424 = vsel %vm214, %v1175, 0
  %v1427 = vsel %vm214, %v1177, 0
  %v1430 = vsel %vm214, %v1179, 0
  %v1433 = vsel %vm214, %v1181, 0
  %v1436 = vsel %vm214, %v1183, 0
  %v1439 = vsel %vm214, %v1185, 0
  %v1442 = vsel %vm214, %v1187, 0
  %v1445 = vsel %vm214, %v1189, 0
  %v1448 = vsel %vm214, %v1191, 0
  %v1451 = vsel %vm214, %v1193, 0
  %v1454 = vsel %vm214, %v1195, 0
  %v1457 = vsel %vm214, %v1197, 0
  %v1460 = vsel %vm214, %v1199, 0
  %v1463 = vsel %vm214, %v1201, 0
  %v1466 = vsel %vm214, %v1203, 0
  %v1469 = vsel %vm214, %v1205, 0
  %v1472 = vsel %vm214, %v1207, 0
  %v1475 = vsel %vm214, %v1209, 0
  %v1478 = vsel %vm214, %v1211, 0
  %v1481 = vsel %vm214, %v1213, 0
  %v1484 = vsel %vm214, %v1215, 0
  %v1487 = vsel %vm214, %v1217, 0
  %v1490 = vsel %vm214, %v1219, 0
  %v1493 = vsel %vm214, %v1221, 0
  %v1496 = vsel %vm214, %v1223, 0
  %v1499 = vsel %vm214, %v1225, 0
  %v1502 = vsel %vm214, %v1227, 0
  %v1505 = vsel %vm214, %v1229, 0
  %v1508 = vsel %vm214, %v1231, 0
  %v1511 = vsel %vm214, %v1233, 0
  %v1514 = vsel %vm214, %v1235, 0
  %v1517 = vsel %vm214, %v1237, 0
  %v1520 = vsel %vm214, %v1239, 0
  %v1523 = vsel %vm214, %v1241, 0
  %v1526 = vsel %vm214, %v1243, 0
  %v1529 = vsel %vm214, %v1245, 0
  %v1532 = vsel %vm214, %v1247, 0
  %v1535 = vsel %vm214, %v1249, 0
  %v1538 = vsel %vm214, %v1251, 0
  %v1541 = vsel %vm214, %v1253, 0
  %v1544 = vsel %vm214, %v1255, 0
  %v1547 = vsel %vm214, %v1257, 0
  %v1550 = vsel %vm214, %v1259, 0
  %v1553 = vsel %vm214, %v1261, 0
  %v1556 = vsel %vm214, %v1263, 0
  %1558 = vmatprep.subr.mxu0 0.0
  %1559 = vmatpush1.msra.mxu0 %v14
  %1560 = vmatprep.subr.mxu0 0.0
  %1561 = vmatpush1.msra.mxu0 %v15
  %1562 = vmatprep.subr.mxu0 0.0
  %1563 = vmatpush1.msra.mxu0 %v16
  %1564 = vmatprep.subr.mxu0 0.0
  %1565 = vmatpush1.msra.mxu0 %v17
  %1566 = vmatprep.subr.mxu0 0.0
  %1567 = vmatpush1.msra.mxu0 %v511
  %1568 = vmatprep.subr.mxu0 0.0
  %1569 = vmatpush1.msra.mxu0 0.0
  %1570 = vmatprep.subr.mxu0 0.0
  %1571 = vmatpush1.msra.mxu0 0.0
  %1572 = vmatprep.subr.mxu0 0.0
  %1573 = vmatpush1.msra.mxu0 0.0
  %1574 = vmatprep.subr.mxu0 0.0
  %1575 = vmatpush1.msra.mxu0 0.0
  %1576 = vmatprep.subr.mxu0 0.0
  %1577 = vmatpush1.msra.mxu0 0.0
  %1578 = vmatprep.subr.mxu0 0.0
  %1579 = vmatpush1.msra.mxu0 0.0
  %1580 = vmatprep.subr.mxu0 0.0
  %1581 = vmatpush1.msra.mxu0 0.0
  %1582 = vmatprep.subr.mxu0 0.0
  %1583 = vmatpush1.msra.mxu0 0.0
  %1584 = vmatprep.subr.mxu0 0.0
  %1585 = vmatpush1.msra.mxu0 0.0
  %1586 = vmatprep.subr.mxu0 0.0
  %1587 = vmatpush1.msra.mxu0 0.0
  %1588 = vmatprep.subr.mxu0 0.0
  %1589 = vmatpush1.msra.mxu0 0.0
  %1590 = vmatprep.subr.mxu0 0.0
  %1591 = vmatpush1.msra.mxu0 0.0
  %1592 = vmatprep.subr.mxu0 0.0
  %1593 = vmatpush1.msra.mxu0 0.0
  %1594 = vmatprep.subr.mxu0 0.0
  %1595 = vmatpush1.msra.mxu0 0.0
  %1596 = vmatprep.subr.mxu0 0.0
  %1597 = vmatpush1.msra.mxu0 0.0
  %1598 = vmatprep.subr.mxu0 0.0
  %1599 = vmatpush1.msra.mxu0 0.0
  %1600 = vmatprep.subr.mxu0 0.0
  %1601 = vmatpush1.msra.mxu0 0.0
  %1602 = vmatprep.subr.mxu0 0.0
  %1603 = vmatpush1.msra.mxu0 0.0
  %1604 = vmatprep.subr.mxu0 0.0
  %1605 = vmatpush1.msra.mxu0 0.0
  %1606 = vmatprep.subr.mxu0 0.0
  %1607 = vmatpush1.msra.mxu0 0.0
  %1608 = vmatprep.subr.mxu0 0.0
  %1609 = vmatpush1.msra.mxu0 0.0
  %1610 = vmatprep.subr.mxu0 0.0
  %1611 = vmatpush1.msra.mxu0 0.0
  %1612 = vmatprep.subr.mxu0 0.0
  %1613 = vmatpush1.msra.mxu0 0.0
  %1614 = vmatprep.subr.mxu0 0.0
  %1615 = vmatpush1.msra.mxu0 0.0
  %1616 = vmatprep.subr.mxu0 0.0
  %1617 = vmatpush1.msra.mxu0 0.0
  %1618 = vmatprep.subr.mxu0 0.0
  %1619 = vmatpush1.msra.mxu0 0.0
  %1620 = vmatprep.subr.mxu0 0.0
  %1621 = vmatpush1.msra.mxu0 0.0
  %1622 = vmatprep.mubr.f32.mxu0 0.0
  %1623 = vmatmul.mubr.f32.gmra.mrb[0].mxu0 %v1265
  %v1624 = vpop.f32.mrb[0].mxu0
  %v1625 = vadd.f32 0.0, %v1624
  %v1626 = vpop.f32.mrb[0].mxu0
  %1627 = vmatprep.mubr.f32.mxu0 0.0
  %1628 = vmatmul.mubr.f32.gmra.mrb[0].mxu0 %v1268
  %v1629 = vpop.f32.mrb[0].mxu0
  %v1630 = vadd.f32 0.0, %v1629
  %v1631 = vpop.f32.mrb[0].mxu0
  %1632 = vmatprep.mubr.f32.mxu0 0.0
  %1633 = vmatmul.mubr.f32.gmra.mrb[0].mxu0 %v1271
  %v1634 = vpop.f32.mrb[0].mxu0
  %v1635 = vadd.f32 0.0, %v1634
  %v1636 = vpop.f32.mrb[0].mxu0
  %1637 = vmatprep.mubr.f32.mxu0 0.0
  %1638 = vmatmul.mubr.f32.gmra.mrb[0].mxu0 %v1274
  %v1639 = vpop.f32.mrb[0].mxu0
  %v1640 = vadd.f32 0.0, %v1639
  %v1641 = vpop.f32.mrb[0].mxu0
  %1642 = vmatprep.mubr.f32.mxu0 0.0
  %1643 = vmatmul.mubr.f32.gmra.mrb[0].mxu0 %v1277
  %v1644 = vpop.f32.mrb[0].mxu0
  %v1645 = vadd.f32 0.0, %v1644
  %v1646 = vpop.f32.mrb[0].mxu0
  %1647 = vmatprep.mubr.f32.mxu0 0.0
  %1648 = vmatmul.mubr.f32.gmra.mrb[0].mxu0 %v1280
  %v1649 = vpop.f32.mrb[0].mxu0
  %v1650 = vadd.f32 0.0, %v1649
  %v1651 = vpop.f32.mrb[0].mxu0
  %1652 = vmatprep.mubr.f32.mxu0 0.0
  %1653 = vmatmul.mubr.f32.gmra.mrb[0].mxu0 %v1283
  %v1654 = vpop.f32.mrb[0].mxu0
  %v1655 = vadd.f32 0.0, %v1654
  %v1656 = vpop.f32.mrb[0].mxu0
  %1657 = vmatprep.mubr.f32.mxu0 0.0
  %1658 = vmatmul.mubr.f32.gmra.mrb[0].mxu0 %v1286
  %v1659 = vpop.f32.mrb[0].mxu0
  %v1660 = vadd.f32 0.0, %v1659
  %v1661 = vpop.f32.mrb[0].mxu0
  %1662 = vmatprep.mubr.f32.mxu0 0.0
  %1663 = vmatmul.mubr.f32.gmra.mrb[0].mxu0 %v1289
  %v1664 = vpop.f32.mrb[0].mxu0
  %v1665 = vadd.f32 0.0, %v1664
  %v1666 = vpop.f32.mrb[0].mxu0
  %1667 = vmatprep.mubr.f32.mxu0 0.0
  %1668 = vmatmul.mubr.f32.gmra.mrb[0].mxu0 %v1292
  %v1669 = vpop.f32.mrb[0].mxu0
  %v1670 = vadd.f32 0.0, %v1669
  %v1671 = vpop.f32.mrb[0].mxu0
  %1672 = vmatprep.mubr.f32.mxu0 0.0
  %1673 = vmatmul.mubr.f32.gmra.mrb[0].mxu0 %v1295
  %v1674 = vpop.f32.mrb[0].mxu0
  %v1675 = vadd.f32 0.0, %v1674
  %v1676 = vpop.f32.mrb[0].mxu0
  %1677 = vmatprep.mubr.f32.mxu0 0.0
  %1678 = vmatmul.mubr.f32.gmra.mrb[0].mxu0 %v1298
  %v1679 = vpop.f32.mrb[0].mxu0
  %v1680 = vadd.f32 0.0, %v1679
  %v1681 = vpop.f32.mrb[0].mxu0
  %1682 = vmatprep.mubr.f32.mxu0 0.0
  %1683 = vmatmul.mubr.f32.gmra.mrb[0].mxu0 %v1301
  %v1684 = vpop.f32.mrb[0].mxu0
  %v1685 = vadd.f32 0.0, %v1684
  %v1686 = vpop.f32.mrb[0].mxu0
  %1687 = vmatprep.mubr.f32.mxu0 0.0
  %1688 = vmatmul.mubr.f32.gmra.mrb[0].mxu0 %v1304
  %v1689 = vpop.f32.mrb[0].mxu0
  %v1690 = vadd.f32 0.0, %v1689
  %v1691 = vpop.f32.mrb[0].mxu0
  %1692 = vmatprep.mubr.f32.mxu0 0.0
  %1693 = vmatmul.mubr.f32.gmra.mrb[0].mxu0 %v1307
  %v1694 = vpop.f32.mrb[0].mxu0
  %v1695 = vadd.f32 0.0, %v1694
  %v1696 = vpop.f32.mrb[0].mxu0
  %1697 = vmatprep.mubr.f32.mxu0 0.0
  %1698 = vmatmul.mubr.f32.gmra.mrb[0].mxu0 %v1310
  %v1699 = vpop.f32.mrb[0].mxu0
  %v1700 = vadd.f32 0.0, %v1699
  %v1701 = vpop.f32.mrb[0].mxu0
  %1702 = vmatprep.mubr.f32.mxu0 0.0
  %1703 = vmatmul.mubr.f32.gmra.mrb[0].mxu0 %v1313
  %v1704 = vpop.f32.mrb[0].mxu0
  %v1705 = vadd.f32 0.0, %v1704
  %v1706 = vpop.f32.mrb[0].mxu0
  %1707 = vmatprep.mubr.f32.mxu0 0.0
  %1708 = vmatmul.mubr.f32.gmra.mrb[0].mxu0 %v1316
  %v1709 = vpop.f32.mrb[0].mxu0
  %v1710 = vadd.f32 0.0, %v1709
  %v1711 = vpop.f32.mrb[0].mxu0
  %1712 = vmatprep.mubr.f32.mxu0 0.0
  %1713 = vmatmul.mubr.f32.gmra.mrb[0].mxu0 %v1319
  %v1714 = vpop.f32.mrb[0].mxu0
  %v1715 = vadd.f32 0.0, %v1714
  %v1716 = vpop.f32.mrb[0].mxu0
  %1717 = vmatprep.mubr.f32.mxu0 0.0
  %1718 = vmatmul.mubr.f32.gmra.mrb[0].mxu0 %v1322
  %v1719 = vpop.f32.mrb[0].mxu0
  %v1720 = vadd.f32 0.0, %v1719
  %v1721 = vpop.f32.mrb[0].mxu0
  %1722 = vmatprep.mubr.f32.mxu0 0.0
  %1723 = vmatmul.mubr.f32.gmra.mrb[0].mxu0 %v1325
  %v1724 = vpop.f32.mrb[0].mxu0
  %v1725 = vadd.f32 0.0, %v1724
  %v1726 = vpop.f32.mrb[0].mxu0
  %1727 = vmatprep.mubr.f32.mxu0 0.0
  %1728 = vmatmul.mubr.f32.gmra.mrb[0].mxu0 %v1328
  %v1729 = vpop.f32.mrb[0].mxu0
  %v1730 = vadd.f32 0.0, %v1729
  %v1731 = vpop.f32.mrb[0].mxu0
  %1732 = vmatprep.mubr.f32.mxu0 0.0
  %1733 = vmatmul.mubr.f32.gmra.mrb[0].mxu0 %v1331
  %v1734 = vpop.f32.mrb[0].mxu0
  %v1735 = vadd.f32 0.0, %v1734
  %v1736 = vpop.f32.mrb[0].mxu0
  %1737 = vmatprep.mubr.f32.mxu0 0.0
  %1738 = vmatmul.mubr.f32.gmra.mrb[0].mxu0 %v1334
  %v1739 = vpop.f32.mrb[0].mxu0
  %v1740 = vadd.f32 0.0, %v1739
  %v1741 = vpop.f32.mrb[0].mxu0
  %1742 = vmatprep.mubr.f32.mxu0 0.0
  %1743 = vmatmul.mubr.f32.gmra.mrb[0].mxu0 %v1337
  %v1744 = vpop.f32.mrb[0].mxu0
  %v1745 = vadd.f32 0.0, %v1744
  %v1746 = vpop.f32.mrb[0].mxu0
  %1747 = vmatprep.mubr.f32.mxu0 0.0
  %1748 = vmatmul.mubr.f32.gmra.mrb[0].mxu0 %v1340
  %v1749 = vpop.f32.mrb[0].mxu0
  %v1750 = vadd.f32 0.0, %v1749
  %v1751 = vpop.f32.mrb[0].mxu0
  %1752 = vmatprep.mubr.f32.mxu0 0.0
  %1753 = vmatmul.mubr.f32.gmra.mrb[0].mxu0 %v1343
  %v1754 = vpop.f32.mrb[0].mxu0
  %v1755 = vadd.f32 0.0, %v1754
  %v1756 = vpop.f32.mrb[0].mxu0
  %1757 = vmatprep.mubr.f32.mxu0 0.0
  %1758 = vmatmul.mubr.f32.gmra.mrb[0].mxu0 %v1346
  %v1759 = vpop.f32.mrb[0].mxu0
  %v1760 = vadd.f32 0.0, %v1759
  %v1761 = vpop.f32.mrb[0].mxu0
  %1762 = vmatprep.mubr.f32.mxu0 0.0
  %1763 = vmatmul.mubr.f32.gmra.mrb[0].mxu0 %v1349
  %v1764 = vpop.f32.mrb[0].mxu0
  %v1765 = vadd.f32 0.0, %v1764
  %v1766 = vpop.f32.mrb[0].mxu0
  %1767 = vmatprep.mubr.f32.mxu0 0.0
  %1768 = vmatmul.mubr.f32.gmra.mrb[0].mxu0 %v1352
  %v1769 = vpop.f32.mrb[0].mxu0
  %v1770 = vadd.f32 0.0, %v1769
  %v1771 = vpop.f32.mrb[0].mxu0
  %1772 = vmatprep.mubr.f32.mxu0 0.0
  %1773 = vmatmul.mubr.f32.gmra.mrb[0].mxu0 %v1355
  %v1774 = vpop.f32.mrb[0].mxu0
  %v1775 = vadd.f32 0.0, %v1774
  %v1776 = vpop.f32.mrb[0].mxu0
  %1777 = vmatprep.mubr.f32.mxu0 0.0
  %1778 = vmatmul.mubr.f32.gmra.mrb[0].mxu0 %v1358
  %v1779 = vpop.f32.mrb[0].mxu0
  %v1780 = vadd.f32 0.0, %v1779
  %v1781 = vpop.f32.mrb[0].mxu0
  %1782 = vmatprep.mubr.f32.mxu0 0.0
  %1783 = vmatmul.mubr.f32.gmra.mrb[0].mxu0 %v1361
  %v1784 = vpop.f32.mrb[0].mxu0
  %v1785 = vadd.f32 0.0, %v1784
  %v1786 = vpop.f32.mrb[0].mxu0
  %1787 = vmatprep.mubr.f32.mxu0 0.0
  %1788 = vmatmul.mubr.f32.gmra.mrb[0].mxu0 %v1364
  %v1789 = vpop.f32.mrb[0].mxu0
  %v1790 = vadd.f32 0.0, %v1789
  %v1791 = vpop.f32.mrb[0].mxu0
  %1792 = vmatprep.mubr.f32.mxu0 0.0
  %1793 = vmatmul.mubr.f32.gmra.mrb[0].mxu0 %v1367
  %v1794 = vpop.f32.mrb[0].mxu0
  %v1795 = vadd.f32 0.0, %v1794
  %v1796 = vpop.f32.mrb[0].mxu0
  %1797 = vmatprep.mubr.f32.mxu0 0.0
  %1798 = vmatmul.mubr.f32.gmra.mrb[0].mxu0 %v1370
  %v1799 = vpop.f32.mrb[0].mxu0
  %v1800 = vadd.f32 0.0, %v1799
  %v1801 = vpop.f32.mrb[0].mxu0
  %1802 = vmatprep.mubr.f32.mxu0 0.0
  %1803 = vmatmul.mubr.f32.gmra.mrb[0].mxu0 %v1373
  %v1804 = vpop.f32.mrb[0].mxu0
  %v1805 = vadd.f32 0.0, %v1804
  %v1806 = vpop.f32.mrb[0].mxu0
  %1807 = vmatprep.mubr.f32.mxu0 0.0
  %1808 = vmatmul.mubr.f32.gmra.mrb[0].mxu0 %v1376
  %v1809 = vpop.f32.mrb[0].mxu0
  %v1810 = vadd.f32 0.0, %v1809
  %v1811 = vpop.f32.mrb[0].mxu0
  %1812 = vmatprep.mubr.f32.mxu0 0.0
  %1813 = vmatmul.mubr.f32.gmra.mrb[0].mxu0 %v1379
  %v1814 = vpop.f32.mrb[0].mxu0
  %v1815 = vadd.f32 0.0, %v1814
  %v1816 = vpop.f32.mrb[0].mxu0
  %1817 = vmatprep.mubr.f32.mxu0 0.0
  %1818 = vmatmul.mubr.f32.gmra.mrb[0].mxu0 %v1382
  %v1819 = vpop.f32.mrb[0].mxu0
  %v1820 = vadd.f32 0.0, %v1819
  %v1821 = vpop.f32.mrb[0].mxu0
  %1822 = vmatprep.mubr.f32.mxu0 0.0
  %1823 = vmatmul.mubr.f32.gmra.mrb[0].mxu0 %v1385
  %v1824 = vpop.f32.mrb[0].mxu0
  %v1825 = vadd.f32 0.0, %v1824
  %v1826 = vpop.f32.mrb[0].mxu0
  %1827 = vmatprep.mubr.f32.mxu0 0.0
  %1828 = vmatmul.mubr.f32.gmra.mrb[0].mxu0 %v1388
  %v1829 = vpop.f32.mrb[0].mxu0
  %v1830 = vadd.f32 0.0, %v1829
  %v1831 = vpop.f32.mrb[0].mxu0
  %1832 = vmatprep.mubr.f32.mxu0 0.0
  %1833 = vmatmul.mubr.f32.gmra.mrb[0].mxu0 %v1391
  %v1834 = vpop.f32.mrb[0].mxu0
  %v1835 = vadd.f32 0.0, %v1834
  %v1836 = vpop.f32.mrb[0].mxu0
  %1837 = vmatprep.mubr.f32.mxu0 0.0
  %1838 = vmatmul.mubr.f32.gmra.mrb[0].mxu0 %v1394
  %v1839 = vpop.f32.mrb[0].mxu0
  %v1840 = vadd.f32 0.0, %v1839
  %v1841 = vpop.f32.mrb[0].mxu0
  %1842 = vmatprep.mubr.f32.mxu0 0.0
  %1843 = vmatmul.mubr.f32.gmra.mrb[0].mxu0 %v1397
  %v1844 = vpop.f32.mrb[0].mxu0
  %v1845 = vadd.f32 0.0, %v1844
  %v1846 = vpop.f32.mrb[0].mxu0
  %1847 = vmatprep.mubr.f32.mxu0 0.0
  %1848 = vmatmul.mubr.f32.gmra.mrb[0].mxu0 %v1400
  %v1849 = vpop.f32.mrb[0].mxu0
  %v1850 = vadd.f32 0.0, %v1849
  %v1851 = vpop.f32.mrb[0].mxu0
  %1852 = vmatprep.mubr.f32.mxu0 0.0
  %1853 = vmatmul.mubr.f32.gmra.mrb[0].mxu0 %v1403
  %v1854 = vpop.f32.mrb[0].mxu0
  %v1855 = vadd.f32 0.0, %v1854
  %v1856 = vpop.f32.mrb[0].mxu0
  %1857 = vmatprep.mubr.f32.mxu0 0.0
  %1858 = vmatmul.mubr.f32.gmra.mrb[0].mxu0 %v1406
  %v1859 = vpop.f32.mrb[0].mxu0
  %v1860 = vadd.f32 0.0, %v1859
  %v1861 = vpop.f32.mrb[0].mxu0
  %1862 = vmatprep.mubr.f32.mxu0 0.0
  %1863 = vmatmul.mubr.f32.gmra.mrb[0].mxu0 %v1409
  %v1864 = vpop.f32.mrb[0].mxu0
  %v1865 = vadd.f32 0.0, %v1864
  %v1866 = vpop.f32.mrb[0].mxu0
  %1867 = vmatprep.mubr.f32.mxu0 0.0
  %1868 = vmatmul.mubr.f32.gmra.mrb[0].mxu0 %v1412
  %v1869 = vpop.f32.mrb[0].mxu0
  %v1870 = vadd.f32 0.0, %v1869
  %v1871 = vpop.f32.mrb[0].mxu0
  %1872 = vmatprep.mubr.f32.mxu0 0.0
  %1873 = vmatmul.mubr.f32.gmra.mrb[0].mxu0 %v1415
  %v1874 = vpop.f32.mrb[0].mxu0
  %v1875 = vadd.f32 0.0, %v1874
  %v1876 = vpop.f32.mrb[0].mxu0
  %1877 = vmatprep.mubr.f32.mxu0 0.0
  %1878 = vmatmul.mubr.f32.gmra.mrb[0].mxu0 %v1418
  %v1879 = vpop.f32.mrb[0].mxu0
  %v1880 = vadd.f32 0.0, %v1879
  %v1881 = vpop.f32.mrb[0].mxu0
  %1882 = vmatprep.mubr.f32.mxu0 0.0
  %1883 = vmatmul.mubr.f32.gmra.mrb[0].mxu0 %v1421
  %v1884 = vpop.f32.mrb[0].mxu0
  %v1885 = vadd.f32 0.0, %v1884
  %v1886 = vpop.f32.mrb[0].mxu0
  %1887 = vmatprep.mubr.f32.mxu0 0.0
  %1888 = vmatmul.mubr.f32.gmra.mrb[0].mxu0 %v1424
  %v1889 = vpop.f32.mrb[0].mxu0
  %v1890 = vadd.f32 0.0, %v1889
  %v1891 = vpop.f32.mrb[0].mxu0
  %1892 = vmatprep.mubr.f32.mxu0 0.0
  %1893 = vmatmul.mubr.f32.gmra.mrb[0].mxu0 %v1427
  %v1894 = vpop.f32.mrb[0].mxu0
  %v1895 = vadd.f32 0.0, %v1894
  %v1896 = vpop.f32.mrb[0].mxu0
  %1897 = vmatprep.mubr.f32.mxu0 0.0
  %1898 = vmatmul.mubr.f32.gmra.mrb[0].mxu0 %v1430
  %v1899 = vpop.f32.mrb[0].mxu0
  %v1900 = vadd.f32 0.0, %v1899
  %v1901 = vpop.f32.mrb[0].mxu0
  %1902 = vmatprep.mubr.f32.mxu0 0.0
  %1903 = vmatmul.mubr.f32.gmra.mrb[0].mxu0 %v1433
  %v1904 = vpop.f32.mrb[0].mxu0
  %v1905 = vadd.f32 0.0, %v1904
  %v1906 = vpop.f32.mrb[0].mxu0
  %1907 = vmatprep.mubr.f32.mxu0 0.0
  %1908 = vmatmul.mubr.f32.gmra.mrb[0].mxu0 %v1436
  %v1909 = vpop.f32.mrb[0].mxu0
  %v1910 = vadd.f32 0.0, %v1909
  %v1911 = vpop.f32.mrb[0].mxu0
  %1912 = vmatprep.mubr.f32.mxu0 0.0
  %1913 = vmatmul.mubr.f32.gmra.mrb[0].mxu0 %v1439
  %v1914 = vpop.f32.mrb[0].mxu0
  %v1915 = vadd.f32 0.0, %v1914
  %v1916 = vpop.f32.mrb[0].mxu0
  %1917 = vmatprep.mubr.f32.mxu0 0.0
  %1918 = vmatmul.mubr.f32.gmra.mrb[0].mxu0 %v1442
  %v1919 = vpop.f32.mrb[0].mxu0
  %v1920 = vadd.f32 0.0, %v1919
  %v1921 = vpop.f32.mrb[0].mxu0
  %1922 = vmatprep.mubr.f32.mxu0 0.0
  %1923 = vmatmul.mubr.f32.gmra.mrb[0].mxu0 %v1445
  %v1924 = vpop.f32.mrb[0].mxu0
  %v1925 = vadd.f32 0.0, %v1924
  %v1926 = vpop.f32.mrb[0].mxu0
  %1927 = vmatprep.mubr.f32.mxu0 0.0
  %1928 = vmatmul.mubr.f32.gmra.mrb[0].mxu0 %v1448
  %v1929 = vpop.f32.mrb[0].mxu0
  %v1930 = vadd.f32 0.0, %v1929
  %v1931 = vpop.f32.mrb[0].mxu0
  %1932 = vmatprep.mubr.f32.mxu0 0.0
  %1933 = vmatmul.mubr.f32.gmra.mrb[0].mxu0 %v1451
  %v1934 = vpop.f32.mrb[0].mxu0
  %v1935 = vadd.f32 0.0, %v1934
  %v1936 = vpop.f32.mrb[0].mxu0
  %1937 = vmatprep.mubr.f32.mxu0 0.0
  %1938 = vmatmul.mubr.f32.gmra.mrb[0].mxu0 %v1454
  %v1939 = vpop.f32.mrb[0].mxu0
  %v1940 = vadd.f32 0.0, %v1939
  %v1941 = vpop.f32.mrb[0].mxu0
  %1942 = vmatprep.mubr.f32.mxu0 0.0
  %1943 = vmatmul.mubr.f32.gmra.mrb[0].mxu0 %v1457
  %v1944 = vpop.f32.mrb[0].mxu0
  %v1945 = vadd.f32 0.0, %v1944
  %v1946 = vpop.f32.mrb[0].mxu0
  %1947 = vmatprep.mubr.f32.mxu0 0.0
  %1948 = vmatmul.mubr.f32.gmra.mrb[0].mxu0 %v1460
  %v1949 = vpop.f32.mrb[0].mxu0
  %v1950 = vadd.f32 0.0, %v1949
  %v1951 = vpop.f32.mrb[0].mxu0
  %1952 = vmatprep.mubr.f32.mxu0 0.0
  %1953 = vmatmul.mubr.f32.gmra.mrb[0].mxu0 %v1463
  %v1954 = vpop.f32.mrb[0].mxu0
  %v1955 = vadd.f32 0.0, %v1954
  %v1956 = vpop.f32.mrb[0].mxu0
  %1957 = vmatprep.mubr.f32.mxu0 0.0
  %1958 = vmatmul.mubr.f32.gmra.mrb[0].mxu0 %v1466
  %v1959 = vpop.f32.mrb[0].mxu0
  %v1960 = vadd.f32 0.0, %v1959
  %v1961 = vpop.f32.mrb[0].mxu0
  %1962 = vmatprep.mubr.f32.mxu0 0.0
  %1963 = vmatmul.mubr.f32.gmra.mrb[0].mxu0 %v1469
  %v1964 = vpop.f32.mrb[0].mxu0
  %v1965 = vadd.f32 0.0, %v1964
  %v1966 = vpop.f32.mrb[0].mxu0
  %1967 = vmatprep.mubr.f32.mxu0 0.0
  %1968 = vmatmul.mubr.f32.gmra.mrb[0].mxu0 %v1472
  %v1969 = vpop.f32.mrb[0].mxu0
  %v1970 = vadd.f32 0.0, %v1969
  %v1971 = vpop.f32.mrb[0].mxu0
  %1972 = vmatprep.mubr.f32.mxu0 0.0
  %1973 = vmatmul.mubr.f32.gmra.mrb[0].mxu0 %v1475
  %v1974 = vpop.f32.mrb[0].mxu0
  %v1975 = vadd.f32 0.0, %v1974
  %v1976 = vpop.f32.mrb[0].mxu0
  %1977 = vmatprep.mubr.f32.mxu0 0.0
  %1978 = vmatmul.mubr.f32.gmra.mrb[0].mxu0 %v1478
  %v1979 = vpop.f32.mrb[0].mxu0
  %v1980 = vadd.f32 0.0, %v1979
  %v1981 = vpop.f32.mrb[0].mxu0
  %1982 = vmatprep.mubr.f32.mxu0 0.0
  %1983 = vmatmul.mubr.f32.gmra.mrb[0].mxu0 %v1481
  %v1984 = vpop.f32.mrb[0].mxu0
  %v1985 = vadd.f32 0.0, %v1984
  %v1986 = vpop.f32.mrb[0].mxu0
  %1987 = vmatprep.mubr.f32.mxu0 0.0
  %1988 = vmatmul.mubr.f32.gmra.mrb[0].mxu0 %v1484
  %v1989 = vpop.f32.mrb[0].mxu0
  %v1990 = vadd.f32 0.0, %v1989
  %v1991 = vpop.f32.mrb[0].mxu0
  %1992 = vmatprep.mubr.f32.mxu0 0.0
  %1993 = vmatmul.mubr.f32.gmra.mrb[0].mxu0 %v1487
  %v1994 = vpop.f32.mrb[0].mxu0
  %v1995 = vadd.f32 0.0, %v1994
  %v1996 = vpop.f32.mrb[0].mxu0
  %1997 = vmatprep.mubr.f32.mxu0 0.0
  %1998 = vmatmul.mubr.f32.gmra.mrb[0].mxu0 %v1490
  %v1999 = vpop.f32.mrb[0].mxu0
  %v2000 = vadd.f32 0.0, %v1999
  %v2001 = vpop.f32.mrb[0].mxu0
  %2002 = vmatprep.mubr.f32.mxu0 0.0
  %2003 = vmatmul.mubr.f32.gmra.mrb[0].mxu0 %v1493
  %v2004 = vpop.f32.mrb[0].mxu0
  %v2005 = vadd.f32 0.0, %v2004
  %v2006 = vpop.f32.mrb[0].mxu0
  %2007 = vmatprep.mubr.f32.mxu0 0.0
  %2008 = vmatmul.mubr.f32.gmra.mrb[0].mxu0 %v1496
  %v2009 = vpop.f32.mrb[0].mxu0
  %v2010 = vadd.f32 0.0, %v2009
  %v2011 = vpop.f32.mrb[0].mxu0
  %2012 = vmatprep.mubr.f32.mxu0 0.0
  %2013 = vmatmul.mubr.f32.gmra.mrb[0].mxu0 %v1499
  %v2014 = vpop.f32.mrb[0].mxu0
  %v2015 = vadd.f32 0.0, %v2014
  %v2016 = vpop.f32.mrb[0].mxu0
  %2017 = vmatprep.mubr.f32.mxu0 0.0
  %2018 = vmatmul.mubr.f32.gmra.mrb[0].mxu0 %v1502
  %v2019 = vpop.f32.mrb[0].mxu0
  %v2020 = vadd.f32 0.0, %v2019
  %v2021 = vpop.f32.mrb[0].mxu0
  %2022 = vmatprep.mubr.f32.mxu0 0.0
  %2023 = vmatmul.mubr.f32.gmra.mrb[0].mxu0 %v1505
  %v2024 = vpop.f32.mrb[0].mxu0
  %v2025 = vadd.f32 0.0, %v2024
  %v2026 = vpop.f32.mrb[0].mxu0
  %2027 = vmatprep.mubr.f32.mxu0 0.0
  %2028 = vmatmul.mubr.f32.gmra.mrb[0].mxu0 %v1508
  %v2029 = vpop.f32.mrb[0].mxu0
  %v2030 = vadd.f32 0.0, %v2029
  %v2031 = vpop.f32.mrb[0].mxu0
  %2032 = vmatprep.mubr.f32.mxu0 0.0
  %2033 = vmatmul.mubr.f32.gmra.mrb[0].mxu0 %v1511
  %v2034 = vpop.f32.mrb[0].mxu0
  %v2035 = vadd.f32 0.0, %v2034
  %v2036 = vpop.f32.mrb[0].mxu0
  %2037 = vmatprep.mubr.f32.mxu0 0.0
  %2038 = vmatmul.mubr.f32.gmra.mrb[0].mxu0 %v1514
  %v2039 = vpop.f32.mrb[0].mxu0
  %v2040 = vadd.f32 0.0, %v2039
  %v2041 = vpop.f32.mrb[0].mxu0
  %2042 = vmatprep.mubr.f32.mxu0 0.0
  %2043 = vmatmul.mubr.f32.gmra.mrb[0].mxu0 %v1517
  %v2044 = vpop.f32.mrb[0].mxu0
  %v2045 = vadd.f32 0.0, %v2044
  %v2046 = vpop.f32.mrb[0].mxu0
  %2047 = vmatprep.mubr.f32.mxu0 0.0
  %2048 = vmatmul.mubr.f32.gmra.mrb[0].mxu0 %v1520
  %v2049 = vpop.f32.mrb[0].mxu0
  %v2050 = vadd.f32 0.0, %v2049
  %v2051 = vpop.f32.mrb[0].mxu0
  %2052 = vmatprep.mubr.f32.mxu0 0.0
  %2053 = vmatmul.mubr.f32.gmra.mrb[0].mxu0 %v1523
  %v2054 = vpop.f32.mrb[0].mxu0
  %v2055 = vadd.f32 0.0, %v2054
  %v2056 = vpop.f32.mrb[0].mxu0
  %2057 = vmatprep.mubr.f32.mxu0 0.0
  %2058 = vmatmul.mubr.f32.gmra.mrb[0].mxu0 %v1526
  %v2059 = vpop.f32.mrb[0].mxu0
  %v2060 = vadd.f32 0.0, %v2059
  %v2061 = vpop.f32.mrb[0].mxu0
  %2062 = vmatprep.mubr.f32.mxu0 0.0
  %2063 = vmatmul.mubr.f32.gmra.mrb[0].mxu0 %v1529
  %v2064 = vpop.f32.mrb[0].mxu0
  %v2065 = vadd.f32 0.0, %v2064
  %v2066 = vpop.f32.mrb[0].mxu0
  %2067 = vmatprep.mubr.f32.mxu0 0.0
  %2068 = vmatmul.mubr.f32.gmra.mrb[0].mxu0 %v1532
  %v2069 = vpop.f32.mrb[0].mxu0
  %v2070 = vadd.f32 0.0, %v2069
  %v2071 = vpop.f32.mrb[0].mxu0
  %2072 = vmatprep.mubr.f32.mxu0 0.0
  %2073 = vmatmul.mubr.f32.gmra.mrb[0].mxu0 %v1535
  %v2074 = vpop.f32.mrb[0].mxu0
  %v2075 = vadd.f32 0.0, %v2074
  %v2076 = vpop.f32.mrb[0].mxu0
  %2077 = vmatprep.mubr.f32.mxu0 0.0
  %2078 = vmatmul.mubr.f32.gmra.mrb[0].mxu0 %v1538
  %v2079 = vpop.f32.mrb[0].mxu0
  %v2080 = vadd.f32 0.0, %v2079
  %v2081 = vpop.f32.mrb[0].mxu0
  %2082 = vmatprep.mubr.f32.mxu0 0.0
  %2083 = vmatmul.mubr.f32.gmra.mrb[0].mxu0 %v1541
  %v2084 = vpop.f32.mrb[0].mxu0
  %v2085 = vadd.f32 0.0, %v2084
  %v2086 = vpop.f32.mrb[0].mxu0
  %2087 = vmatprep.mubr.f32.mxu0 0.0
  %2088 = vmatmul.mubr.f32.gmra.mrb[0].mxu0 %v1544
  %v2089 = vpop.f32.mrb[0].mxu0
  %v2090 = vadd.f32 0.0, %v2089
  %v2091 = vpop.f32.mrb[0].mxu0
  %2092 = vmatprep.mubr.f32.mxu0 0.0
  %2093 = vmatmul.mubr.f32.gmra.mrb[0].mxu0 %v1547
  %v2094 = vpop.f32.mrb[0].mxu0
  %v2095 = vadd.f32 0.0, %v2094
  %v2096 = vpop.f32.mrb[0].mxu0
  %2097 = vmatprep.mubr.f32.mxu0 0.0
  %2098 = vmatmul.mubr.f32.gmra.mrb[0].mxu0 %v1550
  %v2099 = vpop.f32.mrb[0].mxu0
  %v2100 = vadd.f32 0.0, %v2099
  %v2101 = vpop.f32.mrb[0].mxu0
  %2102 = vmatprep.mubr.f32.mxu0 0.0
  %2103 = vmatmul.mubr.f32.gmra.mrb[0].mxu0 %v1553
  %v2104 = vpop.f32.mrb[0].mxu0
  %v2105 = vadd.f32 0.0, %v2104
  %v2106 = vpop.f32.mrb[0].mxu0
  %2107 = vmatprep.mubr.f32.mxu0 0.0
  %2108 = vmatmul.mubr.f32.gmra.mrb[0].mxu0 %v1556
  %v2109 = vpop.f32.mrb[0].mxu0
  %v2110 = vadd.f32 0.0, %v2109
  %v2111 = vpop.f32.mrb[0].mxu0
  %2112 = vdwg.mxu0
  %v2113 = vmax.f32 %v580, %v1625
  %v2114 = vmax.f32 %v585, %v1630
  %v2115 = vmax.f32 %v590, %v1635
  %v2116 = vmax.f32 %v595, %v1640
  %v2117 = vmax.f32 %v600, %v1645
  %v2118 = vmax.f32 %v605, %v1650
  %v2119 = vmax.f32 %v610, %v1655
  %v2120 = vmax.f32 %v615, %v1660
  %v2121 = vmax.f32 %v620, %v1665
  %v2122 = vmax.f32 %v625, %v1670
  %v2123 = vmax.f32 %v630, %v1675
  %v2124 = vmax.f32 %v635, %v1680
  %v2125 = vmax.f32 %v640, %v1685
  %v2126 = vmax.f32 %v645, %v1690
  %v2127 = vmax.f32 %v650, %v1695
  %v2128 = vmax.f32 %v655, %v1700
  %v2129 = vmax.f32 %v660, %v1705
  %v2130 = vmax.f32 %v665, %v1710
  %v2131 = vmax.f32 %v670, %v1715
  %v2132 = vmax.f32 %v675, %v1720
  %v2133 = vmax.f32 %v680, %v1725
  %v2134 = vmax.f32 %v685, %v1730
  %v2135 = vmax.f32 %v690, %v1735
  %v2136 = vmax.f32 %v695, %v1740
  %v2137 = vmax.f32 %v700, %v1745
  %v2138 = vmax.f32 %v705, %v1750
  %v2139 = vmax.f32 %v710, %v1755
  %v2140 = vmax.f32 %v715, %v1760
  %v2141 = vmax.f32 %v720, %v1765
  %v2142 = vmax.f32 %v725, %v1770
  %v2143 = vmax.f32 %v730, %v1775
  %v2144 = vmax.f32 %v735, %v1780
  %v2145 = vmax.f32 %v740, %v1785
  %v2146 = vmax.f32 %v745, %v1790
  %v2147 = vmax.f32 %v750, %v1795
  %v2148 = vmax.f32 %v755, %v1800
  %v2149 = vmax.f32 %v760, %v1805
  %v2150 = vmax.f32 %v765, %v1810
  %v2151 = vmax.f32 %v770, %v1815
  %v2152 = vmax.f32 %v775, %v1820
  %v2153 = vmax.f32 %v780, %v1825
  %v2154 = vmax.f32 %v785, %v1830
  %v2155 = vmax.f32 %v790, %v1835
  %v2156 = vmax.f32 %v795, %v1840
  %v2157 = vmax.f32 %v800, %v1845
  %v2158 = vmax.f32 %v805, %v1850
  %v2159 = vmax.f32 %v810, %v1855
  %v2160 = vmax.f32 %v815, %v1860
  %v2161 = vmax.f32 %v820, %v1865
  %v2162 = vmax.f32 %v825, %v1870
  %v2163 = vmax.f32 %v830, %v1875
  %v2164 = vmax.f32 %v835, %v1880
  %v2165 = vmax.f32 %v840, %v1885
  %v2166 = vmax.f32 %v845, %v1890
  %v2167 = vmax.f32 %v850, %v1895
  %v2168 = vmax.f32 %v855, %v1900
  %v2169 = vmax.f32 %v860, %v1905
  %v2170 = vmax.f32 %v865, %v1910
  %v2171 = vmax.f32 %v870, %v1915
  %v2172 = vmax.f32 %v875, %v1920
  %v2173 = vmax.f32 %v880, %v1925
  %v2174 = vmax.f32 %v885, %v1930
  %v2175 = vmax.f32 %v890, %v1935
  %v2176 = vmax.f32 %v895, %v1940
  %v2177 = vmax.f32 %v900, %v1945
  %v2178 = vmax.f32 %v905, %v1950
  %v2179 = vmax.f32 %v910, %v1955
  %v2180 = vmax.f32 %v915, %v1960
  %v2181 = vmax.f32 %v920, %v1965
  %v2182 = vmax.f32 %v925, %v1970
  %v2183 = vmax.f32 %v930, %v1975
  %v2184 = vmax.f32 %v935, %v1980
  %v2185 = vmax.f32 %v940, %v1985
  %v2186 = vmax.f32 %v945, %v1990
  %v2187 = vmax.f32 %v950, %v1995
  %v2188 = vmax.f32 %v955, %v2000
  %v2189 = vmax.f32 %v960, %v2005
  %v2190 = vmax.f32 %v965, %v2010
  %v2191 = vmax.f32 %v970, %v2015
  %v2192 = vmax.f32 %v975, %v2020
  %v2193 = vmax.f32 %v980, %v2025
  %v2194 = vmax.f32 %v985, %v2030
  %v2195 = vmax.f32 %v990, %v2035
  %v2196 = vmax.f32 %v995, %v2040
  %v2197 = vmax.f32 %v1000, %v2045
  %v2198 = vmax.f32 %v1005, %v2050
  %v2199 = vmax.f32 %v1010, %v2055
  %v2200 = vmax.f32 %v1015, %v2060
  %v2201 = vmax.f32 %v1020, %v2065
  %v2202 = vmax.f32 %v1025, %v2070
  %v2203 = vmax.f32 %v1030, %v2075
  %v2204 = vmax.f32 %v1035, %v2080
  %v2205 = vmax.f32 %v1040, %v2085
  %v2206 = vmax.f32 %v1045, %v2090
  %v2207 = vmax.f32 %v1050, %v2095
  %v2208 = vmax.f32 %v1055, %v2100
  %v2209 = vmax.f32 %v1060, %v2105
  %v2210 = vmax.f32 %v1065, %v2110
  %v2211 = vld [vmem:[%s2] sm:$0x1]
  %v2213 = vlaneseq
  %v2214 = vshrl.u32 %v2213, 7
  %v2215 = vsub.s32 0, %v2214
  %v2216 = vrot.slane %v2211, %v2215
  %v2218 = vadd.f32 %v2113, %v2216
  %v2219 = vadd.f32 %v2114, %v2216
  %v2220 = vadd.f32 %v2115, %v2216
  %v2221 = vadd.f32 %v2116, %v2216
  %v2222 = vadd.f32 %v2117, %v2216
  %v2223 = vadd.f32 %v2118, %v2216
  %v2224 = vadd.f32 %v2119, %v2216
  %v2225 = vadd.f32 %v2120, %v2216
  %v2226 = vadd.f32 %v2121, %v2216
  %v2227 = vadd.f32 %v2122, %v2216
  %v2228 = vadd.f32 %v2123, %v2216
  %v2229 = vadd.f32 %v2124, %v2216
  %v2230 = vadd.f32 %v2125, %v2216
  %v2231 = vadd.f32 %v2126, %v2216
  %v2232 = vadd.f32 %v2127, %v2216
  %v2233 = vadd.f32 %v2128, %v2216
  %v2234 = vadd.f32 %v2129, %v2216
  %v2235 = vadd.f32 %v2130, %v2216
  %v2236 = vadd.f32 %v2131, %v2216
  %v2237 = vadd.f32 %v2132, %v2216
  %v2238 = vadd.f32 %v2133, %v2216
  %v2239 = vadd.f32 %v2134, %v2216
  %v2240 = vadd.f32 %v2135, %v2216
  %v2241 = vadd.f32 %v2136, %v2216
  %v2242 = vadd.f32 %v2137, %v2216
  %v2243 = vadd.f32 %v2138, %v2216
  %v2244 = vadd.f32 %v2139, %v2216
  %v2245 = vadd.f32 %v2140, %v2216
  %v2246 = vadd.f32 %v2141, %v2216
  %v2247 = vadd.f32 %v2142, %v2216
  %v2248 = vadd.f32 %v2143, %v2216
  %v2249 = vadd.f32 %v2144, %v2216
  %v2250 = vadd.f32 %v2145, %v2216
  %v2251 = vadd.f32 %v2146, %v2216
  %v2252 = vadd.f32 %v2147, %v2216
  %v2253 = vadd.f32 %v2148, %v2216
  %v2254 = vadd.f32 %v2149, %v2216
  %v2255 = vadd.f32 %v2150, %v2216
  %v2256 = vadd.f32 %v2151, %v2216
  %v2257 = vadd.f32 %v2152, %v2216
  %v2258 = vadd.f32 %v2153, %v2216
  %v2259 = vadd.f32 %v2154, %v2216
  %v2260 = vadd.f32 %v2155, %v2216
  %v2261 = vadd.f32 %v2156, %v2216
  %v2262 = vadd.f32 %v2157, %v2216
  %v2263 = vadd.f32 %v2158, %v2216
  %v2264 = vadd.f32 %v2159, %v2216
  %v2265 = vadd.f32 %v2160, %v2216
  %v2266 = vadd.f32 %v2161, %v2216
  %v2267 = vadd.f32 %v2162, %v2216
  %v2268 = vadd.f32 %v2163, %v2216
  %v2269 = vadd.f32 %v2164, %v2216
  %v2270 = vadd.f32 %v2165, %v2216
  %v2271 = vadd.f32 %v2166, %v2216
  %v2272 = vadd.f32 %v2167, %v2216
  %v2273 = vadd.f32 %v2168, %v2216
  %v2274 = vadd.f32 %v2169, %v2216
  %v2275 = vadd.f32 %v2170, %v2216
  %v2276 = vadd.f32 %v2171, %v2216
  %v2277 = vadd.f32 %v2172, %v2216
  %v2278 = vadd.f32 %v2173, %v2216
  %v2279 = vadd.f32 %v2174, %v2216
  %v2280 = vadd.f32 %v2175, %v2216
  %v2281 = vadd.f32 %v2176, %v2216
  %v2282 = vadd.f32 %v2177, %v2216
  %v2283 = vadd.f32 %v2178, %v2216
  %v2284 = vadd.f32 %v2179, %v2216
  %v2285 = vadd.f32 %v2180, %v2216
  %v2286 = vadd.f32 %v2181, %v2216
  %v2287 = vadd.f32 %v2182, %v2216
  %v2288 = vadd.f32 %v2183, %v2216
  %v2289 = vadd.f32 %v2184, %v2216
  %v2290 = vadd.f32 %v2185, %v2216
  %v2291 = vadd.f32 %v2186, %v2216
  %v2292 = vadd.f32 %v2187, %v2216
  %v2293 = vadd.f32 %v2188, %v2216
  %v2294 = vadd.f32 %v2189, %v2216
  %v2295 = vadd.f32 %v2190, %v2216
  %v2296 = vadd.f32 %v2191, %v2216
  %v2297 = vadd.f32 %v2192, %v2216
  %v2298 = vadd.f32 %v2193, %v2216
  %v2299 = vadd.f32 %v2194, %v2216
  %v2300 = vadd.f32 %v2195, %v2216
  %v2301 = vadd.f32 %v2196, %v2216
  %v2302 = vadd.f32 %v2197, %v2216
  %v2303 = vadd.f32 %v2198, %v2216
  %v2304 = vadd.f32 %v2199, %v2216
  %v2305 = vadd.f32 %v2200, %v2216
  %v2306 = vadd.f32 %v2201, %v2216
  %v2307 = vadd.f32 %v2202, %v2216
  %v2308 = vadd.f32 %v2203, %v2216
  %v2309 = vadd.f32 %v2204, %v2216
  %v2310 = vadd.f32 %v2205, %v2216
  %v2311 = vadd.f32 %v2206, %v2216
  %v2312 = vadd.f32 %v2207, %v2216
  %v2313 = vadd.f32 %v2208, %v2216
  %v2314 = vadd.f32 %v2209, %v2216
  %v2315 = vadd.f32 %v2210, %v2216
  %v2316 = vmax.f32 %v2218, 0.0
  %v2317 = vmax.f32 %v2219, 0.0
  %v2318 = vmax.f32 %v2220, 0.0
  %v2319 = vmax.f32 %v2221, 0.0
  %v2320 = vmax.f32 %v2222, 0.0
  %v2321 = vmax.f32 %v2223, 0.0
  %v2322 = vmax.f32 %v2224, 0.0
  %v2323 = vmax.f32 %v2225, 0.0
  %v2324 = vmax.f32 %v2226, 0.0
  %v2325 = vmax.f32 %v2227, 0.0
  %v2326 = vmax.f32 %v2228, 0.0
  %v2327 = vmax.f32 %v2229, 0.0
  %v2328 = vmax.f32 %v2230, 0.0
  %v2329 = vmax.f32 %v2231, 0.0
  %v2330 = vmax.f32 %v2232, 0.0
  %v2331 = vmax.f32 %v2233, 0.0
  %v2332 = vmax.f32 %v2234, 0.0
  %v2333 = vmax.f32 %v2235, 0.0
  %v2334 = vmax.f32 %v2236, 0.0
  %v2335 = vmax.f32 %v2237, 0.0
  %v2336 = vmax.f32 %v2238, 0.0
  %v2337 = vmax.f32 %v2239, 0.0
  %v2338 = vmax.f32 %v2240, 0.0
  %v2339 = vmax.f32 %v2241, 0.0
  %v2340 = vmax.f32 %v2242, 0.0
  %v2341 = vmax.f32 %v2243, 0.0
  %v2342 = vmax.f32 %v2244, 0.0
  %v2343 = vmax.f32 %v2245, 0.0
  %v2344 = vmax.f32 %v2246, 0.0
  %v2345 = vmax.f32 %v2247, 0.0
  %v2346 = vmax.f32 %v2248, 0.0
  %v2347 = vmax.f32 %v2249, 0.0
  %v2348 = vmax.f32 %v2250, 0.0
  %v2349 = vmax.f32 %v2251, 0.0
  %v2350 = vmax.f32 %v2252, 0.0
  %v2351 = vmax.f32 %v2253, 0.0
  %v2352 = vmax.f32 %v2254, 0.0
  %v2353 = vmax.f32 %v2255, 0.0
  %v2354 = vmax.f32 %v2256, 0.0
  %v2355 = vmax.f32 %v2257, 0.0
  %v2356 = vmax.f32 %v2258, 0.0
  %v2357 = vmax.f32 %v2259, 0.0
  %v2358 = vmax.f32 %v2260, 0.0
  %v2359 = vmax.f32 %v2261, 0.0
  %v2360 = vmax.f32 %v2262, 0.0
  %v2361 = vmax.f32 %v2263, 0.0
  %v2362 = vmax.f32 %v2264, 0.0
  %v2363 = vmax.f32 %v2265, 0.0
  %v2364 = vmax.f32 %v2266, 0.0
  %v2365 = vmax.f32 %v2267, 0.0
  %v2366 = vmax.f32 %v2268, 0.0
  %v2367 = vmax.f32 %v2269, 0.0
  %v2368 = vmax.f32 %v2270, 0.0
  %v2369 = vmax.f32 %v2271, 0.0
  %v2370 = vmax.f32 %v2272, 0.0
  %v2371 = vmax.f32 %v2273, 0.0
  %v2372 = vmax.f32 %v2274, 0.0
  %v2373 = vmax.f32 %v2275, 0.0
  %v2374 = vmax.f32 %v2276, 0.0
  %v2375 = vmax.f32 %v2277, 0.0
  %v2376 = vmax.f32 %v2278, 0.0
  %v2377 = vmax.f32 %v2279, 0.0
  %v2378 = vmax.f32 %v2280, 0.0
  %v2379 = vmax.f32 %v2281, 0.0
  %v2380 = vmax.f32 %v2282, 0.0
  %v2381 = vmax.f32 %v2283, 0.0
  %v2382 = vmax.f32 %v2284, 0.0
  %v2383 = vmax.f32 %v2285, 0.0
  %v2384 = vmax.f32 %v2286, 0.0
  %v2385 = vmax.f32 %v2287, 0.0
  %v2386 = vmax.f32 %v2288, 0.0
  %v2387 = vmax.f32 %v2289, 0.0
  %v2388 = vmax.f32 %v2290, 0.0
  %v2389 = vmax.f32 %v2291, 0.0
  %v2390 = vmax.f32 %v2292, 0.0
  %v2391 = vmax.f32 %v2293, 0.0
  %v2392 = vmax.f32 %v2294, 0.0
  %v2393 = vmax.f32 %v2295, 0.0
  %v2394 = vmax.f32 %v2296, 0.0
  %v2395 = vmax.f32 %v2297, 0.0
  %v2396 = vmax.f32 %v2298, 0.0
  %v2397 = vmax.f32 %v2299, 0.0
  %v2398 = vmax.f32 %v2300, 0.0
  %v2399 = vmax.f32 %v2301, 0.0
  %v2400 = vmax.f32 %v2302, 0.0
  %v2401 = vmax.f32 %v2303, 0.0
  %v2402 = vmax.f32 %v2304, 0.0
  %v2403 = vmax.f32 %v2305, 0.0
  %v2404 = vmax.f32 %v2306, 0.0
  %v2405 = vmax.f32 %v2307, 0.0
  %v2406 = vmax.f32 %v2308, 0.0
  %v2407 = vmax.f32 %v2309, 0.0
  %v2408 = vmax.f32 %v2310, 0.0
  %v2409 = vmax.f32 %v2311, 0.0
  %v2410 = vmax.f32 %v2312, 0.0
  %v2411 = vmax.f32 %v2313, 0.0
  %v2412 = vmax.f32 %v2314, 0.0
  %v2413 = vmax.f32 %v2315, 0.0
  %vm2417 = vcmask 1041408
  %v2418 = vrot.slane %v2317, 6
  %v2419 = vrot.slane %v2318, 6
  %v2420 = vsel %vm2417, %v2418, %v2419
  %v2421 = vrot.slane %v2319, 6
  %v2422 = vsel %vm2417, %v2419, %v2421
  %v2425 = vmax.f32 %v2316, %v2420
  %v2426 = vmax.f32 %v2317, %v2422
  %vm2427 = vcmask 261120
  %2428 = vst.msk [vmem:[%s3] sm:$0xff] %vm2427, %v2425
  %vm2429 = vcmask 259072
  %2430 = vst.msk [vmem:[%s3 + $0x8] sm:$0x3f] %vm2429, %v2426
  %v2433 = vrot.slane %v2321, 6
  %v2434 = vrot.slane %v2322, 6
  %v2435 = vsel %vm2417, %v2433, %v2434
  %v2439 = vmax.f32 %v2319, %v2433
  %v2440 = vmax.f32 %v2320, %v2435
  %v2441 = vmax.f32 %v2321, %v2434
  %vm2442 = vcmask 261124
  %2443 = vst.msk [vmem:[%s3 + $0xa] sm:$0xf0] %vm2442, %v2439
  %2444 = vst.msk [vmem:[%s3 + $0x12] sm:$0xff] %vm2427, %v2440
  %vm2445 = vcmask 254976
  %2446 = vst.msk [vmem:[%s3 + $0x1a] sm:$0x3] %vm2445, %v2441
  %v2450 = vrot.slane %v2324, 6
  %v2451 = vrot.slane %v2325, 6
  %v2452 = vsel %vm2417, %v2450, %v2451
  %v2453 = vrot.slane %v2326, 6
  %v2454 = vsel %vm2417, %v2451, %v2453
  %v2457 = vmax.f32 %v2323, %v2452
  %v2458 = vmax.f32 %v2324, %v2454
  %2459 = vst.msk [vmem:[%s3 + $0x1c] sm:$0xff] %vm2427, %v2457
  %2460 = vst.msk [vmem:[%s3 + $0x24] sm:$0x3f] %vm2429, %v2458
  %v2463 = vrot.slane %v2328, 6
  %v2464 = vrot.slane %v2329, 6
  %v2465 = vsel %vm2417, %v2463, %v2464
  %v2469 = vmax.f32 %v2326, %v2463
  %v2470 = vmax.f32 %v2327, %v2465
  %v2471 = vmax.f32 %v2328, %v2464
  %2472 = vst.msk [vmem:[%s3 + $0x26] sm:$0xf0] %vm2442, %v2469
  %2473 = vst.msk [vmem:[%s3 + $0x2e] sm:$0xff] %vm2427, %v2470
  %2474 = vst.msk [vmem:[%s3 + $0x36] sm:$0x3] %vm2445, %v2471
  %v2478 = vrot.slane %v2331, 6
  %v2479 = vrot.slane %v2332, 6
  %v2480 = vsel %vm2417, %v2478, %v2479
  %v2481 = vrot.slane %v2333, 6
  %v2482 = vsel %vm2417, %v2479, %v2481
  %v2485 = vmax.f32 %v2330, %v2480
  %v2486 = vmax.f32 %v2331, %v2482
  %2487 = vst.msk [vmem:[%s3 + $0x38] sm:$0xff] %vm2427, %v2485
  %2488 = vst.msk [vmem:[%s3 + $0x40] sm:$0x3f] %vm2429, %v2486
  %v2491 = vrot.slane %v2335, 6
  %v2492 = vrot.slane %v2336, 6
  %v2493 = vsel %vm2417, %v2491, %v2492
  %v2497 = vmax.f32 %v2333, %v2491
  %v2498 = vmax.f32 %v2334, %v2493
  %v2499 = vmax.f32 %v2335, %v2492
  %2500 = vst.msk [vmem:[%s3 + $0x42] sm:$0xf0] %vm2442, %v2497
  %2501 = vst.msk [vmem:[%s3 + $0x4a] sm:$0xff] %vm2427, %v2498
  %2502 = vst.msk [vmem:[%s3 + $0x52] sm:$0x3] %vm2445, %v2499
  %v2506 = vrot.slane %v2338, 6
  %v2507 = vrot.slane %v2339, 6
  %v2508 = vsel %vm2417, %v2506, %v2507
  %v2509 = vrot.slane %v2340, 6
  %v2510 = vsel %vm2417, %v2507, %v2509
  %v2513 = vmax.f32 %v2337, %v2508
  %v2514 = vmax.f32 %v2338, %v2510
  %2515 = vst.msk [vmem:[%s3 + $0x54] sm:$0xff] %vm2427, %v2513
  %2516 = vst.msk [vmem:[%s3 + $0x5c] sm:$0x3f] %vm2429, %v2514
  %v2519 = vrot.slane %v2342, 6
  %v2520 = vrot.slane %v2343, 6
  %v2521 = vsel %vm2417, %v2519, %v2520
  %v2525 = vmax.f32 %v2340, %v2519
  %v2526 = vmax.f32 %v2341, %v2521
  %v2527 = vmax.f32 %v2342, %v2520
  %2528 = vst.msk [vmem:[%s3 + $0x5e] sm:$0xf0] %vm2442, %v2525
  %2529 = vst.msk [vmem:[%s3 + $0x66] sm:$0xff] %vm2427, %v2526
  %2530 = vst.msk [vmem:[%s3 + $0x6e] sm:$0x3] %vm2445, %v2527
  %v2534 = vrot.slane %v2345, 6
  %v2535 = vrot.slane %v2346, 6
  %v2536 = vsel %vm2417, %v2534, %v2535
  %v2537 = vrot.slane %v2347, 6
  %v2538 = vsel %vm2417, %v2535, %v2537
  %v2541 = vmax.f32 %v2344, %v2536
  %v2542 = vmax.f32 %v2345, %v2538
  %2543 = vst.msk [vmem:[%s3 + $0x70] sm:$0xff] %vm2427, %v2541
  %2544 = vst.msk [vmem:[%s3 + $0x78] sm:$0x3f] %vm2429, %v2542
  %v2547 = vrot.slane %v2349, 6
  %v2548 = vrot.slane %v2350, 6
  %v2549 = vsel %vm2417, %v2547, %v2548
  %v2553 = vmax.f32 %v2347, %v2547
  %v2554 = vmax.f32 %v2348, %v2549
  %v2555 = vmax.f32 %v2349, %v2548
  %2556 = vst.msk [vmem:[%s3 + $0x7a] sm:$0xf0] %vm2442, %v2553
  %2557 = vst.msk [vmem:[%s3 + $0x82] sm:$0xff] %vm2427, %v2554
  %2558 = vst.msk [vmem:[%s3 + $0x8a] sm:$0x3] %vm2445, %v2555
  %v2562 = vrot.slane %v2352, 6
  %v2563 = vrot.slane %v2353, 6
  %v2564 = vsel %vm2417, %v2562, %v2563
  %v2565 = vrot.slane %v2354, 6
  %v2566 = vsel %vm2417, %v2563, %v2565
  %v2569 = vmax.f32 %v2351, %v2564
  %v2570 = vmax.f32 %v2352, %v2566
  %2571 = vst.msk [vmem:[%s3 + $0x8c] sm:$0xff] %vm2427, %v2569
  %2572 = vst.msk [vmem:[%s3 + $0x94] sm:$0x3f] %vm2429, %v2570
  %v2575 = vrot.slane %v2356, 6
  %v2576 = vrot.slane %v2357, 6
  %v2577 = vsel %vm2417, %v2575, %v2576
  %v2581 = vmax.f32 %v2354, %v2575
  %v2582 = vmax.f32 %v2355, %v2577
  %v2583 = vmax.f32 %v2356, %v2576
  %2584 = vst.msk [vmem:[%s3 + $0x96] sm:$0xf0] %vm2442, %v2581
  %2585 = vst.msk [vmem:[%s3 + $0x9e] sm:$0xff] %vm2427, %v2582
  %2586 = vst.msk [vmem:[%s3 + $0xa6] sm:$0x3] %vm2445, %v2583
  %v2590 = vrot.slane %v2359, 6
  %v2591 = vrot.slane %v2360, 6
  %v2592 = vsel %vm2417, %v2590, %v2591
  %v2593 = vrot.slane %v2361, 6
  %v2594 = vsel %vm2417, %v2591, %v2593
  %v2597 = vmax.f32 %v2358, %v2592
  %v2598 = vmax.f32 %v2359, %v2594
  %2599 = vst.msk [vmem:[%s3 + $0xa8] sm:$0xff] %vm2427, %v2597
  %2600 = vst.msk [vmem:[%s3 + $0xb0] sm:$0x3f] %vm2429, %v2598
  %v2603 = vrot.slane %v2363, 6
  %v2604 = vrot.slane %v2364, 6
  %v2605 = vsel %vm2417, %v2603, %v2604
  %v2609 = vmax.f32 %v2361, %v2603
  %v2610 = vmax.f32 %v2362, %v2605
  %v2611 = vmax.f32 %v2363, %v2604
  %2612 = vst.msk [vmem:[%s3 + $0xb2] sm:$0xf0] %vm2442, %v2609
  %2613 = vst.msk [vmem:[%s3 + $0xba] sm:$0xff] %vm2427, %v2610
  %2614 = vst.msk [vmem:[%s3 + $0xc2] sm:$0x3] %vm2445, %v2611
  %v2618 = vrot.slane %v2366, 6
  %v2619 = vrot.slane %v2367, 6
  %v2620 = vsel %vm2417, %v2618, %v2619
  %v2621 = vrot.slane %v2368, 6
  %v2622 = vsel %vm2417, %v2619, %v2621
  %v2625 = vmax.f32 %v2365, %v2620
  %v2626 = vmax.f32 %v2366, %v2622
  %2627 = vst.msk [vmem:[%s3 + $0xc4] sm:$0xff] %vm2427, %v2625
  %2628 = vst.msk [vmem:[%s3 + $0xcc] sm:$0x3f] %vm2429, %v2626
  %v2631 = vrot.slane %v2370, 6
  %v2632 = vrot.slane %v2371, 6
  %v2633 = vsel %vm2417, %v2631, %v2632
  %v2637 = vmax.f32 %v2368, %v2631
  %v2638 = vmax.f32 %v2369, %v2633
  %v2639 = vmax.f32 %v2370, %v2632
  %2640 = vst.msk [vmem:[%s3 + $0xce] sm:$0xf0] %vm2442, %v2637
  %2641 = vst.msk [vmem:[%s3 + $0xd6] sm:$0xff] %vm2427, %v2638
  %2642 = vst.msk [vmem:[%s3 + $0xde] sm:$0x3] %vm2445, %v2639
  %v2646 = vrot.slane %v2373, 6
  %v2647 = vrot.slane %v2374, 6
  %v2648 = vsel %vm2417, %v2646, %v2647
  %v2649 = vrot.slane %v2375, 6
  %v2650 = vsel %vm2417, %v2647, %v2649
  %v2653 = vmax.f32 %v2372, %v2648
  %v2654 = vmax.f32 %v2373, %v2650
  %2655 = vst.msk [vmem:[%s3 + $0xe0] sm:$0xff] %vm2427, %v2653
  %2656 = vst.msk [vmem:[%s3 + $0xe8] sm:$0x3f] %vm2429, %v2654
  %v2659 = vrot.slane %v2377, 6
  %v2660 = vrot.slane %v2378, 6
  %v2661 = vsel %vm2417, %v2659, %v2660
  %v2665 = vmax.f32 %v2375, %v2659
  %v2666 = vmax.f32 %v2376, %v2661
  %v2667 = vmax.f32 %v2377, %v2660
  %2668 = vst.msk [vmem:[%s3 + $0xea] sm:$0xf0] %vm2442, %v2665
  %2669 = vst.msk [vmem:[%s3 + $0xf2] sm:$0xff] %vm2427, %v2666
  %2670 = vst.msk [vmem:[%s3 + $0xfa] sm:$0x3] %vm2445, %v2667
  %v2674 = vrot.slane %v2380, 6
  %v2675 = vrot.slane %v2381, 6
  %v2676 = vsel %vm2417, %v2674, %v2675
  %v2677 = vrot.slane %v2382, 6
  %v2678 = vsel %vm2417, %v2675, %v2677
  %v2681 = vmax.f32 %v2379, %v2676
  %v2682 = vmax.f32 %v2380, %v2678
  %2683 = vst.msk [vmem:[%s3 + $0xfc] sm:$0xff] %vm2427, %v2681
  %2684 = vst.msk [vmem:[%s3 + $0x104] sm:$0x3f] %vm2429, %v2682
  %v2687 = vrot.slane %v2384, 6
  %v2688 = vrot.slane %v2385, 6
  %v2689 = vsel %vm2417, %v2687, %v2688
  %v2693 = vmax.f32 %v2382, %v2687
  %v2694 = vmax.f32 %v2383, %v2689
  %v2695 = vmax.f32 %v2384, %v2688
  %2696 = vst.msk [vmem:[%s3 + $0x106] sm:$0xf0] %vm2442, %v2693
  %2697 = vst.msk [vmem:[%s3 + $0x10e] sm:$0xff] %vm2427, %v2694
  %2698 = vst.msk [vmem:[%s3 + $0x116] sm:$0x3] %vm2445, %v2695
  %v2702 = vrot.slane %v2387, 6
  %v2703 = vrot.slane %v2388, 6
  %v2704 = vsel %vm2417, %v2702, %v2703
  %v2705 = vrot.slane %v2389, 6
  %v2706 = vsel %vm2417, %v2703, %v2705
  %v2709 = vmax.f32 %v2386, %v2704
  %v2710 = vmax.f32 %v2387, %v2706
  %2711 = vst.msk [vmem:[%s3 + $0x118] sm:$0xff] %vm2427, %v2709
  %2712 = vst.msk [vmem:[%s3 + $0x120] sm:$0x3f] %vm2429, %v2710
  %v2715 = vrot.slane %v2391, 6
  %v2716 = vrot.slane %v2392, 6
  %v2717 = vsel %vm2417, %v2715, %v2716
  %v2721 = vmax.f32 %v2389, %v2715
  %v2722 = vmax.f32 %v2390, %v2717
  %v2723 = vmax.f32 %v2391, %v2716
  %2724 = vst.msk [vmem:[%s3 + $0x122] sm:$0xf0] %vm2442, %v2721
  %2725 = vst.msk [vmem:[%s3 + $0x12a] sm:$0xff] %vm2427, %v2722
  %2726 = vst.msk [vmem:[%s3 + $0x132] sm:$0x3] %vm2445, %v2723
  %v2730 = vrot.slane %v2394, 6
  %v2731 = vrot.slane %v2395, 6
  %v2732 = vsel %vm2417, %v2730, %v2731
  %v2733 = vrot.slane %v2396, 6
  %v2734 = vsel %vm2417, %v2731, %v2733
  %v2737 = vmax.f32 %v2393, %v2732
  %v2738 = vmax.f32 %v2394, %v2734
  %2739 = vst.msk [vmem:[%s3 + $0x134] sm:$0xff] %vm2427, %v2737
  %2740 = vst.msk [vmem:[%s3 + $0x13c] sm:$0x3f] %vm2429, %v2738
  %v2743 = vrot.slane %v2398, 6
  %v2744 = vrot.slane %v2399, 6
  %v2745 = vsel %vm2417, %v2743, %v2744
  %v2749 = vmax.f32 %v2396, %v2743
  %v2750 = vmax.f32 %v2397, %v2745
  %v2751 = vmax.f32 %v2398, %v2744
  %2752 = vst.msk [vmem:[%s3 + $0x13e] sm:$0xf0] %vm2442, %v2749
  %2753 = vst.msk [vmem:[%s3 + $0x146] sm:$0xff] %vm2427, %v2750
  %2754 = vst.msk [vmem:[%s3 + $0x14e] sm:$0x3] %vm2445, %v2751
  %v2758 = vrot.slane %v2401, 6
  %v2759 = vrot.slane %v2402, 6
  %v2760 = vsel %vm2417, %v2758, %v2759
  %v2761 = vrot.slane %v2403, 6
  %v2762 = vsel %vm2417, %v2759, %v2761
  %v2765 = vmax.f32 %v2400, %v2760
  %v2766 = vmax.f32 %v2401, %v2762
  %2767 = vst.msk [vmem:[%s3 + $0x150] sm:$0xff] %vm2427, %v2765
  %2768 = vst.msk [vmem:[%s3 + $0x158] sm:$0x3f] %vm2429, %v2766
  %v2771 = vrot.slane %v2405, 6
  %v2772 = vrot.slane %v2406, 6
  %v2773 = vsel %vm2417, %v2771, %v2772
  %v2777 = vmax.f32 %v2403, %v2771
  %v2778 = vmax.f32 %v2404, %v2773
  %v2779 = vmax.f32 %v2405, %v2772
  %2780 = vst.msk [vmem:[%s3 + $0x15a] sm:$0xf0] %vm2442, %v2777
  %2781 = vst.msk [vmem:[%s3 + $0x162] sm:$0xff] %vm2427, %v2778
  %2782 = vst.msk [vmem:[%s3 + $0x16a] sm:$0x3] %vm2445, %v2779
  %v2786 = vrot.slane %v2408, 6
  %v2787 = vrot.slane %v2409, 6
  %v2788 = vsel %vm2417, %v2786, %v2787
  %v2789 = vrot.slane %v2410, 6
  %v2790 = vsel %vm2417, %v2787, %v2789
  %v2793 = vmax.f32 %v2407, %v2788
  %v2794 = vmax.f32 %v2408, %v2790
  %2795 = vst.msk [vmem:[%s3 + $0x16c] sm:$0xff] %vm2427, %v2793
  %2796 = vst.msk [vmem:[%s3 + $0x174] sm:$0x3f] %vm2429, %v2794
  %v2799 = vrot.slane %v2412, 6
  %v2800 = vrot.slane %v2413, 6
  %v2801 = vsel %vm2417, %v2799, %v2800
  %v2805 = vmax.f32 %v2410, %v2799
  %v2806 = vmax.f32 %v2411, %v2801
  %v2807 = vmax.f32 %v2412, %v2800
  %2808 = vst.msk [vmem:[%s3 + $0x176] sm:$0xf0] %vm2442, %v2805
  %2809 = vst.msk [vmem:[%s3 + $0x17e] sm:$0xff] %vm2427, %v2806
  %2810 = vst.msk [vmem:[%s3 + $0x186] sm:$0x3] %vm2445, %v2807
  // Predicated region
  $region14: #{combined_model_forward.2} parent=0 // pred_check
    _
  $region15: #{combined_model_forward.2} parent=0 // pred_check_branch
    %2812 = sbr.rel (0) target = $region17
  $region16: #{combined_model_forward.2} parent=0 // pred_region
    _
  $region17: #{combined_model_forward.2} parent=0 // pred_fallthru
    _
  // Predicated region
  $region18: #{combined_model_forward.2} parent=0 // pred_check
    _
  $region19: #{combined_model_forward.2} parent=0 // pred_check_branch
    %2814 = sbr.rel (0) target = $region21
  $region20: #{combined_model_forward.2} parent=0 // pred_region
    _
  $region21: #{combined_model_forward.2} parent=0 // pred_fallthru
    _

// kernel: combined_model_forward.3
$region0: #{combined_model_forward.3}
  #allocation0 [shape = 'u32[]', space=smem, size = 0x4, offset = 0x4, fixed_abs, tag = 'smem constant byte address 0x4 - core index']
  #allocation1 [shape = 'u32[144,128]{1,0:T(1,128)}', space=vmem, size = 0x12000, scoped, tag = 'internal scratch']
  %s0 = inlined_call_operand.vmem [shape: f32[2,6272], index: 0, kind: input, shape index: {}]
  %s1 = inlined_call_operand.vmem [shape: bf16[6272,128], index: 1, kind: input, shape index: {}]
  %s2 = inlined_call_operand.vmem [shape: f32[1,128], index: 2, kind: input, shape index: {}]
  %s3 = inlined_call_operand.vmem [shape: f32[128,10], index: 3, kind: input, shape index: {}]
  %s4 = inlined_call_operand.vmem [shape: f32[1,10], index: 4, kind: input, shape index: {}]
  %s5 = inlined_call_operand.hbm [shape: f32[2,10], index: 5, kind: output, shape index: {}]
  %s6 = sld [smem:[#allocation0]]
  $region30: #{combined_model_forward.3} parent=0
    _
  %s8 = ssub.s32 1, %s6
  %s9 = scalar_select 0, %s8, %s6
  $region1: #{combined_model_forward.3} parent=0
    #allocation2 [shape = 'u8[1024]{0}', space=vmem, size = 0x400, scoped, tag = 'output window, operand 0, single buffered']
    #allocation3 [shape = 's32[1]{0}', space=sflag, size = 0x4, scoped, tag = 'scoped memory for combined_model_forward.3']
    %10 = vsyncpa [#allocation3], 0
    // Predicated region
    $region2: #{combined_model_forward.3} parent=1 // pred_check
      _
    $region3: #{combined_model_forward.3} parent=1 // pred_check_branch
      %12 = sbr.rel (0) target = $region5
    $region4: #{combined_model_forward.3} parent=1 // pred_region
      _
    $region5: #{combined_model_forward.3} parent=1 // pred_fallthru
      _
    // Predicated region
    $region6: #{combined_model_forward.3} parent=1 // pred_check
      _
    $region7: #{combined_model_forward.3} parent=1 // pred_check_branch
      %14 = sbr.rel (0) target = $region9
    $region8: #{combined_model_forward.3} parent=1 // pred_region
      _
    $region9: #{combined_model_forward.3} parent=1 // pred_fallthru
      _
    // Predicated region
    $region10: #{combined_model_forward.3} parent=1 // pred_check
      _
    $region11: #{combined_model_forward.3} parent=1 // pred_check_branch
      %16 = sbr.rel (0) target = $region13
    $region12: #{combined_model_forward.3} parent=1 // pred_region
      _
    $region13: #{combined_model_forward.3} parent=1 // pred_fallthru
      _
    // Predicated region
    $region14: #{combined_model_forward.3} parent=1 // pred_check
      _
    $region15: #{combined_model_forward.3} parent=1 // pred_check_branch
      %18 = sbr.rel (0) target = $region17
    $region16: #{combined_model_forward.3} parent=1 // pred_region
      _
    $region17: #{combined_model_forward.3} parent=1 // pred_fallthru
      _
    // Predicated region
    $region18: #{combined_model_forward.3} parent=1 // pred_check
      _
    $region19: #{combined_model_forward.3} parent=1 // pred_check_branch
      %20 = sbr.rel (0) target = $region21
    $region20: #{combined_model_forward.3} parent=1 // pred_region
      _
    $region21: #{combined_model_forward.3} parent=1 // pred_fallthru
      _
    %v22 = vld [vmem:[%s0] sm:$0xff]
    %v23 = vld [vmem:[%s0 + $0x8] sm:$0xff]
    %v24 = vld [vmem:[%s0 + $0x10] sm:$0xff]
    %v25 = vld [vmem:[%s0 + $0x18] sm:$0xff]
    %v26 = vld [vmem:[%s0 + $0x20] sm:$0xff]
    %v27 = vld [vmem:[%s0 + $0x28] sm:$0xff]
    %v28 = vld [vmem:[%s0 + $0x30] sm:$0xff]
    %v29 = vld [vmem:[%s0 + $0x38] sm:$0xff]
    %v30 = vld [vmem:[%s0 + $0x40] sm:$0xff]
    %v31 = vld [vmem:[%s0 + $0x48] sm:$0xff]
    %v32 = vld [vmem:[%s0 + $0x50] sm:$0xff]
    %v33 = vld [vmem:[%s0 + $0x58] sm:$0xff]
    %v34 = vld [vmem:[%s0 + $0x60] sm:$0x3]
    %v48 = vcombine.high %v22, %v22
    %v50 = vunpack.c.l.s4 1983009808
    %v51 = vunpack.c.0.s8 %v50
    %v52 = vlaneseq
    %v53 = vshrl.u32 %v52, 7
    %v54 = vsub.s32 %v51, %v53
    %v55 = vrot.slane %v22, %v54
    %v57 = vunpack.c.l.s4 1983009808
    %v58 = vunpack.c.0.s8 %v57
    %v59 = vlaneseq
    %v60 = vshrl.u32 %v59, 7
    %v61 = vsub.s32 %v58, %v60
    %v62 = vrot.slane %v48, %v61
    %v63 = vcombine.high %v55, %v55
    %v64 = vcombine.high %v62, %v62
    %v65 = vcombine.high %v23, %v23
    %v67 = vunpack.c.l.s4 1983009808
    %v68 = vunpack.c.0.s8 %v67
    %v69 = vlaneseq
    %v70 = vshrl.u32 %v69, 7
    %v71 = vsub.s32 %v68, %v70
    %v72 = vrot.slane %v23, %v71
    %v74 = vunpack.c.l.s4 1983009808
    %v75 = vunpack.c.0.s8 %v74
    %v76 = vlaneseq
    %v77 = vshrl.u32 %v76, 7
    %v78 = vsub.s32 %v75, %v77
    %v79 = vrot.slane %v65, %v78
    %v80 = vcombine.high %v72, %v72
    %v81 = vcombine.high %v79, %v79
    %v82 = vcombine.high %v24, %v24
    %v84 = vunpack.c.l.s4 1983009808
    %v85 = vunpack.c.0.s8 %v84
    %v86 = vlaneseq
    %v87 = vshrl.u32 %v86, 7
    %v88 = vsub.s32 %v85, %v87
    %v89 = vrot.slane %v24, %v88
    %v91 = vunpack.c.l.s4 1983009808
    %v92 = vunpack.c.0.s8 %v91
    %v93 = vlaneseq
    %v94 = vshrl.u32 %v93, 7
    %v95 = vsub.s32 %v92, %v94
    %v96 = vrot.slane %v82, %v95
    %v97 = vcombine.high %v89, %v89
    %v98 = vcombine.high %v96, %v96
    %v99 = vcombine.high %v25, %v25
    %v101 = vunpack.c.l.s4 1983009808
    %v102 = vunpack.c.0.s8 %v101
    %v103 = vlaneseq
    %v104 = vshrl.u32 %v103, 7
    %v105 = vsub.s32 %v102, %v104
    %v106 = vrot.slane %v25, %v105
    %v108 = vunpack.c.l.s4 1983009808
    %v109 = vunpack.c.0.s8 %v108
    %v110 = vlaneseq
    %v111 = vshrl.u32 %v110, 7
    %v112 = vsub.s32 %v109, %v111
    %v113 = vrot.slane %v99, %v112
    %v114 = vcombine.high %v106, %v106
    %v115 = vcombine.high %v113, %v113
    %v116 = vcombine.high %v26, %v26
    %v118 = vunpack.c.l.s4 1983009808
    %v119 = vunpack.c.0.s8 %v118
    %v120 = vlaneseq
    %v121 = vshrl.u32 %v120, 7
    %v122 = vsub.s32 %v119, %v121
    %v123 = vrot.slane %v26, %v122
    %v125 = vunpack.c.l.s4 1983009808
    %v126 = vunpack.c.0.s8 %v125
    %v127 = vlaneseq
    %v128 = vshrl.u32 %v127, 7
    %v129 = vsub.s32 %v126, %v128
    %v130 = vrot.slane %v116, %v129
    %v131 = vcombine.high %v123, %v123
    %v132 = vcombine.high %v130, %v130
    %v133 = vcombine.high %v27, %v27
    %v135 = vunpack.c.l.s4 1983009808
    %v136 = vunpack.c.0.s8 %v135
    %v137 = vlaneseq
    %v138 = vshrl.u32 %v137, 7
    %v139 = vsub.s32 %v136, %v138
    %v140 = vrot.slane %v27, %v139
    %v142 = vunpack.c.l.s4 1983009808
    %v143 = vunpack.c.0.s8 %v142
    %v144 = vlaneseq
    %v145 = vshrl.u32 %v144, 7
    %v146 = vsub.s32 %v143, %v145
    %v147 = vrot.slane %v133, %v146
    %v148 = vcombine.high %v140, %v140
    %v149 = vcombine.high %v147, %v147
    %v150 = vcombine.high %v28, %v28
    %v152 = vunpack.c.l.s4 1983009808
    %v153 = vunpack.c.0.s8 %v152
    %v154 = vlaneseq
    %v155 = vshrl.u32 %v154, 7
    %v156 = vsub.s32 %v153, %v155
    %v157 = vrot.slane %v28, %v156
    %v159 = vunpack.c.l.s4 1983009808
    %v160 = vunpack.c.0.s8 %v159
    %v161 = vlaneseq
    %v162 = vshrl.u32 %v161, 7
    %v163 = vsub.s32 %v160, %v162
    %v164 = vrot.slane %v150, %v163
    %v165 = vcombine.high %v157, %v157
    %v166 = vcombine.high %v164, %v164
    %v167 = vcombine.high %v29, %v29
    %v169 = vunpack.c.l.s4 1983009808
    %v170 = vunpack.c.0.s8 %v169
    %v171 = vlaneseq
    %v172 = vshrl.u32 %v171, 7
    %v173 = vsub.s32 %v170, %v172
    %v174 = vrot.slane %v29, %v173
    %v176 = vunpack.c.l.s4 1983009808
    %v177 = vunpack.c.0.s8 %v176
    %v178 = vlaneseq
    %v179 = vshrl.u32 %v178, 7
    %v180 = vsub.s32 %v177, %v179
    %v181 = vrot.slane %v167, %v180
    %v182 = vcombine.high %v174, %v174
    %v183 = vcombine.high %v181, %v181
    %v184 = vcombine.high %v30, %v30
    %v186 = vunpack.c.l.s4 1983009808
    %v187 = vunpack.c.0.s8 %v186
    %v188 = vlaneseq
    %v189 = vshrl.u32 %v188, 7
    %v190 = vsub.s32 %v187, %v189
    %v191 = vrot.slane %v30, %v190
    %v193 = vunpack.c.l.s4 1983009808
    %v194 = vunpack.c.0.s8 %v193
    %v195 = vlaneseq
    %v196 = vshrl.u32 %v195, 7
    %v197 = vsub.s32 %v194, %v196
    %v198 = vrot.slane %v184, %v197
    %v199 = vcombine.high %v191, %v191
    %v200 = vcombine.high %v198, %v198
    %v201 = vcombine.high %v31, %v31
    %v203 = vunpack.c.l.s4 1983009808
    %v204 = vunpack.c.0.s8 %v203
    %v205 = vlaneseq
    %v206 = vshrl.u32 %v205, 7
    %v207 = vsub.s32 %v204, %v206
    %v208 = vrot.slane %v31, %v207
    %v210 = vunpack.c.l.s4 1983009808
    %v211 = vunpack.c.0.s8 %v210
    %v212 = vlaneseq
    %v213 = vshrl.u32 %v212, 7
    %v214 = vsub.s32 %v211, %v213
    %v215 = vrot.slane %v201, %v214
    %v216 = vcombine.high %v208, %v208
    %v217 = vcombine.high %v215, %v215
    %v218 = vcombine.high %v32, %v32
    %v220 = vunpack.c.l.s4 1983009808
    %v221 = vunpack.c.0.s8 %v220
    %v222 = vlaneseq
    %v223 = vshrl.u32 %v222, 7
    %v224 = vsub.s32 %v221, %v223
    %v225 = vrot.slane %v32, %v224
    %v227 = vunpack.c.l.s4 1983009808
    %v228 = vunpack.c.0.s8 %v227
    %v229 = vlaneseq
    %v230 = vshrl.u32 %v229, 7
    %v231 = vsub.s32 %v228, %v230
    %v232 = vrot.slane %v218, %v231
    %v233 = vcombine.high %v225, %v225
    %v234 = vcombine.high %v232, %v232
    %v235 = vcombine.high %v33, %v33
    %v237 = vunpack.c.l.s4 1983009808
    %v238 = vunpack.c.0.s8 %v237
    %v239 = vlaneseq
    %v240 = vshrl.u32 %v239, 7
    %v241 = vsub.s32 %v238, %v240
    %v242 = vrot.slane %v33, %v241
    %v244 = vunpack.c.l.s4 1983009808
    %v245 = vunpack.c.0.s8 %v244
    %v246 = vlaneseq
    %v247 = vshrl.u32 %v246, 7
    %v248 = vsub.s32 %v245, %v247
    %v249 = vrot.slane %v235, %v248
    %v250 = vcombine.high %v242, %v242
    %v251 = vcombine.high %v249, %v249
    %v253 = vunpack.c.l.s4 1983009808
    %v254 = vunpack.c.0.s8 %v253
    %v255 = vlaneseq
    %v256 = vshrl.u32 %v255, 7
    %v257 = vsub.s32 %v254, %v256
    %v258 = vrot.slane %v34, %v257
    %v308 = vpack.c.bf16 %v55, %v55
    %v309 = vpack.c.bf16 %v63, %v63
    %v310 = vpack.c.bf16 %v62, %v62
    %v311 = vpack.c.bf16 %v64, %v64
    %v312 = vpack.c.bf16 %v72, %v72
    %v313 = vpack.c.bf16 %v80, %v80
    %v314 = vpack.c.bf16 %v79, %v79
    %v315 = vpack.c.bf16 %v81, %v81
    %v316 = vpack.c.bf16 %v89, %v89
    %v317 = vpack.c.bf16 %v97, %v97
    %v318 = vpack.c.bf16 %v96, %v96
    %v319 = vpack.c.bf16 %v98, %v98
    %v320 = vpack.c.bf16 %v106, %v106
    %v321 = vpack.c.bf16 %v114, %v114
    %v322 = vpack.c.bf16 %v113, %v113
    %v323 = vpack.c.bf16 %v115, %v115
    %v324 = vpack.c.bf16 %v123, %v123
    %v325 = vpack.c.bf16 %v131, %v131
    %v326 = vpack.c.bf16 %v130, %v130
    %v327 = vpack.c.bf16 %v132, %v132
    %v328 = vpack.c.bf16 %v140, %v140
    %v329 = vpack.c.bf16 %v148, %v148
    %v330 = vpack.c.bf16 %v147, %v147
    %v331 = vpack.c.bf16 %v149, %v149
    %v332 = vpack.c.bf16 %v157, %v157
    %v333 = vpack.c.bf16 %v165, %v165
    %v334 = vpack.c.bf16 %v164, %v164
    %v335 = vpack.c.bf16 %v166, %v166
    %v336 = vpack.c.bf16 %v174, %v174
    %v337 = vpack.c.bf16 %v182, %v182
    %v338 = vpack.c.bf16 %v181, %v181
    %v339 = vpack.c.bf16 %v183, %v183
    %v340 = vpack.c.bf16 %v191, %v191
    %v341 = vpack.c.bf16 %v199, %v199
    %v342 = vpack.c.bf16 %v198, %v198
    %v343 = vpack.c.bf16 %v200, %v200
    %v344 = vpack.c.bf16 %v208, %v208
    %v345 = vpack.c.bf16 %v216, %v216
    %v346 = vpack.c.bf16 %v215, %v215
    %v347 = vpack.c.bf16 %v217, %v217
    %v348 = vpack.c.bf16 %v225, %v225
    %v349 = vpack.c.bf16 %v233, %v233
    %v350 = vpack.c.bf16 %v232, %v232
    %v351 = vpack.c.bf16 %v234, %v234
    %v352 = vpack.c.bf16 %v242, %v242
    %v353 = vpack.c.bf16 %v250, %v250
    %v354 = vpack.c.bf16 %v249, %v249
    %v355 = vpack.c.bf16 %v251, %v251
    %v356 = vpack.c.bf16 %v258, %v258
    %v357 = vld [vmem:[%s1] sm:$0xf]
    %v358 = vld [vmem:[%s1 + $0x4] sm:$0xf]
    %v359 = vld [vmem:[%s1 + $0x8] sm:$0xf]
    %v360 = vld [vmem:[%s1 + $0xc] sm:$0xf]
    %v361 = vld [vmem:[%s1 + $0x10] sm:$0xf]
    %v362 = vld [vmem:[%s1 + $0x14] sm:$0xf]
    %v363 = vld [vmem:[%s1 + $0x18] sm:$0xf]
    %v364 = vld [vmem:[%s1 + $0x1c] sm:$0xf]
    %v365 = vld [vmem:[%s1 + $0x20] sm:$0xf]
    %v366 = vld [vmem:[%s1 + $0x24] sm:$0xf]
    %v367 = vld [vmem:[%s1 + $0x28] sm:$0xf]
    %v368 = vld [vmem:[%s1 + $0x2c] sm:$0xf]
    %v369 = vld [vmem:[%s1 + $0x30] sm:$0xf]
    %v370 = vld [vmem:[%s1 + $0x34] sm:$0xf]
    %v371 = vld [vmem:[%s1 + $0x38] sm:$0xf]
    %v372 = vld [vmem:[%s1 + $0x3c] sm:$0xf]
    %v373 = vld [vmem:[%s1 + $0x40] sm:$0xf]
    %v374 = vld [vmem:[%s1 + $0x44] sm:$0xf]
    %v375 = vld [vmem:[%s1 + $0x48] sm:$0xf]
    %v376 = vld [vmem:[%s1 + $0x4c] sm:$0xf]
    %v377 = vld [vmem:[%s1 + $0x50] sm:$0xf]
    %v378 = vld [vmem:[%s1 + $0x54] sm:$0xf]
    %v379 = vld [vmem:[%s1 + $0x58] sm:$0xf]
    %v380 = vld [vmem:[%s1 + $0x5c] sm:$0xf]
    %v381 = vld [vmem:[%s1 + $0x60] sm:$0xf]
    %v382 = vld [vmem:[%s1 + $0x64] sm:$0xf]
    %v383 = vld [vmem:[%s1 + $0x68] sm:$0xf]
    %v384 = vld [vmem:[%s1 + $0x6c] sm:$0xf]
    %v385 = vld [vmem:[%s1 + $0x70] sm:$0xf]
    %v386 = vld [vmem:[%s1 + $0x74] sm:$0xf]
    %v387 = vld [vmem:[%s1 + $0x78] sm:$0xf]
    %v388 = vld [vmem:[%s1 + $0x7c] sm:$0xf]
    %v389 = vld [vmem:[%s1 + $0x80] sm:$0xf]
    %v390 = vld [vmem:[%s1 + $0x84] sm:$0xf]
    %v391 = vld [vmem:[%s1 + $0x88] sm:$0xf]
    %v392 = vld [vmem:[%s1 + $0x8c] sm:$0xf]
    %v393 = vld [vmem:[%s1 + $0x90] sm:$0xf]
    %v394 = vld [vmem:[%s1 + $0x94] sm:$0xf]
    %v395 = vld [vmem:[%s1 + $0x98] sm:$0xf]
    %v396 = vld [vmem:[%s1 + $0x9c] sm:$0xf]
    %v397 = vld [vmem:[%s1 + $0xa0] sm:$0xf]
    %v398 = vld [vmem:[%s1 + $0xa4] sm:$0xf]
    %v399 = vld [vmem:[%s1 + $0xa8] sm:$0xf]
    %v400 = vld [vmem:[%s1 + $0xac] sm:$0xf]
    %v401 = vld [vmem:[%s1 + $0xb0] sm:$0xf]
    %v402 = vld [vmem:[%s1 + $0xb4] sm:$0xf]
    %v403 = vld [vmem:[%s1 + $0xb8] sm:$0xf]
    %v404 = vld [vmem:[%s1 + $0xbc] sm:$0xf]
    %v405 = vld [vmem:[%s1 + $0xc0] sm:$0xf]
    %v406 = vld [vmem:[%s1 + $0xc4] sm:$0xf]
    %v407 = vld [vmem:[%s1 + $0xc8] sm:$0xf]
    %v408 = vld [vmem:[%s1 + $0xcc] sm:$0xf]
    %v409 = vld [vmem:[%s1 + $0xd0] sm:$0xf]
    %v410 = vld [vmem:[%s1 + $0xd4] sm:$0xf]
    %v411 = vld [vmem:[%s1 + $0xd8] sm:$0xf]
    %v412 = vld [vmem:[%s1 + $0xdc] sm:$0xf]
    %v413 = vld [vmem:[%s1 + $0xe0] sm:$0xf]
    %v414 = vld [vmem:[%s1 + $0xe4] sm:$0xf]
    %v415 = vld [vmem:[%s1 + $0xe8] sm:$0xf]
    %v416 = vld [vmem:[%s1 + $0xec] sm:$0xf]
    %v417 = vld [vmem:[%s1 + $0xf0] sm:$0xf]
    %v418 = vld [vmem:[%s1 + $0xf4] sm:$0xf]
    %v419 = vld [vmem:[%s1 + $0xf8] sm:$0xf]
    %v420 = vld [vmem:[%s1 + $0xfc] sm:$0xf]
    %v421 = vld [vmem:[%s1 + $0x100] sm:$0xf]
    %v422 = vld [vmem:[%s1 + $0x104] sm:$0xf]
    %v423 = vld [vmem:[%s1 + $0x108] sm:$0xf]
    %v424 = vld [vmem:[%s1 + $0x10c] sm:$0xf]
    %v425 = vld [vmem:[%s1 + $0x110] sm:$0xf]
    %v426 = vld [vmem:[%s1 + $0x114] sm:$0xf]
    %v427 = vld [vmem:[%s1 + $0x118] sm:$0xf]
    %v428 = vld [vmem:[%s1 + $0x11c] sm:$0xf]
    %v429 = vld [vmem:[%s1 + $0x120] sm:$0xf]
    %v430 = vld [vmem:[%s1 + $0x124] sm:$0xf]
    %v431 = vld [vmem:[%s1 + $0x128] sm:$0xf]
    %v432 = vld [vmem:[%s1 + $0x12c] sm:$0xf]
    %v433 = vld [vmem:[%s1 + $0x130] sm:$0xf]
    %v434 = vld [vmem:[%s1 + $0x134] sm:$0xf]
    %v435 = vld [vmem:[%s1 + $0x138] sm:$0xf]
    %v436 = vld [vmem:[%s1 + $0x13c] sm:$0xf]
    %v437 = vld [vmem:[%s1 + $0x140] sm:$0xf]
    %v438 = vld [vmem:[%s1 + $0x144] sm:$0xf]
    %v439 = vld [vmem:[%s1 + $0x148] sm:$0xf]
    %v440 = vld [vmem:[%s1 + $0x14c] sm:$0xf]
    %v441 = vld [vmem:[%s1 + $0x150] sm:$0xf]
    %v442 = vld [vmem:[%s1 + $0x154] sm:$0xf]
    %v443 = vld [vmem:[%s1 + $0x158] sm:$0xf]
    %v444 = vld [vmem:[%s1 + $0x15c] sm:$0xf]
    %v445 = vld [vmem:[%s1 + $0x160] sm:$0xf]
    %v446 = vld [vmem:[%s1 + $0x164] sm:$0xf]
    %v447 = vld [vmem:[%s1 + $0x168] sm:$0xf]
    %v448 = vld [vmem:[%s1 + $0x16c] sm:$0xf]
    %v449 = vld [vmem:[%s1 + $0x170] sm:$0xf]
    %v450 = vld [vmem:[%s1 + $0x174] sm:$0xf]
    %v451 = vld [vmem:[%s1 + $0x178] sm:$0xf]
    %v452 = vld [vmem:[%s1 + $0x17c] sm:$0xf]
    %v453 = vld [vmem:[%s1 + $0x180] sm:$0xf]
    %v454 = vld [vmem:[%s1 + $0x184] sm:$0xf]
    %v455 = vld [vmem:[%s1 + $0x188] sm:$0xf]
    %v456 = vld [vmem:[%s1 + $0x18c] sm:$0xf]
    %v457 = vld [vmem:[%s1 + $0x190] sm:$0xf]
    %v458 = vld [vmem:[%s1 + $0x194] sm:$0xf]
    %v459 = vld [vmem:[%s1 + $0x198] sm:$0xf]
    %v460 = vld [vmem:[%s1 + $0x19c] sm:$0xf]
    %v461 = vld [vmem:[%s1 + $0x1a0] sm:$0xf]
    %v462 = vld [vmem:[%s1 + $0x1a4] sm:$0xf]
    %v463 = vld [vmem:[%s1 + $0x1a8] sm:$0xf]
    %v464 = vld [vmem:[%s1 + $0x1ac] sm:$0xf]
    %v465 = vld [vmem:[%s1 + $0x1b0] sm:$0xf]
    %v466 = vld [vmem:[%s1 + $0x1b4] sm:$0xf]
    %v467 = vld [vmem:[%s1 + $0x1b8] sm:$0xf]
    %v468 = vld [vmem:[%s1 + $0x1bc] sm:$0xf]
    %v469 = vld [vmem:[%s1 + $0x1c0] sm:$0xf]
    %v470 = vld [vmem:[%s1 + $0x1c4] sm:$0xf]
    %v471 = vld [vmem:[%s1 + $0x1c8] sm:$0xf]
    %v472 = vld [vmem:[%s1 + $0x1cc] sm:$0xf]
    %v473 = vld [vmem:[%s1 + $0x1d0] sm:$0xf]
    %v474 = vld [vmem:[%s1 + $0x1d4] sm:$0xf]
    %v475 = vld [vmem:[%s1 + $0x1d8] sm:$0xf]
    %v476 = vld [vmem:[%s1 + $0x1dc] sm:$0xf]
    %v477 = vld [vmem:[%s1 + $0x1e0] sm:$0xf]
    %v478 = vld [vmem:[%s1 + $0x1e4] sm:$0xf]
    %v479 = vld [vmem:[%s1 + $0x1e8] sm:$0xf]
    %v480 = vld [vmem:[%s1 + $0x1ec] sm:$0xf]
    %v481 = vld [vmem:[%s1 + $0x1f0] sm:$0xf]
    %v482 = vld [vmem:[%s1 + $0x1f4] sm:$0xf]
    %v483 = vld [vmem:[%s1 + $0x1f8] sm:$0xf]
    %v484 = vld [vmem:[%s1 + $0x1fc] sm:$0xf]
    %v485 = vld [vmem:[%s1 + $0x200] sm:$0xf]
    %v486 = vld [vmem:[%s1 + $0x204] sm:$0xf]
    %v487 = vld [vmem:[%s1 + $0x208] sm:$0xf]
    %v488 = vld [vmem:[%s1 + $0x20c] sm:$0xf]
    %v489 = vld [vmem:[%s1 + $0x210] sm:$0xf]
    %v490 = vld [vmem:[%s1 + $0x214] sm:$0xf]
    %v491 = vld [vmem:[%s1 + $0x218] sm:$0xf]
    %v492 = vld [vmem:[%s1 + $0x21c] sm:$0xf]
    %v493 = vld [vmem:[%s1 + $0x220] sm:$0xf]
    %v494 = vld [vmem:[%s1 + $0x224] sm:$0xf]
    %v495 = vld [vmem:[%s1 + $0x228] sm:$0xf]
    %v496 = vld [vmem:[%s1 + $0x22c] sm:$0xf]
    %v497 = vld [vmem:[%s1 + $0x230] sm:$0xf]
    %v498 = vld [vmem:[%s1 + $0x234] sm:$0xf]
    %v499 = vld [vmem:[%s1 + $0x238] sm:$0xf]
    %v500 = vld [vmem:[%s1 + $0x23c] sm:$0xf]
    %v501 = vld [vmem:[%s1 + $0x240] sm:$0xf]
    %v502 = vld [vmem:[%s1 + $0x244] sm:$0xf]
    %v503 = vld [vmem:[%s1 + $0x248] sm:$0xf]
    %v504 = vld [vmem:[%s1 + $0x24c] sm:$0xf]
    %v505 = vld [vmem:[%s1 + $0x250] sm:$0xf]
    %v506 = vld [vmem:[%s1 + $0x254] sm:$0xf]
    %v507 = vld [vmem:[%s1 + $0x258] sm:$0xf]
    %v508 = vld [vmem:[%s1 + $0x25c] sm:$0xf]
    %v509 = vld [vmem:[%s1 + $0x260] sm:$0xf]
    %v510 = vld [vmem:[%s1 + $0x264] sm:$0xf]
    %v511 = vld [vmem:[%s1 + $0x268] sm:$0xf]
    %v512 = vld [vmem:[%s1 + $0x26c] sm:$0xf]
    %v513 = vld [vmem:[%s1 + $0x270] sm:$0xf]
    %v514 = vld [vmem:[%s1 + $0x274] sm:$0xf]
    %v515 = vld [vmem:[%s1 + $0x278] sm:$0xf]
    %v516 = vld [vmem:[%s1 + $0x27c] sm:$0xf]
    %v517 = vld [vmem:[%s1 + $0x280] sm:$0xf]
    %v518 = vld [vmem:[%s1 + $0x284] sm:$0xf]
    %v519 = vld [vmem:[%s1 + $0x288] sm:$0xf]
    %v520 = vld [vmem:[%s1 + $0x28c] sm:$0xf]
    %v521 = vld [vmem:[%s1 + $0x290] sm:$0xf]
    %v522 = vld [vmem:[%s1 + $0x294] sm:$0xf]
    %v523 = vld [vmem:[%s1 + $0x298] sm:$0xf]
    %v524 = vld [vmem:[%s1 + $0x29c] sm:$0xf]
    %v525 = vld [vmem:[%s1 + $0x2a0] sm:$0xf]
    %v526 = vld [vmem:[%s1 + $0x2a4] sm:$0xf]
    %v527 = vld [vmem:[%s1 + $0x2a8] sm:$0xf]
    %v528 = vld [vmem:[%s1 + $0x2ac] sm:$0xf]
    %v529 = vld [vmem:[%s1 + $0x2b0] sm:$0xf]
    %v530 = vld [vmem:[%s1 + $0x2b4] sm:$0xf]
    %v531 = vld [vmem:[%s1 + $0x2b8] sm:$0xf]
    %v532 = vld [vmem:[%s1 + $0x2bc] sm:$0xf]
    %v533 = vld [vmem:[%s1 + $0x2c0] sm:$0xf]
    %v534 = vld [vmem:[%s1 + $0x2c4] sm:$0xf]
    %v535 = vld [vmem:[%s1 + $0x2c8] sm:$0xf]
    %v536 = vld [vmem:[%s1 + $0x2cc] sm:$0xf]
    %v537 = vld [vmem:[%s1 + $0x2d0] sm:$0xf]
    %v538 = vld [vmem:[%s1 + $0x2d4] sm:$0xf]
    %v539 = vld [vmem:[%s1 + $0x2d8] sm:$0xf]
    %v540 = vld [vmem:[%s1 + $0x2dc] sm:$0xf]
    %v541 = vld [vmem:[%s1 + $0x2e0] sm:$0xf]
    %v542 = vld [vmem:[%s1 + $0x2e4] sm:$0xf]
    %v543 = vld [vmem:[%s1 + $0x2e8] sm:$0xf]
    %v544 = vld [vmem:[%s1 + $0x2ec] sm:$0xf]
    %v545 = vld [vmem:[%s1 + $0x2f0] sm:$0xf]
    %v546 = vld [vmem:[%s1 + $0x2f4] sm:$0xf]
    %v547 = vld [vmem:[%s1 + $0x2f8] sm:$0xf]
    %v548 = vld [vmem:[%s1 + $0x2fc] sm:$0xf]
    %v549 = vld [vmem:[%s1 + $0x300] sm:$0xf]
    %v550 = vld [vmem:[%s1 + $0x304] sm:$0xf]
    %v551 = vld [vmem:[%s1 + $0x308] sm:$0xf]
    %v552 = vld [vmem:[%s1 + $0x30c] sm:$0xf]
    %v553 = vld [vmem:[%s1 + $0x310] sm:$0xf]
    %v554 = vld [vmem:[%s1 + $0x314] sm:$0xf]
    %v555 = vld [vmem:[%s1 + $0x318] sm:$0xf]
    %v556 = vld [vmem:[%s1 + $0x31c] sm:$0xf]
    %v557 = vld [vmem:[%s1 + $0x320] sm:$0xf]
    %v558 = vld [vmem:[%s1 + $0x324] sm:$0xf]
    %v559 = vld [vmem:[%s1 + $0x328] sm:$0xf]
    %v560 = vld [vmem:[%s1 + $0x32c] sm:$0xf]
    %v561 = vld [vmem:[%s1 + $0x330] sm:$0xf]
    %v562 = vld [vmem:[%s1 + $0x334] sm:$0xf]
    %v563 = vld [vmem:[%s1 + $0x338] sm:$0xf]
    %v564 = vld [vmem:[%s1 + $0x33c] sm:$0xf]
    %v565 = vld [vmem:[%s1 + $0x340] sm:$0xf]
    %v566 = vld [vmem:[%s1 + $0x344] sm:$0xf]
    %v567 = vld [vmem:[%s1 + $0x348] sm:$0xf]
    %v568 = vld [vmem:[%s1 + $0x34c] sm:$0xf]
    %v569 = vld [vmem:[%s1 + $0x350] sm:$0xf]
    %v570 = vld [vmem:[%s1 + $0x354] sm:$0xf]
    %v571 = vld [vmem:[%s1 + $0x358] sm:$0xf]
    %v572 = vld [vmem:[%s1 + $0x35c] sm:$0xf]
    %v573 = vld [vmem:[%s1 + $0x360] sm:$0xf]
    %v574 = vld [vmem:[%s1 + $0x364] sm:$0xf]
    %v575 = vld [vmem:[%s1 + $0x368] sm:$0xf]
    %v576 = vld [vmem:[%s1 + $0x36c] sm:$0xf]
    %v577 = vld [vmem:[%s1 + $0x370] sm:$0xf]
    %v578 = vld [vmem:[%s1 + $0x374] sm:$0xf]
    %v579 = vld [vmem:[%s1 + $0x378] sm:$0xf]
    %v580 = vld [vmem:[%s1 + $0x37c] sm:$0xf]
    %v581 = vld [vmem:[%s1 + $0x380] sm:$0xf]
    %v582 = vld [vmem:[%s1 + $0x384] sm:$0xf]
    %v583 = vld [vmem:[%s1 + $0x388] sm:$0xf]
    %v584 = vld [vmem:[%s1 + $0x38c] sm:$0xf]
    %v585 = vld [vmem:[%s1 + $0x390] sm:$0xf]
    %v586 = vld [vmem:[%s1 + $0x394] sm:$0xf]
    %v587 = vld [vmem:[%s1 + $0x398] sm:$0xf]
    %v588 = vld [vmem:[%s1 + $0x39c] sm:$0xf]
    %v589 = vld [vmem:[%s1 + $0x3a0] sm:$0xf]
    %v590 = vld [vmem:[%s1 + $0x3a4] sm:$0xf]
    %v591 = vld [vmem:[%s1 + $0x3a8] sm:$0xf]
    %v592 = vld [vmem:[%s1 + $0x3ac] sm:$0xf]
    %v593 = vld [vmem:[%s1 + $0x3b0] sm:$0xf]
    %v594 = vld [vmem:[%s1 + $0x3b4] sm:$0xf]
    %v595 = vld [vmem:[%s1 + $0x3b8] sm:$0xf]
    %v596 = vld [vmem:[%s1 + $0x3bc] sm:$0xf]
    %v597 = vld [vmem:[%s1 + $0x3c0] sm:$0xf]
    %v598 = vld [vmem:[%s1 + $0x3c4] sm:$0xf]
    %v599 = vld [vmem:[%s1 + $0x3c8] sm:$0xf]
    %v600 = vld [vmem:[%s1 + $0x3cc] sm:$0xf]
    %v601 = vld [vmem:[%s1 + $0x3d0] sm:$0xf]
    %v602 = vld [vmem:[%s1 + $0x3d4] sm:$0xf]
    %v603 = vld [vmem:[%s1 + $0x3d8] sm:$0xf]
    %v604 = vld [vmem:[%s1 + $0x3dc] sm:$0xf]
    %v605 = vld [vmem:[%s1 + $0x3e0] sm:$0xf]
    %v606 = vld [vmem:[%s1 + $0x3e4] sm:$0xf]
    %v607 = vld [vmem:[%s1 + $0x3e8] sm:$0xf]
    %v608 = vld [vmem:[%s1 + $0x3ec] sm:$0xf]
    %v609 = vld [vmem:[%s1 + $0x3f0] sm:$0xf]
    %v610 = vld [vmem:[%s1 + $0x3f4] sm:$0xf]
    %v611 = vld [vmem:[%s1 + $0x3f8] sm:$0xf]
    %v612 = vld [vmem:[%s1 + $0x3fc] sm:$0xf]
    %v613 = vld [vmem:[%s1 + $0x400] sm:$0xf]
    %v614 = vld [vmem:[%s1 + $0x404] sm:$0xf]
    %v615 = vld [vmem:[%s1 + $0x408] sm:$0xf]
    %v616 = vld [vmem:[%s1 + $0x40c] sm:$0xf]
    %v617 = vld [vmem:[%s1 + $0x410] sm:$0xf]
    %v618 = vld [vmem:[%s1 + $0x414] sm:$0xf]
    %v619 = vld [vmem:[%s1 + $0x418] sm:$0xf]
    %v620 = vld [vmem:[%s1 + $0x41c] sm:$0xf]
    %v621 = vld [vmem:[%s1 + $0x420] sm:$0xf]
    %v622 = vld [vmem:[%s1 + $0x424] sm:$0xf]
    %v623 = vld [vmem:[%s1 + $0x428] sm:$0xf]
    %v624 = vld [vmem:[%s1 + $0x42c] sm:$0xf]
    %v625 = vld [vmem:[%s1 + $0x430] sm:$0xf]
    %v626 = vld [vmem:[%s1 + $0x434] sm:$0xf]
    %v627 = vld [vmem:[%s1 + $0x438] sm:$0xf]
    %v628 = vld [vmem:[%s1 + $0x43c] sm:$0xf]
    %v629 = vld [vmem:[%s1 + $0x440] sm:$0xf]
    %v630 = vld [vmem:[%s1 + $0x444] sm:$0xf]
    %v631 = vld [vmem:[%s1 + $0x448] sm:$0xf]
    %v632 = vld [vmem:[%s1 + $0x44c] sm:$0xf]
    %v633 = vld [vmem:[%s1 + $0x450] sm:$0xf]
    %v634 = vld [vmem:[%s1 + $0x454] sm:$0xf]
    %v635 = vld [vmem:[%s1 + $0x458] sm:$0xf]
    %v636 = vld [vmem:[%s1 + $0x45c] sm:$0xf]
    %v637 = vld [vmem:[%s1 + $0x460] sm:$0xf]
    %v638 = vld [vmem:[%s1 + $0x464] sm:$0xf]
    %v639 = vld [vmem:[%s1 + $0x468] sm:$0xf]
    %v640 = vld [vmem:[%s1 + $0x46c] sm:$0xf]
    %v641 = vld [vmem:[%s1 + $0x470] sm:$0xf]
    %v642 = vld [vmem:[%s1 + $0x474] sm:$0xf]
    %v643 = vld [vmem:[%s1 + $0x478] sm:$0xf]
    %v644 = vld [vmem:[%s1 + $0x47c] sm:$0xf]
    %v645 = vld [vmem:[%s1 + $0x480] sm:$0xf]
    %v646 = vld [vmem:[%s1 + $0x484] sm:$0xf]
    %v647 = vld [vmem:[%s1 + $0x488] sm:$0xf]
    %v648 = vld [vmem:[%s1 + $0x48c] sm:$0xf]
    %v649 = vld [vmem:[%s1 + $0x490] sm:$0xf]
    %v650 = vld [vmem:[%s1 + $0x494] sm:$0xf]
    %v651 = vld [vmem:[%s1 + $0x498] sm:$0xf]
    %v652 = vld [vmem:[%s1 + $0x49c] sm:$0xf]
    %v653 = vld [vmem:[%s1 + $0x4a0] sm:$0xf]
    %v654 = vld [vmem:[%s1 + $0x4a4] sm:$0xf]
    %v655 = vld [vmem:[%s1 + $0x4a8] sm:$0xf]
    %v656 = vld [vmem:[%s1 + $0x4ac] sm:$0xf]
    %v657 = vld [vmem:[%s1 + $0x4b0] sm:$0xf]
    %v658 = vld [vmem:[%s1 + $0x4b4] sm:$0xf]
    %v659 = vld [vmem:[%s1 + $0x4b8] sm:$0xf]
    %v660 = vld [vmem:[%s1 + $0x4bc] sm:$0xf]
    %v661 = vld [vmem:[%s1 + $0x4c0] sm:$0xf]
    %v662 = vld [vmem:[%s1 + $0x4c4] sm:$0xf]
    %v663 = vld [vmem:[%s1 + $0x4c8] sm:$0xf]
    %v664 = vld [vmem:[%s1 + $0x4cc] sm:$0xf]
    %v665 = vld [vmem:[%s1 + $0x4d0] sm:$0xf]
    %v666 = vld [vmem:[%s1 + $0x4d4] sm:$0xf]
    %v667 = vld [vmem:[%s1 + $0x4d8] sm:$0xf]
    %v668 = vld [vmem:[%s1 + $0x4dc] sm:$0xf]
    %v669 = vld [vmem:[%s1 + $0x4e0] sm:$0xf]
    %v670 = vld [vmem:[%s1 + $0x4e4] sm:$0xf]
    %v671 = vld [vmem:[%s1 + $0x4e8] sm:$0xf]
    %v672 = vld [vmem:[%s1 + $0x4ec] sm:$0xf]
    %v673 = vld [vmem:[%s1 + $0x4f0] sm:$0xf]
    %v674 = vld [vmem:[%s1 + $0x4f4] sm:$0xf]
    %v675 = vld [vmem:[%s1 + $0x4f8] sm:$0xf]
    %v676 = vld [vmem:[%s1 + $0x4fc] sm:$0xf]
    %v677 = vld [vmem:[%s1 + $0x500] sm:$0xf]
    %v678 = vld [vmem:[%s1 + $0x504] sm:$0xf]
    %v679 = vld [vmem:[%s1 + $0x508] sm:$0xf]
    %v680 = vld [vmem:[%s1 + $0x50c] sm:$0xf]
    %v681 = vld [vmem:[%s1 + $0x510] sm:$0xf]
    %v682 = vld [vmem:[%s1 + $0x514] sm:$0xf]
    %v683 = vld [vmem:[%s1 + $0x518] sm:$0xf]
    %v684 = vld [vmem:[%s1 + $0x51c] sm:$0xf]
    %v685 = vld [vmem:[%s1 + $0x520] sm:$0xf]
    %v686 = vld [vmem:[%s1 + $0x524] sm:$0xf]
    %v687 = vld [vmem:[%s1 + $0x528] sm:$0xf]
    %v688 = vld [vmem:[%s1 + $0x52c] sm:$0xf]
    %v689 = vld [vmem:[%s1 + $0x530] sm:$0xf]
    %v690 = vld [vmem:[%s1 + $0x534] sm:$0xf]
    %v691 = vld [vmem:[%s1 + $0x538] sm:$0xf]
    %v692 = vld [vmem:[%s1 + $0x53c] sm:$0xf]
    %v693 = vld [vmem:[%s1 + $0x540] sm:$0xf]
    %v694 = vld [vmem:[%s1 + $0x544] sm:$0xf]
    %v695 = vld [vmem:[%s1 + $0x548] sm:$0xf]
    %v696 = vld [vmem:[%s1 + $0x54c] sm:$0xf]
    %v697 = vld [vmem:[%s1 + $0x550] sm:$0xf]
    %v698 = vld [vmem:[%s1 + $0x554] sm:$0xf]
    %v699 = vld [vmem:[%s1 + $0x558] sm:$0xf]
    %v700 = vld [vmem:[%s1 + $0x55c] sm:$0xf]
    %v701 = vld [vmem:[%s1 + $0x560] sm:$0xf]
    %v702 = vld [vmem:[%s1 + $0x564] sm:$0xf]
    %v703 = vld [vmem:[%s1 + $0x568] sm:$0xf]
    %v704 = vld [vmem:[%s1 + $0x56c] sm:$0xf]
    %v705 = vld [vmem:[%s1 + $0x570] sm:$0xf]
    %v706 = vld [vmem:[%s1 + $0x574] sm:$0xf]
    %v707 = vld [vmem:[%s1 + $0x578] sm:$0xf]
    %v708 = vld [vmem:[%s1 + $0x57c] sm:$0xf]
    %v709 = vld [vmem:[%s1 + $0x580] sm:$0xf]
    %v710 = vld [vmem:[%s1 + $0x584] sm:$0xf]
    %v711 = vld [vmem:[%s1 + $0x588] sm:$0xf]
    %v712 = vld [vmem:[%s1 + $0x58c] sm:$0xf]
    %v713 = vld [vmem:[%s1 + $0x590] sm:$0xf]
    %v714 = vld [vmem:[%s1 + $0x594] sm:$0xf]
    %v715 = vld [vmem:[%s1 + $0x598] sm:$0xf]
    %v716 = vld [vmem:[%s1 + $0x59c] sm:$0xf]
    %v717 = vld [vmem:[%s1 + $0x5a0] sm:$0xf]
    %v718 = vld [vmem:[%s1 + $0x5a4] sm:$0xf]
    %v719 = vld [vmem:[%s1 + $0x5a8] sm:$0xf]
    %v720 = vld [vmem:[%s1 + $0x5ac] sm:$0xf]
    %v721 = vld [vmem:[%s1 + $0x5b0] sm:$0xf]
    %v722 = vld [vmem:[%s1 + $0x5b4] sm:$0xf]
    %v723 = vld [vmem:[%s1 + $0x5b8] sm:$0xf]
    %v724 = vld [vmem:[%s1 + $0x5bc] sm:$0xf]
    %v725 = vld [vmem:[%s1 + $0x5c0] sm:$0xf]
    %v726 = vld [vmem:[%s1 + $0x5c4] sm:$0xf]
    %v727 = vld [vmem:[%s1 + $0x5c8] sm:$0xf]
    %v728 = vld [vmem:[%s1 + $0x5cc] sm:$0xf]
    %v729 = vld [vmem:[%s1 + $0x5d0] sm:$0xf]
    %v730 = vld [vmem:[%s1 + $0x5d4] sm:$0xf]
    %v731 = vld [vmem:[%s1 + $0x5d8] sm:$0xf]
    %v732 = vld [vmem:[%s1 + $0x5dc] sm:$0xf]
    %v733 = vld [vmem:[%s1 + $0x5e0] sm:$0xf]
    %v734 = vld [vmem:[%s1 + $0x5e4] sm:$0xf]
    %v735 = vld [vmem:[%s1 + $0x5e8] sm:$0xf]
    %v736 = vld [vmem:[%s1 + $0x5ec] sm:$0xf]
    %v737 = vld [vmem:[%s1 + $0x5f0] sm:$0xf]
    %v738 = vld [vmem:[%s1 + $0x5f4] sm:$0xf]
    %v739 = vld [vmem:[%s1 + $0x5f8] sm:$0xf]
    %v740 = vld [vmem:[%s1 + $0x5fc] sm:$0xf]
    %v741 = vld [vmem:[%s1 + $0x600] sm:$0xf]
    %v742 = vld [vmem:[%s1 + $0x604] sm:$0xf]
    %v743 = vld [vmem:[%s1 + $0x608] sm:$0xf]
    %v744 = vld [vmem:[%s1 + $0x60c] sm:$0xf]
    %v745 = vld [vmem:[%s1 + $0x610] sm:$0xf]
    %v746 = vld [vmem:[%s1 + $0x614] sm:$0xf]
    %v747 = vld [vmem:[%s1 + $0x618] sm:$0xf]
    %v748 = vld [vmem:[%s1 + $0x61c] sm:$0xf]
    %v749 = vld [vmem:[%s1 + $0x620] sm:$0xf]
    %v750 = vld [vmem:[%s1 + $0x624] sm:$0xf]
    %v751 = vld [vmem:[%s1 + $0x628] sm:$0xf]
    %v752 = vld [vmem:[%s1 + $0x62c] sm:$0xf]
    %v753 = vld [vmem:[%s1 + $0x630] sm:$0xf]
    %v754 = vld [vmem:[%s1 + $0x634] sm:$0xf]
    %v755 = vld [vmem:[%s1 + $0x638] sm:$0xf]
    %v756 = vld [vmem:[%s1 + $0x63c] sm:$0xf]
    %v757 = vld [vmem:[%s1 + $0x640] sm:$0xf]
    %v758 = vld [vmem:[%s1 + $0x644] sm:$0xf]
    %v759 = vld [vmem:[%s1 + $0x648] sm:$0xf]
    %v760 = vld [vmem:[%s1 + $0x64c] sm:$0xf]
    %v761 = vld [vmem:[%s1 + $0x650] sm:$0xf]
    %v762 = vld [vmem:[%s1 + $0x654] sm:$0xf]
    %v763 = vld [vmem:[%s1 + $0x658] sm:$0xf]
    %v764 = vld [vmem:[%s1 + $0x65c] sm:$0xf]
    %v765 = vld [vmem:[%s1 + $0x660] sm:$0xf]
    %v766 = vld [vmem:[%s1 + $0x664] sm:$0xf]
    %v767 = vld [vmem:[%s1 + $0x668] sm:$0xf]
    %v768 = vld [vmem:[%s1 + $0x66c] sm:$0xf]
    %v769 = vld [vmem:[%s1 + $0x670] sm:$0xf]
    %v770 = vld [vmem:[%s1 + $0x674] sm:$0xf]
    %v771 = vld [vmem:[%s1 + $0x678] sm:$0xf]
    %v772 = vld [vmem:[%s1 + $0x67c] sm:$0xf]
    %v773 = vld [vmem:[%s1 + $0x680] sm:$0xf]
    %v774 = vld [vmem:[%s1 + $0x684] sm:$0xf]
    %v775 = vld [vmem:[%s1 + $0x688] sm:$0xf]
    %v776 = vld [vmem:[%s1 + $0x68c] sm:$0xf]
    %v777 = vld [vmem:[%s1 + $0x690] sm:$0xf]
    %v778 = vld [vmem:[%s1 + $0x694] sm:$0xf]
    %v779 = vld [vmem:[%s1 + $0x698] sm:$0xf]
    %v780 = vld [vmem:[%s1 + $0x69c] sm:$0xf]
    %v781 = vld [vmem:[%s1 + $0x6a0] sm:$0xf]
    %v782 = vld [vmem:[%s1 + $0x6a4] sm:$0xf]
    %v783 = vld [vmem:[%s1 + $0x6a8] sm:$0xf]
    %v784 = vld [vmem:[%s1 + $0x6ac] sm:$0xf]
    %v785 = vld [vmem:[%s1 + $0x6b0] sm:$0xf]
    %v786 = vld [vmem:[%s1 + $0x6b4] sm:$0xf]
    %v787 = vld [vmem:[%s1 + $0x6b8] sm:$0xf]
    %v788 = vld [vmem:[%s1 + $0x6bc] sm:$0xf]
    %v789 = vld [vmem:[%s1 + $0x6c0] sm:$0xf]
    %v790 = vld [vmem:[%s1 + $0x6c4] sm:$0xf]
    %v791 = vld [vmem:[%s1 + $0x6c8] sm:$0xf]
    %v792 = vld [vmem:[%s1 + $0x6cc] sm:$0xf]
    %v793 = vld [vmem:[%s1 + $0x6d0] sm:$0xf]
    %v794 = vld [vmem:[%s1 + $0x6d4] sm:$0xf]
    %v795 = vld [vmem:[%s1 + $0x6d8] sm:$0xf]
    %v796 = vld [vmem:[%s1 + $0x6dc] sm:$0xf]
    %v797 = vld [vmem:[%s1 + $0x6e0] sm:$0xf]
    %v798 = vld [vmem:[%s1 + $0x6e4] sm:$0xf]
    %v799 = vld [vmem:[%s1 + $0x6e8] sm:$0xf]
    %v800 = vld [vmem:[%s1 + $0x6ec] sm:$0xf]
    %v801 = vld [vmem:[%s1 + $0x6f0] sm:$0xf]
    %v802 = vld [vmem:[%s1 + $0x6f4] sm:$0xf]
    %v803 = vld [vmem:[%s1 + $0x6f8] sm:$0xf]
    %v804 = vld [vmem:[%s1 + $0x6fc] sm:$0xf]
    %v805 = vld [vmem:[%s1 + $0x700] sm:$0xf]
    %v806 = vld [vmem:[%s1 + $0x704] sm:$0xf]
    %v807 = vld [vmem:[%s1 + $0x708] sm:$0xf]
    %v808 = vld [vmem:[%s1 + $0x70c] sm:$0xf]
    %v809 = vld [vmem:[%s1 + $0x710] sm:$0xf]
    %v810 = vld [vmem:[%s1 + $0x714] sm:$0xf]
    %v811 = vld [vmem:[%s1 + $0x718] sm:$0xf]
    %v812 = vld [vmem:[%s1 + $0x71c] sm:$0xf]
    %v813 = vld [vmem:[%s1 + $0x720] sm:$0xf]
    %v814 = vld [vmem:[%s1 + $0x724] sm:$0xf]
    %v815 = vld [vmem:[%s1 + $0x728] sm:$0xf]
    %v816 = vld [vmem:[%s1 + $0x72c] sm:$0xf]
    %v817 = vld [vmem:[%s1 + $0x730] sm:$0xf]
    %v818 = vld [vmem:[%s1 + $0x734] sm:$0xf]
    %v819 = vld [vmem:[%s1 + $0x738] sm:$0xf]
    %v820 = vld [vmem:[%s1 + $0x73c] sm:$0xf]
    %v821 = vld [vmem:[%s1 + $0x740] sm:$0xf]
    %v822 = vld [vmem:[%s1 + $0x744] sm:$0xf]
    %v823 = vld [vmem:[%s1 + $0x748] sm:$0xf]
    %v824 = vld [vmem:[%s1 + $0x74c] sm:$0xf]
    %v825 = vld [vmem:[%s1 + $0x750] sm:$0xf]
    %v826 = vld [vmem:[%s1 + $0x754] sm:$0xf]
    %v827 = vld [vmem:[%s1 + $0x758] sm:$0xf]
    %v828 = vld [vmem:[%s1 + $0x75c] sm:$0xf]
    %v829 = vld [vmem:[%s1 + $0x760] sm:$0xf]
    %v830 = vld [vmem:[%s1 + $0x764] sm:$0xf]
    %v831 = vld [vmem:[%s1 + $0x768] sm:$0xf]
    %v832 = vld [vmem:[%s1 + $0x76c] sm:$0xf]
    %v833 = vld [vmem:[%s1 + $0x770] sm:$0xf]
    %v834 = vld [vmem:[%s1 + $0x774] sm:$0xf]
    %v835 = vld [vmem:[%s1 + $0x778] sm:$0xf]
    %v836 = vld [vmem:[%s1 + $0x77c] sm:$0xf]
    %v837 = vld [vmem:[%s1 + $0x780] sm:$0xf]
    %v838 = vld [vmem:[%s1 + $0x784] sm:$0xf]
    %v839 = vld [vmem:[%s1 + $0x788] sm:$0xf]
    %v840 = vld [vmem:[%s1 + $0x78c] sm:$0xf]
    %v841 = vld [vmem:[%s1 + $0x790] sm:$0xf]
    %v842 = vld [vmem:[%s1 + $0x794] sm:$0xf]
    %v843 = vld [vmem:[%s1 + $0x798] sm:$0xf]
    %v844 = vld [vmem:[%s1 + $0x79c] sm:$0xf]
    %v845 = vld [vmem:[%s1 + $0x7a0] sm:$0xf]
    %v846 = vld [vmem:[%s1 + $0x7a4] sm:$0xf]
    %v847 = vld [vmem:[%s1 + $0x7a8] sm:$0xf]
    %v848 = vld [vmem:[%s1 + $0x7ac] sm:$0xf]
    %v849 = vld [vmem:[%s1 + $0x7b0] sm:$0xf]
    %v850 = vld [vmem:[%s1 + $0x7b4] sm:$0xf]
    %v851 = vld [vmem:[%s1 + $0x7b8] sm:$0xf]
    %v852 = vld [vmem:[%s1 + $0x7bc] sm:$0xf]
    %v853 = vld [vmem:[%s1 + $0x7c0] sm:$0xf]
    %v854 = vld [vmem:[%s1 + $0x7c4] sm:$0xf]
    %v855 = vld [vmem:[%s1 + $0x7c8] sm:$0xf]
    %v856 = vld [vmem:[%s1 + $0x7cc] sm:$0xf]
    %v857 = vld [vmem:[%s1 + $0x7d0] sm:$0xf]
    %v858 = vld [vmem:[%s1 + $0x7d4] sm:$0xf]
    %v859 = vld [vmem:[%s1 + $0x7d8] sm:$0xf]
    %v860 = vld [vmem:[%s1 + $0x7dc] sm:$0xf]
    %v861 = vld [vmem:[%s1 + $0x7e0] sm:$0xf]
    %v862 = vld [vmem:[%s1 + $0x7e4] sm:$0xf]
    %v863 = vld [vmem:[%s1 + $0x7e8] sm:$0xf]
    %v864 = vld [vmem:[%s1 + $0x7ec] sm:$0xf]
    %v865 = vld [vmem:[%s1 + $0x7f0] sm:$0xf]
    %v866 = vld [vmem:[%s1 + $0x7f4] sm:$0xf]
    %v867 = vld [vmem:[%s1 + $0x7f8] sm:$0xf]
    %v868 = vld [vmem:[%s1 + $0x7fc] sm:$0xf]
    %v869 = vld [vmem:[%s1 + $0x800] sm:$0xf]
    %v870 = vld [vmem:[%s1 + $0x804] sm:$0xf]
    %v871 = vld [vmem:[%s1 + $0x808] sm:$0xf]
    %v872 = vld [vmem:[%s1 + $0x80c] sm:$0xf]
    %v873 = vld [vmem:[%s1 + $0x810] sm:$0xf]
    %v874 = vld [vmem:[%s1 + $0x814] sm:$0xf]
    %v875 = vld [vmem:[%s1 + $0x818] sm:$0xf]
    %v876 = vld [vmem:[%s1 + $0x81c] sm:$0xf]
    %v877 = vld [vmem:[%s1 + $0x820] sm:$0xf]
    %v878 = vld [vmem:[%s1 + $0x824] sm:$0xf]
    %v879 = vld [vmem:[%s1 + $0x828] sm:$0xf]
    %v880 = vld [vmem:[%s1 + $0x82c] sm:$0xf]
    %v881 = vld [vmem:[%s1 + $0x830] sm:$0xf]
    %v882 = vld [vmem:[%s1 + $0x834] sm:$0xf]
    %v883 = vld [vmem:[%s1 + $0x838] sm:$0xf]
    %v884 = vld [vmem:[%s1 + $0x83c] sm:$0xf]
    %v885 = vld [vmem:[%s1 + $0x840] sm:$0xf]
    %v886 = vld [vmem:[%s1 + $0x844] sm:$0xf]
    %v887 = vld [vmem:[%s1 + $0x848] sm:$0xf]
    %v888 = vld [vmem:[%s1 + $0x84c] sm:$0xf]
    %v889 = vld [vmem:[%s1 + $0x850] sm:$0xf]
    %v890 = vld [vmem:[%s1 + $0x854] sm:$0xf]
    %v891 = vld [vmem:[%s1 + $0x858] sm:$0xf]
    %v892 = vld [vmem:[%s1 + $0x85c] sm:$0xf]
    %v893 = vld [vmem:[%s1 + $0x860] sm:$0xf]
    %v894 = vld [vmem:[%s1 + $0x864] sm:$0xf]
    %v895 = vld [vmem:[%s1 + $0x868] sm:$0xf]
    %v896 = vld [vmem:[%s1 + $0x86c] sm:$0xf]
    %v897 = vld [vmem:[%s1 + $0x870] sm:$0xf]
    %v898 = vld [vmem:[%s1 + $0x874] sm:$0xf]
    %v899 = vld [vmem:[%s1 + $0x878] sm:$0xf]
    %v900 = vld [vmem:[%s1 + $0x87c] sm:$0xf]
    %v901 = vld [vmem:[%s1 + $0x880] sm:$0xf]
    %v902 = vld [vmem:[%s1 + $0x884] sm:$0xf]
    %v903 = vld [vmem:[%s1 + $0x888] sm:$0xf]
    %v904 = vld [vmem:[%s1 + $0x88c] sm:$0xf]
    %v905 = vld [vmem:[%s1 + $0x890] sm:$0xf]
    %v906 = vld [vmem:[%s1 + $0x894] sm:$0xf]
    %v907 = vld [vmem:[%s1 + $0x898] sm:$0xf]
    %v908 = vld [vmem:[%s1 + $0x89c] sm:$0xf]
    %v909 = vld [vmem:[%s1 + $0x8a0] sm:$0xf]
    %v910 = vld [vmem:[%s1 + $0x8a4] sm:$0xf]
    %v911 = vld [vmem:[%s1 + $0x8a8] sm:$0xf]
    %v912 = vld [vmem:[%s1 + $0x8ac] sm:$0xf]
    %v913 = vld [vmem:[%s1 + $0x8b0] sm:$0xf]
    %v914 = vld [vmem:[%s1 + $0x8b4] sm:$0xf]
    %v915 = vld [vmem:[%s1 + $0x8b8] sm:$0xf]
    %v916 = vld [vmem:[%s1 + $0x8bc] sm:$0xf]
    %v917 = vld [vmem:[%s1 + $0x8c0] sm:$0xf]
    %v918 = vld [vmem:[%s1 + $0x8c4] sm:$0xf]
    %v919 = vld [vmem:[%s1 + $0x8c8] sm:$0xf]
    %v920 = vld [vmem:[%s1 + $0x8cc] sm:$0xf]
    %v921 = vld [vmem:[%s1 + $0x8d0] sm:$0xf]
    %v922 = vld [vmem:[%s1 + $0x8d4] sm:$0xf]
    %v923 = vld [vmem:[%s1 + $0x8d8] sm:$0xf]
    %v924 = vld [vmem:[%s1 + $0x8dc] sm:$0xf]
    %v925 = vld [vmem:[%s1 + $0x8e0] sm:$0xf]
    %v926 = vld [vmem:[%s1 + $0x8e4] sm:$0xf]
    %v927 = vld [vmem:[%s1 + $0x8e8] sm:$0xf]
    %v928 = vld [vmem:[%s1 + $0x8ec] sm:$0xf]
    %v929 = vld [vmem:[%s1 + $0x8f0] sm:$0xf]
    %v930 = vld [vmem:[%s1 + $0x8f4] sm:$0xf]
    %v931 = vld [vmem:[%s1 + $0x8f8] sm:$0xf]
    %v932 = vld [vmem:[%s1 + $0x8fc] sm:$0xf]
    %v933 = vld [vmem:[%s1 + $0x900] sm:$0xf]
    %v934 = vld [vmem:[%s1 + $0x904] sm:$0xf]
    %v935 = vld [vmem:[%s1 + $0x908] sm:$0xf]
    %v936 = vld [vmem:[%s1 + $0x90c] sm:$0xf]
    %v937 = vld [vmem:[%s1 + $0x910] sm:$0xf]
    %v938 = vld [vmem:[%s1 + $0x914] sm:$0xf]
    %v939 = vld [vmem:[%s1 + $0x918] sm:$0xf]
    %v940 = vld [vmem:[%s1 + $0x91c] sm:$0xf]
    %v941 = vld [vmem:[%s1 + $0x920] sm:$0xf]
    %v942 = vld [vmem:[%s1 + $0x924] sm:$0xf]
    %v943 = vld [vmem:[%s1 + $0x928] sm:$0xf]
    %v944 = vld [vmem:[%s1 + $0x92c] sm:$0xf]
    %v945 = vld [vmem:[%s1 + $0x930] sm:$0xf]
    %v946 = vld [vmem:[%s1 + $0x934] sm:$0xf]
    %v947 = vld [vmem:[%s1 + $0x938] sm:$0xf]
    %v948 = vld [vmem:[%s1 + $0x93c] sm:$0xf]
    %v949 = vld [vmem:[%s1 + $0x940] sm:$0xf]
    %v950 = vld [vmem:[%s1 + $0x944] sm:$0xf]
    %v951 = vld [vmem:[%s1 + $0x948] sm:$0xf]
    %v952 = vld [vmem:[%s1 + $0x94c] sm:$0xf]
    %v953 = vld [vmem:[%s1 + $0x950] sm:$0xf]
    %v954 = vld [vmem:[%s1 + $0x954] sm:$0xf]
    %v955 = vld [vmem:[%s1 + $0x958] sm:$0xf]
    %v956 = vld [vmem:[%s1 + $0x95c] sm:$0xf]
    %v957 = vld [vmem:[%s1 + $0x960] sm:$0xf]
    %v958 = vld [vmem:[%s1 + $0x964] sm:$0xf]
    %v959 = vld [vmem:[%s1 + $0x968] sm:$0xf]
    %v960 = vld [vmem:[%s1 + $0x96c] sm:$0xf]
    %v961 = vld [vmem:[%s1 + $0x970] sm:$0xf]
    %v962 = vld [vmem:[%s1 + $0x974] sm:$0xf]
    %v963 = vld [vmem:[%s1 + $0x978] sm:$0xf]
    %v964 = vld [vmem:[%s1 + $0x97c] sm:$0xf]
    %v965 = vld [vmem:[%s1 + $0x980] sm:$0xf]
    %v966 = vld [vmem:[%s1 + $0x984] sm:$0xf]
    %v967 = vld [vmem:[%s1 + $0x988] sm:$0xf]
    %v968 = vld [vmem:[%s1 + $0x98c] sm:$0xf]
    %v969 = vld [vmem:[%s1 + $0x990] sm:$0xf]
    %v970 = vld [vmem:[%s1 + $0x994] sm:$0xf]
    %v971 = vld [vmem:[%s1 + $0x998] sm:$0xf]
    %v972 = vld [vmem:[%s1 + $0x99c] sm:$0xf]
    %v973 = vld [vmem:[%s1 + $0x9a0] sm:$0xf]
    %v974 = vld [vmem:[%s1 + $0x9a4] sm:$0xf]
    %v975 = vld [vmem:[%s1 + $0x9a8] sm:$0xf]
    %v976 = vld [vmem:[%s1 + $0x9ac] sm:$0xf]
    %v977 = vld [vmem:[%s1 + $0x9b0] sm:$0xf]
    %v978 = vld [vmem:[%s1 + $0x9b4] sm:$0xf]
    %v979 = vld [vmem:[%s1 + $0x9b8] sm:$0xf]
    %v980 = vld [vmem:[%s1 + $0x9bc] sm:$0xf]
    %v981 = vld [vmem:[%s1 + $0x9c0] sm:$0xf]
    %v982 = vld [vmem:[%s1 + $0x9c4] sm:$0xf]
    %v983 = vld [vmem:[%s1 + $0x9c8] sm:$0xf]
    %v984 = vld [vmem:[%s1 + $0x9cc] sm:$0xf]
    %v985 = vld [vmem:[%s1 + $0x9d0] sm:$0xf]
    %v986 = vld [vmem:[%s1 + $0x9d4] sm:$0xf]
    %v987 = vld [vmem:[%s1 + $0x9d8] sm:$0xf]
    %v988 = vld [vmem:[%s1 + $0x9dc] sm:$0xf]
    %v989 = vld [vmem:[%s1 + $0x9e0] sm:$0xf]
    %v990 = vld [vmem:[%s1 + $0x9e4] sm:$0xf]
    %v991 = vld [vmem:[%s1 + $0x9e8] sm:$0xf]
    %v992 = vld [vmem:[%s1 + $0x9ec] sm:$0xf]
    %v993 = vld [vmem:[%s1 + $0x9f0] sm:$0xf]
    %v994 = vld [vmem:[%s1 + $0x9f4] sm:$0xf]
    %v995 = vld [vmem:[%s1 + $0x9f8] sm:$0xf]
    %v996 = vld [vmem:[%s1 + $0x9fc] sm:$0xf]
    %v997 = vld [vmem:[%s1 + $0xa00] sm:$0xf]
    %v998 = vld [vmem:[%s1 + $0xa04] sm:$0xf]
    %v999 = vld [vmem:[%s1 + $0xa08] sm:$0xf]
    %v1000 = vld [vmem:[%s1 + $0xa0c] sm:$0xf]
    %v1001 = vld [vmem:[%s1 + $0xa10] sm:$0xf]
    %v1002 = vld [vmem:[%s1 + $0xa14] sm:$0xf]
    %v1003 = vld [vmem:[%s1 + $0xa18] sm:$0xf]
    %v1004 = vld [vmem:[%s1 + $0xa1c] sm:$0xf]
    %v1005 = vld [vmem:[%s1 + $0xa20] sm:$0xf]
    %v1006 = vld [vmem:[%s1 + $0xa24] sm:$0xf]
    %v1007 = vld [vmem:[%s1 + $0xa28] sm:$0xf]
    %v1008 = vld [vmem:[%s1 + $0xa2c] sm:$0xf]
    %v1009 = vld [vmem:[%s1 + $0xa30] sm:$0xf]
    %v1010 = vld [vmem:[%s1 + $0xa34] sm:$0xf]
    %v1011 = vld [vmem:[%s1 + $0xa38] sm:$0xf]
    %v1012 = vld [vmem:[%s1 + $0xa3c] sm:$0xf]
    %v1013 = vld [vmem:[%s1 + $0xa40] sm:$0xf]
    %v1014 = vld [vmem:[%s1 + $0xa44] sm:$0xf]
    %v1015 = vld [vmem:[%s1 + $0xa48] sm:$0xf]
    %v1016 = vld [vmem:[%s1 + $0xa4c] sm:$0xf]
    %v1017 = vld [vmem:[%s1 + $0xa50] sm:$0xf]
    %v1018 = vld [vmem:[%s1 + $0xa54] sm:$0xf]
    %v1019 = vld [vmem:[%s1 + $0xa58] sm:$0xf]
    %v1020 = vld [vmem:[%s1 + $0xa5c] sm:$0xf]
    %v1021 = vld [vmem:[%s1 + $0xa60] sm:$0xf]
    %v1022 = vld [vmem:[%s1 + $0xa64] sm:$0xf]
    %v1023 = vld [vmem:[%s1 + $0xa68] sm:$0xf]
    %v1024 = vld [vmem:[%s1 + $0xa6c] sm:$0xf]
    %v1025 = vld [vmem:[%s1 + $0xa70] sm:$0xf]
    %v1026 = vld [vmem:[%s1 + $0xa74] sm:$0xf]
    %v1027 = vld [vmem:[%s1 + $0xa78] sm:$0xf]
    %v1028 = vld [vmem:[%s1 + $0xa7c] sm:$0xf]
    %v1029 = vld [vmem:[%s1 + $0xa80] sm:$0xf]
    %v1030 = vld [vmem:[%s1 + $0xa84] sm:$0xf]
    %v1031 = vld [vmem:[%s1 + $0xa88] sm:$0xf]
    %v1032 = vld [vmem:[%s1 + $0xa8c] sm:$0xf]
    %v1033 = vld [vmem:[%s1 + $0xa90] sm:$0xf]
    %v1034 = vld [vmem:[%s1 + $0xa94] sm:$0xf]
    %v1035 = vld [vmem:[%s1 + $0xa98] sm:$0xf]
    %v1036 = vld [vmem:[%s1 + $0xa9c] sm:$0xf]
    %v1037 = vld [vmem:[%s1 + $0xaa0] sm:$0xf]
    %v1038 = vld [vmem:[%s1 + $0xaa4] sm:$0xf]
    %v1039 = vld [vmem:[%s1 + $0xaa8] sm:$0xf]
    %v1040 = vld [vmem:[%s1 + $0xaac] sm:$0xf]
    %v1041 = vld [vmem:[%s1 + $0xab0] sm:$0xf]
    %v1042 = vld [vmem:[%s1 + $0xab4] sm:$0xf]
    %v1043 = vld [vmem:[%s1 + $0xab8] sm:$0xf]
    %v1044 = vld [vmem:[%s1 + $0xabc] sm:$0xf]
    %v1045 = vld [vmem:[%s1 + $0xac0] sm:$0xf]
    %v1046 = vld [vmem:[%s1 + $0xac4] sm:$0xf]
    %v1047 = vld [vmem:[%s1 + $0xac8] sm:$0xf]
    %v1048 = vld [vmem:[%s1 + $0xacc] sm:$0xf]
    %v1049 = vld [vmem:[%s1 + $0xad0] sm:$0xf]
    %v1050 = vld [vmem:[%s1 + $0xad4] sm:$0xf]
    %v1051 = vld [vmem:[%s1 + $0xad8] sm:$0xf]
    %v1052 = vld [vmem:[%s1 + $0xadc] sm:$0xf]
    %v1053 = vld [vmem:[%s1 + $0xae0] sm:$0xf]
    %v1054 = vld [vmem:[%s1 + $0xae4] sm:$0xf]
    %v1055 = vld [vmem:[%s1 + $0xae8] sm:$0xf]
    %v1056 = vld [vmem:[%s1 + $0xaec] sm:$0xf]
    %v1057 = vld [vmem:[%s1 + $0xaf0] sm:$0xf]
    %v1058 = vld [vmem:[%s1 + $0xaf4] sm:$0xf]
    %v1059 = vld [vmem:[%s1 + $0xaf8] sm:$0xf]
    %v1060 = vld [vmem:[%s1 + $0xafc] sm:$0xf]
    %v1061 = vld [vmem:[%s1 + $0xb00] sm:$0xf]
    %v1062 = vld [vmem:[%s1 + $0xb04] sm:$0xf]
    %v1063 = vld [vmem:[%s1 + $0xb08] sm:$0xf]
    %v1064 = vld [vmem:[%s1 + $0xb0c] sm:$0xf]
    %v1065 = vld [vmem:[%s1 + $0xb10] sm:$0xf]
    %v1066 = vld [vmem:[%s1 + $0xb14] sm:$0xf]
    %v1067 = vld [vmem:[%s1 + $0xb18] sm:$0xf]
    %v1068 = vld [vmem:[%s1 + $0xb1c] sm:$0xf]
    %v1069 = vld [vmem:[%s1 + $0xb20] sm:$0xf]
    %v1070 = vld [vmem:[%s1 + $0xb24] sm:$0xf]
    %v1071 = vld [vmem:[%s1 + $0xb28] sm:$0xf]
    %v1072 = vld [vmem:[%s1 + $0xb2c] sm:$0xf]
    %v1073 = vld [vmem:[%s1 + $0xb30] sm:$0xf]
    %v1074 = vld [vmem:[%s1 + $0xb34] sm:$0xf]
    %v1075 = vld [vmem:[%s1 + $0xb38] sm:$0xf]
    %v1076 = vld [vmem:[%s1 + $0xb3c] sm:$0xf]
    %v1077 = vld [vmem:[%s1 + $0xb40] sm:$0xf]
    %v1078 = vld [vmem:[%s1 + $0xb44] sm:$0xf]
    %v1079 = vld [vmem:[%s1 + $0xb48] sm:$0xf]
    %v1080 = vld [vmem:[%s1 + $0xb4c] sm:$0xf]
    %v1081 = vld [vmem:[%s1 + $0xb50] sm:$0xf]
    %v1082 = vld [vmem:[%s1 + $0xb54] sm:$0xf]
    %v1083 = vld [vmem:[%s1 + $0xb58] sm:$0xf]
    %v1084 = vld [vmem:[%s1 + $0xb5c] sm:$0xf]
    %v1085 = vld [vmem:[%s1 + $0xb60] sm:$0xf]
    %v1086 = vld [vmem:[%s1 + $0xb64] sm:$0xf]
    %v1087 = vld [vmem:[%s1 + $0xb68] sm:$0xf]
    %v1088 = vld [vmem:[%s1 + $0xb6c] sm:$0xf]
    %v1089 = vld [vmem:[%s1 + $0xb70] sm:$0xf]
    %v1090 = vld [vmem:[%s1 + $0xb74] sm:$0xf]
    %v1091 = vld [vmem:[%s1 + $0xb78] sm:$0xf]
    %v1092 = vld [vmem:[%s1 + $0xb7c] sm:$0xf]
    %v1093 = vld [vmem:[%s1 + $0xb80] sm:$0xf]
    %v1094 = vld [vmem:[%s1 + $0xb84] sm:$0xf]
    %v1095 = vld [vmem:[%s1 + $0xb88] sm:$0xf]
    %v1096 = vld [vmem:[%s1 + $0xb8c] sm:$0xf]
    %v1097 = vld [vmem:[%s1 + $0xb90] sm:$0xf]
    %v1098 = vld [vmem:[%s1 + $0xb94] sm:$0xf]
    %v1099 = vld [vmem:[%s1 + $0xb98] sm:$0xf]
    %v1100 = vld [vmem:[%s1 + $0xb9c] sm:$0xf]
    %v1101 = vld [vmem:[%s1 + $0xba0] sm:$0xf]
    %v1102 = vld [vmem:[%s1 + $0xba4] sm:$0xf]
    %v1103 = vld [vmem:[%s1 + $0xba8] sm:$0xf]
    %v1104 = vld [vmem:[%s1 + $0xbac] sm:$0xf]
    %v1105 = vld [vmem:[%s1 + $0xbb0] sm:$0xf]
    %v1106 = vld [vmem:[%s1 + $0xbb4] sm:$0xf]
    %v1107 = vld [vmem:[%s1 + $0xbb8] sm:$0xf]
    %v1108 = vld [vmem:[%s1 + $0xbbc] sm:$0xf]
    %v1109 = vld [vmem:[%s1 + $0xbc0] sm:$0xf]
    %v1110 = vld [vmem:[%s1 + $0xbc4] sm:$0xf]
    %v1111 = vld [vmem:[%s1 + $0xbc8] sm:$0xf]
    %v1112 = vld [vmem:[%s1 + $0xbcc] sm:$0xf]
    %v1113 = vld [vmem:[%s1 + $0xbd0] sm:$0xf]
    %v1114 = vld [vmem:[%s1 + $0xbd4] sm:$0xf]
    %v1115 = vld [vmem:[%s1 + $0xbd8] sm:$0xf]
    %v1116 = vld [vmem:[%s1 + $0xbdc] sm:$0xf]
    %v1117 = vld [vmem:[%s1 + $0xbe0] sm:$0xf]
    %v1118 = vld [vmem:[%s1 + $0xbe4] sm:$0xf]
    %v1119 = vld [vmem:[%s1 + $0xbe8] sm:$0xf]
    %v1120 = vld [vmem:[%s1 + $0xbec] sm:$0xf]
    %v1121 = vld [vmem:[%s1 + $0xbf0] sm:$0xf]
    %v1122 = vld [vmem:[%s1 + $0xbf4] sm:$0xf]
    %v1123 = vld [vmem:[%s1 + $0xbf8] sm:$0xf]
    %v1124 = vld [vmem:[%s1 + $0xbfc] sm:$0xf]
    %v1125 = vld [vmem:[%s1 + $0xc00] sm:$0xf]
    %v1126 = vld [vmem:[%s1 + $0xc04] sm:$0xf]
    %v1127 = vld [vmem:[%s1 + $0xc08] sm:$0xf]
    %v1128 = vld [vmem:[%s1 + $0xc0c] sm:$0xf]
    %v1129 = vld [vmem:[%s1 + $0xc10] sm:$0xf]
    %v1130 = vld [vmem:[%s1 + $0xc14] sm:$0xf]
    %v1131 = vld [vmem:[%s1 + $0xc18] sm:$0xf]
    %v1132 = vld [vmem:[%s1 + $0xc1c] sm:$0xf]
    %v1133 = vld [vmem:[%s1 + $0xc20] sm:$0xf]
    %v1134 = vld [vmem:[%s1 + $0xc24] sm:$0xf]
    %v1135 = vld [vmem:[%s1 + $0xc28] sm:$0xf]
    %v1136 = vld [vmem:[%s1 + $0xc2c] sm:$0xf]
    %v1137 = vld [vmem:[%s1 + $0xc30] sm:$0xf]
    %v1138 = vld [vmem:[%s1 + $0xc34] sm:$0xf]
    %v1139 = vld [vmem:[%s1 + $0xc38] sm:$0xf]
    %v1140 = vld [vmem:[%s1 + $0xc3c] sm:$0xf]
    %v1141 = vld [vmem:[%s2] sm:$0x1]
    %v1143 = vlaneseq
    %v1144 = vshrl.u32 %v1143, 7
    %v1145 = vsub.s32 0, %v1144
    %v1146 = vrot.slane %v1141, %v1145
    %v1932 = vunpack.c.l.b16 %v357
    %v1933 = vunpack.c.l.b16 %v358
    %v1934 = vunpack.c.l.b16 %v359
    %v1935 = vunpack.c.l.b16 %v360
    %v1936 = vunpack.c.l.b16 %v361
    %v1937 = vunpack.c.l.b16 %v362
    %v1938 = vunpack.c.l.b16 %v363
    %v1939 = vunpack.c.l.b16 %v364
    %v1940 = vunpack.c.l.b16 %v365
    %v1941 = vunpack.c.l.b16 %v366
    %v1942 = vunpack.c.l.b16 %v367
    %v1943 = vunpack.c.l.b16 %v368
    %v1944 = vunpack.c.l.b16 %v369
    %v1945 = vunpack.c.l.b16 %v370
    %v1946 = vunpack.c.l.b16 %v371
    %v1947 = vunpack.c.l.b16 %v372
    %v1948 = vunpack.c.l.b16 %v373
    %v1949 = vunpack.c.l.b16 %v374
    %v1950 = vunpack.c.l.b16 %v375
    %v1951 = vunpack.c.l.b16 %v376
    %v1952 = vunpack.c.l.b16 %v377
    %v1953 = vunpack.c.l.b16 %v378
    %v1954 = vunpack.c.l.b16 %v379
    %v1955 = vunpack.c.l.b16 %v380
    %v1956 = vunpack.c.l.b16 %v381
    %v1957 = vunpack.c.l.b16 %v382
    %v1958 = vunpack.c.l.b16 %v383
    %v1959 = vunpack.c.l.b16 %v384
    %v1960 = vunpack.c.l.b16 %v385
    %v1961 = vunpack.c.l.b16 %v386
    %v1962 = vunpack.c.l.b16 %v387
    %v1963 = vunpack.c.l.b16 %v388
    %v1964 = vunpack.c.l.b16 %v389
    %v1965 = vunpack.c.l.b16 %v390
    %v1966 = vunpack.c.l.b16 %v391
    %v1967 = vunpack.c.l.b16 %v392
    %v1968 = vunpack.c.l.b16 %v393
    %v1969 = vunpack.c.l.b16 %v394
    %v1970 = vunpack.c.l.b16 %v395
    %v1971 = vunpack.c.l.b16 %v396
    %v1972 = vunpack.c.l.b16 %v397
    %v1973 = vunpack.c.l.b16 %v398
    %v1974 = vunpack.c.l.b16 %v399
    %v1975 = vunpack.c.l.b16 %v400
    %v1976 = vunpack.c.l.b16 %v401
    %v1977 = vunpack.c.l.b16 %v402
    %v1978 = vunpack.c.l.b16 %v403
    %v1979 = vunpack.c.l.b16 %v404
    %v1980 = vunpack.c.l.b16 %v405
    %v1981 = vunpack.c.l.b16 %v406
    %v1982 = vunpack.c.l.b16 %v407
    %v1983 = vunpack.c.l.b16 %v408
    %v1984 = vunpack.c.l.b16 %v409
    %v1985 = vunpack.c.l.b16 %v410
    %v1986 = vunpack.c.l.b16 %v411
    %v1987 = vunpack.c.l.b16 %v412
    %v1988 = vunpack.c.l.b16 %v413
    %v1989 = vunpack.c.l.b16 %v414
    %v1990 = vunpack.c.l.b16 %v415
    %v1991 = vunpack.c.l.b16 %v416
    %v1992 = vunpack.c.l.b16 %v417
    %v1993 = vunpack.c.l.b16 %v418
    %v1994 = vunpack.c.l.b16 %v419
    %v1995 = vunpack.c.l.b16 %v420
    %v1996 = vunpack.c.l.b16 %v421
    %v1997 = vunpack.c.l.b16 %v422
    %v1998 = vunpack.c.l.b16 %v423
    %v1999 = vunpack.c.l.b16 %v424
    %v2000 = vunpack.c.l.b16 %v425
    %v2001 = vunpack.c.l.b16 %v426
    %v2002 = vunpack.c.l.b16 %v427
    %v2003 = vunpack.c.l.b16 %v428
    %v2004 = vunpack.c.l.b16 %v429
    %v2005 = vunpack.c.l.b16 %v430
    %v2006 = vunpack.c.l.b16 %v431
    %v2007 = vunpack.c.l.b16 %v432
    %v2008 = vunpack.c.l.b16 %v433
    %v2009 = vunpack.c.l.b16 %v434
    %v2010 = vunpack.c.l.b16 %v435
    %v2011 = vunpack.c.l.b16 %v436
    %v2012 = vunpack.c.l.b16 %v437
    %v2013 = vunpack.c.l.b16 %v438
    %v2014 = vunpack.c.l.b16 %v439
    %v2015 = vunpack.c.l.b16 %v440
    %v2016 = vunpack.c.l.b16 %v441
    %v2017 = vunpack.c.l.b16 %v442
    %v2018 = vunpack.c.l.b16 %v443
    %v2019 = vunpack.c.l.b16 %v444
    %v2020 = vunpack.c.l.b16 %v445
    %v2021 = vunpack.c.l.b16 %v446
    %v2022 = vunpack.c.l.b16 %v447
    %v2023 = vunpack.c.l.b16 %v448
    %v2024 = vunpack.c.l.b16 %v449
    %v2025 = vunpack.c.l.b16 %v450
    %v2026 = vunpack.c.l.b16 %v451
    %v2027 = vunpack.c.l.b16 %v452
    %v2028 = vunpack.c.l.b16 %v453
    %v2029 = vunpack.c.l.b16 %v454
    %v2030 = vunpack.c.l.b16 %v455
    %v2031 = vunpack.c.l.b16 %v456
    %v2032 = vunpack.c.l.b16 %v457
    %v2033 = vunpack.c.l.b16 %v458
    %v2034 = vunpack.c.l.b16 %v459
    %v2035 = vunpack.c.l.b16 %v460
    %v2036 = vunpack.c.l.b16 %v461
    %v2037 = vunpack.c.l.b16 %v462
    %v2038 = vunpack.c.l.b16 %v463
    %v2039 = vunpack.c.l.b16 %v464
    %v2040 = vunpack.c.l.b16 %v465
    %v2041 = vunpack.c.l.b16 %v466
    %v2042 = vunpack.c.l.b16 %v467
    %v2043 = vunpack.c.l.b16 %v468
    %v2044 = vunpack.c.l.b16 %v469
    %v2045 = vunpack.c.l.b16 %v470
    %v2046 = vunpack.c.l.b16 %v471
    %v2047 = vunpack.c.l.b16 %v472
    %v2048 = vunpack.c.l.b16 %v473
    %v2049 = vunpack.c.l.b16 %v474
    %v2050 = vunpack.c.l.b16 %v475
    %v2051 = vunpack.c.l.b16 %v476
    %v2052 = vunpack.c.l.b16 %v477
    %v2053 = vunpack.c.l.b16 %v478
    %v2054 = vunpack.c.l.b16 %v479
    %v2055 = vunpack.c.l.b16 %v480
    %v2056 = vunpack.c.l.b16 %v481
    %v2057 = vunpack.c.l.b16 %v482
    %v2058 = vunpack.c.l.b16 %v483
    %v2059 = vunpack.c.l.b16 %v484
    %v2060 = vunpack.c.l.b16 %v485
    %v2061 = vunpack.c.l.b16 %v486
    %v2062 = vunpack.c.l.b16 %v487
    %v2063 = vunpack.c.l.b16 %v488
    %v2064 = vunpack.c.l.b16 %v489
    %v2065 = vunpack.c.l.b16 %v490
    %v2066 = vunpack.c.l.b16 %v491
    %v2067 = vunpack.c.l.b16 %v492
    %v2068 = vunpack.c.l.b16 %v493
    %v2069 = vunpack.c.l.b16 %v494
    %v2070 = vunpack.c.l.b16 %v495
    %v2071 = vunpack.c.l.b16 %v496
    %v2072 = vunpack.c.l.b16 %v497
    %v2073 = vunpack.c.l.b16 %v498
    %v2074 = vunpack.c.l.b16 %v499
    %v2075 = vunpack.c.l.b16 %v500
    %v2076 = vunpack.c.l.b16 %v501
    %v2077 = vunpack.c.l.b16 %v502
    %v2078 = vunpack.c.l.b16 %v503
    %v2079 = vunpack.c.l.b16 %v504
    %v2080 = vunpack.c.l.b16 %v505
    %v2081 = vunpack.c.l.b16 %v506
    %v2082 = vunpack.c.l.b16 %v507
    %v2083 = vunpack.c.l.b16 %v508
    %v2084 = vunpack.c.l.b16 %v509
    %v2085 = vunpack.c.l.b16 %v510
    %v2086 = vunpack.c.l.b16 %v511
    %v2087 = vunpack.c.l.b16 %v512
    %v2088 = vunpack.c.l.b16 %v513
    %v2089 = vunpack.c.l.b16 %v514
    %v2090 = vunpack.c.l.b16 %v515
    %v2091 = vunpack.c.l.b16 %v516
    %v2092 = vunpack.c.l.b16 %v517
    %v2093 = vunpack.c.l.b16 %v518
    %v2094 = vunpack.c.l.b16 %v519
    %v2095 = vunpack.c.l.b16 %v520
    %v2096 = vunpack.c.l.b16 %v521
    %v2097 = vunpack.c.l.b16 %v522
    %v2098 = vunpack.c.l.b16 %v523
    %v2099 = vunpack.c.l.b16 %v524
    %v2100 = vunpack.c.l.b16 %v525
    %v2101 = vunpack.c.l.b16 %v526
    %v2102 = vunpack.c.l.b16 %v527
    %v2103 = vunpack.c.l.b16 %v528
    %v2104 = vunpack.c.l.b16 %v529
    %v2105 = vunpack.c.l.b16 %v530
    %v2106 = vunpack.c.l.b16 %v531
    %v2107 = vunpack.c.l.b16 %v532
    %v2108 = vunpack.c.l.b16 %v533
    %v2109 = vunpack.c.l.b16 %v534
    %v2110 = vunpack.c.l.b16 %v535
    %v2111 = vunpack.c.l.b16 %v536
    %v2112 = vunpack.c.l.b16 %v537
    %v2113 = vunpack.c.l.b16 %v538
    %v2114 = vunpack.c.l.b16 %v539
    %v2115 = vunpack.c.l.b16 %v540
    %v2116 = vunpack.c.l.b16 %v541
    %v2117 = vunpack.c.l.b16 %v542
    %v2118 = vunpack.c.l.b16 %v543
    %v2119 = vunpack.c.l.b16 %v544
    %v2120 = vunpack.c.l.b16 %v545
    %v2121 = vunpack.c.l.b16 %v546
    %v2122 = vunpack.c.l.b16 %v547
    %v2123 = vunpack.c.l.b16 %v548
    %v2124 = vunpack.c.l.b16 %v549
    %v2125 = vunpack.c.l.b16 %v550
    %v2126 = vunpack.c.l.b16 %v551
    %v2127 = vunpack.c.l.b16 %v552
    %v2128 = vunpack.c.l.b16 %v553
    %v2129 = vunpack.c.l.b16 %v554
    %v2130 = vunpack.c.l.b16 %v555
    %v2131 = vunpack.c.l.b16 %v556
    %v2132 = vunpack.c.l.b16 %v557
    %v2133 = vunpack.c.l.b16 %v558
    %v2134 = vunpack.c.l.b16 %v559
    %v2135 = vunpack.c.l.b16 %v560
    %v2136 = vunpack.c.l.b16 %v561
    %v2137 = vunpack.c.l.b16 %v562
    %v2138 = vunpack.c.l.b16 %v563
    %v2139 = vunpack.c.l.b16 %v564
    %v2140 = vunpack.c.l.b16 %v565
    %v2141 = vunpack.c.l.b16 %v566
    %v2142 = vunpack.c.l.b16 %v567
    %v2143 = vunpack.c.l.b16 %v568
    %v2144 = vunpack.c.l.b16 %v569
    %v2145 = vunpack.c.l.b16 %v570
    %v2146 = vunpack.c.l.b16 %v571
    %v2147 = vunpack.c.l.b16 %v572
    %v2148 = vunpack.c.l.b16 %v573
    %v2149 = vunpack.c.l.b16 %v574
    %v2150 = vunpack.c.l.b16 %v575
    %v2151 = vunpack.c.l.b16 %v576
    %v2152 = vunpack.c.l.b16 %v577
    %v2153 = vunpack.c.l.b16 %v578
    %v2154 = vunpack.c.l.b16 %v579
    %v2155 = vunpack.c.l.b16 %v580
    %v2156 = vunpack.c.l.b16 %v581
    %v2157 = vunpack.c.l.b16 %v582
    %v2158 = vunpack.c.l.b16 %v583
    %v2159 = vunpack.c.l.b16 %v584
    %v2160 = vunpack.c.l.b16 %v585
    %v2161 = vunpack.c.l.b16 %v586
    %v2162 = vunpack.c.l.b16 %v587
    %v2163 = vunpack.c.l.b16 %v588
    %v2164 = vunpack.c.l.b16 %v589
    %v2165 = vunpack.c.l.b16 %v590
    %v2166 = vunpack.c.l.b16 %v591
    %v2167 = vunpack.c.l.b16 %v592
    %v2168 = vunpack.c.l.b16 %v593
    %v2169 = vunpack.c.l.b16 %v594
    %v2170 = vunpack.c.l.b16 %v595
    %v2171 = vunpack.c.l.b16 %v596
    %v2172 = vunpack.c.l.b16 %v597
    %v2173 = vunpack.c.l.b16 %v598
    %v2174 = vunpack.c.l.b16 %v599
    %v2175 = vunpack.c.l.b16 %v600
    %v2176 = vunpack.c.l.b16 %v601
    %v2177 = vunpack.c.l.b16 %v602
    %v2178 = vunpack.c.l.b16 %v603
    %v2179 = vunpack.c.l.b16 %v604
    %v2180 = vunpack.c.l.b16 %v605
    %v2181 = vunpack.c.l.b16 %v606
    %v2182 = vunpack.c.l.b16 %v607
    %v2183 = vunpack.c.l.b16 %v608
    %v2184 = vunpack.c.l.b16 %v609
    %v2185 = vunpack.c.l.b16 %v610
    %v2186 = vunpack.c.l.b16 %v611
    %v2187 = vunpack.c.l.b16 %v612
    %v2188 = vunpack.c.l.b16 %v613
    %v2189 = vunpack.c.l.b16 %v614
    %v2190 = vunpack.c.l.b16 %v615
    %v2191 = vunpack.c.l.b16 %v616
    %v2192 = vunpack.c.l.b16 %v617
    %v2193 = vunpack.c.l.b16 %v618
    %v2194 = vunpack.c.l.b16 %v619
    %v2195 = vunpack.c.l.b16 %v620
    %v2196 = vunpack.c.l.b16 %v621
    %v2197 = vunpack.c.l.b16 %v622
    %v2198 = vunpack.c.l.b16 %v623
    %v2199 = vunpack.c.l.b16 %v624
    %v2200 = vunpack.c.l.b16 %v625
    %v2201 = vunpack.c.l.b16 %v626
    %v2202 = vunpack.c.l.b16 %v627
    %v2203 = vunpack.c.l.b16 %v628
    %v2204 = vunpack.c.l.b16 %v629
    %v2205 = vunpack.c.l.b16 %v630
    %v2206 = vunpack.c.l.b16 %v631
    %v2207 = vunpack.c.l.b16 %v632
    %v2208 = vunpack.c.l.b16 %v633
    %v2209 = vunpack.c.l.b16 %v634
    %v2210 = vunpack.c.l.b16 %v635
    %v2211 = vunpack.c.l.b16 %v636
    %v2212 = vunpack.c.l.b16 %v637
    %v2213 = vunpack.c.l.b16 %v638
    %v2214 = vunpack.c.l.b16 %v639
    %v2215 = vunpack.c.l.b16 %v640
    %v2216 = vunpack.c.l.b16 %v641
    %v2217 = vunpack.c.l.b16 %v642
    %v2218 = vunpack.c.l.b16 %v643
    %v2219 = vunpack.c.l.b16 %v644
    %v2220 = vunpack.c.l.b16 %v645
    %v2221 = vunpack.c.l.b16 %v646
    %v2222 = vunpack.c.l.b16 %v647
    %v2223 = vunpack.c.l.b16 %v648
    %v2224 = vunpack.c.l.b16 %v649
    %v2225 = vunpack.c.l.b16 %v650
    %v2226 = vunpack.c.l.b16 %v651
    %v2227 = vunpack.c.l.b16 %v652
    %v2228 = vunpack.c.l.b16 %v653
    %v2229 = vunpack.c.l.b16 %v654
    %v2230 = vunpack.c.l.b16 %v655
    %v2231 = vunpack.c.l.b16 %v656
    %v2232 = vunpack.c.l.b16 %v657
    %v2233 = vunpack.c.l.b16 %v658
    %v2234 = vunpack.c.l.b16 %v659
    %v2235 = vunpack.c.l.b16 %v660
    %v2236 = vunpack.c.l.b16 %v661
    %v2237 = vunpack.c.l.b16 %v662
    %v2238 = vunpack.c.l.b16 %v663
    %v2239 = vunpack.c.l.b16 %v664
    %v2240 = vunpack.c.l.b16 %v665
    %v2241 = vunpack.c.l.b16 %v666
    %v2242 = vunpack.c.l.b16 %v667
    %v2243 = vunpack.c.l.b16 %v668
    %v2244 = vunpack.c.l.b16 %v669
    %v2245 = vunpack.c.l.b16 %v670
    %v2246 = vunpack.c.l.b16 %v671
    %v2247 = vunpack.c.l.b16 %v672
    %v2248 = vunpack.c.l.b16 %v673
    %v2249 = vunpack.c.l.b16 %v674
    %v2250 = vunpack.c.l.b16 %v675
    %v2251 = vunpack.c.l.b16 %v676
    %v2252 = vunpack.c.l.b16 %v677
    %v2253 = vunpack.c.l.b16 %v678
    %v2254 = vunpack.c.l.b16 %v679
    %v2255 = vunpack.c.l.b16 %v680
    %v2256 = vunpack.c.l.b16 %v681
    %v2257 = vunpack.c.l.b16 %v682
    %v2258 = vunpack.c.l.b16 %v683
    %v2259 = vunpack.c.l.b16 %v684
    %v2260 = vunpack.c.l.b16 %v685
    %v2261 = vunpack.c.l.b16 %v686
    %v2262 = vunpack.c.l.b16 %v687
    %v2263 = vunpack.c.l.b16 %v688
    %v2264 = vunpack.c.l.b16 %v689
    %v2265 = vunpack.c.l.b16 %v690
    %v2266 = vunpack.c.l.b16 %v691
    %v2267 = vunpack.c.l.b16 %v692
    %v2268 = vunpack.c.l.b16 %v693
    %v2269 = vunpack.c.l.b16 %v694
    %v2270 = vunpack.c.l.b16 %v695
    %v2271 = vunpack.c.l.b16 %v696
    %v2272 = vunpack.c.l.b16 %v697
    %v2273 = vunpack.c.l.b16 %v698
    %v2274 = vunpack.c.l.b16 %v699
    %v2275 = vunpack.c.l.b16 %v700
    %v2276 = vunpack.c.l.b16 %v701
    %v2277 = vunpack.c.l.b16 %v702
    %v2278 = vunpack.c.l.b16 %v703
    %v2279 = vunpack.c.l.b16 %v704
    %v2280 = vunpack.c.l.b16 %v705
    %v2281 = vunpack.c.l.b16 %v706
    %v2282 = vunpack.c.l.b16 %v707
    %v2283 = vunpack.c.l.b16 %v708
    %v2284 = vunpack.c.l.b16 %v709
    %v2285 = vunpack.c.l.b16 %v710
    %v2286 = vunpack.c.l.b16 %v711
    %v2287 = vunpack.c.l.b16 %v712
    %v2288 = vunpack.c.l.b16 %v713
    %v2289 = vunpack.c.l.b16 %v714
    %v2290 = vunpack.c.l.b16 %v715
    %v2291 = vunpack.c.l.b16 %v716
    %v2292 = vunpack.c.l.b16 %v717
    %v2293 = vunpack.c.l.b16 %v718
    %v2294 = vunpack.c.l.b16 %v719
    %v2295 = vunpack.c.l.b16 %v720
    %v2296 = vunpack.c.l.b16 %v721
    %v2297 = vunpack.c.l.b16 %v722
    %v2298 = vunpack.c.l.b16 %v723
    %v2299 = vunpack.c.l.b16 %v724
    %v2300 = vunpack.c.l.b16 %v725
    %v2301 = vunpack.c.l.b16 %v726
    %v2302 = vunpack.c.l.b16 %v727
    %v2303 = vunpack.c.l.b16 %v728
    %v2304 = vunpack.c.l.b16 %v729
    %v2305 = vunpack.c.l.b16 %v730
    %v2306 = vunpack.c.l.b16 %v731
    %v2307 = vunpack.c.l.b16 %v732
    %v2308 = vunpack.c.l.b16 %v733
    %v2309 = vunpack.c.l.b16 %v734
    %v2310 = vunpack.c.l.b16 %v735
    %v2311 = vunpack.c.l.b16 %v736
    %v2312 = vunpack.c.l.b16 %v737
    %v2313 = vunpack.c.l.b16 %v738
    %v2314 = vunpack.c.l.b16 %v739
    %v2315 = vunpack.c.l.b16 %v740
    %v2316 = vunpack.c.l.b16 %v741
    %v2317 = vunpack.c.l.b16 %v742
    %v2318 = vunpack.c.l.b16 %v743
    %v2319 = vunpack.c.l.b16 %v744
    %v2320 = vunpack.c.l.b16 %v745
    %v2321 = vunpack.c.l.b16 %v746
    %v2322 = vunpack.c.l.b16 %v747
    %v2323 = vunpack.c.l.b16 %v748
    %v2324 = vunpack.c.l.b16 %v749
    %v2325 = vunpack.c.l.b16 %v750
    %v2326 = vunpack.c.l.b16 %v751
    %v2327 = vunpack.c.l.b16 %v752
    %v2328 = vunpack.c.l.b16 %v753
    %v2329 = vunpack.c.l.b16 %v754
    %v2330 = vunpack.c.l.b16 %v755
    %v2331 = vunpack.c.l.b16 %v756
    %v2332 = vunpack.c.l.b16 %v757
    %v2333 = vunpack.c.l.b16 %v758
    %v2334 = vunpack.c.l.b16 %v759
    %v2335 = vunpack.c.l.b16 %v760
    %v2336 = vunpack.c.l.b16 %v761
    %v2337 = vunpack.c.l.b16 %v762
    %v2338 = vunpack.c.l.b16 %v763
    %v2339 = vunpack.c.l.b16 %v764
    %v2340 = vunpack.c.l.b16 %v765
    %v2341 = vunpack.c.l.b16 %v766
    %v2342 = vunpack.c.l.b16 %v767
    %v2343 = vunpack.c.l.b16 %v768
    %v2344 = vunpack.c.l.b16 %v769
    %v2345 = vunpack.c.l.b16 %v770
    %v2346 = vunpack.c.l.b16 %v771
    %v2347 = vunpack.c.l.b16 %v772
    %v2348 = vunpack.c.l.b16 %v773
    %v2349 = vunpack.c.l.b16 %v774
    %v2350 = vunpack.c.l.b16 %v775
    %v2351 = vunpack.c.l.b16 %v776
    %v2352 = vunpack.c.l.b16 %v777
    %v2353 = vunpack.c.l.b16 %v778
    %v2354 = vunpack.c.l.b16 %v779
    %v2355 = vunpack.c.l.b16 %v780
    %v2356 = vunpack.c.l.b16 %v781
    %v2357 = vunpack.c.l.b16 %v782
    %v2358 = vunpack.c.l.b16 %v783
    %v2359 = vunpack.c.l.b16 %v784
    %v2360 = vunpack.c.l.b16 %v785
    %v2361 = vunpack.c.l.b16 %v786
    %v2362 = vunpack.c.l.b16 %v787
    %v2363 = vunpack.c.l.b16 %v788
    %v2364 = vunpack.c.l.b16 %v789
    %v2365 = vunpack.c.l.b16 %v790
    %v2366 = vunpack.c.l.b16 %v791
    %v2367 = vunpack.c.l.b16 %v792
    %v2368 = vunpack.c.l.b16 %v793
    %v2369 = vunpack.c.l.b16 %v794
    %v2370 = vunpack.c.l.b16 %v795
    %v2371 = vunpack.c.l.b16 %v796
    %v2372 = vunpack.c.l.b16 %v797
    %v2373 = vunpack.c.l.b16 %v798
    %v2374 = vunpack.c.l.b16 %v799
    %v2375 = vunpack.c.l.b16 %v800
    %v2376 = vunpack.c.l.b16 %v801
    %v2377 = vunpack.c.l.b16 %v802
    %v2378 = vunpack.c.l.b16 %v803
    %v2379 = vunpack.c.l.b16 %v804
    %v2380 = vunpack.c.l.b16 %v805
    %v2381 = vunpack.c.l.b16 %v806
    %v2382 = vunpack.c.l.b16 %v807
    %v2383 = vunpack.c.l.b16 %v808
    %v2384 = vunpack.c.l.b16 %v809
    %v2385 = vunpack.c.l.b16 %v810
    %v2386 = vunpack.c.l.b16 %v811
    %v2387 = vunpack.c.l.b16 %v812
    %v2388 = vunpack.c.l.b16 %v813
    %v2389 = vunpack.c.l.b16 %v814
    %v2390 = vunpack.c.l.b16 %v815
    %v2391 = vunpack.c.l.b16 %v816
    %v2392 = vunpack.c.l.b16 %v817
    %v2393 = vunpack.c.l.b16 %v818
    %v2394 = vunpack.c.l.b16 %v819
    %v2395 = vunpack.c.l.b16 %v820
    %v2396 = vunpack.c.l.b16 %v821
    %v2397 = vunpack.c.l.b16 %v822
    %v2398 = vunpack.c.l.b16 %v823
    %v2399 = vunpack.c.l.b16 %v824
    %v2400 = vunpack.c.l.b16 %v825
    %v2401 = vunpack.c.l.b16 %v826
    %v2402 = vunpack.c.l.b16 %v827
    %v2403 = vunpack.c.l.b16 %v828
    %v2404 = vunpack.c.l.b16 %v829
    %v2405 = vunpack.c.l.b16 %v830
    %v2406 = vunpack.c.l.b16 %v831
    %v2407 = vunpack.c.l.b16 %v832
    %v2408 = vunpack.c.l.b16 %v833
    %v2409 = vunpack.c.l.b16 %v834
    %v2410 = vunpack.c.l.b16 %v835
    %v2411 = vunpack.c.l.b16 %v836
    %v2412 = vunpack.c.l.b16 %v837
    %v2413 = vunpack.c.l.b16 %v838
    %v2414 = vunpack.c.l.b16 %v839
    %v2415 = vunpack.c.l.b16 %v840
    %v2416 = vunpack.c.l.b16 %v841
    %v2417 = vunpack.c.l.b16 %v842
    %v2418 = vunpack.c.l.b16 %v843
    %v2419 = vunpack.c.l.b16 %v844
    %v2420 = vunpack.c.l.b16 %v845
    %v2421 = vunpack.c.l.b16 %v846
    %v2422 = vunpack.c.l.b16 %v847
    %v2423 = vunpack.c.l.b16 %v848
    %v2424 = vunpack.c.l.b16 %v849
    %v2425 = vunpack.c.l.b16 %v850
    %v2426 = vunpack.c.l.b16 %v851
    %v2427 = vunpack.c.l.b16 %v852
    %v2428 = vunpack.c.l.b16 %v853
    %v2429 = vunpack.c.l.b16 %v854
    %v2430 = vunpack.c.l.b16 %v855
    %v2431 = vunpack.c.l.b16 %v856
    %v2432 = vunpack.c.l.b16 %v857
    %v2433 = vunpack.c.l.b16 %v858
    %v2434 = vunpack.c.l.b16 %v859
    %v2435 = vunpack.c.l.b16 %v860
    %v2436 = vunpack.c.l.b16 %v861
    %v2437 = vunpack.c.l.b16 %v862
    %v2438 = vunpack.c.l.b16 %v863
    %v2439 = vunpack.c.l.b16 %v864
    %v2440 = vunpack.c.l.b16 %v865
    %v2441 = vunpack.c.l.b16 %v866
    %v2442 = vunpack.c.l.b16 %v867
    %v2443 = vunpack.c.l.b16 %v868
    %v2444 = vunpack.c.l.b16 %v869
    %v2445 = vunpack.c.l.b16 %v870
    %v2446 = vunpack.c.l.b16 %v871
    %v2447 = vunpack.c.l.b16 %v872
    %v2448 = vunpack.c.l.b16 %v873
    %v2449 = vunpack.c.l.b16 %v874
    %v2450 = vunpack.c.l.b16 %v875
    %v2451 = vunpack.c.l.b16 %v876
    %v2452 = vunpack.c.l.b16 %v877
    %v2453 = vunpack.c.l.b16 %v878
    %v2454 = vunpack.c.l.b16 %v879
    %v2455 = vunpack.c.l.b16 %v880
    %v2456 = vunpack.c.l.b16 %v881
    %v2457 = vunpack.c.l.b16 %v882
    %v2458 = vunpack.c.l.b16 %v883
    %v2459 = vunpack.c.l.b16 %v884
    %v2460 = vunpack.c.l.b16 %v885
    %v2461 = vunpack.c.l.b16 %v886
    %v2462 = vunpack.c.l.b16 %v887
    %v2463 = vunpack.c.l.b16 %v888
    %v2464 = vunpack.c.l.b16 %v889
    %v2465 = vunpack.c.l.b16 %v890
    %v2466 = vunpack.c.l.b16 %v891
    %v2467 = vunpack.c.l.b16 %v892
    %v2468 = vunpack.c.l.b16 %v893
    %v2469 = vunpack.c.l.b16 %v894
    %v2470 = vunpack.c.l.b16 %v895
    %v2471 = vunpack.c.l.b16 %v896
    %v2472 = vunpack.c.l.b16 %v897
    %v2473 = vunpack.c.l.b16 %v898
    %v2474 = vunpack.c.l.b16 %v899
    %v2475 = vunpack.c.l.b16 %v900
    %v2476 = vunpack.c.l.b16 %v901
    %v2477 = vunpack.c.l.b16 %v902
    %v2478 = vunpack.c.l.b16 %v903
    %v2479 = vunpack.c.l.b16 %v904
    %v2480 = vunpack.c.l.b16 %v905
    %v2481 = vunpack.c.l.b16 %v906
    %v2482 = vunpack.c.l.b16 %v907
    %v2483 = vunpack.c.l.b16 %v908
    %v2484 = vunpack.c.l.b16 %v909
    %v2485 = vunpack.c.l.b16 %v910
    %v2486 = vunpack.c.l.b16 %v911
    %v2487 = vunpack.c.l.b16 %v912
    %v2488 = vunpack.c.l.b16 %v913
    %v2489 = vunpack.c.l.b16 %v914
    %v2490 = vunpack.c.l.b16 %v915
    %v2491 = vunpack.c.l.b16 %v916
    %v2492 = vunpack.c.l.b16 %v917
    %v2493 = vunpack.c.l.b16 %v918
    %v2494 = vunpack.c.l.b16 %v919
    %v2495 = vunpack.c.l.b16 %v920
    %v2496 = vunpack.c.l.b16 %v921
    %v2497 = vunpack.c.l.b16 %v922
    %v2498 = vunpack.c.l.b16 %v923
    %v2499 = vunpack.c.l.b16 %v924
    %v2500 = vunpack.c.l.b16 %v925
    %v2501 = vunpack.c.l.b16 %v926
    %v2502 = vunpack.c.l.b16 %v927
    %v2503 = vunpack.c.l.b16 %v928
    %v2504 = vunpack.c.l.b16 %v929
    %v2505 = vunpack.c.l.b16 %v930
    %v2506 = vunpack.c.l.b16 %v931
    %v2507 = vunpack.c.l.b16 %v932
    %v2508 = vunpack.c.l.b16 %v933
    %v2509 = vunpack.c.l.b16 %v934
    %v2510 = vunpack.c.l.b16 %v935
    %v2511 = vunpack.c.l.b16 %v936
    %v2512 = vunpack.c.l.b16 %v937
    %v2513 = vunpack.c.l.b16 %v938
    %v2514 = vunpack.c.l.b16 %v939
    %v2515 = vunpack.c.l.b16 %v940
    %v2516 = vunpack.c.l.b16 %v941
    %v2517 = vunpack.c.l.b16 %v942
    %v2518 = vunpack.c.l.b16 %v943
    %v2519 = vunpack.c.l.b16 %v944
    %v2520 = vunpack.c.l.b16 %v945
    %v2521 = vunpack.c.l.b16 %v946
    %v2522 = vunpack.c.l.b16 %v947
    %v2523 = vunpack.c.l.b16 %v948
    %v2524 = vunpack.c.l.b16 %v949
    %v2525 = vunpack.c.l.b16 %v950
    %v2526 = vunpack.c.l.b16 %v951
    %v2527 = vunpack.c.l.b16 %v952
    %v2528 = vunpack.c.l.b16 %v953
    %v2529 = vunpack.c.l.b16 %v954
    %v2530 = vunpack.c.l.b16 %v955
    %v2531 = vunpack.c.l.b16 %v956
    %v2532 = vunpack.c.l.b16 %v957
    %v2533 = vunpack.c.l.b16 %v958
    %v2534 = vunpack.c.l.b16 %v959
    %v2535 = vunpack.c.l.b16 %v960
    %v2536 = vunpack.c.l.b16 %v961
    %v2537 = vunpack.c.l.b16 %v962
    %v2538 = vunpack.c.l.b16 %v963
    %v2539 = vunpack.c.l.b16 %v964
    %v2540 = vunpack.c.l.b16 %v965
    %v2541 = vunpack.c.l.b16 %v966
    %v2542 = vunpack.c.l.b16 %v967
    %v2543 = vunpack.c.l.b16 %v968
    %v2544 = vunpack.c.l.b16 %v969
    %v2545 = vunpack.c.l.b16 %v970
    %v2546 = vunpack.c.l.b16 %v971
    %v2547 = vunpack.c.l.b16 %v972
    %v2548 = vunpack.c.l.b16 %v973
    %v2549 = vunpack.c.l.b16 %v974
    %v2550 = vunpack.c.l.b16 %v975
    %v2551 = vunpack.c.l.b16 %v976
    %v2552 = vunpack.c.l.b16 %v977
    %v2553 = vunpack.c.l.b16 %v978
    %v2554 = vunpack.c.l.b16 %v979
    %v2555 = vunpack.c.l.b16 %v980
    %v2556 = vunpack.c.l.b16 %v981
    %v2557 = vunpack.c.l.b16 %v982
    %v2558 = vunpack.c.l.b16 %v983
    %v2559 = vunpack.c.l.b16 %v984
    %v2560 = vunpack.c.l.b16 %v985
    %v2561 = vunpack.c.l.b16 %v986
    %v2562 = vunpack.c.l.b16 %v987
    %v2563 = vunpack.c.l.b16 %v988
    %v2564 = vunpack.c.l.b16 %v989
    %v2565 = vunpack.c.l.b16 %v990
    %v2566 = vunpack.c.l.b16 %v991
    %v2567 = vunpack.c.l.b16 %v992
    %v2568 = vunpack.c.l.b16 %v993
    %v2569 = vunpack.c.l.b16 %v994
    %v2570 = vunpack.c.l.b16 %v995
    %v2571 = vunpack.c.l.b16 %v996
    %v2572 = vunpack.c.l.b16 %v997
    %v2573 = vunpack.c.l.b16 %v998
    %v2574 = vunpack.c.l.b16 %v999
    %v2575 = vunpack.c.l.b16 %v1000
    %v2576 = vunpack.c.l.b16 %v1001
    %v2577 = vunpack.c.l.b16 %v1002
    %v2578 = vunpack.c.l.b16 %v1003
    %v2579 = vunpack.c.l.b16 %v1004
    %v2580 = vunpack.c.l.b16 %v1005
    %v2581 = vunpack.c.l.b16 %v1006
    %v2582 = vunpack.c.l.b16 %v1007
    %v2583 = vunpack.c.l.b16 %v1008
    %v2584 = vunpack.c.l.b16 %v1009
    %v2585 = vunpack.c.l.b16 %v1010
    %v2586 = vunpack.c.l.b16 %v1011
    %v2587 = vunpack.c.l.b16 %v1012
    %v2588 = vunpack.c.l.b16 %v1013
    %v2589 = vunpack.c.l.b16 %v1014
    %v2590 = vunpack.c.l.b16 %v1015
    %v2591 = vunpack.c.l.b16 %v1016
    %v2592 = vunpack.c.l.b16 %v1017
    %v2593 = vunpack.c.l.b16 %v1018
    %v2594 = vunpack.c.l.b16 %v1019
    %v2595 = vunpack.c.l.b16 %v1020
    %v2596 = vunpack.c.l.b16 %v1021
    %v2597 = vunpack.c.l.b16 %v1022
    %v2598 = vunpack.c.l.b16 %v1023
    %v2599 = vunpack.c.l.b16 %v1024
    %v2600 = vunpack.c.l.b16 %v1025
    %v2601 = vunpack.c.l.b16 %v1026
    %v2602 = vunpack.c.l.b16 %v1027
    %v2603 = vunpack.c.l.b16 %v1028
    %v2604 = vunpack.c.l.b16 %v1029
    %v2605 = vunpack.c.l.b16 %v1030
    %v2606 = vunpack.c.l.b16 %v1031
    %v2607 = vunpack.c.l.b16 %v1032
    %v2608 = vunpack.c.l.b16 %v1033
    %v2609 = vunpack.c.l.b16 %v1034
    %v2610 = vunpack.c.l.b16 %v1035
    %v2611 = vunpack.c.l.b16 %v1036
    %v2612 = vunpack.c.l.b16 %v1037
    %v2613 = vunpack.c.l.b16 %v1038
    %v2614 = vunpack.c.l.b16 %v1039
    %v2615 = vunpack.c.l.b16 %v1040
    %v2616 = vunpack.c.l.b16 %v1041
    %v2617 = vunpack.c.l.b16 %v1042
    %v2618 = vunpack.c.l.b16 %v1043
    %v2619 = vunpack.c.l.b16 %v1044
    %v2620 = vunpack.c.l.b16 %v1045
    %v2621 = vunpack.c.l.b16 %v1046
    %v2622 = vunpack.c.l.b16 %v1047
    %v2623 = vunpack.c.l.b16 %v1048
    %v2624 = vunpack.c.l.b16 %v1049
    %v2625 = vunpack.c.l.b16 %v1050
    %v2626 = vunpack.c.l.b16 %v1051
    %v2627 = vunpack.c.l.b16 %v1052
    %v2628 = vunpack.c.l.b16 %v1053
    %v2629 = vunpack.c.l.b16 %v1054
    %v2630 = vunpack.c.l.b16 %v1055
    %v2631 = vunpack.c.l.b16 %v1056
    %v2632 = vunpack.c.l.b16 %v1057
    %v2633 = vunpack.c.l.b16 %v1058
    %v2634 = vunpack.c.l.b16 %v1059
    %v2635 = vunpack.c.l.b16 %v1060
    %v2636 = vunpack.c.l.b16 %v1061
    %v2637 = vunpack.c.l.b16 %v1062
    %v2638 = vunpack.c.l.b16 %v1063
    %v2639 = vunpack.c.l.b16 %v1064
    %v2640 = vunpack.c.l.b16 %v1065
    %v2641 = vunpack.c.l.b16 %v1066
    %v2642 = vunpack.c.l.b16 %v1067
    %v2643 = vunpack.c.l.b16 %v1068
    %v2644 = vunpack.c.l.b16 %v1069
    %v2645 = vunpack.c.l.b16 %v1070
    %v2646 = vunpack.c.l.b16 %v1071
    %v2647 = vunpack.c.l.b16 %v1072
    %v2648 = vunpack.c.l.b16 %v1073
    %v2649 = vunpack.c.l.b16 %v1074
    %v2650 = vunpack.c.l.b16 %v1075
    %v2651 = vunpack.c.l.b16 %v1076
    %v2652 = vunpack.c.l.b16 %v1077
    %v2653 = vunpack.c.l.b16 %v1078
    %v2654 = vunpack.c.l.b16 %v1079
    %v2655 = vunpack.c.l.b16 %v1080
    %v2656 = vunpack.c.l.b16 %v1081
    %v2657 = vunpack.c.l.b16 %v1082
    %v2658 = vunpack.c.l.b16 %v1083
    %v2659 = vunpack.c.l.b16 %v1084
    %v2660 = vunpack.c.l.b16 %v1085
    %v2661 = vunpack.c.l.b16 %v1086
    %v2662 = vunpack.c.l.b16 %v1087
    %v2663 = vunpack.c.l.b16 %v1088
    %v2664 = vunpack.c.l.b16 %v1089
    %v2665 = vunpack.c.l.b16 %v1090
    %v2666 = vunpack.c.l.b16 %v1091
    %v2667 = vunpack.c.l.b16 %v1092
    %v2668 = vunpack.c.l.b16 %v1093
    %v2669 = vunpack.c.l.b16 %v1094
    %v2670 = vunpack.c.l.b16 %v1095
    %v2671 = vunpack.c.l.b16 %v1096
    %v2672 = vunpack.c.l.b16 %v1097
    %v2673 = vunpack.c.l.b16 %v1098
    %v2674 = vunpack.c.l.b16 %v1099
    %v2675 = vunpack.c.l.b16 %v1100
    %v2676 = vunpack.c.l.b16 %v1101
    %v2677 = vunpack.c.l.b16 %v1102
    %v2678 = vunpack.c.l.b16 %v1103
    %v2679 = vunpack.c.l.b16 %v1104
    %v2680 = vunpack.c.l.b16 %v1105
    %v2681 = vunpack.c.l.b16 %v1106
    %v2682 = vunpack.c.l.b16 %v1107
    %v2683 = vunpack.c.l.b16 %v1108
    %v2684 = vunpack.c.l.b16 %v1109
    %v2685 = vunpack.c.l.b16 %v1110
    %v2686 = vunpack.c.l.b16 %v1111
    %v2687 = vunpack.c.l.b16 %v1112
    %v2688 = vunpack.c.l.b16 %v1113
    %v2689 = vunpack.c.l.b16 %v1114
    %v2690 = vunpack.c.l.b16 %v1115
    %v2691 = vunpack.c.l.b16 %v1116
    %v2692 = vunpack.c.l.b16 %v1117
    %v2693 = vunpack.c.l.b16 %v1118
    %v2694 = vunpack.c.l.b16 %v1119
    %v2695 = vunpack.c.l.b16 %v1120
    %v2696 = vunpack.c.l.b16 %v1121
    %v2697 = vunpack.c.l.b16 %v1122
    %v2698 = vunpack.c.l.b16 %v1123
    %v2699 = vunpack.c.l.b16 %v1124
    %v2700 = vunpack.c.l.b16 %v1125
    %v2701 = vunpack.c.l.b16 %v1126
    %v2702 = vunpack.c.l.b16 %v1127
    %v2703 = vunpack.c.l.b16 %v1128
    %v2704 = vunpack.c.l.b16 %v1129
    %v2705 = vunpack.c.l.b16 %v1130
    %v2706 = vunpack.c.l.b16 %v1131
    %v2707 = vunpack.c.l.b16 %v1132
    %v2708 = vunpack.c.l.b16 %v1133
    %v2709 = vunpack.c.l.b16 %v1134
    %v2710 = vunpack.c.l.b16 %v1135
    %v2711 = vunpack.c.l.b16 %v1136
    %v2712 = vunpack.c.l.b16 %v1137
    %v2713 = vunpack.c.l.b16 %v1138
    %v2714 = vunpack.c.l.b16 %v1139
    %v2715 = vunpack.c.l.b16 %v1140
    %v2716 = vpack.c.b16 %v1933, %v1932
    %v2717 = vpack.c.b16 %v1935, %v1934
    %v2718 = vpack.c.b16 %v1937, %v1936
    %v2719 = vpack.c.b16 %v1939, %v1938
    %v2720 = vpack.c.b16 %v1941, %v1940
    %v2721 = vpack.c.b16 %v1943, %v1942
    %v2722 = vpack.c.b16 %v1945, %v1944
    %v2723 = vpack.c.b16 %v1947, %v1946
    %v2724 = vpack.c.b16 %v1949, %v1948
    %v2725 = vpack.c.b16 %v1951, %v1950
    %v2726 = vpack.c.b16 %v1953, %v1952
    %v2727 = vpack.c.b16 %v1955, %v1954
    %v2728 = vpack.c.b16 %v1957, %v1956
    %v2729 = vpack.c.b16 %v1959, %v1958
    %v2730 = vpack.c.b16 %v1961, %v1960
    %v2731 = vpack.c.b16 %v1963, %v1962
    %v2732 = vpack.c.b16 %v1965, %v1964
    %v2733 = vpack.c.b16 %v1967, %v1966
    %v2734 = vpack.c.b16 %v1969, %v1968
    %v2735 = vpack.c.b16 %v1971, %v1970
    %v2736 = vpack.c.b16 %v1973, %v1972
    %v2737 = vpack.c.b16 %v1975, %v1974
    %v2738 = vpack.c.b16 %v1977, %v1976
    %v2739 = vpack.c.b16 %v1979, %v1978
    %v2740 = vpack.c.b16 %v1981, %v1980
    %v2741 = vpack.c.b16 %v1983, %v1982
    %v2742 = vpack.c.b16 %v1985, %v1984
    %v2743 = vpack.c.b16 %v1987, %v1986
    %v2744 = vpack.c.b16 %v1989, %v1988
    %v2745 = vpack.c.b16 %v1991, %v1990
    %v2746 = vpack.c.b16 %v1993, %v1992
    %v2747 = vpack.c.b16 %v1995, %v1994
    %v2748 = vpack.c.b16 %v1997, %v1996
    %v2749 = vpack.c.b16 %v1999, %v1998
    %v2750 = vpack.c.b16 %v2001, %v2000
    %v2751 = vpack.c.b16 %v2003, %v2002
    %v2752 = vpack.c.b16 %v2005, %v2004
    %v2753 = vpack.c.b16 %v2007, %v2006
    %v2754 = vpack.c.b16 %v2009, %v2008
    %v2755 = vpack.c.b16 %v2011, %v2010
    %v2756 = vpack.c.b16 %v2013, %v2012
    %v2757 = vpack.c.b16 %v2015, %v2014
    %v2758 = vpack.c.b16 %v2017, %v2016
    %v2759 = vpack.c.b16 %v2019, %v2018
    %v2760 = vpack.c.b16 %v2021, %v2020
    %v2761 = vpack.c.b16 %v2023, %v2022
    %v2762 = vpack.c.b16 %v2025, %v2024
    %v2763 = vpack.c.b16 %v2027, %v2026
    %v2764 = vpack.c.b16 %v2029, %v2028
    %v2765 = vpack.c.b16 %v2031, %v2030
    %v2766 = vpack.c.b16 %v2033, %v2032
    %v2767 = vpack.c.b16 %v2035, %v2034
    %v2768 = vpack.c.b16 %v2037, %v2036
    %v2769 = vpack.c.b16 %v2039, %v2038
    %v2770 = vpack.c.b16 %v2041, %v2040
    %v2771 = vpack.c.b16 %v2043, %v2042
    %v2772 = vpack.c.b16 %v2045, %v2044
    %v2773 = vpack.c.b16 %v2047, %v2046
    %v2774 = vpack.c.b16 %v2049, %v2048
    %v2775 = vpack.c.b16 %v2051, %v2050
    %v2776 = vpack.c.b16 %v2053, %v2052
    %v2777 = vpack.c.b16 %v2055, %v2054
    %v2778 = vpack.c.b16 %v2057, %v2056
    %v2779 = vpack.c.b16 %v2059, %v2058
    %v2780 = vpack.c.b16 %v2061, %v2060
    %v2781 = vpack.c.b16 %v2063, %v2062
    %v2782 = vpack.c.b16 %v2065, %v2064
    %v2783 = vpack.c.b16 %v2067, %v2066
    %v2784 = vpack.c.b16 %v2069, %v2068
    %v2785 = vpack.c.b16 %v2071, %v2070
    %v2786 = vpack.c.b16 %v2073, %v2072
    %v2787 = vpack.c.b16 %v2075, %v2074
    %v2788 = vpack.c.b16 %v2077, %v2076
    %v2789 = vpack.c.b16 %v2079, %v2078
    %v2790 = vpack.c.b16 %v2081, %v2080
    %v2791 = vpack.c.b16 %v2083, %v2082
    %v2792 = vpack.c.b16 %v2085, %v2084
    %v2793 = vpack.c.b16 %v2087, %v2086
    %v2794 = vpack.c.b16 %v2089, %v2088
    %v2795 = vpack.c.b16 %v2091, %v2090
    %v2796 = vpack.c.b16 %v2093, %v2092
    %v2797 = vpack.c.b16 %v2095, %v2094
    %v2798 = vpack.c.b16 %v2097, %v2096
    %v2799 = vpack.c.b16 %v2099, %v2098
    %v2800 = vpack.c.b16 %v2101, %v2100
    %v2801 = vpack.c.b16 %v2103, %v2102
    %v2802 = vpack.c.b16 %v2105, %v2104
    %v2803 = vpack.c.b16 %v2107, %v2106
    %v2804 = vpack.c.b16 %v2109, %v2108
    %v2805 = vpack.c.b16 %v2111, %v2110
    %v2806 = vpack.c.b16 %v2113, %v2112
    %v2807 = vpack.c.b16 %v2115, %v2114
    %v2808 = vpack.c.b16 %v2117, %v2116
    %v2809 = vpack.c.b16 %v2119, %v2118
    %v2810 = vpack.c.b16 %v2121, %v2120
    %v2811 = vpack.c.b16 %v2123, %v2122
    %v2812 = vpack.c.b16 %v2125, %v2124
    %v2813 = vpack.c.b16 %v2127, %v2126
    %v2814 = vpack.c.b16 %v2129, %v2128
    %v2815 = vpack.c.b16 %v2131, %v2130
    %v2816 = vpack.c.b16 %v2133, %v2132
    %v2817 = vpack.c.b16 %v2135, %v2134
    %v2818 = vpack.c.b16 %v2137, %v2136
    %v2819 = vpack.c.b16 %v2139, %v2138
    %v2820 = vpack.c.b16 %v2141, %v2140
    %v2821 = vpack.c.b16 %v2143, %v2142
    %v2822 = vpack.c.b16 %v2145, %v2144
    %v2823 = vpack.c.b16 %v2147, %v2146
    %v2824 = vpack.c.b16 %v2149, %v2148
    %v2825 = vpack.c.b16 %v2151, %v2150
    %v2826 = vpack.c.b16 %v2153, %v2152
    %v2827 = vpack.c.b16 %v2155, %v2154
    %v2828 = vpack.c.b16 %v2157, %v2156
    %v2829 = vpack.c.b16 %v2159, %v2158
    %v2830 = vpack.c.b16 %v2161, %v2160
    %v2831 = vpack.c.b16 %v2163, %v2162
    %v2832 = vpack.c.b16 %v2165, %v2164
    %v2833 = vpack.c.b16 %v2167, %v2166
    %v2834 = vpack.c.b16 %v2169, %v2168
    %v2835 = vpack.c.b16 %v2171, %v2170
    %v2836 = vpack.c.b16 %v2173, %v2172
    %v2837 = vpack.c.b16 %v2175, %v2174
    %v2838 = vpack.c.b16 %v2177, %v2176
    %v2839 = vpack.c.b16 %v2179, %v2178
    %v2840 = vpack.c.b16 %v2181, %v2180
    %v2841 = vpack.c.b16 %v2183, %v2182
    %v2842 = vpack.c.b16 %v2185, %v2184
    %v2843 = vpack.c.b16 %v2187, %v2186
    %v2844 = vpack.c.b16 %v2189, %v2188
    %v2845 = vpack.c.b16 %v2191, %v2190
    %v2846 = vpack.c.b16 %v2193, %v2192
    %v2847 = vpack.c.b16 %v2195, %v2194
    %v2848 = vpack.c.b16 %v2197, %v2196
    %v2849 = vpack.c.b16 %v2199, %v2198
    %v2850 = vpack.c.b16 %v2201, %v2200
    %v2851 = vpack.c.b16 %v2203, %v2202
    %v2852 = vpack.c.b16 %v2205, %v2204
    %v2853 = vpack.c.b16 %v2207, %v2206
    %v2854 = vpack.c.b16 %v2209, %v2208
    %v2855 = vpack.c.b16 %v2211, %v2210
    %v2856 = vpack.c.b16 %v2213, %v2212
    %v2857 = vpack.c.b16 %v2215, %v2214
    %v2858 = vpack.c.b16 %v2217, %v2216
    %v2859 = vpack.c.b16 %v2219, %v2218
    %v2860 = vpack.c.b16 %v2221, %v2220
    %v2861 = vpack.c.b16 %v2223, %v2222
    %v2862 = vpack.c.b16 %v2225, %v2224
    %v2863 = vpack.c.b16 %v2227, %v2226
    %v2864 = vpack.c.b16 %v2229, %v2228
    %v2865 = vpack.c.b16 %v2231, %v2230
    %v2866 = vpack.c.b16 %v2233, %v2232
    %v2867 = vpack.c.b16 %v2235, %v2234
    %v2868 = vpack.c.b16 %v2237, %v2236
    %v2869 = vpack.c.b16 %v2239, %v2238
    %v2870 = vpack.c.b16 %v2241, %v2240
    %v2871 = vpack.c.b16 %v2243, %v2242
    %v2872 = vpack.c.b16 %v2245, %v2244
    %v2873 = vpack.c.b16 %v2247, %v2246
    %v2874 = vpack.c.b16 %v2249, %v2248
    %v2875 = vpack.c.b16 %v2251, %v2250
    %v2876 = vpack.c.b16 %v2253, %v2252
    %v2877 = vpack.c.b16 %v2255, %v2254
    %v2878 = vpack.c.b16 %v2257, %v2256
    %v2879 = vpack.c.b16 %v2259, %v2258
    %v2880 = vpack.c.b16 %v2261, %v2260
    %v2881 = vpack.c.b16 %v2263, %v2262
    %v2882 = vpack.c.b16 %v2265, %v2264
    %v2883 = vpack.c.b16 %v2267, %v2266
    %v2884 = vpack.c.b16 %v2269, %v2268
    %v2885 = vpack.c.b16 %v2271, %v2270
    %v2886 = vpack.c.b16 %v2273, %v2272
    %v2887 = vpack.c.b16 %v2275, %v2274
    %v2888 = vpack.c.b16 %v2277, %v2276
    %v2889 = vpack.c.b16 %v2279, %v2278
    %v2890 = vpack.c.b16 %v2281, %v2280
    %v2891 = vpack.c.b16 %v2283, %v2282
    %v2892 = vpack.c.b16 %v2285, %v2284
    %v2893 = vpack.c.b16 %v2287, %v2286
    %v2894 = vpack.c.b16 %v2289, %v2288
    %v2895 = vpack.c.b16 %v2291, %v2290
    %v2896 = vpack.c.b16 %v2293, %v2292
    %v2897 = vpack.c.b16 %v2295, %v2294
    %v2898 = vpack.c.b16 %v2297, %v2296
    %v2899 = vpack.c.b16 %v2299, %v2298
    %v2900 = vpack.c.b16 %v2301, %v2300
    %v2901 = vpack.c.b16 %v2303, %v2302
    %v2902 = vpack.c.b16 %v2305, %v2304
    %v2903 = vpack.c.b16 %v2307, %v2306
    %v2904 = vpack.c.b16 %v2309, %v2308
    %v2905 = vpack.c.b16 %v2311, %v2310
    %v2906 = vpack.c.b16 %v2313, %v2312
    %v2907 = vpack.c.b16 %v2315, %v2314
    %v2908 = vpack.c.b16 %v2317, %v2316
    %v2909 = vpack.c.b16 %v2319, %v2318
    %v2910 = vpack.c.b16 %v2321, %v2320
    %v2911 = vpack.c.b16 %v2323, %v2322
    %v2912 = vpack.c.b16 %v2325, %v2324
    %v2913 = vpack.c.b16 %v2327, %v2326
    %v2914 = vpack.c.b16 %v2329, %v2328
    %v2915 = vpack.c.b16 %v2331, %v2330
    %v2916 = vpack.c.b16 %v2333, %v2332
    %v2917 = vpack.c.b16 %v2335, %v2334
    %v2918 = vpack.c.b16 %v2337, %v2336
    %v2919 = vpack.c.b16 %v2339, %v2338
    %v2920 = vpack.c.b16 %v2341, %v2340
    %v2921 = vpack.c.b16 %v2343, %v2342
    %v2922 = vpack.c.b16 %v2345, %v2344
    %v2923 = vpack.c.b16 %v2347, %v2346
    %v2924 = vpack.c.b16 %v2349, %v2348
    %v2925 = vpack.c.b16 %v2351, %v2350
    %v2926 = vpack.c.b16 %v2353, %v2352
    %v2927 = vpack.c.b16 %v2355, %v2354
    %v2928 = vpack.c.b16 %v2357, %v2356
    %v2929 = vpack.c.b16 %v2359, %v2358
    %v2930 = vpack.c.b16 %v2361, %v2360
    %v2931 = vpack.c.b16 %v2363, %v2362
    %v2932 = vpack.c.b16 %v2365, %v2364
    %v2933 = vpack.c.b16 %v2367, %v2366
    %v2934 = vpack.c.b16 %v2369, %v2368
    %v2935 = vpack.c.b16 %v2371, %v2370
    %v2936 = vpack.c.b16 %v2373, %v2372
    %v2937 = vpack.c.b16 %v2375, %v2374
    %v2938 = vpack.c.b16 %v2377, %v2376
    %v2939 = vpack.c.b16 %v2379, %v2378
    %v2940 = vpack.c.b16 %v2381, %v2380
    %v2941 = vpack.c.b16 %v2383, %v2382
    %v2942 = vpack.c.b16 %v2385, %v2384
    %v2943 = vpack.c.b16 %v2387, %v2386
    %v2944 = vpack.c.b16 %v2389, %v2388
    %v2945 = vpack.c.b16 %v2391, %v2390
    %v2946 = vpack.c.b16 %v2393, %v2392
    %v2947 = vpack.c.b16 %v2395, %v2394
    %v2948 = vpack.c.b16 %v2397, %v2396
    %v2949 = vpack.c.b16 %v2399, %v2398
    %v2950 = vpack.c.b16 %v2401, %v2400
    %v2951 = vpack.c.b16 %v2403, %v2402
    %v2952 = vpack.c.b16 %v2405, %v2404
    %v2953 = vpack.c.b16 %v2407, %v2406
    %v2954 = vpack.c.b16 %v2409, %v2408
    %v2955 = vpack.c.b16 %v2411, %v2410
    %v2956 = vpack.c.b16 %v2413, %v2412
    %v2957 = vpack.c.b16 %v2415, %v2414
    %v2958 = vpack.c.b16 %v2417, %v2416
    %v2959 = vpack.c.b16 %v2419, %v2418
    %v2960 = vpack.c.b16 %v2421, %v2420
    %v2961 = vpack.c.b16 %v2423, %v2422
    %v2962 = vpack.c.b16 %v2425, %v2424
    %v2963 = vpack.c.b16 %v2427, %v2426
    %v2964 = vpack.c.b16 %v2429, %v2428
    %v2965 = vpack.c.b16 %v2431, %v2430
    %v2966 = vpack.c.b16 %v2433, %v2432
    %v2967 = vpack.c.b16 %v2435, %v2434
    %v2968 = vpack.c.b16 %v2437, %v2436
    %v2969 = vpack.c.b16 %v2439, %v2438
    %v2970 = vpack.c.b16 %v2441, %v2440
    %v2971 = vpack.c.b16 %v2443, %v2442
    %v2972 = vpack.c.b16 %v2445, %v2444
    %v2973 = vpack.c.b16 %v2447, %v2446
    %v2974 = vpack.c.b16 %v2449, %v2448
    %v2975 = vpack.c.b16 %v2451, %v2450
    %v2976 = vpack.c.b16 %v2453, %v2452
    %v2977 = vpack.c.b16 %v2455, %v2454
    %v2978 = vpack.c.b16 %v2457, %v2456
    %v2979 = vpack.c.b16 %v2459, %v2458
    %v2980 = vpack.c.b16 %v2461, %v2460
    %v2981 = vpack.c.b16 %v2463, %v2462
    %v2982 = vpack.c.b16 %v2465, %v2464
    %v2983 = vpack.c.b16 %v2467, %v2466
    %v2984 = vpack.c.b16 %v2469, %v2468
    %v2985 = vpack.c.b16 %v2471, %v2470
    %v2986 = vpack.c.b16 %v2473, %v2472
    %v2987 = vpack.c.b16 %v2475, %v2474
    %v2988 = vpack.c.b16 %v2477, %v2476
    %v2989 = vpack.c.b16 %v2479, %v2478
    %v2990 = vpack.c.b16 %v2481, %v2480
    %v2991 = vpack.c.b16 %v2483, %v2482
    %v2992 = vpack.c.b16 %v2485, %v2484
    %v2993 = vpack.c.b16 %v2487, %v2486
    %v2994 = vpack.c.b16 %v2489, %v2488
    %v2995 = vpack.c.b16 %v2491, %v2490
    %v2996 = vpack.c.b16 %v2493, %v2492
    %v2997 = vpack.c.b16 %v2495, %v2494
    %v2998 = vpack.c.b16 %v2497, %v2496
    %v2999 = vpack.c.b16 %v2499, %v2498
    %v3000 = vpack.c.b16 %v2501, %v2500
    %v3001 = vpack.c.b16 %v2503, %v2502
    %v3002 = vpack.c.b16 %v2505, %v2504
    %v3003 = vpack.c.b16 %v2507, %v2506
    %v3004 = vpack.c.b16 %v2509, %v2508
    %v3005 = vpack.c.b16 %v2511, %v2510
    %v3006 = vpack.c.b16 %v2513, %v2512
    %v3007 = vpack.c.b16 %v2515, %v2514
    %v3008 = vpack.c.b16 %v2517, %v2516
    %v3009 = vpack.c.b16 %v2519, %v2518
    %v3010 = vpack.c.b16 %v2521, %v2520
    %v3011 = vpack.c.b16 %v2523, %v2522
    %v3012 = vpack.c.b16 %v2525, %v2524
    %v3013 = vpack.c.b16 %v2527, %v2526
    %v3014 = vpack.c.b16 %v2529, %v2528
    %v3015 = vpack.c.b16 %v2531, %v2530
    %v3016 = vpack.c.b16 %v2533, %v2532
    %v3017 = vpack.c.b16 %v2535, %v2534
    %v3018 = vpack.c.b16 %v2537, %v2536
    %v3019 = vpack.c.b16 %v2539, %v2538
    %v3020 = vpack.c.b16 %v2541, %v2540
    %v3021 = vpack.c.b16 %v2543, %v2542
    %v3022 = vpack.c.b16 %v2545, %v2544
    %v3023 = vpack.c.b16 %v2547, %v2546
    %v3024 = vpack.c.b16 %v2549, %v2548
    %v3025 = vpack.c.b16 %v2551, %v2550
    %v3026 = vpack.c.b16 %v2553, %v2552
    %v3027 = vpack.c.b16 %v2555, %v2554
    %v3028 = vpack.c.b16 %v2557, %v2556
    %v3029 = vpack.c.b16 %v2559, %v2558
    %v3030 = vpack.c.b16 %v2561, %v2560
    %v3031 = vpack.c.b16 %v2563, %v2562
    %v3032 = vpack.c.b16 %v2565, %v2564
    %v3033 = vpack.c.b16 %v2567, %v2566
    %v3034 = vpack.c.b16 %v2569, %v2568
    %v3035 = vpack.c.b16 %v2571, %v2570
    %v3036 = vpack.c.b16 %v2573, %v2572
    %v3037 = vpack.c.b16 %v2575, %v2574
    %v3038 = vpack.c.b16 %v2577, %v2576
    %v3039 = vpack.c.b16 %v2579, %v2578
    %v3040 = vpack.c.b16 %v2581, %v2580
    %v3041 = vpack.c.b16 %v2583, %v2582
    %v3042 = vpack.c.b16 %v2585, %v2584
    %v3043 = vpack.c.b16 %v2587, %v2586
    %v3044 = vpack.c.b16 %v2589, %v2588
    %v3045 = vpack.c.b16 %v2591, %v2590
    %v3046 = vpack.c.b16 %v2593, %v2592
    %v3047 = vpack.c.b16 %v2595, %v2594
    %v3048 = vpack.c.b16 %v2597, %v2596
    %v3049 = vpack.c.b16 %v2599, %v2598
    %v3050 = vpack.c.b16 %v2601, %v2600
    %v3051 = vpack.c.b16 %v2603, %v2602
    %v3052 = vpack.c.b16 %v2605, %v2604
    %v3053 = vpack.c.b16 %v2607, %v2606
    %v3054 = vpack.c.b16 %v2609, %v2608
    %v3055 = vpack.c.b16 %v2611, %v2610
    %v3056 = vpack.c.b16 %v2613, %v2612
    %v3057 = vpack.c.b16 %v2615, %v2614
    %v3058 = vpack.c.b16 %v2617, %v2616
    %v3059 = vpack.c.b16 %v2619, %v2618
    %v3060 = vpack.c.b16 %v2621, %v2620
    %v3061 = vpack.c.b16 %v2623, %v2622
    %v3062 = vpack.c.b16 %v2625, %v2624
    %v3063 = vpack.c.b16 %v2627, %v2626
    %v3064 = vpack.c.b16 %v2629, %v2628
    %v3065 = vpack.c.b16 %v2631, %v2630
    %v3066 = vpack.c.b16 %v2633, %v2632
    %v3067 = vpack.c.b16 %v2635, %v2634
    %v3068 = vpack.c.b16 %v2637, %v2636
    %v3069 = vpack.c.b16 %v2639, %v2638
    %v3070 = vpack.c.b16 %v2641, %v2640
    %v3071 = vpack.c.b16 %v2643, %v2642
    %v3072 = vpack.c.b16 %v2645, %v2644
    %v3073 = vpack.c.b16 %v2647, %v2646
    %v3074 = vpack.c.b16 %v2649, %v2648
    %v3075 = vpack.c.b16 %v2651, %v2650
    %v3076 = vpack.c.b16 %v2653, %v2652
    %v3077 = vpack.c.b16 %v2655, %v2654
    %v3078 = vpack.c.b16 %v2657, %v2656
    %v3079 = vpack.c.b16 %v2659, %v2658
    %v3080 = vpack.c.b16 %v2661, %v2660
    %v3081 = vpack.c.b16 %v2663, %v2662
    %v3082 = vpack.c.b16 %v2665, %v2664
    %v3083 = vpack.c.b16 %v2667, %v2666
    %v3084 = vpack.c.b16 %v2669, %v2668
    %v3085 = vpack.c.b16 %v2671, %v2670
    %v3086 = vpack.c.b16 %v2673, %v2672
    %v3087 = vpack.c.b16 %v2675, %v2674
    %v3088 = vpack.c.b16 %v2677, %v2676
    %v3089 = vpack.c.b16 %v2679, %v2678
    %v3090 = vpack.c.b16 %v2681, %v2680
    %v3091 = vpack.c.b16 %v2683, %v2682
    %v3092 = vpack.c.b16 %v2685, %v2684
    %v3093 = vpack.c.b16 %v2687, %v2686
    %v3094 = vpack.c.b16 %v2689, %v2688
    %v3095 = vpack.c.b16 %v2691, %v2690
    %v3096 = vpack.c.b16 %v2693, %v2692
    %v3097 = vpack.c.b16 %v2695, %v2694
    %v3098 = vpack.c.b16 %v2697, %v2696
    %v3099 = vpack.c.b16 %v2699, %v2698
    %v3100 = vpack.c.b16 %v2701, %v2700
    %v3101 = vpack.c.b16 %v2703, %v2702
    %v3102 = vpack.c.b16 %v2705, %v2704
    %v3103 = vpack.c.b16 %v2707, %v2706
    %v3104 = vpack.c.b16 %v2709, %v2708
    %v3105 = vpack.c.b16 %v2711, %v2710
    %v3106 = vpack.c.b16 %v2713, %v2712
    %v3107 = vpack.c.b16 %v2715, %v2714
    %3500 = vmatprep.subr.bf16.mxu0 0
    %3501 = vmatpush1.bf16.msra.mxu0 %v2716
    %3502 = vmatprep.subr.bf16.mxu0 0
    %3503 = vmatpush1.bf16.msra.mxu0 %v2717
    %3504 = vmatprep.subr.bf16.mxu0 0
    %3505 = vmatpush1.bf16.msra.mxu0 %v2718
    %3506 = vmatprep.subr.bf16.mxu0 0
    %3507 = vmatpush1.bf16.msra.mxu0 %v2719
    %3508 = vmatprep.subr.bf16.mxu0 0
    %3509 = vmatpush1.bf16.msra.mxu0 %v2720
    %3510 = vmatprep.subr.bf16.mxu0 0
    %3511 = vmatpush1.bf16.msra.mxu0 %v2721
    %3512 = vmatprep.subr.bf16.mxu0 0
    %3513 = vmatpush1.bf16.msra.mxu0 %v2722
    %3514 = vmatprep.subr.bf16.mxu0 0
    %3515 = vmatpush1.bf16.msra.mxu0 %v2723
    %3516 = vmatprep.subr.bf16.mxu0 0
    %3517 = vmatpush1.bf16.msra.mxu0 %v2724
    %3518 = vmatprep.subr.bf16.mxu0 0
    %3519 = vmatpush1.bf16.msra.mxu0 %v2725
    %3520 = vmatprep.subr.bf16.mxu0 0
    %3521 = vmatpush1.bf16.msra.mxu0 %v2726
    %3522 = vmatprep.subr.bf16.mxu0 0
    %3523 = vmatpush1.bf16.msra.mxu0 %v2727
    %3524 = vmatprep.subr.bf16.mxu0 0
    %3525 = vmatpush1.bf16.msra.mxu0 %v2728
    %3526 = vmatprep.subr.bf16.mxu0 0
    %3527 = vmatpush1.bf16.msra.mxu0 %v2729
    %3528 = vmatprep.subr.bf16.mxu0 0
    %3529 = vmatpush1.bf16.msra.mxu0 %v2730
    %3530 = vmatprep.subr.bf16.mxu0 0
    %3531 = vmatpush1.bf16.msra.mxu0 %v2731
    %3532 = vmatprep.mubr.bf16.mxu0 %v309
    %3533 = vmatmul.mubr.bf16.gmra.mrb[0].mxu0 %v308
    %v3534 = vpop.f32.mrb[0].mxu0
    %v3535 = vadd.f32 %v1146, %v3534
    %v3536 = vpop.f32.mrb[0].mxu0
    %v3537 = vpop.f32.mrb[0].mxu0
    %v3538 = vpop.f32.mrb[0].mxu0
    %3539 = vdwg.mxu0
    %3540 = vmatprep.subr.bf16.mxu0 0
    %3541 = vmatpush1.bf16.msra.mxu0 %v2732
    %3542 = vmatprep.subr.bf16.mxu0 0
    %3543 = vmatpush1.bf16.msra.mxu0 %v2733
    %3544 = vmatprep.subr.bf16.mxu0 0
    %3545 = vmatpush1.bf16.msra.mxu0 %v2734
    %3546 = vmatprep.subr.bf16.mxu0 0
    %3547 = vmatpush1.bf16.msra.mxu0 %v2735
    %3548 = vmatprep.subr.bf16.mxu0 0
    %3549 = vmatpush1.bf16.msra.mxu0 %v2736
    %3550 = vmatprep.subr.bf16.mxu0 0
    %3551 = vmatpush1.bf16.msra.mxu0 %v2737
    %3552 = vmatprep.subr.bf16.mxu0 0
    %3553 = vmatpush1.bf16.msra.mxu0 %v2738
    %3554 = vmatprep.subr.bf16.mxu0 0
    %3555 = vmatpush1.bf16.msra.mxu0 %v2739
    %3556 = vmatprep.subr.bf16.mxu0 0
    %3557 = vmatpush1.bf16.msra.mxu0 %v2740
    %3558 = vmatprep.subr.bf16.mxu0 0
    %3559 = vmatpush1.bf16.msra.mxu0 %v2741
    %3560 = vmatprep.subr.bf16.mxu0 0
    %3561 = vmatpush1.bf16.msra.mxu0 %v2742
    %3562 = vmatprep.subr.bf16.mxu0 0
    %3563 = vmatpush1.bf16.msra.mxu0 %v2743
    %3564 = vmatprep.subr.bf16.mxu0 0
    %3565 = vmatpush1.bf16.msra.mxu0 %v2744
    %3566 = vmatprep.subr.bf16.mxu0 0
    %3567 = vmatpush1.bf16.msra.mxu0 %v2745
    %3568 = vmatprep.subr.bf16.mxu0 0
    %3569 = vmatpush1.bf16.msra.mxu0 %v2746
    %3570 = vmatprep.subr.bf16.mxu0 0
    %3571 = vmatpush1.bf16.msra.mxu0 %v2747
    %3572 = vmatprep.mubr.bf16.mxu0 %v311
    %3573 = vmatmul.mubr.bf16.gmra.mrb[0].mxu0 %v310
    %v3574 = vpop.f32.mrb[0].mxu0
    %v3575 = vadd.f32 %v3535, %v3574
    %v3576 = vpop.f32.mrb[0].mxu0
    %v3577 = vpop.f32.mrb[0].mxu0
    %v3578 = vpop.f32.mrb[0].mxu0
    %3579 = vdwg.mxu0
    %3580 = vmatprep.subr.bf16.mxu0 0
    %3581 = vmatpush1.bf16.msra.mxu0 %v2748
    %3582 = vmatprep.subr.bf16.mxu0 0
    %3583 = vmatpush1.bf16.msra.mxu0 %v2749
    %3584 = vmatprep.subr.bf16.mxu0 0
    %3585 = vmatpush1.bf16.msra.mxu0 %v2750
    %3586 = vmatprep.subr.bf16.mxu0 0
    %3587 = vmatpush1.bf16.msra.mxu0 %v2751
    %3588 = vmatprep.subr.bf16.mxu0 0
    %3589 = vmatpush1.bf16.msra.mxu0 %v2752
    %3590 = vmatprep.subr.bf16.mxu0 0
    %3591 = vmatpush1.bf16.msra.mxu0 %v2753
    %3592 = vmatprep.subr.bf16.mxu0 0
    %3593 = vmatpush1.bf16.msra.mxu0 %v2754
    %3594 = vmatprep.subr.bf16.mxu0 0
    %3595 = vmatpush1.bf16.msra.mxu0 %v2755
    %3596 = vmatprep.subr.bf16.mxu0 0
    %3597 = vmatpush1.bf16.msra.mxu0 %v2756
    %3598 = vmatprep.subr.bf16.mxu0 0
    %3599 = vmatpush1.bf16.msra.mxu0 %v2757
    %3600 = vmatprep.subr.bf16.mxu0 0
    %3601 = vmatpush1.bf16.msra.mxu0 %v2758
    %3602 = vmatprep.subr.bf16.mxu0 0
    %3603 = vmatpush1.bf16.msra.mxu0 %v2759
    %3604 = vmatprep.subr.bf16.mxu0 0
    %3605 = vmatpush1.bf16.msra.mxu0 %v2760
    %3606 = vmatprep.subr.bf16.mxu0 0
    %3607 = vmatpush1.bf16.msra.mxu0 %v2761
    %3608 = vmatprep.subr.bf16.mxu0 0
    %3609 = vmatpush1.bf16.msra.mxu0 %v2762
    %3610 = vmatprep.subr.bf16.mxu0 0
    %3611 = vmatpush1.bf16.msra.mxu0 %v2763
    %3612 = vmatprep.mubr.bf16.mxu0 %v313
    %3613 = vmatmul.mubr.bf16.gmra.mrb[0].mxu0 %v312
    %v3614 = vpop.f32.mrb[0].mxu0
    %v3615 = vadd.f32 %v3575, %v3614
    %v3616 = vpop.f32.mrb[0].mxu0
    %v3617 = vpop.f32.mrb[0].mxu0
    %v3618 = vpop.f32.mrb[0].mxu0
    %3619 = vdwg.mxu0
    %3620 = vmatprep.subr.bf16.mxu0 0
    %3621 = vmatpush1.bf16.msra.mxu0 %v2764
    %3622 = vmatprep.subr.bf16.mxu0 0
    %3623 = vmatpush1.bf16.msra.mxu0 %v2765
    %3624 = vmatprep.subr.bf16.mxu0 0
    %3625 = vmatpush1.bf16.msra.mxu0 %v2766
    %3626 = vmatprep.subr.bf16.mxu0 0
    %3627 = vmatpush1.bf16.msra.mxu0 %v2767
    %3628 = vmatprep.subr.bf16.mxu0 0
    %3629 = vmatpush1.bf16.msra.mxu0 %v2768
    %3630 = vmatprep.subr.bf16.mxu0 0
    %3631 = vmatpush1.bf16.msra.mxu0 %v2769
    %3632 = vmatprep.subr.bf16.mxu0 0
    %3633 = vmatpush1.bf16.msra.mxu0 %v2770
    %3634 = vmatprep.subr.bf16.mxu0 0
    %3635 = vmatpush1.bf16.msra.mxu0 %v2771
    %3636 = vmatprep.subr.bf16.mxu0 0
    %3637 = vmatpush1.bf16.msra.mxu0 %v2772
    %3638 = vmatprep.subr.bf16.mxu0 0
    %3639 = vmatpush1.bf16.msra.mxu0 %v2773
    %3640 = vmatprep.subr.bf16.mxu0 0
    %3641 = vmatpush1.bf16.msra.mxu0 %v2774
    %3642 = vmatprep.subr.bf16.mxu0 0
    %3643 = vmatpush1.bf16.msra.mxu0 %v2775
    %3644 = vmatprep.subr.bf16.mxu0 0
    %3645 = vmatpush1.bf16.msra.mxu0 %v2776
    %3646 = vmatprep.subr.bf16.mxu0 0
    %3647 = vmatpush1.bf16.msra.mxu0 %v2777
    %3648 = vmatprep.subr.bf16.mxu0 0
    %3649 = vmatpush1.bf16.msra.mxu0 %v2778
    %3650 = vmatprep.subr.bf16.mxu0 0
    %3651 = vmatpush1.bf16.msra.mxu0 %v2779
    %3652 = vmatprep.mubr.bf16.mxu0 %v315
    %3653 = vmatmul.mubr.bf16.gmra.mrb[0].mxu0 %v314
    %v3654 = vpop.f32.mrb[0].mxu0
    %v3655 = vadd.f32 %v3615, %v3654
    %v3656 = vpop.f32.mrb[0].mxu0
    %v3657 = vpop.f32.mrb[0].mxu0
    %v3658 = vpop.f32.mrb[0].mxu0
    %3659 = vdwg.mxu0
    %3660 = vmatprep.subr.bf16.mxu0 0
    %3661 = vmatpush1.bf16.msra.mxu0 %v2780
    %3662 = vmatprep.subr.bf16.mxu0 0
    %3663 = vmatpush1.bf16.msra.mxu0 %v2781
    %3664 = vmatprep.subr.bf16.mxu0 0
    %3665 = vmatpush1.bf16.msra.mxu0 %v2782
    %3666 = vmatprep.subr.bf16.mxu0 0
    %3667 = vmatpush1.bf16.msra.mxu0 %v2783
    %3668 = vmatprep.subr.bf16.mxu0 0
    %3669 = vmatpush1.bf16.msra.mxu0 %v2784
    %3670 = vmatprep.subr.bf16.mxu0 0
    %3671 = vmatpush1.bf16.msra.mxu0 %v2785
    %3672 = vmatprep.subr.bf16.mxu0 0
    %3673 = vmatpush1.bf16.msra.mxu0 %v2786
    %3674 = vmatprep.subr.bf16.mxu0 0
    %3675 = vmatpush1.bf16.msra.mxu0 %v2787
    %3676 = vmatprep.subr.bf16.mxu0 0
    %3677 = vmatpush1.bf16.msra.mxu0 %v2788
    %3678 = vmatprep.subr.bf16.mxu0 0
    %3679 = vmatpush1.bf16.msra.mxu0 %v2789
    %3680 = vmatprep.subr.bf16.mxu0 0
    %3681 = vmatpush1.bf16.msra.mxu0 %v2790
    %3682 = vmatprep.subr.bf16.mxu0 0
    %3683 = vmatpush1.bf16.msra.mxu0 %v2791
    %3684 = vmatprep.subr.bf16.mxu0 0
    %3685 = vmatpush1.bf16.msra.mxu0 %v2792
    %3686 = vmatprep.subr.bf16.mxu0 0
    %3687 = vmatpush1.bf16.msra.mxu0 %v2793
    %3688 = vmatprep.subr.bf16.mxu0 0
    %3689 = vmatpush1.bf16.msra.mxu0 %v2794
    %3690 = vmatprep.subr.bf16.mxu0 0
    %3691 = vmatpush1.bf16.msra.mxu0 %v2795
    %3692 = vmatprep.mubr.bf16.mxu0 %v317
    %3693 = vmatmul.mubr.bf16.gmra.mrb[0].mxu0 %v316
    %v3694 = vpop.f32.mrb[0].mxu0
    %v3695 = vadd.f32 %v3655, %v3694
    %v3696 = vpop.f32.mrb[0].mxu0
    %v3697 = vpop.f32.mrb[0].mxu0
    %v3698 = vpop.f32.mrb[0].mxu0
    %3699 = vdwg.mxu0
    %3700 = vmatprep.subr.bf16.mxu0 0
    %3701 = vmatpush1.bf16.msra.mxu0 %v2796
    %3702 = vmatprep.subr.bf16.mxu0 0
    %3703 = vmatpush1.bf16.msra.mxu0 %v2797
    %3704 = vmatprep.subr.bf16.mxu0 0
    %3705 = vmatpush1.bf16.msra.mxu0 %v2798
    %3706 = vmatprep.subr.bf16.mxu0 0
    %3707 = vmatpush1.bf16.msra.mxu0 %v2799
    %3708 = vmatprep.subr.bf16.mxu0 0
    %3709 = vmatpush1.bf16.msra.mxu0 %v2800
    %3710 = vmatprep.subr.bf16.mxu0 0
    %3711 = vmatpush1.bf16.msra.mxu0 %v2801
    %3712 = vmatprep.subr.bf16.mxu0 0
    %3713 = vmatpush1.bf16.msra.mxu0 %v2802
    %3714 = vmatprep.subr.bf16.mxu0 0
    %3715 = vmatpush1.bf16.msra.mxu0 %v2803
    %3716 = vmatprep.subr.bf16.mxu0 0
    %3717 = vmatpush1.bf16.msra.mxu0 %v2804
    %3718 = vmatprep.subr.bf16.mxu0 0
    %3719 = vmatpush1.bf16.msra.mxu0 %v2805
    %3720 = vmatprep.subr.bf16.mxu0 0
    %3721 = vmatpush1.bf16.msra.mxu0 %v2806
    %3722 = vmatprep.subr.bf16.mxu0 0
    %3723 = vmatpush1.bf16.msra.mxu0 %v2807
    %3724 = vmatprep.subr.bf16.mxu0 0
    %3725 = vmatpush1.bf16.msra.mxu0 %v2808
    %3726 = vmatprep.subr.bf16.mxu0 0
    %3727 = vmatpush1.bf16.msra.mxu0 %v2809
    %3728 = vmatprep.subr.bf16.mxu0 0
    %3729 = vmatpush1.bf16.msra.mxu0 %v2810
    %3730 = vmatprep.subr.bf16.mxu0 0
    %3731 = vmatpush1.bf16.msra.mxu0 %v2811
    %3732 = vmatprep.mubr.bf16.mxu0 %v319
    %3733 = vmatmul.mubr.bf16.gmra.mrb[0].mxu0 %v318
    %v3734 = vpop.f32.mrb[0].mxu0
    %v3735 = vadd.f32 %v3695, %v3734
    %v3736 = vpop.f32.mrb[0].mxu0
    %v3737 = vpop.f32.mrb[0].mxu0
    %v3738 = vpop.f32.mrb[0].mxu0
    %3739 = vdwg.mxu0
    %3740 = vmatprep.subr.bf16.mxu0 0
    %3741 = vmatpush1.bf16.msra.mxu0 %v2812
    %3742 = vmatprep.subr.bf16.mxu0 0
    %3743 = vmatpush1.bf16.msra.mxu0 %v2813
    %3744 = vmatprep.subr.bf16.mxu0 0
    %3745 = vmatpush1.bf16.msra.mxu0 %v2814
    %3746 = vmatprep.subr.bf16.mxu0 0
    %3747 = vmatpush1.bf16.msra.mxu0 %v2815
    %3748 = vmatprep.subr.bf16.mxu0 0
    %3749 = vmatpush1.bf16.msra.mxu0 %v2816
    %3750 = vmatprep.subr.bf16.mxu0 0
    %3751 = vmatpush1.bf16.msra.mxu0 %v2817
    %3752 = vmatprep.subr.bf16.mxu0 0
    %3753 = vmatpush1.bf16.msra.mxu0 %v2818
    %3754 = vmatprep.subr.bf16.mxu0 0
    %3755 = vmatpush1.bf16.msra.mxu0 %v2819
    %3756 = vmatprep.subr.bf16.mxu0 0
    %3757 = vmatpush1.bf16.msra.mxu0 %v2820
    %3758 = vmatprep.subr.bf16.mxu0 0
    %3759 = vmatpush1.bf16.msra.mxu0 %v2821
    %3760 = vmatprep.subr.bf16.mxu0 0
    %3761 = vmatpush1.bf16.msra.mxu0 %v2822
    %3762 = vmatprep.subr.bf16.mxu0 0
    %3763 = vmatpush1.bf16.msra.mxu0 %v2823
    %3764 = vmatprep.subr.bf16.mxu0 0
    %3765 = vmatpush1.bf16.msra.mxu0 %v2824
    %3766 = vmatprep.subr.bf16.mxu0 0
    %3767 = vmatpush1.bf16.msra.mxu0 %v2825
    %3768 = vmatprep.subr.bf16.mxu0 0
    %3769 = vmatpush1.bf16.msra.mxu0 %v2826
    %3770 = vmatprep.subr.bf16.mxu0 0
    %3771 = vmatpush1.bf16.msra.mxu0 %v2827
    %3772 = vmatprep.mubr.bf16.mxu0 %v321
    %3773 = vmatmul.mubr.bf16.gmra.mrb[0].mxu0 %v320
    %v3774 = vpop.f32.mrb[0].mxu0
    %v3775 = vadd.f32 %v3735, %v3774
    %v3776 = vpop.f32.mrb[0].mxu0
    %v3777 = vpop.f32.mrb[0].mxu0
    %v3778 = vpop.f32.mrb[0].mxu0
    %3779 = vdwg.mxu0
    %3780 = vmatprep.subr.bf16.mxu0 0
    %3781 = vmatpush1.bf16.msra.mxu0 %v2828
    %3782 = vmatprep.subr.bf16.mxu0 0
    %3783 = vmatpush1.bf16.msra.mxu0 %v2829
    %3784 = vmatprep.subr.bf16.mxu0 0
    %3785 = vmatpush1.bf16.msra.mxu0 %v2830
    %3786 = vmatprep.subr.bf16.mxu0 0
    %3787 = vmatpush1.bf16.msra.mxu0 %v2831
    %3788 = vmatprep.subr.bf16.mxu0 0
    %3789 = vmatpush1.bf16.msra.mxu0 %v2832
    %3790 = vmatprep.subr.bf16.mxu0 0
    %3791 = vmatpush1.bf16.msra.mxu0 %v2833
    %3792 = vmatprep.subr.bf16.mxu0 0
    %3793 = vmatpush1.bf16.msra.mxu0 %v2834
    %3794 = vmatprep.subr.bf16.mxu0 0
    %3795 = vmatpush1.bf16.msra.mxu0 %v2835
    %3796 = vmatprep.subr.bf16.mxu0 0
    %3797 = vmatpush1.bf16.msra.mxu0 %v2836
    %3798 = vmatprep.subr.bf16.mxu0 0
    %3799 = vmatpush1.bf16.msra.mxu0 %v2837
    %3800 = vmatprep.subr.bf16.mxu0 0
    %3801 = vmatpush1.bf16.msra.mxu0 %v2838
    %3802 = vmatprep.subr.bf16.mxu0 0
    %3803 = vmatpush1.bf16.msra.mxu0 %v2839
    %3804 = vmatprep.subr.bf16.mxu0 0
    %3805 = vmatpush1.bf16.msra.mxu0 %v2840
    %3806 = vmatprep.subr.bf16.mxu0 0
    %3807 = vmatpush1.bf16.msra.mxu0 %v2841
    %3808 = vmatprep.subr.bf16.mxu0 0
    %3809 = vmatpush1.bf16.msra.mxu0 %v2842
    %3810 = vmatprep.subr.bf16.mxu0 0
    %3811 = vmatpush1.bf16.msra.mxu0 %v2843
    %3812 = vmatprep.mubr.bf16.mxu0 %v323
    %3813 = vmatmul.mubr.bf16.gmra.mrb[0].mxu0 %v322
    %v3814 = vpop.f32.mrb[0].mxu0
    %v3815 = vadd.f32 %v3775, %v3814
    %v3816 = vpop.f32.mrb[0].mxu0
    %v3817 = vpop.f32.mrb[0].mxu0
    %v3818 = vpop.f32.mrb[0].mxu0
    %3819 = vdwg.mxu0
    %3820 = vmatprep.subr.bf16.mxu0 0
    %3821 = vmatpush1.bf16.msra.mxu0 %v2844
    %3822 = vmatprep.subr.bf16.mxu0 0
    %3823 = vmatpush1.bf16.msra.mxu0 %v2845
    %3824 = vmatprep.subr.bf16.mxu0 0
    %3825 = vmatpush1.bf16.msra.mxu0 %v2846
    %3826 = vmatprep.subr.bf16.mxu0 0
    %3827 = vmatpush1.bf16.msra.mxu0 %v2847
    %3828 = vmatprep.subr.bf16.mxu0 0
    %3829 = vmatpush1.bf16.msra.mxu0 %v2848
    %3830 = vmatprep.subr.bf16.mxu0 0
    %3831 = vmatpush1.bf16.msra.mxu0 %v2849
    %3832 = vmatprep.subr.bf16.mxu0 0
    %3833 = vmatpush1.bf16.msra.mxu0 %v2850
    %3834 = vmatprep.subr.bf16.mxu0 0
    %3835 = vmatpush1.bf16.msra.mxu0 %v2851
    %3836 = vmatprep.subr.bf16.mxu0 0
    %3837 = vmatpush1.bf16.msra.mxu0 %v2852
    %3838 = vmatprep.subr.bf16.mxu0 0
    %3839 = vmatpush1.bf16.msra.mxu0 %v2853
    %3840 = vmatprep.subr.bf16.mxu0 0
    %3841 = vmatpush1.bf16.msra.mxu0 %v2854
    %3842 = vmatprep.subr.bf16.mxu0 0
    %3843 = vmatpush1.bf16.msra.mxu0 %v2855
    %3844 = vmatprep.subr.bf16.mxu0 0
    %3845 = vmatpush1.bf16.msra.mxu0 %v2856
    %3846 = vmatprep.subr.bf16.mxu0 0
    %3847 = vmatpush1.bf16.msra.mxu0 %v2857
    %3848 = vmatprep.subr.bf16.mxu0 0
    %3849 = vmatpush1.bf16.msra.mxu0 %v2858
    %3850 = vmatprep.subr.bf16.mxu0 0
    %3851 = vmatpush1.bf16.msra.mxu0 %v2859
    %3852 = vmatprep.mubr.bf16.mxu0 %v325
    %3853 = vmatmul.mubr.bf16.gmra.mrb[0].mxu0 %v324
    %v3854 = vpop.f32.mrb[0].mxu0
    %v3855 = vadd.f32 %v3815, %v3854
    %v3856 = vpop.f32.mrb[0].mxu0
    %v3857 = vpop.f32.mrb[0].mxu0
    %v3858 = vpop.f32.mrb[0].mxu0
    %3859 = vdwg.mxu0
    %3860 = vmatprep.subr.bf16.mxu0 0
    %3861 = vmatpush1.bf16.msra.mxu0 %v2860
    %3862 = vmatprep.subr.bf16.mxu0 0
    %3863 = vmatpush1.bf16.msra.mxu0 %v2861
    %3864 = vmatprep.subr.bf16.mxu0 0
    %3865 = vmatpush1.bf16.msra.mxu0 %v2862
    %3866 = vmatprep.subr.bf16.mxu0 0
    %3867 = vmatpush1.bf16.msra.mxu0 %v2863
    %3868 = vmatprep.subr.bf16.mxu0 0
    %3869 = vmatpush1.bf16.msra.mxu0 %v2864
    %3870 = vmatprep.subr.bf16.mxu0 0
    %3871 = vmatpush1.bf16.msra.mxu0 %v2865
    %3872 = vmatprep.subr.bf16.mxu0 0
    %3873 = vmatpush1.bf16.msra.mxu0 %v2866
    %3874 = vmatprep.subr.bf16.mxu0 0
    %3875 = vmatpush1.bf16.msra.mxu0 %v2867
    %3876 = vmatprep.subr.bf16.mxu0 0
    %3877 = vmatpush1.bf16.msra.mxu0 %v2868
    %3878 = vmatprep.subr.bf16.mxu0 0
    %3879 = vmatpush1.bf16.msra.mxu0 %v2869
    %3880 = vmatprep.subr.bf16.mxu0 0
    %3881 = vmatpush1.bf16.msra.mxu0 %v2870
    %3882 = vmatprep.subr.bf16.mxu0 0
    %3883 = vmatpush1.bf16.msra.mxu0 %v2871
    %3884 = vmatprep.subr.bf16.mxu0 0
    %3885 = vmatpush1.bf16.msra.mxu0 %v2872
    %3886 = vmatprep.subr.bf16.mxu0 0
    %3887 = vmatpush1.bf16.msra.mxu0 %v2873
    %3888 = vmatprep.subr.bf16.mxu0 0
    %3889 = vmatpush1.bf16.msra.mxu0 %v2874
    %3890 = vmatprep.subr.bf16.mxu0 0
    %3891 = vmatpush1.bf16.msra.mxu0 %v2875
    %3892 = vmatprep.mubr.bf16.mxu0 %v327
    %3893 = vmatmul.mubr.bf16.gmra.mrb[0].mxu0 %v326
    %v3894 = vpop.f32.mrb[0].mxu0
    %v3895 = vadd.f32 %v3855, %v3894
    %v3896 = vpop.f32.mrb[0].mxu0
    %v3897 = vpop.f32.mrb[0].mxu0
    %v3898 = vpop.f32.mrb[0].mxu0
    %3899 = vdwg.mxu0
    %3900 = vmatprep.subr.bf16.mxu0 0
    %3901 = vmatpush1.bf16.msra.mxu0 %v2876
    %3902 = vmatprep.subr.bf16.mxu0 0
    %3903 = vmatpush1.bf16.msra.mxu0 %v2877
    %3904 = vmatprep.subr.bf16.mxu0 0
    %3905 = vmatpush1.bf16.msra.mxu0 %v2878
    %3906 = vmatprep.subr.bf16.mxu0 0
    %3907 = vmatpush1.bf16.msra.mxu0 %v2879
    %3908 = vmatprep.subr.bf16.mxu0 0
    %3909 = vmatpush1.bf16.msra.mxu0 %v2880
    %3910 = vmatprep.subr.bf16.mxu0 0
    %3911 = vmatpush1.bf16.msra.mxu0 %v2881
    %3912 = vmatprep.subr.bf16.mxu0 0
    %3913 = vmatpush1.bf16.msra.mxu0 %v2882
    %3914 = vmatprep.subr.bf16.mxu0 0
    %3915 = vmatpush1.bf16.msra.mxu0 %v2883
    %3916 = vmatprep.subr.bf16.mxu0 0
    %3917 = vmatpush1.bf16.msra.mxu0 %v2884
    %3918 = vmatprep.subr.bf16.mxu0 0
    %3919 = vmatpush1.bf16.msra.mxu0 %v2885
    %3920 = vmatprep.subr.bf16.mxu0 0
    %3921 = vmatpush1.bf16.msra.mxu0 %v2886
    %3922 = vmatprep.subr.bf16.mxu0 0
    %3923 = vmatpush1.bf16.msra.mxu0 %v2887
    %3924 = vmatprep.subr.bf16.mxu0 0
    %3925 = vmatpush1.bf16.msra.mxu0 %v2888
    %3926 = vmatprep.subr.bf16.mxu0 0
    %3927 = vmatpush1.bf16.msra.mxu0 %v2889
    %3928 = vmatprep.subr.bf16.mxu0 0
    %3929 = vmatpush1.bf16.msra.mxu0 %v2890
    %3930 = vmatprep.subr.bf16.mxu0 0
    %3931 = vmatpush1.bf16.msra.mxu0 %v2891
    %3932 = vmatprep.mubr.bf16.mxu0 %v329
    %3933 = vmatmul.mubr.bf16.gmra.mrb[0].mxu0 %v328
    %v3934 = vpop.f32.mrb[0].mxu0
    %v3935 = vadd.f32 %v3895, %v3934
    %v3936 = vpop.f32.mrb[0].mxu0
    %v3937 = vpop.f32.mrb[0].mxu0
    %v3938 = vpop.f32.mrb[0].mxu0
    %3939 = vdwg.mxu0
    %3940 = vmatprep.subr.bf16.mxu0 0
    %3941 = vmatpush1.bf16.msra.mxu0 %v2892
    %3942 = vmatprep.subr.bf16.mxu0 0
    %3943 = vmatpush1.bf16.msra.mxu0 %v2893
    %3944 = vmatprep.subr.bf16.mxu0 0
    %3945 = vmatpush1.bf16.msra.mxu0 %v2894
    %3946 = vmatprep.subr.bf16.mxu0 0
    %3947 = vmatpush1.bf16.msra.mxu0 %v2895
    %3948 = vmatprep.subr.bf16.mxu0 0
    %3949 = vmatpush1.bf16.msra.mxu0 %v2896
    %3950 = vmatprep.subr.bf16.mxu0 0
    %3951 = vmatpush1.bf16.msra.mxu0 %v2897
    %3952 = vmatprep.subr.bf16.mxu0 0
    %3953 = vmatpush1.bf16.msra.mxu0 %v2898
    %3954 = vmatprep.subr.bf16.mxu0 0
    %3955 = vmatpush1.bf16.msra.mxu0 %v2899
    %3956 = vmatprep.subr.bf16.mxu0 0
    %3957 = vmatpush1.bf16.msra.mxu0 %v2900
    %3958 = vmatprep.subr.bf16.mxu0 0
    %3959 = vmatpush1.bf16.msra.mxu0 %v2901
    %3960 = vmatprep.subr.bf16.mxu0 0
    %3961 = vmatpush1.bf16.msra.mxu0 %v2902
    %3962 = vmatprep.subr.bf16.mxu0 0
    %3963 = vmatpush1.bf16.msra.mxu0 %v2903
    %3964 = vmatprep.subr.bf16.mxu0 0
    %3965 = vmatpush1.bf16.msra.mxu0 %v2904
    %3966 = vmatprep.subr.bf16.mxu0 0
    %3967 = vmatpush1.bf16.msra.mxu0 %v2905
    %3968 = vmatprep.subr.bf16.mxu0 0
    %3969 = vmatpush1.bf16.msra.mxu0 %v2906
    %3970 = vmatprep.subr.bf16.mxu0 0
    %3971 = vmatpush1.bf16.msra.mxu0 %v2907
    %3972 = vmatprep.mubr.bf16.mxu0 %v331
    %3973 = vmatmul.mubr.bf16.gmra.mrb[0].mxu0 %v330
    %v3974 = vpop.f32.mrb[0].mxu0
    %v3975 = vadd.f32 %v3935, %v3974
    %v3976 = vpop.f32.mrb[0].mxu0
    %v3977 = vpop.f32.mrb[0].mxu0
    %v3978 = vpop.f32.mrb[0].mxu0
    %3979 = vdwg.mxu0
    %3980 = vmatprep.subr.bf16.mxu0 0
    %3981 = vmatpush1.bf16.msra.mxu0 %v2908
    %3982 = vmatprep.subr.bf16.mxu0 0
    %3983 = vmatpush1.bf16.msra.mxu0 %v2909
    %3984 = vmatprep.subr.bf16.mxu0 0
    %3985 = vmatpush1.bf16.msra.mxu0 %v2910
    %3986 = vmatprep.subr.bf16.mxu0 0
    %3987 = vmatpush1.bf16.msra.mxu0 %v2911
    %3988 = vmatprep.subr.bf16.mxu0 0
    %3989 = vmatpush1.bf16.msra.mxu0 %v2912
    %3990 = vmatprep.subr.bf16.mxu0 0
    %3991 = vmatpush1.bf16.msra.mxu0 %v2913
    %3992 = vmatprep.subr.bf16.mxu0 0
    %3993 = vmatpush1.bf16.msra.mxu0 %v2914
    %3994 = vmatprep.subr.bf16.mxu0 0
    %3995 = vmatpush1.bf16.msra.mxu0 %v2915
    %3996 = vmatprep.subr.bf16.mxu0 0
    %3997 = vmatpush1.bf16.msra.mxu0 %v2916
    %3998 = vmatprep.subr.bf16.mxu0 0
    %3999 = vmatpush1.bf16.msra.mxu0 %v2917
    %4000 = vmatprep.subr.bf16.mxu0 0
    %4001 = vmatpush1.bf16.msra.mxu0 %v2918
    %4002 = vmatprep.subr.bf16.mxu0 0
    %4003 = vmatpush1.bf16.msra.mxu0 %v2919
    %4004 = vmatprep.subr.bf16.mxu0 0
    %4005 = vmatpush1.bf16.msra.mxu0 %v2920
    %4006 = vmatprep.subr.bf16.mxu0 0
    %4007 = vmatpush1.bf16.msra.mxu0 %v2921
    %4008 = vmatprep.subr.bf16.mxu0 0
    %4009 = vmatpush1.bf16.msra.mxu0 %v2922
    %4010 = vmatprep.subr.bf16.mxu0 0
    %4011 = vmatpush1.bf16.msra.mxu0 %v2923
    %4012 = vmatprep.mubr.bf16.mxu0 %v333
    %4013 = vmatmul.mubr.bf16.gmra.mrb[0].mxu0 %v332
    %v4014 = vpop.f32.mrb[0].mxu0
    %v4015 = vadd.f32 %v3975, %v4014
    %v4016 = vpop.f32.mrb[0].mxu0
    %v4017 = vpop.f32.mrb[0].mxu0
    %v4018 = vpop.f32.mrb[0].mxu0
    %4019 = vdwg.mxu0
    %4020 = vmatprep.subr.bf16.mxu0 0
    %4021 = vmatpush1.bf16.msra.mxu0 %v2924
    %4022 = vmatprep.subr.bf16.mxu0 0
    %4023 = vmatpush1.bf16.msra.mxu0 %v2925
    %4024 = vmatprep.subr.bf16.mxu0 0
    %4025 = vmatpush1.bf16.msra.mxu0 %v2926
    %4026 = vmatprep.subr.bf16.mxu0 0
    %4027 = vmatpush1.bf16.msra.mxu0 %v2927
    %4028 = vmatprep.subr.bf16.mxu0 0
    %4029 = vmatpush1.bf16.msra.mxu0 %v2928
    %4030 = vmatprep.subr.bf16.mxu0 0
    %4031 = vmatpush1.bf16.msra.mxu0 %v2929
    %4032 = vmatprep.subr.bf16.mxu0 0
    %4033 = vmatpush1.bf16.msra.mxu0 %v2930
    %4034 = vmatprep.subr.bf16.mxu0 0
    %4035 = vmatpush1.bf16.msra.mxu0 %v2931
    %4036 = vmatprep.subr.bf16.mxu0 0
    %4037 = vmatpush1.bf16.msra.mxu0 %v2932
    %4038 = vmatprep.subr.bf16.mxu0 0
    %4039 = vmatpush1.bf16.msra.mxu0 %v2933
    %4040 = vmatprep.subr.bf16.mxu0 0
    %4041 = vmatpush1.bf16.msra.mxu0 %v2934
    %4042 = vmatprep.subr.bf16.mxu0 0
    %4043 = vmatpush1.bf16.msra.mxu0 %v2935
    %4044 = vmatprep.subr.bf16.mxu0 0
    %4045 = vmatpush1.bf16.msra.mxu0 %v2936
    %4046 = vmatprep.subr.bf16.mxu0 0
    %4047 = vmatpush1.bf16.msra.mxu0 %v2937
    %4048 = vmatprep.subr.bf16.mxu0 0
    %4049 = vmatpush1.bf16.msra.mxu0 %v2938
    %4050 = vmatprep.subr.bf16.mxu0 0
    %4051 = vmatpush1.bf16.msra.mxu0 %v2939
    %4052 = vmatprep.mubr.bf16.mxu0 %v335
    %4053 = vmatmul.mubr.bf16.gmra.mrb[0].mxu0 %v334
    %v4054 = vpop.f32.mrb[0].mxu0
    %v4055 = vadd.f32 %v4015, %v4054
    %v4056 = vpop.f32.mrb[0].mxu0
    %v4057 = vpop.f32.mrb[0].mxu0
    %v4058 = vpop.f32.mrb[0].mxu0
    %4059 = vdwg.mxu0
    %4060 = vmatprep.subr.bf16.mxu0 0
    %4061 = vmatpush1.bf16.msra.mxu0 %v2940
    %4062 = vmatprep.subr.bf16.mxu0 0
    %4063 = vmatpush1.bf16.msra.mxu0 %v2941
    %4064 = vmatprep.subr.bf16.mxu0 0
    %4065 = vmatpush1.bf16.msra.mxu0 %v2942
    %4066 = vmatprep.subr.bf16.mxu0 0
    %4067 = vmatpush1.bf16.msra.mxu0 %v2943
    %4068 = vmatprep.subr.bf16.mxu0 0
    %4069 = vmatpush1.bf16.msra.mxu0 %v2944
    %4070 = vmatprep.subr.bf16.mxu0 0
    %4071 = vmatpush1.bf16.msra.mxu0 %v2945
    %4072 = vmatprep.subr.bf16.mxu0 0
    %4073 = vmatpush1.bf16.msra.mxu0 %v2946
    %4074 = vmatprep.subr.bf16.mxu0 0
    %4075 = vmatpush1.bf16.msra.mxu0 %v2947
    %4076 = vmatprep.subr.bf16.mxu0 0
    %4077 = vmatpush1.bf16.msra.mxu0 %v2948
    %4078 = vmatprep.subr.bf16.mxu0 0
    %4079 = vmatpush1.bf16.msra.mxu0 %v2949
    %4080 = vmatprep.subr.bf16.mxu0 0
    %4081 = vmatpush1.bf16.msra.mxu0 %v2950
    %4082 = vmatprep.subr.bf16.mxu0 0
    %4083 = vmatpush1.bf16.msra.mxu0 %v2951
    %4084 = vmatprep.subr.bf16.mxu0 0
    %4085 = vmatpush1.bf16.msra.mxu0 %v2952
    %4086 = vmatprep.subr.bf16.mxu0 0
    %4087 = vmatpush1.bf16.msra.mxu0 %v2953
    %4088 = vmatprep.subr.bf16.mxu0 0
    %4089 = vmatpush1.bf16.msra.mxu0 %v2954
    %4090 = vmatprep.subr.bf16.mxu0 0
    %4091 = vmatpush1.bf16.msra.mxu0 %v2955
    %4092 = vmatprep.mubr.bf16.mxu0 %v337
    %4093 = vmatmul.mubr.bf16.gmra.mrb[0].mxu0 %v336
    %v4094 = vpop.f32.mrb[0].mxu0
    %v4095 = vadd.f32 %v4055, %v4094
    %v4096 = vpop.f32.mrb[0].mxu0
    %v4097 = vpop.f32.mrb[0].mxu0
    %v4098 = vpop.f32.mrb[0].mxu0
    %4099 = vdwg.mxu0
    %4100 = vmatprep.subr.bf16.mxu0 0
    %4101 = vmatpush1.bf16.msra.mxu0 %v2956
    %4102 = vmatprep.subr.bf16.mxu0 0
    %4103 = vmatpush1.bf16.msra.mxu0 %v2957
    %4104 = vmatprep.subr.bf16.mxu0 0
    %4105 = vmatpush1.bf16.msra.mxu0 %v2958
    %4106 = vmatprep.subr.bf16.mxu0 0
    %4107 = vmatpush1.bf16.msra.mxu0 %v2959
    %4108 = vmatprep.subr.bf16.mxu0 0
    %4109 = vmatpush1.bf16.msra.mxu0 %v2960
    %4110 = vmatprep.subr.bf16.mxu0 0
    %4111 = vmatpush1.bf16.msra.mxu0 %v2961
    %4112 = vmatprep.subr.bf16.mxu0 0
    %4113 = vmatpush1.bf16.msra.mxu0 %v2962
    %4114 = vmatprep.subr.bf16.mxu0 0
    %4115 = vmatpush1.bf16.msra.mxu0 %v2963
    %4116 = vmatprep.subr.bf16.mxu0 0
    %4117 = vmatpush1.bf16.msra.mxu0 %v2964
    %4118 = vmatprep.subr.bf16.mxu0 0
    %4119 = vmatpush1.bf16.msra.mxu0 %v2965
    %4120 = vmatprep.subr.bf16.mxu0 0
    %4121 = vmatpush1.bf16.msra.mxu0 %v2966
    %4122 = vmatprep.subr.bf16.mxu0 0
    %4123 = vmatpush1.bf16.msra.mxu0 %v2967
    %4124 = vmatprep.subr.bf16.mxu0 0
    %4125 = vmatpush1.bf16.msra.mxu0 %v2968
    %4126 = vmatprep.subr.bf16.mxu0 0
    %4127 = vmatpush1.bf16.msra.mxu0 %v2969
    %4128 = vmatprep.subr.bf16.mxu0 0
    %4129 = vmatpush1.bf16.msra.mxu0 %v2970
    %4130 = vmatprep.subr.bf16.mxu0 0
    %4131 = vmatpush1.bf16.msra.mxu0 %v2971
    %4132 = vmatprep.mubr.bf16.mxu0 %v339
    %4133 = vmatmul.mubr.bf16.gmra.mrb[0].mxu0 %v338
    %v4134 = vpop.f32.mrb[0].mxu0
    %v4135 = vadd.f32 %v4095, %v4134
    %v4136 = vpop.f32.mrb[0].mxu0
    %v4137 = vpop.f32.mrb[0].mxu0
    %v4138 = vpop.f32.mrb[0].mxu0
    %4139 = vdwg.mxu0
    %4140 = vmatprep.subr.bf16.mxu0 0
    %4141 = vmatpush1.bf16.msra.mxu0 %v2972
    %4142 = vmatprep.subr.bf16.mxu0 0
    %4143 = vmatpush1.bf16.msra.mxu0 %v2973
    %4144 = vmatprep.subr.bf16.mxu0 0
    %4145 = vmatpush1.bf16.msra.mxu0 %v2974
    %4146 = vmatprep.subr.bf16.mxu0 0
    %4147 = vmatpush1.bf16.msra.mxu0 %v2975
    %4148 = vmatprep.subr.bf16.mxu0 0
    %4149 = vmatpush1.bf16.msra.mxu0 %v2976
    %4150 = vmatprep.subr.bf16.mxu0 0
    %4151 = vmatpush1.bf16.msra.mxu0 %v2977
    %4152 = vmatprep.subr.bf16.mxu0 0
    %4153 = vmatpush1.bf16.msra.mxu0 %v2978
    %4154 = vmatprep.subr.bf16.mxu0 0
    %4155 = vmatpush1.bf16.msra.mxu0 %v2979
    %4156 = vmatprep.subr.bf16.mxu0 0
    %4157 = vmatpush1.bf16.msra.mxu0 %v2980
    %4158 = vmatprep.subr.bf16.mxu0 0
    %4159 = vmatpush1.bf16.msra.mxu0 %v2981
    %4160 = vmatprep.subr.bf16.mxu0 0
    %4161 = vmatpush1.bf16.msra.mxu0 %v2982
    %4162 = vmatprep.subr.bf16.mxu0 0
    %4163 = vmatpush1.bf16.msra.mxu0 %v2983
    %4164 = vmatprep.subr.bf16.mxu0 0
    %4165 = vmatpush1.bf16.msra.mxu0 %v2984
    %4166 = vmatprep.subr.bf16.mxu0 0
    %4167 = vmatpush1.bf16.msra.mxu0 %v2985
    %4168 = vmatprep.subr.bf16.mxu0 0
    %4169 = vmatpush1.bf16.msra.mxu0 %v2986
    %4170 = vmatprep.subr.bf16.mxu0 0
    %4171 = vmatpush1.bf16.msra.mxu0 %v2987
    %4172 = vmatprep.mubr.bf16.mxu0 %v341
    %4173 = vmatmul.mubr.bf16.gmra.mrb[0].mxu0 %v340
    %v4174 = vpop.f32.mrb[0].mxu0
    %v4175 = vadd.f32 %v4135, %v4174
    %v4176 = vpop.f32.mrb[0].mxu0
    %v4177 = vpop.f32.mrb[0].mxu0
    %v4178 = vpop.f32.mrb[0].mxu0
    %4179 = vdwg.mxu0
    %4180 = vmatprep.subr.bf16.mxu0 0
    %4181 = vmatpush1.bf16.msra.mxu0 %v2988
    %4182 = vmatprep.subr.bf16.mxu0 0
    %4183 = vmatpush1.bf16.msra.mxu0 %v2989
    %4184 = vmatprep.subr.bf16.mxu0 0
    %4185 = vmatpush1.bf16.msra.mxu0 %v2990
    %4186 = vmatprep.subr.bf16.mxu0 0
    %4187 = vmatpush1.bf16.msra.mxu0 %v2991
    %4188 = vmatprep.subr.bf16.mxu0 0
    %4189 = vmatpush1.bf16.msra.mxu0 %v2992
    %4190 = vmatprep.subr.bf16.mxu0 0
    %4191 = vmatpush1.bf16.msra.mxu0 %v2993
    %4192 = vmatprep.subr.bf16.mxu0 0
    %4193 = vmatpush1.bf16.msra.mxu0 %v2994
    %4194 = vmatprep.subr.bf16.mxu0 0
    %4195 = vmatpush1.bf16.msra.mxu0 %v2995
    %4196 = vmatprep.subr.bf16.mxu0 0
    %4197 = vmatpush1.bf16.msra.mxu0 %v2996
    %4198 = vmatprep.subr.bf16.mxu0 0
    %4199 = vmatpush1.bf16.msra.mxu0 %v2997
    %4200 = vmatprep.subr.bf16.mxu0 0
    %4201 = vmatpush1.bf16.msra.mxu0 %v2998
    %4202 = vmatprep.subr.bf16.mxu0 0
    %4203 = vmatpush1.bf16.msra.mxu0 %v2999
    %4204 = vmatprep.subr.bf16.mxu0 0
    %4205 = vmatpush1.bf16.msra.mxu0 %v3000
    %4206 = vmatprep.subr.bf16.mxu0 0
    %4207 = vmatpush1.bf16.msra.mxu0 %v3001
    %4208 = vmatprep.subr.bf16.mxu0 0
    %4209 = vmatpush1.bf16.msra.mxu0 %v3002
    %4210 = vmatprep.subr.bf16.mxu0 0
    %4211 = vmatpush1.bf16.msra.mxu0 %v3003
    %4212 = vmatprep.mubr.bf16.mxu0 %v343
    %4213 = vmatmul.mubr.bf16.gmra.mrb[0].mxu0 %v342
    %v4214 = vpop.f32.mrb[0].mxu0
    %v4215 = vadd.f32 %v4175, %v4214
    %v4216 = vpop.f32.mrb[0].mxu0
    %v4217 = vpop.f32.mrb[0].mxu0
    %v4218 = vpop.f32.mrb[0].mxu0
    %4219 = vdwg.mxu0
    %4220 = vmatprep.subr.bf16.mxu0 0
    %4221 = vmatpush1.bf16.msra.mxu0 %v3004
    %4222 = vmatprep.subr.bf16.mxu0 0
    %4223 = vmatpush1.bf16.msra.mxu0 %v3005
    %4224 = vmatprep.subr.bf16.mxu0 0
    %4225 = vmatpush1.bf16.msra.mxu0 %v3006
    %4226 = vmatprep.subr.bf16.mxu0 0
    %4227 = vmatpush1.bf16.msra.mxu0 %v3007
    %4228 = vmatprep.subr.bf16.mxu0 0
    %4229 = vmatpush1.bf16.msra.mxu0 %v3008
    %4230 = vmatprep.subr.bf16.mxu0 0
    %4231 = vmatpush1.bf16.msra.mxu0 %v3009
    %4232 = vmatprep.subr.bf16.mxu0 0
    %4233 = vmatpush1.bf16.msra.mxu0 %v3010
    %4234 = vmatprep.subr.bf16.mxu0 0
    %4235 = vmatpush1.bf16.msra.mxu0 %v3011
    %4236 = vmatprep.subr.bf16.mxu0 0
    %4237 = vmatpush1.bf16.msra.mxu0 %v3012
    %4238 = vmatprep.subr.bf16.mxu0 0
    %4239 = vmatpush1.bf16.msra.mxu0 %v3013
    %4240 = vmatprep.subr.bf16.mxu0 0
    %4241 = vmatpush1.bf16.msra.mxu0 %v3014
    %4242 = vmatprep.subr.bf16.mxu0 0
    %4243 = vmatpush1.bf16.msra.mxu0 %v3015
    %4244 = vmatprep.subr.bf16.mxu0 0
    %4245 = vmatpush1.bf16.msra.mxu0 %v3016
    %4246 = vmatprep.subr.bf16.mxu0 0
    %4247 = vmatpush1.bf16.msra.mxu0 %v3017
    %4248 = vmatprep.subr.bf16.mxu0 0
    %4249 = vmatpush1.bf16.msra.mxu0 %v3018
    %4250 = vmatprep.subr.bf16.mxu0 0
    %4251 = vmatpush1.bf16.msra.mxu0 %v3019
    %4252 = vmatprep.mubr.bf16.mxu0 %v345
    %4253 = vmatmul.mubr.bf16.gmra.mrb[0].mxu0 %v344
    %v4254 = vpop.f32.mrb[0].mxu0
    %v4255 = vadd.f32 %v4215, %v4254
    %v4256 = vpop.f32.mrb[0].mxu0
    %v4257 = vpop.f32.mrb[0].mxu0
    %v4258 = vpop.f32.mrb[0].mxu0
    %4259 = vdwg.mxu0
    %4260 = vmatprep.subr.bf16.mxu0 0
    %4261 = vmatpush1.bf16.msra.mxu0 %v3020
    %4262 = vmatprep.subr.bf16.mxu0 0
    %4263 = vmatpush1.bf16.msra.mxu0 %v3021
    %4264 = vmatprep.subr.bf16.mxu0 0
    %4265 = vmatpush1.bf16.msra.mxu0 %v3022
    %4266 = vmatprep.subr.bf16.mxu0 0
    %4267 = vmatpush1.bf16.msra.mxu0 %v3023
    %4268 = vmatprep.subr.bf16.mxu0 0
    %4269 = vmatpush1.bf16.msra.mxu0 %v3024
    %4270 = vmatprep.subr.bf16.mxu0 0
    %4271 = vmatpush1.bf16.msra.mxu0 %v3025
    %4272 = vmatprep.subr.bf16.mxu0 0
    %4273 = vmatpush1.bf16.msra.mxu0 %v3026
    %4274 = vmatprep.subr.bf16.mxu0 0
    %4275 = vmatpush1.bf16.msra.mxu0 %v3027
    %4276 = vmatprep.subr.bf16.mxu0 0
    %4277 = vmatpush1.bf16.msra.mxu0 %v3028
    %4278 = vmatprep.subr.bf16.mxu0 0
    %4279 = vmatpush1.bf16.msra.mxu0 %v3029
    %4280 = vmatprep.subr.bf16.mxu0 0
    %4281 = vmatpush1.bf16.msra.mxu0 %v3030
    %4282 = vmatprep.subr.bf16.mxu0 0
    %4283 = vmatpush1.bf16.msra.mxu0 %v3031
    %4284 = vmatprep.subr.bf16.mxu0 0
    %4285 = vmatpush1.bf16.msra.mxu0 %v3032
    %4286 = vmatprep.subr.bf16.mxu0 0
    %4287 = vmatpush1.bf16.msra.mxu0 %v3033
    %4288 = vmatprep.subr.bf16.mxu0 0
    %4289 = vmatpush1.bf16.msra.mxu0 %v3034
    %4290 = vmatprep.subr.bf16.mxu0 0
    %4291 = vmatpush1.bf16.msra.mxu0 %v3035
    %4292 = vmatprep.mubr.bf16.mxu0 %v347
    %4293 = vmatmul.mubr.bf16.gmra.mrb[0].mxu0 %v346
    %v4294 = vpop.f32.mrb[0].mxu0
    %v4295 = vadd.f32 %v4255, %v4294
    %v4296 = vpop.f32.mrb[0].mxu0
    %v4297 = vpop.f32.mrb[0].mxu0
    %v4298 = vpop.f32.mrb[0].mxu0
    %4299 = vdwg.mxu0
    %4300 = vmatprep.subr.bf16.mxu0 0
    %4301 = vmatpush1.bf16.msra.mxu0 %v3036
    %4302 = vmatprep.subr.bf16.mxu0 0
    %4303 = vmatpush1.bf16.msra.mxu0 %v3037
    %4304 = vmatprep.subr.bf16.mxu0 0
    %4305 = vmatpush1.bf16.msra.mxu0 %v3038
    %4306 = vmatprep.subr.bf16.mxu0 0
    %4307 = vmatpush1.bf16.msra.mxu0 %v3039
    %4308 = vmatprep.subr.bf16.mxu0 0
    %4309 = vmatpush1.bf16.msra.mxu0 %v3040
    %4310 = vmatprep.subr.bf16.mxu0 0
    %4311 = vmatpush1.bf16.msra.mxu0 %v3041
    %4312 = vmatprep.subr.bf16.mxu0 0
    %4313 = vmatpush1.bf16.msra.mxu0 %v3042
    %4314 = vmatprep.subr.bf16.mxu0 0
    %4315 = vmatpush1.bf16.msra.mxu0 %v3043
    %4316 = vmatprep.subr.bf16.mxu0 0
    %4317 = vmatpush1.bf16.msra.mxu0 %v3044
    %4318 = vmatprep.subr.bf16.mxu0 0
    %4319 = vmatpush1.bf16.msra.mxu0 %v3045
    %4320 = vmatprep.subr.bf16.mxu0 0
    %4321 = vmatpush1.bf16.msra.mxu0 %v3046
    %4322 = vmatprep.subr.bf16.mxu0 0
    %4323 = vmatpush1.bf16.msra.mxu0 %v3047
    %4324 = vmatprep.subr.bf16.mxu0 0
    %4325 = vmatpush1.bf16.msra.mxu0 %v3048
    %4326 = vmatprep.subr.bf16.mxu0 0
    %4327 = vmatpush1.bf16.msra.mxu0 %v3049
    %4328 = vmatprep.subr.bf16.mxu0 0
    %4329 = vmatpush1.bf16.msra.mxu0 %v3050
    %4330 = vmatprep.subr.bf16.mxu0 0
    %4331 = vmatpush1.bf16.msra.mxu0 %v3051
    %4332 = vmatprep.mubr.bf16.mxu0 %v349
    %4333 = vmatmul.mubr.bf16.gmra.mrb[0].mxu0 %v348
    %v4334 = vpop.f32.mrb[0].mxu0
    %v4335 = vadd.f32 %v4295, %v4334
    %v4336 = vpop.f32.mrb[0].mxu0
    %v4337 = vpop.f32.mrb[0].mxu0
    %v4338 = vpop.f32.mrb[0].mxu0
    %4339 = vdwg.mxu0
    %4340 = vmatprep.subr.bf16.mxu0 0
    %4341 = vmatpush1.bf16.msra.mxu0 %v3052
    %4342 = vmatprep.subr.bf16.mxu0 0
    %4343 = vmatpush1.bf16.msra.mxu0 %v3053
    %4344 = vmatprep.subr.bf16.mxu0 0
    %4345 = vmatpush1.bf16.msra.mxu0 %v3054
    %4346 = vmatprep.subr.bf16.mxu0 0
    %4347 = vmatpush1.bf16.msra.mxu0 %v3055
    %4348 = vmatprep.subr.bf16.mxu0 0
    %4349 = vmatpush1.bf16.msra.mxu0 %v3056
    %4350 = vmatprep.subr.bf16.mxu0 0
    %4351 = vmatpush1.bf16.msra.mxu0 %v3057
    %4352 = vmatprep.subr.bf16.mxu0 0
    %4353 = vmatpush1.bf16.msra.mxu0 %v3058
    %4354 = vmatprep.subr.bf16.mxu0 0
    %4355 = vmatpush1.bf16.msra.mxu0 %v3059
    %4356 = vmatprep.subr.bf16.mxu0 0
    %4357 = vmatpush1.bf16.msra.mxu0 %v3060
    %4358 = vmatprep.subr.bf16.mxu0 0
    %4359 = vmatpush1.bf16.msra.mxu0 %v3061
    %4360 = vmatprep.subr.bf16.mxu0 0
    %4361 = vmatpush1.bf16.msra.mxu0 %v3062
    %4362 = vmatprep.subr.bf16.mxu0 0
    %4363 = vmatpush1.bf16.msra.mxu0 %v3063
    %4364 = vmatprep.subr.bf16.mxu0 0
    %4365 = vmatpush1.bf16.msra.mxu0 %v3064
    %4366 = vmatprep.subr.bf16.mxu0 0
    %4367 = vmatpush1.bf16.msra.mxu0 %v3065
    %4368 = vmatprep.subr.bf16.mxu0 0
    %4369 = vmatpush1.bf16.msra.mxu0 %v3066
    %4370 = vmatprep.subr.bf16.mxu0 0
    %4371 = vmatpush1.bf16.msra.mxu0 %v3067
    %4372 = vmatprep.mubr.bf16.mxu0 %v351
    %4373 = vmatmul.mubr.bf16.gmra.mrb[0].mxu0 %v350
    %v4374 = vpop.f32.mrb[0].mxu0
    %v4375 = vadd.f32 %v4335, %v4374
    %v4376 = vpop.f32.mrb[0].mxu0
    %v4377 = vpop.f32.mrb[0].mxu0
    %v4378 = vpop.f32.mrb[0].mxu0
    %4379 = vdwg.mxu0
    %4380 = vmatprep.subr.bf16.mxu0 0
    %4381 = vmatpush1.bf16.msra.mxu0 %v3068
    %4382 = vmatprep.subr.bf16.mxu0 0
    %4383 = vmatpush1.bf16.msra.mxu0 %v3069
    %4384 = vmatprep.subr.bf16.mxu0 0
    %4385 = vmatpush1.bf16.msra.mxu0 %v3070
    %4386 = vmatprep.subr.bf16.mxu0 0
    %4387 = vmatpush1.bf16.msra.mxu0 %v3071
    %4388 = vmatprep.subr.bf16.mxu0 0
    %4389 = vmatpush1.bf16.msra.mxu0 %v3072
    %4390 = vmatprep.subr.bf16.mxu0 0
    %4391 = vmatpush1.bf16.msra.mxu0 %v3073
    %4392 = vmatprep.subr.bf16.mxu0 0
    %4393 = vmatpush1.bf16.msra.mxu0 %v3074
    %4394 = vmatprep.subr.bf16.mxu0 0
    %4395 = vmatpush1.bf16.msra.mxu0 %v3075
    %4396 = vmatprep.subr.bf16.mxu0 0
    %4397 = vmatpush1.bf16.msra.mxu0 %v3076
    %4398 = vmatprep.subr.bf16.mxu0 0
    %4399 = vmatpush1.bf16.msra.mxu0 %v3077
    %4400 = vmatprep.subr.bf16.mxu0 0
    %4401 = vmatpush1.bf16.msra.mxu0 %v3078
    %4402 = vmatprep.subr.bf16.mxu0 0
    %4403 = vmatpush1.bf16.msra.mxu0 %v3079
    %4404 = vmatprep.subr.bf16.mxu0 0
    %4405 = vmatpush1.bf16.msra.mxu0 %v3080
    %4406 = vmatprep.subr.bf16.mxu0 0
    %4407 = vmatpush1.bf16.msra.mxu0 %v3081
    %4408 = vmatprep.subr.bf16.mxu0 0
    %4409 = vmatpush1.bf16.msra.mxu0 %v3082
    %4410 = vmatprep.subr.bf16.mxu0 0
    %4411 = vmatpush1.bf16.msra.mxu0 %v3083
    %4412 = vmatprep.mubr.bf16.mxu0 %v353
    %4413 = vmatmul.mubr.bf16.gmra.mrb[0].mxu0 %v352
    %v4414 = vpop.f32.mrb[0].mxu0
    %v4415 = vadd.f32 %v4375, %v4414
    %v4416 = vpop.f32.mrb[0].mxu0
    %v4417 = vpop.f32.mrb[0].mxu0
    %v4418 = vpop.f32.mrb[0].mxu0
    %4419 = vdwg.mxu0
    %4420 = vmatprep.subr.bf16.mxu0 0
    %4421 = vmatpush1.bf16.msra.mxu0 %v3084
    %4422 = vmatprep.subr.bf16.mxu0 0
    %4423 = vmatpush1.bf16.msra.mxu0 %v3085
    %4424 = vmatprep.subr.bf16.mxu0 0
    %4425 = vmatpush1.bf16.msra.mxu0 %v3086
    %4426 = vmatprep.subr.bf16.mxu0 0
    %4427 = vmatpush1.bf16.msra.mxu0 %v3087
    %4428 = vmatprep.subr.bf16.mxu0 0
    %4429 = vmatpush1.bf16.msra.mxu0 %v3088
    %4430 = vmatprep.subr.bf16.mxu0 0
    %4431 = vmatpush1.bf16.msra.mxu0 %v3089
    %4432 = vmatprep.subr.bf16.mxu0 0
    %4433 = vmatpush1.bf16.msra.mxu0 %v3090
    %4434 = vmatprep.subr.bf16.mxu0 0
    %4435 = vmatpush1.bf16.msra.mxu0 %v3091
    %4436 = vmatprep.subr.bf16.mxu0 0
    %4437 = vmatpush1.bf16.msra.mxu0 %v3092
    %4438 = vmatprep.subr.bf16.mxu0 0
    %4439 = vmatpush1.bf16.msra.mxu0 %v3093
    %4440 = vmatprep.subr.bf16.mxu0 0
    %4441 = vmatpush1.bf16.msra.mxu0 %v3094
    %4442 = vmatprep.subr.bf16.mxu0 0
    %4443 = vmatpush1.bf16.msra.mxu0 %v3095
    %4444 = vmatprep.subr.bf16.mxu0 0
    %4445 = vmatpush1.bf16.msra.mxu0 %v3096
    %4446 = vmatprep.subr.bf16.mxu0 0
    %4447 = vmatpush1.bf16.msra.mxu0 %v3097
    %4448 = vmatprep.subr.bf16.mxu0 0
    %4449 = vmatpush1.bf16.msra.mxu0 %v3098
    %4450 = vmatprep.subr.bf16.mxu0 0
    %4451 = vmatpush1.bf16.msra.mxu0 %v3099
    %4452 = vmatprep.mubr.bf16.mxu0 %v355
    %4453 = vmatmul.mubr.bf16.gmra.mrb[0].mxu0 %v354
    %v4454 = vpop.f32.mrb[0].mxu0
    %v4455 = vadd.f32 %v4415, %v4454
    %v4456 = vpop.f32.mrb[0].mxu0
    %v4457 = vpop.f32.mrb[0].mxu0
    %v4458 = vpop.f32.mrb[0].mxu0
    %4459 = vdwg.mxu0
    %4460 = vmatprep.subr.bf16.mxu0 0
    %4461 = vmatpush1.bf16.msra.mxu0 %v3100
    %4462 = vmatprep.subr.bf16.mxu0 0
    %4463 = vmatpush1.bf16.msra.mxu0 %v3101
    %4464 = vmatprep.subr.bf16.mxu0 0
    %4465 = vmatpush1.bf16.msra.mxu0 %v3102
    %4466 = vmatprep.subr.bf16.mxu0 0
    %4467 = vmatpush1.bf16.msra.mxu0 %v3103
    %4468 = vmatprep.subr.bf16.mxu0 0
    %4469 = vmatpush1.bf16.msra.mxu0 %v3104
    %4470 = vmatprep.subr.bf16.mxu0 0
    %4471 = vmatpush1.bf16.msra.mxu0 %v3105
    %4472 = vmatprep.subr.bf16.mxu0 0
    %4473 = vmatpush1.bf16.msra.mxu0 %v3106
    %4474 = vmatprep.subr.bf16.mxu0 0
    %4475 = vmatpush1.bf16.msra.mxu0 %v3107
    %4476 = vmatprep.subr.bf16.mxu0 0
    %4477 = vmatpush1.bf16.msra.mxu0 0
    %4478 = vmatprep.subr.bf16.mxu0 0
    %4479 = vmatpush1.bf16.msra.mxu0 0
    %4480 = vmatprep.subr.bf16.mxu0 0
    %4481 = vmatpush1.bf16.msra.mxu0 0
    %4482 = vmatprep.subr.bf16.mxu0 0
    %4483 = vmatpush1.bf16.msra.mxu0 0
    %4484 = vmatprep.subr.bf16.mxu0 0
    %4485 = vmatpush1.bf16.msra.mxu0 0
    %4486 = vmatprep.subr.bf16.mxu0 0
    %4487 = vmatpush1.bf16.msra.mxu0 0
    %4488 = vmatprep.subr.bf16.mxu0 0
    %4489 = vmatpush1.bf16.msra.mxu0 0
    %4490 = vmatprep.subr.bf16.mxu0 0
    %4491 = vmatpush1.bf16.msra.mxu0 0
    %4492 = vmatprep.mubr.bf16.mxu0 0
    %4493 = vmatmul.mubr.bf16.gmra.mrb[0].mxu0 %v356
    %v4494 = vpop.f32.mrb[0].mxu0
    %v4495 = vadd.f32 %v4455, %v4494
    %v4496 = vpop.f32.mrb[0].mxu0
    %v4497 = vpop.f32.mrb[0].mxu0
    %v4498 = vpop.f32.mrb[0].mxu0
    %4499 = vdwg.mxu0
    %v4500 = vmax.f32 %v4495, 0.0
    %v4501 = vld [vmem:[%s3] sm:$0xff]
    %v4502 = vld [vmem:[%s3 + $0x8] sm:$0xff]
    %v4503 = vld [vmem:[%s3 + $0x10] sm:$0xff]
    %v4504 = vld [vmem:[%s3 + $0x18] sm:$0xff]
    %v4505 = vld [vmem:[%s3 + $0x20] sm:$0xff]
    %v4506 = vld [vmem:[%s3 + $0x28] sm:$0xff]
    %v4507 = vld [vmem:[%s3 + $0x30] sm:$0xff]
    %v4508 = vld [vmem:[%s3 + $0x38] sm:$0xff]
    %v4509 = vld [vmem:[%s3 + $0x40] sm:$0xff]
    %v4510 = vld [vmem:[%s3 + $0x48] sm:$0xff]
    %v4511 = vld [vmem:[%s3 + $0x50] sm:$0xff]
    %v4512 = vld [vmem:[%s3 + $0x58] sm:$0xff]
    %v4513 = vld [vmem:[%s3 + $0x60] sm:$0xff]
    %v4514 = vld [vmem:[%s3 + $0x68] sm:$0xff]
    %v4515 = vld [vmem:[%s3 + $0x70] sm:$0xff]
    %v4516 = vld [vmem:[%s3 + $0x78] sm:$0xff]
    %v4517 = vld [vmem:[%s4] sm:$0x1]
    %v4519 = vlaneseq
    %v4520 = vshrl.u32 %v4519, 7
    %v4521 = vsub.s32 0, %v4520
    %v4522 = vrot.slane %v4517, %v4521
    %4524 = vmatprep.subr.mxu0 0.0
    %4525 = vmatpush1.msra.mxu0 %v4501
    %4526 = vmatprep.subr.mxu0 0.0
    %4527 = vmatpush1.msra.mxu0 %v4502
    %4528 = vmatprep.subr.mxu0 0.0
    %4529 = vmatpush1.msra.mxu0 %v4503
    %4530 = vmatprep.subr.mxu0 0.0
    %4531 = vmatpush1.msra.mxu0 %v4504
    %4532 = vmatprep.subr.mxu0 0.0
    %4533 = vmatpush1.msra.mxu0 %v4505
    %4534 = vmatprep.subr.mxu0 0.0
    %4535 = vmatpush1.msra.mxu0 %v4506
    %4536 = vmatprep.subr.mxu0 0.0
    %4537 = vmatpush1.msra.mxu0 %v4507
    %4538 = vmatprep.subr.mxu0 0.0
    %4539 = vmatpush1.msra.mxu0 %v4508
    %4540 = vmatprep.subr.mxu0 0.0
    %4541 = vmatpush1.msra.mxu0 %v4509
    %4542 = vmatprep.subr.mxu0 0.0
    %4543 = vmatpush1.msra.mxu0 %v4510
    %4544 = vmatprep.subr.mxu0 0.0
    %4545 = vmatpush1.msra.mxu0 %v4511
    %4546 = vmatprep.subr.mxu0 0.0
    %4547 = vmatpush1.msra.mxu0 %v4512
    %4548 = vmatprep.subr.mxu0 0.0
    %4549 = vmatpush1.msra.mxu0 %v4513
    %4550 = vmatprep.subr.mxu0 0.0
    %4551 = vmatpush1.msra.mxu0 %v4514
    %4552 = vmatprep.subr.mxu0 0.0
    %4553 = vmatpush1.msra.mxu0 %v4515
    %4554 = vmatprep.subr.mxu0 0.0
    %4555 = vmatpush1.msra.mxu0 %v4516
    %4556 = vmatprep.subr.mxu0 0.0
    %4557 = vmatpush1.msra.mxu0 0.0
    %4558 = vmatprep.subr.mxu0 0.0
    %4559 = vmatpush1.msra.mxu0 0.0
    %4560 = vmatprep.subr.mxu0 0.0
    %4561 = vmatpush1.msra.mxu0 0.0
    %4562 = vmatprep.subr.mxu0 0.0
    %4563 = vmatpush1.msra.mxu0 0.0
    %4564 = vmatprep.subr.mxu0 0.0
    %4565 = vmatpush1.msra.mxu0 0.0
    %4566 = vmatprep.subr.mxu0 0.0
    %4567 = vmatpush1.msra.mxu0 0.0
    %4568 = vmatprep.subr.mxu0 0.0
    %4569 = vmatpush1.msra.mxu0 0.0
    %4570 = vmatprep.subr.mxu0 0.0
    %4571 = vmatpush1.msra.mxu0 0.0
    %4572 = vmatprep.subr.mxu0 0.0
    %4573 = vmatpush1.msra.mxu0 0.0
    %4574 = vmatprep.subr.mxu0 0.0
    %4575 = vmatpush1.msra.mxu0 0.0
    %4576 = vmatprep.subr.mxu0 0.0
    %4577 = vmatpush1.msra.mxu0 0.0
    %4578 = vmatprep.subr.mxu0 0.0
    %4579 = vmatpush1.msra.mxu0 0.0
    %4580 = vmatprep.subr.mxu0 0.0
    %4581 = vmatpush1.msra.mxu0 0.0
    %4582 = vmatprep.subr.mxu0 0.0
    %4583 = vmatpush1.msra.mxu0 0.0
    %4584 = vmatprep.subr.mxu0 0.0
    %4585 = vmatpush1.msra.mxu0 0.0
    %4586 = vmatprep.subr.mxu0 0.0
    %4587 = vmatpush1.msra.mxu0 0.0
    %4588 = vmatprep.mubr.f32.mxu0 0.0
    %4589 = vmatmul.mubr.f32.gmra.mrb[0].mxu0 %v4500
    %v4590 = vpop.f32.mrb[0].mxu0
    %v4591 = vadd.f32 %v4522, %v4590
    %v4592 = vpop.f32.mrb[0].mxu0
    %4593 = vdwg.mxu0
    %vm4594 = vcmask 74752
    %4595 = vst.msk [vmem:[#allocation2] sm:$0x3] %vm4594, %v4591
    // Predicated region
    $region22: #{combined_model_forward.3} parent=1 // pred_check
      _
    $region23: #{combined_model_forward.3} parent=1 // pred_check_branch
      %4597 = sbr.rel (0) target = $region25
    $region24: #{combined_model_forward.3} parent=1 // pred_region
      %s4599 = ssub.s32 32, 32
      %4600 = vsyncadd [#allocation3], %s4599
      %s4602 = sshll.u32 [#allocation2], 4
      %s4603 = int_to_ptr.vmem [resolvable:$true] %s4602
      %4605 = dma.vmem_to_hbm [thread:$0]  %s4603, 32, %s5, [#allocation3]
    $region25: #{combined_model_forward.3} parent=1 // pred_fallthru
      _
    // Predicated region
    $region26: #{combined_model_forward.3} parent=1 // pred_check
      _
    $region27: #{combined_model_forward.3} parent=1 // pred_check_branch
      %4607 = sbr.rel (0) target = $region29
    $region28: #{combined_model_forward.3} parent=1 // pred_region
      %4608 = dma.done [#allocation3], 32
    $region29: #{combined_model_forward.3} parent=1 // pred_fallthru
      _
    %4609 = vsyncpa [#allocation3], 1

</llo_original>
